<compile_context>
chip_gen: v7x
topology: tpu7x:2x2x1
jax: 0.10.0
libtpu: 0.0.40
codegen_flags: <defaults>
</compile_context>

<pallas_src>
import jax
import jax.numpy as jnp
from jax.experimental import pallas as pl
from jax.experimental.pallas import tpu as pltpu

CHANNELS = 3
IMG_SIZE = 64
IN_FEATURES = CHANNELS * IMG_SIZE * IMG_SIZE  # 12288
H1 = 512
H2 = 256
OUT = 1

B_MIN = 16   # bf16 packs 16 sublanes per vreg -> pad batch to a multiple of 16
TK = 4096    # K-tile for layer 1: 12288 / 4096 = 3 grid steps


def _disc_kernel(x_ref, w1_ref, b1_ref, w2_ref, b2_ref, w3_ref, b3_ref,
                 out_ref, h1_acc):
    k = pl.program_id(0)

    @pl.when(k == 0)
    def _():
        h1_acc[...] = jnp.zeros_like(h1_acc)

    # Layer 1 partial matmul over the K tiles (the hot path): bf16 x bf16 -> f32 acc.
    h1_acc[...] += jnp.dot(x_ref[...], w1_ref[...],
                           preferred_element_type=jnp.float32)

    @pl.when(k == pl.num_programs(0) - 1)
    def _():
        # finish layer 1: bias + LeakyReLU(0.2)   (biases kept in f32)
        h1 = h1_acc[...] + b1_ref[...]
        h1 = jnp.where(h1 > 0, h1, 0.2 * h1)
        # layer 2: Linear(512, 256) in bf16 on the MXU, f32 accumulate, + LeakyReLU
        h2 = jnp.dot(h1.astype(jnp.bfloat16), w2_ref[...],
                     preferred_element_type=jnp.float32)
        h2 = h2 + b2_ref[...]
        h2 = jnp.where(h2 > 0, h2, 0.2 * h2)
        # layer 3 (N=1): broadcast-multiply + lane reduction (avoids a 1-wide MXU matmul)
        h3 = jnp.sum(h2 * w3_ref[...], axis=-1, keepdims=True) + b3_ref[...]
        # sigmoid: exp and approximate reciprocal both land on the EUP slot
        out_ref[...] = pl.reciprocal(1.0 + jnp.exp(-h3), approx=True)


@jax.jit
def discriminator_forward(img, w1, b1, w2, b2, w3, b3):
    """img: (B, C, H, W) float32 -> (B, 1) float32."""
    bsz = img.shape[0]
    x = img.reshape(bsz, -1)                          # (B, 12288), same as torch .view
    b_pad = ((bsz + B_MIN - 1) // B_MIN) * B_MIN      # round batch up to a multiple of 16
    x = jnp.pad(x, ((0, b_pad - bsz), (0, 0)))

    # bf16 for the streamed/hot matmul operands; biases + W3 stay f32.
    x_bf = x.astype(jnp.bfloat16)
    w1_bf = w1.astype(jnp.bfloat16)
    w2_bf = w2.astype(jnp.bfloat16)

    # biases / W3 shaped as rows so they broadcast against (b_pad, N) tiles
    b1r = b1.reshape(1, H1)
    b2r = b2.reshape(1, H2)
    w3r = w3.reshape(1, H2)      # (256, 1) -> (1, 256) row for the lane-reduction form
    b3r = b3.reshape(1, OUT)

    n_k = IN_FEATURES // TK

    # NOTE: for very large GAN batches a second batch tile (kept as the *inner*
    # axis so W1 streams once) would be the next step; at small batch one tile
    # per call is optimal.
    out = pl.pallas_call(
        _disc_kernel,
        out_shape=jax.ShapeDtypeStruct((b_pad, OUT), jnp.float32),
        grid_spec=pltpu.PrefetchScalarGridSpec(
            num_scalar_prefetch=0,
            grid=(n_k,),
            in_specs=[
                pl.BlockSpec((b_pad, TK), lambda k: (0, k)),   # x tile (bf16)
                pl.BlockSpec((TK, H1), lambda k: (k, 0)),      # W1 tile (bf16)
                pl.BlockSpec((1, H1), lambda k: (0, 0)),       # b1 (f32)
                pl.BlockSpec((H1, H2), lambda k: (0, 0)),      # W2 (bf16)
                pl.BlockSpec((1, H2), lambda k: (0, 0)),       # b2 (f32)
                pl.BlockSpec((1, H2), lambda k: (0, 0)),       # W3 as a row (f32)
                pl.BlockSpec((1, OUT), lambda k: (0, 0)),      # b3 (f32)
            ],
            out_specs=pl.BlockSpec((b_pad, OUT), lambda k: (0, 0)),
            scratch_shapes=[pltpu.VMEM((b_pad, H1), jnp.float32)],
        ),
        compiler_params=pltpu.CompilerParams(
            dimension_semantics=("arbitrary",),   # K is a reduction axis
            vmem_limit_bytes=32 * 1024 * 1024,    # explicit headroom (need ~9 MiB)
        ),
    )(x_bf, w1_bf, b1r, w2_bf, b2r, w3r, b3r)

    return out[:bsz]


def init_params(key):
    """Deterministic init matching the nn.Linear shapes (Kaiming-uniform-ish)."""
    ks = jax.random.split(key, 6)

    def linear(kw, kb, fan_in, fan_out):
        bound = 1.0 / jnp.sqrt(fan_in)
        w = jax.random.uniform(kw, (fan_in, fan_out), jnp.float32, -bound, bound)
        b = jax.random.uniform(kb, (fan_out,), jnp.float32, -bound, bound)
        return w, b

    w1, b1 = linear(ks[0], ks[1], IN_FEATURES, H1)
    w2, b2 = linear(ks[2], ks[3], H1, H2)
    w3, b3 = linear(ks[4], ks[5], H2, OUT)
    return w1, b1, w2, b2, w3, b3


if __name__ == "__main__":
    key = jax.random.PRNGKey(0)
    k_img, k_params = jax.random.split(key)

    batch = 2
    img = jax.random.normal(k_img, (batch, CHANNELS, IMG_SIZE, IMG_SIZE),
                            dtype=jnp.float32)

    params = init_params(k_params)

    out = discriminator_forward(img, *params)
    out = jax.block_until_ready(out)

    # sanity check against a pure-JAX f32 reference (bf16 layers -> looser tolerance)
    w1, b1, w2, b2, w3, b3 = params
    xf = img.reshape(batch, -1)
    h = xf @ w1 + b1
    h = jnp.where(h > 0, h, 0.2 * h)
    h = h @ w2 + b2
    h = jnp.where(h > 0, h, 0.2 * h)
    ref = jax.nn.sigmoid(h @ w3 + b3)
    assert out.shape == (batch, 1)
    assert jnp.allclose(out, ref, atol=2e-2, rtol=2e-2), (out, ref)

    print("KERNEL_OK")
</pallas_src>

<mosaic_0001>
module attributes {stable_mosaic.version = 11 : i64} {
  func.func @_disc_kernel(%arg0: i32, %arg1: memref<16x4096xbf16, #tpu.memory_space<vmem>>, %arg2: memref<4096x512xbf16, #tpu.memory_space<vmem>>, %arg3: memref<1x512xf32, #tpu.memory_space<vmem>>, %arg4: memref<512x256xbf16, #tpu.memory_space<vmem>>, %arg5: memref<1x256xf32, #tpu.memory_space<vmem>>, %arg6: memref<1x256xf32, #tpu.memory_space<vmem>>, %arg7: memref<1x1xf32, #tpu.memory_space<vmem>>, %arg8: memref<16x1xf32, #tpu.memory_space<vmem>>, %arg9: memref<16x512xf32, #tpu.memory_space<vmem>>) attributes {dimension_semantics = [#tpu.dimension_semantics<arbitrary>], iteration_bounds = array<i64: 3>, scalar_prefetch = 0 : i64, scratch_operands = 1 : i64, tpu.core_type = #tpu.core_type<tc>, window_params = [{transform_indices = @transform_0, window_bounds = array<i64: 16, 4096>}, {transform_indices = @transform_1, window_bounds = array<i64: 4096, 512>}, {pipeline_mode = #tpu.pipeline_mode<synchronous>, transform_indices = @transform_2, window_bounds = array<i64: 1, 512>}, {pipeline_mode = #tpu.pipeline_mode<synchronous>, transform_indices = @transform_3, window_bounds = array<i64: 512, 256>}, {pipeline_mode = #tpu.pipeline_mode<synchronous>, transform_indices = @transform_4, window_bounds = array<i64: 1, 256>}, {pipeline_mode = #tpu.pipeline_mode<synchronous>, transform_indices = @transform_5, window_bounds = array<i64: 1, 256>}, {pipeline_mode = #tpu.pipeline_mode<synchronous>, transform_indices = @transform_6, window_bounds = array<i64: 1, 1>}, {pipeline_mode = #tpu.pipeline_mode<synchronous>, transform_indices = @transform_7, window_bounds = array<i64: 16, 1>}]} {
    %c0_i32 = arith.constant 0 : i32
    %0 = arith.cmpi eq, %arg0, %c0_i32 : i32
    %1 = arith.extui %0 : i1 to i32
    %c0_i32_0 = arith.constant 0 : i32
    %2 = arith.cmpi ne, %1, %c0_i32_0 : i32
    scf.if %2 {
      %cst_9 = arith.constant 0.000000e+00 : f32
      %12 = vector.broadcast %cst_9 : f32 to vector<16x512xf32>
      %c0_10 = arith.constant 0 : index
      %c0_11 = arith.constant 0 : index
      %13 = vector.load %arg9[%c0_10, %c0_11] : memref<16x512xf32, #tpu.memory_space<vmem>>, vector<16x512xf32>
      tpu.vector_store %arg9[%c0_10, %c0_11], %12 {strides = array<i32>} : memref<16x512xf32, #tpu.memory_space<vmem>>, vector<16x512xf32>,
    } else {
    }
    %c0 = arith.constant 0 : index
    %c0_1 = arith.constant 0 : index
    %3 = vector.load %arg9[%c0, %c0_1] : memref<16x512xf32, #tpu.memory_space<vmem>>, vector<16x512xf32>
    %c0_2 = arith.constant 0 : index
    %c0_3 = arith.constant 0 : index
    %4 = vector.load %arg1[%c0_2, %c0_3] : memref<16x4096xbf16, #tpu.memory_space<vmem>>, vector<16x4096xbf16>
    %c0_4 = arith.constant 0 : index
    %c0_5 = arith.constant 0 : index
    %5 = vector.load %arg2[%c0_4, %c0_5] : memref<4096x512xbf16, #tpu.memory_space<vmem>>, vector<4096x512xbf16>
    %cst = arith.constant dense<0.000000e+00> : vector<16x512xf32>
    %6 = tpu.matmul %4, %5, %cst {dimension_numbers = #tpu.dot_dimension_numbers<[1], [0], [0], [1], [0, 0, 1, 1], [], []>} : vector<16x4096xbf16>, vector<4096x512xbf16>, vector<16x512xf32> -> vector<16x512xf32>
    %7 = arith.addf %3, %6 : vector<16x512xf32>
    %c0_6 = arith.constant 0 : index
    %c0_7 = arith.constant 0 : index
    %8 = vector.load %arg9[%c0_6, %c0_7] : memref<16x512xf32, #tpu.memory_space<vmem>>, vector<16x512xf32>
    tpu.vector_store %arg9[%c0_6, %c0_7], %7 {strides = array<i32>} : memref<16x512xf32, #tpu.memory_space<vmem>>, vector<16x512xf32>,
    %c2_i32 = arith.constant 2 : i32
    %9 = arith.cmpi eq, %arg0, %c2_i32 : i32
    %10 = arith.extui %9 : i1 to i32
    %c0_i32_8 = arith.constant 0 : i32
    %11 = arith.cmpi ne, %10, %c0_i32_8 : i32
    scf.if %11 {
      %c0_9 = arith.constant 0 : index
      %c0_10 = arith.constant 0 : index
      %12 = vector.load %arg9[%c0_9, %c0_10] : memref<16x512xf32, #tpu.memory_space<vmem>>, vector<16x512xf32>
      %c0_11 = arith.constant 0 : index
      %c0_12 = arith.constant 0 : index
      %13 = vector.load %arg3[%c0_11, %c0_12] : memref<1x512xf32, #tpu.memory_space<vmem>>, vector<1x512xf32>
      %14 = vector.broadcast %13 : vector<1x512xf32> to vector<16x512xf32>
      %15 = arith.addf %12, %14 : vector<16x512xf32>
      %cst_13 = arith.constant 0.000000e+00 : f32
      %16 = vector.broadcast %cst_13 : f32 to vector<16x512xf32>
      %17 = arith.cmpf ogt, %15, %16 : vector<16x512xf32>
      %cst_14 = arith.constant 2.000000e-01 : f32
      %18 = vector.broadcast %cst_14 : f32 to vector<16x512xf32>
      %19 = arith.mulf %18, %15 : vector<16x512xf32>
      %20 = arith.select %17, %15, %19 : vector<16x512xi1>, vector<16x512xf32>
      %21 = arith.truncf %20 : vector<16x512xf32> to vector<16x512xbf16>
      %c0_15 = arith.constant 0 : index
      %c0_16 = arith.constant 0 : index
      %22 = vector.load %arg4[%c0_15, %c0_16] : memref<512x256xbf16, #tpu.memory_space<vmem>>, vector<512x256xbf16>
      %cst_17 = arith.constant dense<0.000000e+00> : vector<16x256xf32>
      %23 = tpu.matmul %21, %22, %cst_17 {dimension_numbers = #tpu.dot_dimension_numbers<[1], [0], [0], [1], [0, 0, 1, 1], [], []>} : vector<16x512xbf16>, vector<512x256xbf16>, vector<16x256xf32> -> vector<16x256xf32>
      %c0_18 = arith.constant 0 : index
      %c0_19 = arith.constant 0 : index
      %24 = vector.load %arg5[%c0_18, %c0_19] : memref<1x256xf32, #tpu.memory_space<vmem>>, vector<1x256xf32>
      %25 = vector.broadcast %24 : vector<1x256xf32> to vector<16x256xf32>
      %26 = arith.addf %23, %25 : vector<16x256xf32>
      %cst_20 = arith.constant 0.000000e+00 : f32
      %27 = vector.broadcast %cst_20 : f32 to vector<16x256xf32>
      %28 = arith.cmpf ogt, %26, %27 : vector<16x256xf32>
      %cst_21 = arith.constant 2.000000e-01 : f32
      %29 = vector.broadcast %cst_21 : f32 to vector<16x256xf32>
      %30 = arith.mulf %29, %26 : vector<16x256xf32>
      %31 = arith.select %28, %26, %30 : vector<16x256xi1>, vector<16x256xf32>
      %c0_22 = arith.constant 0 : index
      %c0_23 = arith.constant 0 : index
      %32 = vector.load %arg6[%c0_22, %c0_23] : memref<1x256xf32, #tpu.memory_space<vmem>>, vector<1x256xf32>
      %33 = vector.broadcast %32 : vector<1x256xf32> to vector<16x256xf32>
      %34 = arith.mulf %31, %33 : vector<16x256xf32>
      %cst_24 = arith.constant dense<0.000000e+00> : vector<16xf32>
      %35 = vector.multi_reduction <add>, %34, %cst_24 [1] : vector<16x256xf32> to vector<16xf32>
      %36 = vector.shape_cast %35 : vector<16xf32> to vector<16x1xf32>
      %c0_25 = arith.constant 0 : index
      %c0_26 = arith.constant 0 : index
      %37 = vector.load %arg7[%c0_25, %c0_26] : memref<1x1xf32, #tpu.memory_space<vmem>>, vector<1x1xf32>
      %38 = vector.broadcast %37 : vector<1x1xf32> to vector<16x1xf32>
      %39 = arith.addf %36, %38 : vector<16x1xf32>
      %cst_27 = arith.constant 0.000000e+00 : f32
      %40 = vector.broadcast %cst_27 : f32 to vector<16x1xf32>
      %41 = arith.subf %40, %39 : vector<16x1xf32>
      %42 = math.exp %41 : vector<16x1xf32>
      %cst_28 = arith.constant 1.000000e+00 : f32
      %43 = vector.broadcast %cst_28 : f32 to vector<16x1xf32>
      %44 = arith.addf %43, %42 : vector<16x1xf32>
      %45 = tpu.reciprocal %44 {approx = true} : vector<16x1xf32> -> vector<16x1xf32>
      %c0_29 = arith.constant 0 : index
      %c0_30 = arith.constant 0 : index
      %46 = vector.load %arg8[%c0_29, %c0_30] : memref<16x1xf32, #tpu.memory_space<vmem>>, vector<16x1xf32>
      tpu.vector_store %arg8[%c0_29, %c0_30], %45 {strides = array<i32>} : memref<16x1xf32, #tpu.memory_space<vmem>>, vector<16x1xf32>,
    } else {
    }
    return
  }
  func.func @transform_0(%arg0: i32) -> (i32, i32) {
    %c0_i32 = arith.constant 0 : i32
    %c0_i32_0 = arith.constant 0 : i32
    return %c0_i32, %arg0 : i32, i32
  }
  func.func @transform_1(%arg0: i32) -> (i32, i32) {
    %c0_i32 = arith.constant 0 : i32
    %c0_i32_0 = arith.constant 0 : i32
    return %arg0, %c0_i32 : i32, i32
  }
  func.func @transform_2(%arg0: i32) -> (i32, i32) {
    %c0_i32 = arith.constant 0 : i32
    %c0_i32_0 = arith.constant 0 : i32
    %c0_i32_1 = arith.constant 0 : i32
    return %c0_i32, %c0_i32_0 : i32, i32
  }
  func.func @transform_3(%arg0: i32) -> (i32, i32) {
    %c0_i32 = arith.constant 0 : i32
    %c0_i32_0 = arith.constant 0 : i32
    %c0_i32_1 = arith.constant 0 : i32
    return %c0_i32, %c0_i32_0 : i32, i32
  }
  func.func @transform_4(%arg0: i32) -> (i32, i32) {
    %c0_i32 = arith.constant 0 : i32
    %c0_i32_0 = arith.constant 0 : i32
    %c0_i32_1 = arith.constant 0 : i32
    return %c0_i32, %c0_i32_0 : i32, i32
  }
  func.func @transform_5(%arg0: i32) -> (i32, i32) {
    %c0_i32 = arith.constant 0 : i32
    %c0_i32_0 = arith.constant 0 : i32
    %c0_i32_1 = arith.constant 0 : i32
    return %c0_i32, %c0_i32_0 : i32, i32
  }
  func.func @transform_6(%arg0: i32) -> (i32, i32) {
    %c0_i32 = arith.constant 0 : i32
    %c0_i32_0 = arith.constant 0 : i32
    %c0_i32_1 = arith.constant 0 : i32
    return %c0_i32, %c0_i32_0 : i32, i32
  }
  func.func @transform_7(%arg0: i32) -> (i32, i32) {
    %c0_i32 = arith.constant 0 : i32
    %c0_i32_0 = arith.constant 0 : i32
    %c0_i32_1 = arith.constant 0 : i32
    return %c0_i32, %c0_i32_0 : i32, i32
  }
}

</mosaic_0001>

<llo_original>
// kernel: discriminator_forward.1
$region0: #{discriminator_forward.1}
  #allocation0 [shape = 'u32[]', space=smem, size = 0x4, offset = 0x4, fixed_abs, tag = 'smem constant byte address 0x4 - core index']
  #allocation1 [shape = 'u32[144,128]{1,0:T(1,128)}', space=vmem, size = 0x12000, scoped, tag = 'internal scratch']
  #allocation2 [shape = 'f32[16,512]{1,0:T(8,128)}', space=vmem, size = 0x8000, scoped, tag = 'scratch operand']
  #allocation3 [shape = 'f32[1,1]{1,0:T(1,128)S(1)}', space=vmem, size = 0x200, scoped, tag = 'scoped memory for discriminator_forward.1']
  %s0 = inlined_call_operand.vmem [shape: bf16[16,12288], index: 0, kind: input, shape index: {}]
  %s1 = inlined_call_operand.vmem [shape: bf16[12288,512], index: 1, kind: input, shape index: {}]
  %s2 = inlined_call_operand.vmem [shape: f32[1,512], index: 2, kind: input, shape index: {}]
  %s3 = inlined_call_operand.vmem [shape: bf16[512,256], index: 3, kind: input, shape index: {}]
  %s4 = inlined_call_operand.vmem [shape: f32[1,256], index: 4, kind: input, shape index: {}]
  %s5 = inlined_call_operand.vmem [shape: f32[1,256], index: 5, kind: input, shape index: {}]
  %s6 = inlined_call_operand.<no memory space> [shape: f32[1,1], index: 6, kind: input, shape index: {}]
  %s7 = inlined_call_operand.vmem [shape: f32[16,1], index: 7, kind: output, shape index: {}]
  %s8 = sld [smem:[#allocation0]]
  $region92: #{discriminator_forward.1} parent=0
    _
  %s10 = ssub.s32 1, %s8
  %s11 = scalar_select 0, %s10, %s8
  %v12 = vstv %s6
  %13 = vst [vmem:[#allocation3] sm:$0x1] %v12
  $region1: #{discriminator_forward.1} parent=0
    #allocation4 [shape = 'u8[262144]{0}', space=vmem, size = 0x40000, scoped, tag = 'input window, operand 0']
    loop: start=0, step=1, limit=5
    $region2: #{discriminator_forward.1} parent=1 // loop_pre_header
      _
    $region3: #{discriminator_forward.1} parent=1 // loop_header
      %s15 = sphi 0, %s19
      %p16 = scmp.ge.s32.totalorder %s15, 5
      %s25 = sphi 0, %s27
      %s28 = sphi 0, %s25
      %s29 = sphi 0, %s28
      %s45 = sphi 0, %s29
      %s51 = sphi 0, %s53
      %s54 = sphi 0, %s51
      %s55 = sphi 0, %s54
      %s71 = sphi 0, %s55
      %s75 = sphi 0, %s75
      %s77 = sphi 0, %s75
      %s78 = sphi 0, %s77
      %s92 = sphi 0, %s78
      %s96 = sphi 0, %s96
      %s98 = sphi 0, %s96
      %s99 = sphi 0, %s98
      %s113 = sphi 0, %s99
      %s117 = sphi 0, %s117
      %s119 = sphi 0, %s117
      %s120 = sphi 0, %s119
      %s134 = sphi 0, %s120
      %s138 = sphi 0, %s138
      %s140 = sphi 0, %s138
      %s141 = sphi 0, %s140
      %s155 = sphi 0, %s141
      %s159 = sphi 0, %s159
      %s161 = sphi 0, %s159
      %s162 = sphi 0, %s161
      %s176 = sphi 0, %s162
      %s180 = sphi 0, %s180
      %s182 = sphi 0, %s180
      %s183 = sphi 0, %s182
      %s197 = sphi 0, %s183
    $region4: #{discriminator_forward.1} parent=1 // loop_header_branch
      %18 = sbr.rel (%p16) target = $region8
    $region5: #{discriminator_forward.1} parent=1 // loop_body
      %s20 = ssub.s32 %s15, 1
      %s21 = ssub.s32 %s15, 2
      %s22 = sadd.s32 %s15, 1
      %s23 = ssub.s32 %s15, %s22
      %p24 = scmp.eq.s32.totalorder %s23, 0
      %s26 = sadd.s32 %s25, 1
      %s27 = scalar_select %p24, %s25, %s26
      %p30 = pneg %p24
      %p31 = scmp.eq.s32.totalorder %s15, 2
      %p32 = por %p30, %p31
      %p33 = scmp.ne.s32.totalorder %s25, %s28
      %p34 = scmp.eq.s32.totalorder %s15, 0
      %p35 = por %p33, %p34
      %p36 = scmp.ne.s32.totalorder %s25, %s28
      %p37 = scmp.eq.s32.totalorder %s20, 2
      %p38 = por %p36, %p37
      %p39 = scmp.ne.s32.totalorder %s28, %s29
      %p40 = scmp.eq.s32.totalorder %s20, 0
      %p41 = por %p39, %p40
      %p42 = scmp.ne.s32.totalorder %s28, %s29
      %p43 = scmp.eq.s32.totalorder %s21, 2
      %p44 = por %p42, %p43
      %p46 = scmp.ne.s32.totalorder %s29, %s45
      %p47 = scmp.eq.s32.totalorder %s21, 0
      %p48 = por %p46, %p47
      %s49 = ssub.s32 %s15, %s22
      %p50 = scmp.eq.s32.totalorder %s49, 0
      %s52 = sadd.s32 %s51, 1
      %s53 = scalar_select %p50, %s51, %s52
      %p56 = pneg %p50
      %p57 = scmp.eq.s32.totalorder %s15, 2
      %p58 = por %p56, %p57
      %p59 = scmp.ne.s32.totalorder %s51, %s54
      %p60 = scmp.eq.s32.totalorder %s15, 0
      %p61 = por %p59, %p60
      %p62 = scmp.ne.s32.totalorder %s51, %s54
      %p63 = scmp.eq.s32.totalorder %s20, 2
      %p64 = por %p62, %p63
      %p65 = scmp.ne.s32.totalorder %s54, %s55
      %p66 = scmp.eq.s32.totalorder %s20, 0
      %p67 = por %p65, %p66
      %p68 = scmp.ne.s32.totalorder %s54, %s55
      %p69 = scmp.eq.s32.totalorder %s21, 2
      %p70 = por %p68, %p69
      %p72 = scmp.ne.s32.totalorder %s55, %s71
      %p73 = scmp.eq.s32.totalorder %s21, 0
      %p74 = por %p72, %p73
      %s76 = sadd.s32 %s75, 1
      %p79 = scmp.eq.s32.totalorder %s15, 2
      %p80 = scmp.ne.s32.totalorder %s75, %s77
      %p81 = scmp.eq.s32.totalorder %s15, 0
      %p82 = por %p80, %p81
      %p83 = scmp.ne.s32.totalorder %s75, %s77
      %p84 = scmp.eq.s32.totalorder %s20, 2
      %p85 = por %p83, %p84
      %p86 = scmp.ne.s32.totalorder %s77, %s78
      %p87 = scmp.eq.s32.totalorder %s20, 0
      %p88 = por %p86, %p87
      %p89 = scmp.ne.s32.totalorder %s77, %s78
      %p90 = scmp.eq.s32.totalorder %s21, 2
      %p91 = por %p89, %p90
      %p93 = scmp.ne.s32.totalorder %s78, %s92
      %p94 = scmp.eq.s32.totalorder %s21, 0
      %p95 = por %p93, %p94
      %s97 = sadd.s32 %s96, 1
      %p100 = scmp.eq.s32.totalorder %s15, 2
      %p101 = scmp.ne.s32.totalorder %s96, %s98
      %p102 = scmp.eq.s32.totalorder %s15, 0
      %p103 = por %p101, %p102
      %p104 = scmp.ne.s32.totalorder %s96, %s98
      %p105 = scmp.eq.s32.totalorder %s20, 2
      %p106 = por %p104, %p105
      %p107 = scmp.ne.s32.totalorder %s98, %s99
      %p108 = scmp.eq.s32.totalorder %s20, 0
      %p109 = por %p107, %p108
      %p110 = scmp.ne.s32.totalorder %s98, %s99
      %p111 = scmp.eq.s32.totalorder %s21, 2
      %p112 = por %p110, %p111
      %p114 = scmp.ne.s32.totalorder %s99, %s113
      %p115 = scmp.eq.s32.totalorder %s21, 0
      %p116 = por %p114, %p115
      %s118 = sadd.s32 %s117, 1
      %p121 = scmp.eq.s32.totalorder %s15, 2
      %p122 = scmp.ne.s32.totalorder %s117, %s119
      %p123 = scmp.eq.s32.totalorder %s15, 0
      %p124 = por %p122, %p123
      %p125 = scmp.ne.s32.totalorder %s117, %s119
      %p126 = scmp.eq.s32.totalorder %s20, 2
      %p127 = por %p125, %p126
      %p128 = scmp.ne.s32.totalorder %s119, %s120
      %p129 = scmp.eq.s32.totalorder %s20, 0
      %p130 = por %p128, %p129
      %p131 = scmp.ne.s32.totalorder %s119, %s120
      %p132 = scmp.eq.s32.totalorder %s21, 2
      %p133 = por %p131, %p132
      %p135 = scmp.ne.s32.totalorder %s120, %s134
      %p136 = scmp.eq.s32.totalorder %s21, 0
      %p137 = por %p135, %p136
      %s139 = sadd.s32 %s138, 1
      %p142 = scmp.eq.s32.totalorder %s15, 2
      %p143 = scmp.ne.s32.totalorder %s138, %s140
      %p144 = scmp.eq.s32.totalorder %s15, 0
      %p145 = por %p143, %p144
      %p146 = scmp.ne.s32.totalorder %s138, %s140
      %p147 = scmp.eq.s32.totalorder %s20, 2
      %p148 = por %p146, %p147
      %p149 = scmp.ne.s32.totalorder %s140, %s141
      %p150 = scmp.eq.s32.totalorder %s20, 0
      %p151 = por %p149, %p150
      %p152 = scmp.ne.s32.totalorder %s140, %s141
      %p153 = scmp.eq.s32.totalorder %s21, 2
      %p154 = por %p152, %p153
      %p156 = scmp.ne.s32.totalorder %s141, %s155
      %p157 = scmp.eq.s32.totalorder %s21, 0
      %p158 = por %p156, %p157
      %s160 = sadd.s32 %s159, 1
      %p163 = scmp.eq.s32.totalorder %s15, 2
      %p164 = scmp.ne.s32.totalorder %s159, %s161
      %p165 = scmp.eq.s32.totalorder %s15, 0
      %p166 = por %p164, %p165
      %p167 = scmp.ne.s32.totalorder %s159, %s161
      %p168 = scmp.eq.s32.totalorder %s20, 2
      %p169 = por %p167, %p168
      %p170 = scmp.ne.s32.totalorder %s161, %s162
      %p171 = scmp.eq.s32.totalorder %s20, 0
      %p172 = por %p170, %p171
      %p173 = scmp.ne.s32.totalorder %s161, %s162
      %p174 = scmp.eq.s32.totalorder %s21, 2
      %p175 = por %p173, %p174
      %p177 = scmp.ne.s32.totalorder %s162, %s176
      %p178 = scmp.eq.s32.totalorder %s21, 0
      %p179 = por %p177, %p178
      %s181 = sadd.s32 %s180, 1
      %p184 = scmp.eq.s32.totalorder %s15, 2
      %p185 = scmp.ne.s32.totalorder %s180, %s182
      %p186 = scmp.eq.s32.totalorder %s15, 0
      %p187 = por %p185, %p186
      %p188 = scmp.ne.s32.totalorder %s180, %s182
      %p189 = scmp.eq.s32.totalorder %s20, 2
      %p190 = por %p188, %p189
      %p191 = scmp.ne.s32.totalorder %s182, %s183
      %p192 = scmp.eq.s32.totalorder %s20, 0
      %p193 = por %p191, %p192
      %p194 = scmp.ne.s32.totalorder %s182, %s183
      %p195 = scmp.eq.s32.totalorder %s21, 2
      %p196 = por %p194, %p195
      %p198 = scmp.ne.s32.totalorder %s183, %s197
      %p199 = scmp.eq.s32.totalorder %s21, 0
      %p200 = por %p198, %p199
      %p201 = scmp.le.s32.totalorder 1, %s15
      %p202 = scmp.lt.s32.totalorder %s15, 4
      %p203 = pnand %p201, %p202
      %p204 = pneg %p203
      // Predicated region
      $region9: #{discriminator_forward.1} parent=5 // pred_check
        _
      $region10: #{discriminator_forward.1} parent=5 // pred_check_branch
        %206 = sbr.rel (%p203) target = $region12
      $region11: #{discriminator_forward.1} parent=5 // pred_region
        %s207 = ssub.s32 %s15, 1
        // Predicated region
        $region13: #{discriminator_forward.1} parent=11 // pred_check
          %p208 = pneg %p88
        $region14: #{discriminator_forward.1} parent=11 // pred_check_branch
          %210 = sbr.rel (%p208) target = $region16
        $region15: #{discriminator_forward.1} parent=11 // pred_region
          _
        $region16: #{discriminator_forward.1} parent=11 // pred_fallthru
          _
        // Predicated region
        $region17: #{discriminator_forward.1} parent=11 // pred_check
          %p211 = pneg %p109
        $region18: #{discriminator_forward.1} parent=11 // pred_check_branch
          %213 = sbr.rel (%p211) target = $region20
        $region19: #{discriminator_forward.1} parent=11 // pred_region
          _
        $region20: #{discriminator_forward.1} parent=11 // pred_fallthru
          _
        // Predicated region
        $region21: #{discriminator_forward.1} parent=11 // pred_check
          %p214 = pneg %p130
        $region22: #{discriminator_forward.1} parent=11 // pred_check_branch
          %216 = sbr.rel (%p214) target = $region24
        $region23: #{discriminator_forward.1} parent=11 // pred_region
          _
        $region24: #{discriminator_forward.1} parent=11 // pred_fallthru
          _
        // Predicated region
        $region25: #{discriminator_forward.1} parent=11 // pred_check
          %p217 = pneg %p151
        $region26: #{discriminator_forward.1} parent=11 // pred_check_branch
          %219 = sbr.rel (%p217) target = $region28
        $region27: #{discriminator_forward.1} parent=11 // pred_region
          _
        $region28: #{discriminator_forward.1} parent=11 // pred_fallthru
          _
        // Predicated region
        $region29: #{discriminator_forward.1} parent=11 // pred_check
          %p220 = pneg %p172
        $region30: #{discriminator_forward.1} parent=11 // pred_check_branch
          %222 = sbr.rel (%p220) target = $region32
        $region31: #{discriminator_forward.1} parent=11 // pred_region
          _
        $region32: #{discriminator_forward.1} parent=11 // pred_fallthru
          _
      $region12: #{discriminator_forward.1} parent=5 // pred_fallthru
        _
      %p223 = scmp.lt.s32.totalorder %s15, 3
      // Predicated region
      $region33: #{discriminator_forward.1} parent=5 // pred_check
        %p224 = pneg %p223
      $region34: #{discriminator_forward.1} parent=5 // pred_check_branch
        %226 = sbr.rel (%p224) target = $region36
      $region35: #{discriminator_forward.1} parent=5 // pred_region
        // Predicated region
        $region37: #{discriminator_forward.1} parent=35 // pred_check
          %p227 = pneg %p35
        $region38: #{discriminator_forward.1} parent=35 // pred_check_branch
          %229 = sbr.rel (%p227) target = $region40
        $region39: #{discriminator_forward.1} parent=35 // pred_region
          %s230 = sand.u32 %s25, 1
          %s231 = sand.u32 %s25, 1
          %s232 = smul.addr %s231, 256
          %s233 = scalar_lea.vmem [#allocation4], %s232
          %s234 = smul.u32 32, %s15
          %s235 = smul.addr %s234, 4
          %s236 = scalar_lea.vmem %s0, %s235
          // Predicated region
          $region41: #{discriminator_forward.1} parent=39 // pred_check
            _
          $region42: #{discriminator_forward.1} parent=39 // pred_check_branch
            %238 = sbr.rel (0) target = $region44
          $region43: #{discriminator_forward.1} parent=39 // pred_region
            // Predicated region
            $region45: #{discriminator_forward.1} parent=43 // pred_check
              _
            $region46: #{discriminator_forward.1} parent=43 // pred_check_branch
              %240 = sbr.rel (0) target = $region48
            $region47: #{discriminator_forward.1} parent=43 // pred_region
              loop: start=0, step=1, limit=1
              $region49: #{discriminator_forward.1} parent=47 // loop_pre_header
                _
              $region50: #{discriminator_forward.1} parent=47 // loop_header
                %s242 = sphi 0, %s246
                %p243 = scmp.ge.s32.totalorder %s242, 1
                %s247 = sphi %s236, %s236
                %s248 = sphi %s233, %s233
              $region51: #{discriminator_forward.1} parent=47 // loop_header_branch
                %245 = sbr.rel (%p243) target = $region55
              $region52: #{discriminator_forward.1} parent=47 // loop_body
                %v249 = vld [vmem:[%s247] sm:$0xff]
                %250 = vst [vmem:[%s248] sm:$0xff] %v249
                %v251 = vld [vmem:[%s247 + $0x8] sm:$0xff]
                %252 = vst [vmem:[%s248 + $0x8] sm:$0xff] %v251
                %v253 = vld [vmem:[%s247 + $0x10] sm:$0xff]
                %254 = vst [vmem:[%s248 + $0x10] sm:$0xff] %v253
                %v255 = vld [vmem:[%s247 + $0x18] sm:$0xff]
                %256 = vst [vmem:[%s248 + $0x18] sm:$0xff] %v255
                %v257 = vld [vmem:[%s247 + $0x20] sm:$0xff]
                %258 = vst [vmem:[%s248 + $0x20] sm:$0xff] %v257
                %v259 = vld [vmem:[%s247 + $0x28] sm:$0xff]
                %260 = vst [vmem:[%s248 + $0x28] sm:$0xff] %v259
                %v261 = vld [vmem:[%s247 + $0x30] sm:$0xff]
                %262 = vst [vmem:[%s248 + $0x30] sm:$0xff] %v261
                %v263 = vld [vmem:[%s247 + $0x38] sm:$0xff]
                %264 = vst [vmem:[%s248 + $0x38] sm:$0xff] %v263
                %v265 = vld [vmem:[%s247 + $0x40] sm:$0xff]
                %266 = vst [vmem:[%s248 + $0x40] sm:$0xff] %v265
                %v267 = vld [vmem:[%s247 + $0x48] sm:$0xff]
                %268 = vst [vmem:[%s248 + $0x48] sm:$0xff] %v267
                %v269 = vld [vmem:[%s247 + $0x50] sm:$0xff]
                %270 = vst [vmem:[%s248 + $0x50] sm:$0xff] %v269
                %v271 = vld [vmem:[%s247 + $0x58] sm:$0xff]
                %272 = vst [vmem:[%s248 + $0x58] sm:$0xff] %v271
                %v273 = vld [vmem:[%s247 + $0x60] sm:$0xff]
                %274 = vst [vmem:[%s248 + $0x60] sm:$0xff] %v273
                %v275 = vld [vmem:[%s247 + $0x68] sm:$0xff]
                %276 = vst [vmem:[%s248 + $0x68] sm:$0xff] %v275
                %v277 = vld [vmem:[%s247 + $0x70] sm:$0xff]
                %278 = vst [vmem:[%s248 + $0x70] sm:$0xff] %v277
                %v279 = vld [vmem:[%s247 + $0x78] sm:$0xff]
                %280 = vst [vmem:[%s248 + $0x78] sm:$0xff] %v279
                %v281 = vld [vmem:[%s247 + $0x180] sm:$0xff]
                %282 = vst [vmem:[%s248 + $0x80] sm:$0xff] %v281
                %v283 = vld [vmem:[%s247 + $0x188] sm:$0xff]
                %284 = vst [vmem:[%s248 + $0x88] sm:$0xff] %v283
                %v285 = vld [vmem:[%s247 + $0x190] sm:$0xff]
                %286 = vst [vmem:[%s248 + $0x90] sm:$0xff] %v285
                %v287 = vld [vmem:[%s247 + $0x198] sm:$0xff]
                %288 = vst [vmem:[%s248 + $0x98] sm:$0xff] %v287
                %v289 = vld [vmem:[%s247 + $0x1a0] sm:$0xff]
                %290 = vst [vmem:[%s248 + $0xa0] sm:$0xff] %v289
                %v291 = vld [vmem:[%s247 + $0x1a8] sm:$0xff]
                %292 = vst [vmem:[%s248 + $0xa8] sm:$0xff] %v291
                %v293 = vld [vmem:[%s247 + $0x1b0] sm:$0xff]
                %294 = vst [vmem:[%s248 + $0xb0] sm:$0xff] %v293
                %v295 = vld [vmem:[%s247 + $0x1b8] sm:$0xff]
                %296 = vst [vmem:[%s248 + $0xb8] sm:$0xff] %v295
                %v297 = vld [vmem:[%s247 + $0x1c0] sm:$0xff]
                %298 = vst [vmem:[%s248 + $0xc0] sm:$0xff] %v297
                %v299 = vld [vmem:[%s247 + $0x1c8] sm:$0xff]
                %300 = vst [vmem:[%s248 + $0xc8] sm:$0xff] %v299
                %v301 = vld [vmem:[%s247 + $0x1d0] sm:$0xff]
                %302 = vst [vmem:[%s248 + $0xd0] sm:$0xff] %v301
                %v303 = vld [vmem:[%s247 + $0x1d8] sm:$0xff]
                %304 = vst [vmem:[%s248 + $0xd8] sm:$0xff] %v303
                %v305 = vld [vmem:[%s247 + $0x1e0] sm:$0xff]
                %306 = vst [vmem:[%s248 + $0xe0] sm:$0xff] %v305
                %v307 = vld [vmem:[%s247 + $0x1e8] sm:$0xff]
                %308 = vst [vmem:[%s248 + $0xe8] sm:$0xff] %v307
                %v309 = vld [vmem:[%s247 + $0x1f0] sm:$0xff]
                %310 = vst [vmem:[%s248 + $0xf0] sm:$0xff] %v309
                %v311 = vld [vmem:[%s247 + $0x1f8] sm:$0xff]
                %312 = vst [vmem:[%s248 + $0xf8] sm:$0xff] %v311
              $region53: #{discriminator_forward.1} parent=47 // loop_footer
                %s246 = sadd.s32 1, %s242
              $region54: #{discriminator_forward.1} parent=47 // loop_footer_branch
                %241 = sbr.rel target = $region50
              $region55: #{discriminator_forward.1} parent=47 // loop_exit
                _
            $region48: #{discriminator_forward.1} parent=43 // pred_fallthru
              _
            // Predicated region
            $region56: #{discriminator_forward.1} parent=43 // pred_check
              _
            $region57: #{discriminator_forward.1} parent=43 // pred_check_branch
              %314 = sbr.rel target = $region59
            $region58: #{discriminator_forward.1} parent=43 // pred_region
              _
            $region59: #{discriminator_forward.1} parent=43 // pred_fallthru
              _
          $region44: #{discriminator_forward.1} parent=39 // pred_fallthru
            _
          %315 = vnop
        $region40: #{discriminator_forward.1} parent=35 // pred_fallthru
          _
        // Predicated region
        $region60: #{discriminator_forward.1} parent=35 // pred_check
          %p316 = pneg %p61
        $region61: #{discriminator_forward.1} parent=35 // pred_check_branch
          %318 = sbr.rel (%p316) target = $region63
        $region62: #{discriminator_forward.1} parent=35 // pred_region
          %s319 = smul.u32 512, %s15
          %p320 = scmp.lt.s32.totalorder %s319, 1535
          %s321 = scalar_select %p320, %s319, 1535
          %s322 = smul.addr %s321, 4
          %s323 = smul.addr %s322, 4
          %s324 = scalar_lea.vmem %s1, %s323
          %s325 = smul.u32 512, %s15
        $region63: #{discriminator_forward.1} parent=35 // pred_fallthru
          _
      $region36: #{discriminator_forward.1} parent=5 // pred_fallthru
        _
      %p326 = scmp.le.s32.totalorder 1, %s15
      %p327 = scmp.lt.s32.totalorder %s15, 4
      %p328 = pnand %p326, %p327
      %p329 = pneg %p328
      // Predicated region
      $region64: #{discriminator_forward.1} parent=5 // pred_check
        _
      $region65: #{discriminator_forward.1} parent=5 // pred_check_branch
        %331 = sbr.rel (%p328) target = $region67
      $region66: #{discriminator_forward.1} parent=5 // pred_region
        %s332 = ssub.s32 %s15, 1
        %s333 = sand.u32 %s28, 1
        %s334 = sand.u32 %s28, 1
        %s335 = smul.addr %s334, 256
        %s336 = scalar_lea.vmem [#allocation4], %s335
        // Predicated region
        $region68: #{discriminator_forward.1} parent=66 // pred_check
          %p337 = pneg %p41
        $region69: #{discriminator_forward.1} parent=66 // pred_check_branch
          %339 = sbr.rel (%p337) target = $region71
        $region70: #{discriminator_forward.1} parent=66 // pred_region
          _
        $region71: #{discriminator_forward.1} parent=66 // pred_fallthru
          _
        %s340 = sand.u32 %s28, 1
        %s341 = sand.u32 %s28, 1
        %s342 = smul.addr %s341, 256
        %s343 = scalar_lea.vmem [#allocation4], %s342
        %p344 = pneg %p41
        %p345 = pneg %p38
        %s346 = smul.u32 512, %s20
        %p347 = scmp.lt.s32.totalorder %s346, 1535
        %s348 = scalar_select %p347, %s346, 1535
        %s349 = smul.addr %s348, 4
        %s350 = smul.addr %s349, 4
        %s351 = scalar_lea.vmem %s1, %s350
        %p352 = pneg %p67
        %p353 = pneg %p64
        %p354 = pneg %p88
        %p355 = pneg %p85
        %p356 = pneg %p109
        %p357 = pneg %p106
        %p358 = pneg %p130
        %p359 = pneg %p127
        %p360 = pneg %p151
        %p361 = pneg %p148
        %p362 = pneg %p172
        %p363 = pneg %p169
        %p364 = pneg %p193
        %p365 = pneg %p190
        %s366 = smul.u32 32, %s20
        %s367 = smul.u32 512, %s20
        %p368 = scmp.lt.s32.totalorder %s367, 1535
        %s369 = scalar_select %p368, %s367, 1535
        %s370 = smul.addr %s369, 4
        %s371 = smul.addr %s370, 4
        %s372 = scalar_lea.vmem %s1, %s371
        %s373 = smul.u32 512, %s20
        %p374 = scmp.eq.s32.totalorder %s20, 0
        // Predicated region
        $region72: #{discriminator_forward.1} parent=66 // pred_check
          %p375 = pneg %p374
        $region73: #{discriminator_forward.1} parent=66 // pred_check_branch
          %377 = sbr.rel (%p375) target = $region75
        $region74: #{discriminator_forward.1} parent=66 // pred_region
          %378 = vst [vmem:[#allocation2] sm:$0xff] 0.0
          %379 = vst [vmem:[#allocation2 + $0x8] sm:$0xff] 0.0
          %380 = vst [vmem:[#allocation2 + $0x10] sm:$0xff] 0.0
          %381 = vst [vmem:[#allocation2 + $0x18] sm:$0xff] 0.0
          %382 = vst [vmem:[#allocation2 + $0x20] sm:$0xff] 0.0
          %383 = vst [vmem:[#allocation2 + $0x28] sm:$0xff] 0.0
          %384 = vst [vmem:[#allocation2 + $0x30] sm:$0xff] 0.0
          %385 = vst [vmem:[#allocation2 + $0x38] sm:$0xff] 0.0
        $region75: #{discriminator_forward.1} parent=66 // pred_fallthru
          _
        %v386 = vld [vmem:[#allocation2] sm:$0xff]
        %v387 = vld [vmem:[#allocation2 + $0x8] sm:$0xff]
        %v388 = vld [vmem:[#allocation2 + $0x10] sm:$0xff]
        %v389 = vld [vmem:[#allocation2 + $0x18] sm:$0xff]
        %v390 = vld [vmem:[#allocation2 + $0x20] sm:$0xff]
        %v391 = vld [vmem:[#allocation2 + $0x28] sm:$0xff]
        %v392 = vld [vmem:[#allocation2 + $0x30] sm:$0xff]
        %v393 = vld [vmem:[#allocation2 + $0x38] sm:$0xff]
        %v394 = vld [vmem:[%s336] sm:$0xff]
        %v395 = vld [vmem:[%s336 + $0x8] sm:$0xff]
        %v396 = vld [vmem:[%s336 + $0x10] sm:$0xff]
        %v397 = vld [vmem:[%s336 + $0x18] sm:$0xff]
        %v398 = vld [vmem:[%s336 + $0x20] sm:$0xff]
        %v399 = vld [vmem:[%s336 + $0x28] sm:$0xff]
        %v400 = vld [vmem:[%s336 + $0x30] sm:$0xff]
        %v401 = vld [vmem:[%s336 + $0x38] sm:$0xff]
        %v402 = vld [vmem:[%s336 + $0x40] sm:$0xff]
        %v403 = vld [vmem:[%s336 + $0x48] sm:$0xff]
        %v404 = vld [vmem:[%s336 + $0x50] sm:$0xff]
        %v405 = vld [vmem:[%s336 + $0x58] sm:$0xff]
        %v406 = vld [vmem:[%s336 + $0x60] sm:$0xff]
        %v407 = vld [vmem:[%s336 + $0x68] sm:$0xff]
        %v408 = vld [vmem:[%s336 + $0x70] sm:$0xff]
        %v409 = vld [vmem:[%s336 + $0x78] sm:$0xff]
        %v410 = vld [vmem:[%s336 + $0x80] sm:$0xff]
        %v411 = vld [vmem:[%s336 + $0x88] sm:$0xff]
        %v412 = vld [vmem:[%s336 + $0x90] sm:$0xff]
        %v413 = vld [vmem:[%s336 + $0x98] sm:$0xff]
        %v414 = vld [vmem:[%s336 + $0xa0] sm:$0xff]
        %v415 = vld [vmem:[%s336 + $0xa8] sm:$0xff]
        %v416 = vld [vmem:[%s336 + $0xb0] sm:$0xff]
        %v417 = vld [vmem:[%s336 + $0xb8] sm:$0xff]
        %v418 = vld [vmem:[%s336 + $0xc0] sm:$0xff]
        %v419 = vld [vmem:[%s336 + $0xc8] sm:$0xff]
        %v420 = vld [vmem:[%s336 + $0xd0] sm:$0xff]
        %v421 = vld [vmem:[%s336 + $0xd8] sm:$0xff]
        %v422 = vld [vmem:[%s336 + $0xe0] sm:$0xff]
        %v423 = vld [vmem:[%s336 + $0xe8] sm:$0xff]
        %v424 = vld [vmem:[%s336 + $0xf0] sm:$0xff]
        %v425 = vld [vmem:[%s336 + $0xf8] sm:$0xff]
        %v426 = vld [vmem:[%s372] sm:$0xff]
        %v427 = vld [vmem:[%s372 + $0x8] sm:$0xff]
        %v428 = vld [vmem:[%s372 + $0x10] sm:$0xff]
        %v429 = vld [vmem:[%s372 + $0x18] sm:$0xff]
        %v430 = vld [vmem:[%s372 + $0x20] sm:$0xff]
        %v431 = vld [vmem:[%s372 + $0x28] sm:$0xff]
        %v432 = vld [vmem:[%s372 + $0x30] sm:$0xff]
        %v433 = vld [vmem:[%s372 + $0x38] sm:$0xff]
        %v434 = vld [vmem:[%s372 + $0x40] sm:$0xff]
        %v435 = vld [vmem:[%s372 + $0x48] sm:$0xff]
        %v436 = vld [vmem:[%s372 + $0x50] sm:$0xff]
        %v437 = vld [vmem:[%s372 + $0x58] sm:$0xff]
        %v438 = vld [vmem:[%s372 + $0x60] sm:$0xff]
        %v439 = vld [vmem:[%s372 + $0x68] sm:$0xff]
        %v440 = vld [vmem:[%s372 + $0x70] sm:$0xff]
        %v441 = vld [vmem:[%s372 + $0x78] sm:$0xff]
        %v442 = vld [vmem:[%s372 + $0x80] sm:$0xff]
        %v443 = vld [vmem:[%s372 + $0x88] sm:$0xff]
        %v444 = vld [vmem:[%s372 + $0x90] sm:$0xff]
        %v445 = vld [vmem:[%s372 + $0x98] sm:$0xff]
        %v446 = vld [vmem:[%s372 + $0xa0] sm:$0xff]
        %v447 = vld [vmem:[%s372 + $0xa8] sm:$0xff]
        %v448 = vld [vmem:[%s372 + $0xb0] sm:$0xff]
        %v449 = vld [vmem:[%s372 + $0xb8] sm:$0xff]
        %v450 = vld [vmem:[%s372 + $0xc0] sm:$0xff]
        %v451 = vld [vmem:[%s372 + $0xc8] sm:$0xff]
        %v452 = vld [vmem:[%s372 + $0xd0] sm:$0xff]
        %v453 = vld [vmem:[%s372 + $0xd8] sm:$0xff]
        %v454 = vld [vmem:[%s372 + $0xe0] sm:$0xff]
        %v455 = vld [vmem:[%s372 + $0xe8] sm:$0xff]
        %v456 = vld [vmem:[%s372 + $0xf0] sm:$0xff]
        %v457 = vld [vmem:[%s372 + $0xf8] sm:$0xff]
        %v458 = vld [vmem:[%s372 + $0x100] sm:$0xff]
        %v459 = vld [vmem:[%s372 + $0x108] sm:$0xff]
        %v460 = vld [vmem:[%s372 + $0x110] sm:$0xff]
        %v461 = vld [vmem:[%s372 + $0x118] sm:$0xff]
        %v462 = vld [vmem:[%s372 + $0x120] sm:$0xff]
        %v463 = vld [vmem:[%s372 + $0x128] sm:$0xff]
        %v464 = vld [vmem:[%s372 + $0x130] sm:$0xff]
        %v465 = vld [vmem:[%s372 + $0x138] sm:$0xff]
        %v466 = vld [vmem:[%s372 + $0x140] sm:$0xff]
        %v467 = vld [vmem:[%s372 + $0x148] sm:$0xff]
        %v468 = vld [vmem:[%s372 + $0x150] sm:$0xff]
        %v469 = vld [vmem:[%s372 + $0x158] sm:$0xff]
        %v470 = vld [vmem:[%s372 + $0x160] sm:$0xff]
        %v471 = vld [vmem:[%s372 + $0x168] sm:$0xff]
        %v472 = vld [vmem:[%s372 + $0x170] sm:$0xff]
        %v473 = vld [vmem:[%s372 + $0x178] sm:$0xff]
        %v474 = vld [vmem:[%s372 + $0x180] sm:$0xff]
        %v475 = vld [vmem:[%s372 + $0x188] sm:$0xff]
        %v476 = vld [vmem:[%s372 + $0x190] sm:$0xff]
        %v477 = vld [vmem:[%s372 + $0x198] sm:$0xff]
        %v478 = vld [vmem:[%s372 + $0x1a0] sm:$0xff]
        %v479 = vld [vmem:[%s372 + $0x1a8] sm:$0xff]
        %v480 = vld [vmem:[%s372 + $0x1b0] sm:$0xff]
        %v481 = vld [vmem:[%s372 + $0x1b8] sm:$0xff]
        %v482 = vld [vmem:[%s372 + $0x1c0] sm:$0xff]
        %v483 = vld [vmem:[%s372 + $0x1c8] sm:$0xff]
        %v484 = vld [vmem:[%s372 + $0x1d0] sm:$0xff]
        %v485 = vld [vmem:[%s372 + $0x1d8] sm:$0xff]
        %v486 = vld [vmem:[%s372 + $0x1e0] sm:$0xff]
        %v487 = vld [vmem:[%s372 + $0x1e8] sm:$0xff]
        %v488 = vld [vmem:[%s372 + $0x1f0] sm:$0xff]
        %v489 = vld [vmem:[%s372 + $0x1f8] sm:$0xff]
        %v490 = vld [vmem:[%s372 + $0x200] sm:$0xff]
        %v491 = vld [vmem:[%s372 + $0x208] sm:$0xff]
        %v492 = vld [vmem:[%s372 + $0x210] sm:$0xff]
        %v493 = vld [vmem:[%s372 + $0x218] sm:$0xff]
        %v494 = vld [vmem:[%s372 + $0x220] sm:$0xff]
        %v495 = vld [vmem:[%s372 + $0x228] sm:$0xff]
        %v496 = vld [vmem:[%s372 + $0x230] sm:$0xff]
        %v497 = vld [vmem:[%s372 + $0x238] sm:$0xff]
        %v498 = vld [vmem:[%s372 + $0x240] sm:$0xff]
        %v499 = vld [vmem:[%s372 + $0x248] sm:$0xff]
        %v500 = vld [vmem:[%s372 + $0x250] sm:$0xff]
        %v501 = vld [vmem:[%s372 + $0x258] sm:$0xff]
        %v502 = vld [vmem:[%s372 + $0x260] sm:$0xff]
        %v503 = vld [vmem:[%s372 + $0x268] sm:$0xff]
        %v504 = vld [vmem:[%s372 + $0x270] sm:$0xff]
        %v505 = vld [vmem:[%s372 + $0x278] sm:$0xff]
        %v506 = vld [vmem:[%s372 + $0x280] sm:$0xff]
        %v507 = vld [vmem:[%s372 + $0x288] sm:$0xff]
        %v508 = vld [vmem:[%s372 + $0x290] sm:$0xff]
        %v509 = vld [vmem:[%s372 + $0x298] sm:$0xff]
        %v510 = vld [vmem:[%s372 + $0x2a0] sm:$0xff]
        %v511 = vld [vmem:[%s372 + $0x2a8] sm:$0xff]
        %v512 = vld [vmem:[%s372 + $0x2b0] sm:$0xff]
        %v513 = vld [vmem:[%s372 + $0x2b8] sm:$0xff]
        %v514 = vld [vmem:[%s372 + $0x2c0] sm:$0xff]
        %v515 = vld [vmem:[%s372 + $0x2c8] sm:$0xff]
        %v516 = vld [vmem:[%s372 + $0x2d0] sm:$0xff]
        %v517 = vld [vmem:[%s372 + $0x2d8] sm:$0xff]
        %v518 = vld [vmem:[%s372 + $0x2e0] sm:$0xff]
        %v519 = vld [vmem:[%s372 + $0x2e8] sm:$0xff]
        %v520 = vld [vmem:[%s372 + $0x2f0] sm:$0xff]
        %v521 = vld [vmem:[%s372 + $0x2f8] sm:$0xff]
        %v522 = vld [vmem:[%s372 + $0x300] sm:$0xff]
        %v523 = vld [vmem:[%s372 + $0x308] sm:$0xff]
        %v524 = vld [vmem:[%s372 + $0x310] sm:$0xff]
        %v525 = vld [vmem:[%s372 + $0x318] sm:$0xff]
        %v526 = vld [vmem:[%s372 + $0x320] sm:$0xff]
        %v527 = vld [vmem:[%s372 + $0x328] sm:$0xff]
        %v528 = vld [vmem:[%s372 + $0x330] sm:$0xff]
        %v529 = vld [vmem:[%s372 + $0x338] sm:$0xff]
        %v530 = vld [vmem:[%s372 + $0x340] sm:$0xff]
        %v531 = vld [vmem:[%s372 + $0x348] sm:$0xff]
        %v532 = vld [vmem:[%s372 + $0x350] sm:$0xff]
        %v533 = vld [vmem:[%s372 + $0x358] sm:$0xff]
        %v534 = vld [vmem:[%s372 + $0x360] sm:$0xff]
        %v535 = vld [vmem:[%s372 + $0x368] sm:$0xff]
        %v536 = vld [vmem:[%s372 + $0x370] sm:$0xff]
        %v537 = vld [vmem:[%s372 + $0x378] sm:$0xff]
        %v538 = vld [vmem:[%s372 + $0x380] sm:$0xff]
        %v539 = vld [vmem:[%s372 + $0x388] sm:$0xff]
        %v540 = vld [vmem:[%s372 + $0x390] sm:$0xff]
        %v541 = vld [vmem:[%s372 + $0x398] sm:$0xff]
        %v542 = vld [vmem:[%s372 + $0x3a0] sm:$0xff]
        %v543 = vld [vmem:[%s372 + $0x3a8] sm:$0xff]
        %v544 = vld [vmem:[%s372 + $0x3b0] sm:$0xff]
        %v545 = vld [vmem:[%s372 + $0x3b8] sm:$0xff]
        %v546 = vld [vmem:[%s372 + $0x3c0] sm:$0xff]
        %v547 = vld [vmem:[%s372 + $0x3c8] sm:$0xff]
        %v548 = vld [vmem:[%s372 + $0x3d0] sm:$0xff]
        %v549 = vld [vmem:[%s372 + $0x3d8] sm:$0xff]
        %v550 = vld [vmem:[%s372 + $0x3e0] sm:$0xff]
        %v551 = vld [vmem:[%s372 + $0x3e8] sm:$0xff]
        %v552 = vld [vmem:[%s372 + $0x3f0] sm:$0xff]
        %v553 = vld [vmem:[%s372 + $0x3f8] sm:$0xff]
        %v554 = vld [vmem:[%s372 + $0x400] sm:$0xff]
        %v555 = vld [vmem:[%s372 + $0x408] sm:$0xff]
        %v556 = vld [vmem:[%s372 + $0x410] sm:$0xff]
        %v557 = vld [vmem:[%s372 + $0x418] sm:$0xff]
        %v558 = vld [vmem:[%s372 + $0x420] sm:$0xff]
        %v559 = vld [vmem:[%s372 + $0x428] sm:$0xff]
        %v560 = vld [vmem:[%s372 + $0x430] sm:$0xff]
        %v561 = vld [vmem:[%s372 + $0x438] sm:$0xff]
        %v562 = vld [vmem:[%s372 + $0x440] sm:$0xff]
        %v563 = vld [vmem:[%s372 + $0x448] sm:$0xff]
        %v564 = vld [vmem:[%s372 + $0x450] sm:$0xff]
        %v565 = vld [vmem:[%s372 + $0x458] sm:$0xff]
        %v566 = vld [vmem:[%s372 + $0x460] sm:$0xff]
        %v567 = vld [vmem:[%s372 + $0x468] sm:$0xff]
        %v568 = vld [vmem:[%s372 + $0x470] sm:$0xff]
        %v569 = vld [vmem:[%s372 + $0x478] sm:$0xff]
        %v570 = vld [vmem:[%s372 + $0x480] sm:$0xff]
        %v571 = vld [vmem:[%s372 + $0x488] sm:$0xff]
        %v572 = vld [vmem:[%s372 + $0x490] sm:$0xff]
        %v573 = vld [vmem:[%s372 + $0x498] sm:$0xff]
        %v574 = vld [vmem:[%s372 + $0x4a0] sm:$0xff]
        %v575 = vld [vmem:[%s372 + $0x4a8] sm:$0xff]
        %v576 = vld [vmem:[%s372 + $0x4b0] sm:$0xff]
        %v577 = vld [vmem:[%s372 + $0x4b8] sm:$0xff]
        %v578 = vld [vmem:[%s372 + $0x4c0] sm:$0xff]
        %v579 = vld [vmem:[%s372 + $0x4c8] sm:$0xff]
        %v580 = vld [vmem:[%s372 + $0x4d0] sm:$0xff]
        %v581 = vld [vmem:[%s372 + $0x4d8] sm:$0xff]
        %v582 = vld [vmem:[%s372 + $0x4e0] sm:$0xff]
        %v583 = vld [vmem:[%s372 + $0x4e8] sm:$0xff]
        %v584 = vld [vmem:[%s372 + $0x4f0] sm:$0xff]
        %v585 = vld [vmem:[%s372 + $0x4f8] sm:$0xff]
        %v586 = vld [vmem:[%s372 + $0x500] sm:$0xff]
        %v587 = vld [vmem:[%s372 + $0x508] sm:$0xff]
        %v588 = vld [vmem:[%s372 + $0x510] sm:$0xff]
        %v589 = vld [vmem:[%s372 + $0x518] sm:$0xff]
        %v590 = vld [vmem:[%s372 + $0x520] sm:$0xff]
        %v591 = vld [vmem:[%s372 + $0x528] sm:$0xff]
        %v592 = vld [vmem:[%s372 + $0x530] sm:$0xff]
        %v593 = vld [vmem:[%s372 + $0x538] sm:$0xff]
        %v594 = vld [vmem:[%s372 + $0x540] sm:$0xff]
        %v595 = vld [vmem:[%s372 + $0x548] sm:$0xff]
        %v596 = vld [vmem:[%s372 + $0x550] sm:$0xff]
        %v597 = vld [vmem:[%s372 + $0x558] sm:$0xff]
        %v598 = vld [vmem:[%s372 + $0x560] sm:$0xff]
        %v599 = vld [vmem:[%s372 + $0x568] sm:$0xff]
        %v600 = vld [vmem:[%s372 + $0x570] sm:$0xff]
        %v601 = vld [vmem:[%s372 + $0x578] sm:$0xff]
        %v602 = vld [vmem:[%s372 + $0x580] sm:$0xff]
        %v603 = vld [vmem:[%s372 + $0x588] sm:$0xff]
        %v604 = vld [vmem:[%s372 + $0x590] sm:$0xff]
        %v605 = vld [vmem:[%s372 + $0x598] sm:$0xff]
        %v606 = vld [vmem:[%s372 + $0x5a0] sm:$0xff]
        %v607 = vld [vmem:[%s372 + $0x5a8] sm:$0xff]
        %v608 = vld [vmem:[%s372 + $0x5b0] sm:$0xff]
        %v609 = vld [vmem:[%s372 + $0x5b8] sm:$0xff]
        %v610 = vld [vmem:[%s372 + $0x5c0] sm:$0xff]
        %v611 = vld [vmem:[%s372 + $0x5c8] sm:$0xff]
        %v612 = vld [vmem:[%s372 + $0x5d0] sm:$0xff]
        %v613 = vld [vmem:[%s372 + $0x5d8] sm:$0xff]
        %v614 = vld [vmem:[%s372 + $0x5e0] sm:$0xff]
        %v615 = vld [vmem:[%s372 + $0x5e8] sm:$0xff]
        %v616 = vld [vmem:[%s372 + $0x5f0] sm:$0xff]
        %v617 = vld [vmem:[%s372 + $0x5f8] sm:$0xff]
        %v618 = vld [vmem:[%s372 + $0x600] sm:$0xff]
        %v619 = vld [vmem:[%s372 + $0x608] sm:$0xff]
        %v620 = vld [vmem:[%s372 + $0x610] sm:$0xff]
        %v621 = vld [vmem:[%s372 + $0x618] sm:$0xff]
        %v622 = vld [vmem:[%s372 + $0x620] sm:$0xff]
        %v623 = vld [vmem:[%s372 + $0x628] sm:$0xff]
        %v624 = vld [vmem:[%s372 + $0x630] sm:$0xff]
        %v625 = vld [vmem:[%s372 + $0x638] sm:$0xff]
        %v626 = vld [vmem:[%s372 + $0x640] sm:$0xff]
        %v627 = vld [vmem:[%s372 + $0x648] sm:$0xff]
        %v628 = vld [vmem:[%s372 + $0x650] sm:$0xff]
        %v629 = vld [vmem:[%s372 + $0x658] sm:$0xff]
        %v630 = vld [vmem:[%s372 + $0x660] sm:$0xff]
        %v631 = vld [vmem:[%s372 + $0x668] sm:$0xff]
        %v632 = vld [vmem:[%s372 + $0x670] sm:$0xff]
        %v633 = vld [vmem:[%s372 + $0x678] sm:$0xff]
        %v634 = vld [vmem:[%s372 + $0x680] sm:$0xff]
        %v635 = vld [vmem:[%s372 + $0x688] sm:$0xff]
        %v636 = vld [vmem:[%s372 + $0x690] sm:$0xff]
        %v637 = vld [vmem:[%s372 + $0x698] sm:$0xff]
        %v638 = vld [vmem:[%s372 + $0x6a0] sm:$0xff]
        %v639 = vld [vmem:[%s372 + $0x6a8] sm:$0xff]
        %v640 = vld [vmem:[%s372 + $0x6b0] sm:$0xff]
        %v641 = vld [vmem:[%s372 + $0x6b8] sm:$0xff]
        %v642 = vld [vmem:[%s372 + $0x6c0] sm:$0xff]
        %v643 = vld [vmem:[%s372 + $0x6c8] sm:$0xff]
        %v644 = vld [vmem:[%s372 + $0x6d0] sm:$0xff]
        %v645 = vld [vmem:[%s372 + $0x6d8] sm:$0xff]
        %v646 = vld [vmem:[%s372 + $0x6e0] sm:$0xff]
        %v647 = vld [vmem:[%s372 + $0x6e8] sm:$0xff]
        %v648 = vld [vmem:[%s372 + $0x6f0] sm:$0xff]
        %v649 = vld [vmem:[%s372 + $0x6f8] sm:$0xff]
        %v650 = vld [vmem:[%s372 + $0x700] sm:$0xff]
        %v651 = vld [vmem:[%s372 + $0x708] sm:$0xff]
        %v652 = vld [vmem:[%s372 + $0x710] sm:$0xff]
        %v653 = vld [vmem:[%s372 + $0x718] sm:$0xff]
        %v654 = vld [vmem:[%s372 + $0x720] sm:$0xff]
        %v655 = vld [vmem:[%s372 + $0x728] sm:$0xff]
        %v656 = vld [vmem:[%s372 + $0x730] sm:$0xff]
        %v657 = vld [vmem:[%s372 + $0x738] sm:$0xff]
        %v658 = vld [vmem:[%s372 + $0x740] sm:$0xff]
        %v659 = vld [vmem:[%s372 + $0x748] sm:$0xff]
        %v660 = vld [vmem:[%s372 + $0x750] sm:$0xff]
        %v661 = vld [vmem:[%s372 + $0x758] sm:$0xff]
        %v662 = vld [vmem:[%s372 + $0x760] sm:$0xff]
        %v663 = vld [vmem:[%s372 + $0x768] sm:$0xff]
        %v664 = vld [vmem:[%s372 + $0x770] sm:$0xff]
        %v665 = vld [vmem:[%s372 + $0x778] sm:$0xff]
        %v666 = vld [vmem:[%s372 + $0x780] sm:$0xff]
        %v667 = vld [vmem:[%s372 + $0x788] sm:$0xff]
        %v668 = vld [vmem:[%s372 + $0x790] sm:$0xff]
        %v669 = vld [vmem:[%s372 + $0x798] sm:$0xff]
        %v670 = vld [vmem:[%s372 + $0x7a0] sm:$0xff]
        %v671 = vld [vmem:[%s372 + $0x7a8] sm:$0xff]
        %v672 = vld [vmem:[%s372 + $0x7b0] sm:$0xff]
        %v673 = vld [vmem:[%s372 + $0x7b8] sm:$0xff]
        %v674 = vld [vmem:[%s372 + $0x7c0] sm:$0xff]
        %v675 = vld [vmem:[%s372 + $0x7c8] sm:$0xff]
        %v676 = vld [vmem:[%s372 + $0x7d0] sm:$0xff]
        %v677 = vld [vmem:[%s372 + $0x7d8] sm:$0xff]
        %v678 = vld [vmem:[%s372 + $0x7e0] sm:$0xff]
        %v679 = vld [vmem:[%s372 + $0x7e8] sm:$0xff]
        %v680 = vld [vmem:[%s372 + $0x7f0] sm:$0xff]
        %v681 = vld [vmem:[%s372 + $0x7f8] sm:$0xff]
        %v682 = vld [vmem:[%s372 + $0x800] sm:$0xff]
        %v683 = vld [vmem:[%s372 + $0x808] sm:$0xff]
        %v684 = vld [vmem:[%s372 + $0x810] sm:$0xff]
        %v685 = vld [vmem:[%s372 + $0x818] sm:$0xff]
        %v686 = vld [vmem:[%s372 + $0x820] sm:$0xff]
        %v687 = vld [vmem:[%s372 + $0x828] sm:$0xff]
        %v688 = vld [vmem:[%s372 + $0x830] sm:$0xff]
        %v689 = vld [vmem:[%s372 + $0x838] sm:$0xff]
        %v690 = vld [vmem:[%s372 + $0x840] sm:$0xff]
        %v691 = vld [vmem:[%s372 + $0x848] sm:$0xff]
        %v692 = vld [vmem:[%s372 + $0x850] sm:$0xff]
        %v693 = vld [vmem:[%s372 + $0x858] sm:$0xff]
        %v694 = vld [vmem:[%s372 + $0x860] sm:$0xff]
        %v695 = vld [vmem:[%s372 + $0x868] sm:$0xff]
        %v696 = vld [vmem:[%s372 + $0x870] sm:$0xff]
        %v697 = vld [vmem:[%s372 + $0x878] sm:$0xff]
        %v698 = vld [vmem:[%s372 + $0x880] sm:$0xff]
        %v699 = vld [vmem:[%s372 + $0x888] sm:$0xff]
        %v700 = vld [vmem:[%s372 + $0x890] sm:$0xff]
        %v701 = vld [vmem:[%s372 + $0x898] sm:$0xff]
        %v702 = vld [vmem:[%s372 + $0x8a0] sm:$0xff]
        %v703 = vld [vmem:[%s372 + $0x8a8] sm:$0xff]
        %v704 = vld [vmem:[%s372 + $0x8b0] sm:$0xff]
        %v705 = vld [vmem:[%s372 + $0x8b8] sm:$0xff]
        %v706 = vld [vmem:[%s372 + $0x8c0] sm:$0xff]
        %v707 = vld [vmem:[%s372 + $0x8c8] sm:$0xff]
        %v708 = vld [vmem:[%s372 + $0x8d0] sm:$0xff]
        %v709 = vld [vmem:[%s372 + $0x8d8] sm:$0xff]
        %v710 = vld [vmem:[%s372 + $0x8e0] sm:$0xff]
        %v711 = vld [vmem:[%s372 + $0x8e8] sm:$0xff]
        %v712 = vld [vmem:[%s372 + $0x8f0] sm:$0xff]
        %v713 = vld [vmem:[%s372 + $0x8f8] sm:$0xff]
        %v714 = vld [vmem:[%s372 + $0x900] sm:$0xff]
        %v715 = vld [vmem:[%s372 + $0x908] sm:$0xff]
        %v716 = vld [vmem:[%s372 + $0x910] sm:$0xff]
        %v717 = vld [vmem:[%s372 + $0x918] sm:$0xff]
        %v718 = vld [vmem:[%s372 + $0x920] sm:$0xff]
        %v719 = vld [vmem:[%s372 + $0x928] sm:$0xff]
        %v720 = vld [vmem:[%s372 + $0x930] sm:$0xff]
        %v721 = vld [vmem:[%s372 + $0x938] sm:$0xff]
        %v722 = vld [vmem:[%s372 + $0x940] sm:$0xff]
        %v723 = vld [vmem:[%s372 + $0x948] sm:$0xff]
        %v724 = vld [vmem:[%s372 + $0x950] sm:$0xff]
        %v725 = vld [vmem:[%s372 + $0x958] sm:$0xff]
        %v726 = vld [vmem:[%s372 + $0x960] sm:$0xff]
        %v727 = vld [vmem:[%s372 + $0x968] sm:$0xff]
        %v728 = vld [vmem:[%s372 + $0x970] sm:$0xff]
        %v729 = vld [vmem:[%s372 + $0x978] sm:$0xff]
        %v730 = vld [vmem:[%s372 + $0x980] sm:$0xff]
        %v731 = vld [vmem:[%s372 + $0x988] sm:$0xff]
        %v732 = vld [vmem:[%s372 + $0x990] sm:$0xff]
        %v733 = vld [vmem:[%s372 + $0x998] sm:$0xff]
        %v734 = vld [vmem:[%s372 + $0x9a0] sm:$0xff]
        %v735 = vld [vmem:[%s372 + $0x9a8] sm:$0xff]
        %v736 = vld [vmem:[%s372 + $0x9b0] sm:$0xff]
        %v737 = vld [vmem:[%s372 + $0x9b8] sm:$0xff]
        %v738 = vld [vmem:[%s372 + $0x9c0] sm:$0xff]
        %v739 = vld [vmem:[%s372 + $0x9c8] sm:$0xff]
        %v740 = vld [vmem:[%s372 + $0x9d0] sm:$0xff]
        %v741 = vld [vmem:[%s372 + $0x9d8] sm:$0xff]
        %v742 = vld [vmem:[%s372 + $0x9e0] sm:$0xff]
        %v743 = vld [vmem:[%s372 + $0x9e8] sm:$0xff]
        %v744 = vld [vmem:[%s372 + $0x9f0] sm:$0xff]
        %v745 = vld [vmem:[%s372 + $0x9f8] sm:$0xff]
        %v746 = vld [vmem:[%s372 + $0xa00] sm:$0xff]
        %v747 = vld [vmem:[%s372 + $0xa08] sm:$0xff]
        %v748 = vld [vmem:[%s372 + $0xa10] sm:$0xff]
        %v749 = vld [vmem:[%s372 + $0xa18] sm:$0xff]
        %v750 = vld [vmem:[%s372 + $0xa20] sm:$0xff]
        %v751 = vld [vmem:[%s372 + $0xa28] sm:$0xff]
        %v752 = vld [vmem:[%s372 + $0xa30] sm:$0xff]
        %v753 = vld [vmem:[%s372 + $0xa38] sm:$0xff]
        %v754 = vld [vmem:[%s372 + $0xa40] sm:$0xff]
        %v755 = vld [vmem:[%s372 + $0xa48] sm:$0xff]
        %v756 = vld [vmem:[%s372 + $0xa50] sm:$0xff]
        %v757 = vld [vmem:[%s372 + $0xa58] sm:$0xff]
        %v758 = vld [vmem:[%s372 + $0xa60] sm:$0xff]
        %v759 = vld [vmem:[%s372 + $0xa68] sm:$0xff]
        %v760 = vld [vmem:[%s372 + $0xa70] sm:$0xff]
        %v761 = vld [vmem:[%s372 + $0xa78] sm:$0xff]
        %v762 = vld [vmem:[%s372 + $0xa80] sm:$0xff]
        %v763 = vld [vmem:[%s372 + $0xa88] sm:$0xff]
        %v764 = vld [vmem:[%s372 + $0xa90] sm:$0xff]
        %v765 = vld [vmem:[%s372 + $0xa98] sm:$0xff]
        %v766 = vld [vmem:[%s372 + $0xaa0] sm:$0xff]
        %v767 = vld [vmem:[%s372 + $0xaa8] sm:$0xff]
        %v768 = vld [vmem:[%s372 + $0xab0] sm:$0xff]
        %v769 = vld [vmem:[%s372 + $0xab8] sm:$0xff]
        %v770 = vld [vmem:[%s372 + $0xac0] sm:$0xff]
        %v771 = vld [vmem:[%s372 + $0xac8] sm:$0xff]
        %v772 = vld [vmem:[%s372 + $0xad0] sm:$0xff]
        %v773 = vld [vmem:[%s372 + $0xad8] sm:$0xff]
        %v774 = vld [vmem:[%s372 + $0xae0] sm:$0xff]
        %v775 = vld [vmem:[%s372 + $0xae8] sm:$0xff]
        %v776 = vld [vmem:[%s372 + $0xaf0] sm:$0xff]
        %v777 = vld [vmem:[%s372 + $0xaf8] sm:$0xff]
        %v778 = vld [vmem:[%s372 + $0xb00] sm:$0xff]
        %v779 = vld [vmem:[%s372 + $0xb08] sm:$0xff]
        %v780 = vld [vmem:[%s372 + $0xb10] sm:$0xff]
        %v781 = vld [vmem:[%s372 + $0xb18] sm:$0xff]
        %v782 = vld [vmem:[%s372 + $0xb20] sm:$0xff]
        %v783 = vld [vmem:[%s372 + $0xb28] sm:$0xff]
        %v784 = vld [vmem:[%s372 + $0xb30] sm:$0xff]
        %v785 = vld [vmem:[%s372 + $0xb38] sm:$0xff]
        %v786 = vld [vmem:[%s372 + $0xb40] sm:$0xff]
        %v787 = vld [vmem:[%s372 + $0xb48] sm:$0xff]
        %v788 = vld [vmem:[%s372 + $0xb50] sm:$0xff]
        %v789 = vld [vmem:[%s372 + $0xb58] sm:$0xff]
        %v790 = vld [vmem:[%s372 + $0xb60] sm:$0xff]
        %v791 = vld [vmem:[%s372 + $0xb68] sm:$0xff]
        %v792 = vld [vmem:[%s372 + $0xb70] sm:$0xff]
        %v793 = vld [vmem:[%s372 + $0xb78] sm:$0xff]
        %v794 = vld [vmem:[%s372 + $0xb80] sm:$0xff]
        %v795 = vld [vmem:[%s372 + $0xb88] sm:$0xff]
        %v796 = vld [vmem:[%s372 + $0xb90] sm:$0xff]
        %v797 = vld [vmem:[%s372 + $0xb98] sm:$0xff]
        %v798 = vld [vmem:[%s372 + $0xba0] sm:$0xff]
        %v799 = vld [vmem:[%s372 + $0xba8] sm:$0xff]
        %v800 = vld [vmem:[%s372 + $0xbb0] sm:$0xff]
        %v801 = vld [vmem:[%s372 + $0xbb8] sm:$0xff]
        %v802 = vld [vmem:[%s372 + $0xbc0] sm:$0xff]
        %v803 = vld [vmem:[%s372 + $0xbc8] sm:$0xff]
        %v804 = vld [vmem:[%s372 + $0xbd0] sm:$0xff]
        %v805 = vld [vmem:[%s372 + $0xbd8] sm:$0xff]
        %v806 = vld [vmem:[%s372 + $0xbe0] sm:$0xff]
        %v807 = vld [vmem:[%s372 + $0xbe8] sm:$0xff]
        %v808 = vld [vmem:[%s372 + $0xbf0] sm:$0xff]
        %v809 = vld [vmem:[%s372 + $0xbf8] sm:$0xff]
        %v810 = vld [vmem:[%s372 + $0xc00] sm:$0xff]
        %v811 = vld [vmem:[%s372 + $0xc08] sm:$0xff]
        %v812 = vld [vmem:[%s372 + $0xc10] sm:$0xff]
        %v813 = vld [vmem:[%s372 + $0xc18] sm:$0xff]
        %v814 = vld [vmem:[%s372 + $0xc20] sm:$0xff]
        %v815 = vld [vmem:[%s372 + $0xc28] sm:$0xff]
        %v816 = vld [vmem:[%s372 + $0xc30] sm:$0xff]
        %v817 = vld [vmem:[%s372 + $0xc38] sm:$0xff]
        %v818 = vld [vmem:[%s372 + $0xc40] sm:$0xff]
        %v819 = vld [vmem:[%s372 + $0xc48] sm:$0xff]
        %v820 = vld [vmem:[%s372 + $0xc50] sm:$0xff]
        %v821 = vld [vmem:[%s372 + $0xc58] sm:$0xff]
        %v822 = vld [vmem:[%s372 + $0xc60] sm:$0xff]
        %v823 = vld [vmem:[%s372 + $0xc68] sm:$0xff]
        %v824 = vld [vmem:[%s372 + $0xc70] sm:$0xff]
        %v825 = vld [vmem:[%s372 + $0xc78] sm:$0xff]
        %v826 = vld [vmem:[%s372 + $0xc80] sm:$0xff]
        %v827 = vld [vmem:[%s372 + $0xc88] sm:$0xff]
        %v828 = vld [vmem:[%s372 + $0xc90] sm:$0xff]
        %v829 = vld [vmem:[%s372 + $0xc98] sm:$0xff]
        %v830 = vld [vmem:[%s372 + $0xca0] sm:$0xff]
        %v831 = vld [vmem:[%s372 + $0xca8] sm:$0xff]
        %v832 = vld [vmem:[%s372 + $0xcb0] sm:$0xff]
        %v833 = vld [vmem:[%s372 + $0xcb8] sm:$0xff]
        %v834 = vld [vmem:[%s372 + $0xcc0] sm:$0xff]
        %v835 = vld [vmem:[%s372 + $0xcc8] sm:$0xff]
        %v836 = vld [vmem:[%s372 + $0xcd0] sm:$0xff]
        %v837 = vld [vmem:[%s372 + $0xcd8] sm:$0xff]
        %v838 = vld [vmem:[%s372 + $0xce0] sm:$0xff]
        %v839 = vld [vmem:[%s372 + $0xce8] sm:$0xff]
        %v840 = vld [vmem:[%s372 + $0xcf0] sm:$0xff]
        %v841 = vld [vmem:[%s372 + $0xcf8] sm:$0xff]
        %v842 = vld [vmem:[%s372 + $0xd00] sm:$0xff]
        %v843 = vld [vmem:[%s372 + $0xd08] sm:$0xff]
        %v844 = vld [vmem:[%s372 + $0xd10] sm:$0xff]
        %v845 = vld [vmem:[%s372 + $0xd18] sm:$0xff]
        %v846 = vld [vmem:[%s372 + $0xd20] sm:$0xff]
        %v847 = vld [vmem:[%s372 + $0xd28] sm:$0xff]
        %v848 = vld [vmem:[%s372 + $0xd30] sm:$0xff]
        %v849 = vld [vmem:[%s372 + $0xd38] sm:$0xff]
        %v850 = vld [vmem:[%s372 + $0xd40] sm:$0xff]
        %v851 = vld [vmem:[%s372 + $0xd48] sm:$0xff]
        %v852 = vld [vmem:[%s372 + $0xd50] sm:$0xff]
        %v853 = vld [vmem:[%s372 + $0xd58] sm:$0xff]
        %v854 = vld [vmem:[%s372 + $0xd60] sm:$0xff]
        %v855 = vld [vmem:[%s372 + $0xd68] sm:$0xff]
        %v856 = vld [vmem:[%s372 + $0xd70] sm:$0xff]
        %v857 = vld [vmem:[%s372 + $0xd78] sm:$0xff]
        %v858 = vld [vmem:[%s372 + $0xd80] sm:$0xff]
        %v859 = vld [vmem:[%s372 + $0xd88] sm:$0xff]
        %v860 = vld [vmem:[%s372 + $0xd90] sm:$0xff]
        %v861 = vld [vmem:[%s372 + $0xd98] sm:$0xff]
        %v862 = vld [vmem:[%s372 + $0xda0] sm:$0xff]
        %v863 = vld [vmem:[%s372 + $0xda8] sm:$0xff]
        %v864 = vld [vmem:[%s372 + $0xdb0] sm:$0xff]
        %v865 = vld [vmem:[%s372 + $0xdb8] sm:$0xff]
        %v866 = vld [vmem:[%s372 + $0xdc0] sm:$0xff]
        %v867 = vld [vmem:[%s372 + $0xdc8] sm:$0xff]
        %v868 = vld [vmem:[%s372 + $0xdd0] sm:$0xff]
        %v869 = vld [vmem:[%s372 + $0xdd8] sm:$0xff]
        %v870 = vld [vmem:[%s372 + $0xde0] sm:$0xff]
        %v871 = vld [vmem:[%s372 + $0xde8] sm:$0xff]
        %v872 = vld [vmem:[%s372 + $0xdf0] sm:$0xff]
        %v873 = vld [vmem:[%s372 + $0xdf8] sm:$0xff]
        %v874 = vld [vmem:[%s372 + $0xe00] sm:$0xff]
        %v875 = vld [vmem:[%s372 + $0xe08] sm:$0xff]
        %v876 = vld [vmem:[%s372 + $0xe10] sm:$0xff]
        %v877 = vld [vmem:[%s372 + $0xe18] sm:$0xff]
        %v878 = vld [vmem:[%s372 + $0xe20] sm:$0xff]
        %v879 = vld [vmem:[%s372 + $0xe28] sm:$0xff]
        %v880 = vld [vmem:[%s372 + $0xe30] sm:$0xff]
        %v881 = vld [vmem:[%s372 + $0xe38] sm:$0xff]
        %v882 = vld [vmem:[%s372 + $0xe40] sm:$0xff]
        %v883 = vld [vmem:[%s372 + $0xe48] sm:$0xff]
        %v884 = vld [vmem:[%s372 + $0xe50] sm:$0xff]
        %v885 = vld [vmem:[%s372 + $0xe58] sm:$0xff]
        %v886 = vld [vmem:[%s372 + $0xe60] sm:$0xff]
        %v887 = vld [vmem:[%s372 + $0xe68] sm:$0xff]
        %v888 = vld [vmem:[%s372 + $0xe70] sm:$0xff]
        %v889 = vld [vmem:[%s372 + $0xe78] sm:$0xff]
        %v890 = vld [vmem:[%s372 + $0xe80] sm:$0xff]
        %v891 = vld [vmem:[%s372 + $0xe88] sm:$0xff]
        %v892 = vld [vmem:[%s372 + $0xe90] sm:$0xff]
        %v893 = vld [vmem:[%s372 + $0xe98] sm:$0xff]
        %v894 = vld [vmem:[%s372 + $0xea0] sm:$0xff]
        %v895 = vld [vmem:[%s372 + $0xea8] sm:$0xff]
        %v896 = vld [vmem:[%s372 + $0xeb0] sm:$0xff]
        %v897 = vld [vmem:[%s372 + $0xeb8] sm:$0xff]
        %v898 = vld [vmem:[%s372 + $0xec0] sm:$0xff]
        %v899 = vld [vmem:[%s372 + $0xec8] sm:$0xff]
        %v900 = vld [vmem:[%s372 + $0xed0] sm:$0xff]
        %v901 = vld [vmem:[%s372 + $0xed8] sm:$0xff]
        %v902 = vld [vmem:[%s372 + $0xee0] sm:$0xff]
        %v903 = vld [vmem:[%s372 + $0xee8] sm:$0xff]
        %v904 = vld [vmem:[%s372 + $0xef0] sm:$0xff]
        %v905 = vld [vmem:[%s372 + $0xef8] sm:$0xff]
        %v906 = vld [vmem:[%s372 + $0xf00] sm:$0xff]
        %v907 = vld [vmem:[%s372 + $0xf08] sm:$0xff]
        %v908 = vld [vmem:[%s372 + $0xf10] sm:$0xff]
        %v909 = vld [vmem:[%s372 + $0xf18] sm:$0xff]
        %v910 = vld [vmem:[%s372 + $0xf20] sm:$0xff]
        %v911 = vld [vmem:[%s372 + $0xf28] sm:$0xff]
        %v912 = vld [vmem:[%s372 + $0xf30] sm:$0xff]
        %v913 = vld [vmem:[%s372 + $0xf38] sm:$0xff]
        %v914 = vld [vmem:[%s372 + $0xf40] sm:$0xff]
        %v915 = vld [vmem:[%s372 + $0xf48] sm:$0xff]
        %v916 = vld [vmem:[%s372 + $0xf50] sm:$0xff]
        %v917 = vld [vmem:[%s372 + $0xf58] sm:$0xff]
        %v918 = vld [vmem:[%s372 + $0xf60] sm:$0xff]
        %v919 = vld [vmem:[%s372 + $0xf68] sm:$0xff]
        %v920 = vld [vmem:[%s372 + $0xf70] sm:$0xff]
        %v921 = vld [vmem:[%s372 + $0xf78] sm:$0xff]
        %v922 = vld [vmem:[%s372 + $0xf80] sm:$0xff]
        %v923 = vld [vmem:[%s372 + $0xf88] sm:$0xff]
        %v924 = vld [vmem:[%s372 + $0xf90] sm:$0xff]
        %v925 = vld [vmem:[%s372 + $0xf98] sm:$0xff]
        %v926 = vld [vmem:[%s372 + $0xfa0] sm:$0xff]
        %v927 = vld [vmem:[%s372 + $0xfa8] sm:$0xff]
        %v928 = vld [vmem:[%s372 + $0xfb0] sm:$0xff]
        %v929 = vld [vmem:[%s372 + $0xfb8] sm:$0xff]
        %v930 = vld [vmem:[%s372 + $0xfc0] sm:$0xff]
        %v931 = vld [vmem:[%s372 + $0xfc8] sm:$0xff]
        %v932 = vld [vmem:[%s372 + $0xfd0] sm:$0xff]
        %v933 = vld [vmem:[%s372 + $0xfd8] sm:$0xff]
        %v934 = vld [vmem:[%s372 + $0xfe0] sm:$0xff]
        %v935 = vld [vmem:[%s372 + $0xfe8] sm:$0xff]
        %v936 = vld [vmem:[%s372 + $0xff0] sm:$0xff]
        %v937 = vld [vmem:[%s372 + $0xff8] sm:$0xff]
        %v938 = vld [vmem:[%s372 + $0x1000] sm:$0xff]
        %v939 = vld [vmem:[%s372 + $0x1008] sm:$0xff]
        %v940 = vld [vmem:[%s372 + $0x1010] sm:$0xff]
        %v941 = vld [vmem:[%s372 + $0x1018] sm:$0xff]
        %v942 = vld [vmem:[%s372 + $0x1020] sm:$0xff]
        %v943 = vld [vmem:[%s372 + $0x1028] sm:$0xff]
        %v944 = vld [vmem:[%s372 + $0x1030] sm:$0xff]
        %v945 = vld [vmem:[%s372 + $0x1038] sm:$0xff]
        %v946 = vld [vmem:[%s372 + $0x1040] sm:$0xff]
        %v947 = vld [vmem:[%s372 + $0x1048] sm:$0xff]
        %v948 = vld [vmem:[%s372 + $0x1050] sm:$0xff]
        %v949 = vld [vmem:[%s372 + $0x1058] sm:$0xff]
        %v950 = vld [vmem:[%s372 + $0x1060] sm:$0xff]
        %v951 = vld [vmem:[%s372 + $0x1068] sm:$0xff]
        %v952 = vld [vmem:[%s372 + $0x1070] sm:$0xff]
        %v953 = vld [vmem:[%s372 + $0x1078] sm:$0xff]
        %v954 = vld [vmem:[%s372 + $0x1080] sm:$0xff]
        %v955 = vld [vmem:[%s372 + $0x1088] sm:$0xff]
        %v956 = vld [vmem:[%s372 + $0x1090] sm:$0xff]
        %v957 = vld [vmem:[%s372 + $0x1098] sm:$0xff]
        %v958 = vld [vmem:[%s372 + $0x10a0] sm:$0xff]
        %v959 = vld [vmem:[%s372 + $0x10a8] sm:$0xff]
        %v960 = vld [vmem:[%s372 + $0x10b0] sm:$0xff]
        %v961 = vld [vmem:[%s372 + $0x10b8] sm:$0xff]
        %v962 = vld [vmem:[%s372 + $0x10c0] sm:$0xff]
        %v963 = vld [vmem:[%s372 + $0x10c8] sm:$0xff]
        %v964 = vld [vmem:[%s372 + $0x10d0] sm:$0xff]
        %v965 = vld [vmem:[%s372 + $0x10d8] sm:$0xff]
        %v966 = vld [vmem:[%s372 + $0x10e0] sm:$0xff]
        %v967 = vld [vmem:[%s372 + $0x10e8] sm:$0xff]
        %v968 = vld [vmem:[%s372 + $0x10f0] sm:$0xff]
        %v969 = vld [vmem:[%s372 + $0x10f8] sm:$0xff]
        %v970 = vld [vmem:[%s372 + $0x1100] sm:$0xff]
        %v971 = vld [vmem:[%s372 + $0x1108] sm:$0xff]
        %v972 = vld [vmem:[%s372 + $0x1110] sm:$0xff]
        %v973 = vld [vmem:[%s372 + $0x1118] sm:$0xff]
        %v974 = vld [vmem:[%s372 + $0x1120] sm:$0xff]
        %v975 = vld [vmem:[%s372 + $0x1128] sm:$0xff]
        %v976 = vld [vmem:[%s372 + $0x1130] sm:$0xff]
        %v977 = vld [vmem:[%s372 + $0x1138] sm:$0xff]
        %v978 = vld [vmem:[%s372 + $0x1140] sm:$0xff]
        %v979 = vld [vmem:[%s372 + $0x1148] sm:$0xff]
        %v980 = vld [vmem:[%s372 + $0x1150] sm:$0xff]
        %v981 = vld [vmem:[%s372 + $0x1158] sm:$0xff]
        %v982 = vld [vmem:[%s372 + $0x1160] sm:$0xff]
        %v983 = vld [vmem:[%s372 + $0x1168] sm:$0xff]
        %v984 = vld [vmem:[%s372 + $0x1170] sm:$0xff]
        %v985 = vld [vmem:[%s372 + $0x1178] sm:$0xff]
        %v986 = vld [vmem:[%s372 + $0x1180] sm:$0xff]
        %v987 = vld [vmem:[%s372 + $0x1188] sm:$0xff]
        %v988 = vld [vmem:[%s372 + $0x1190] sm:$0xff]
        %v989 = vld [vmem:[%s372 + $0x1198] sm:$0xff]
        %v990 = vld [vmem:[%s372 + $0x11a0] sm:$0xff]
        %v991 = vld [vmem:[%s372 + $0x11a8] sm:$0xff]
        %v992 = vld [vmem:[%s372 + $0x11b0] sm:$0xff]
        %v993 = vld [vmem:[%s372 + $0x11b8] sm:$0xff]
        %v994 = vld [vmem:[%s372 + $0x11c0] sm:$0xff]
        %v995 = vld [vmem:[%s372 + $0x11c8] sm:$0xff]
        %v996 = vld [vmem:[%s372 + $0x11d0] sm:$0xff]
        %v997 = vld [vmem:[%s372 + $0x11d8] sm:$0xff]
        %v998 = vld [vmem:[%s372 + $0x11e0] sm:$0xff]
        %v999 = vld [vmem:[%s372 + $0x11e8] sm:$0xff]
        %v1000 = vld [vmem:[%s372 + $0x11f0] sm:$0xff]
        %v1001 = vld [vmem:[%s372 + $0x11f8] sm:$0xff]
        %v1002 = vld [vmem:[%s372 + $0x1200] sm:$0xff]
        %v1003 = vld [vmem:[%s372 + $0x1208] sm:$0xff]
        %v1004 = vld [vmem:[%s372 + $0x1210] sm:$0xff]
        %v1005 = vld [vmem:[%s372 + $0x1218] sm:$0xff]
        %v1006 = vld [vmem:[%s372 + $0x1220] sm:$0xff]
        %v1007 = vld [vmem:[%s372 + $0x1228] sm:$0xff]
        %v1008 = vld [vmem:[%s372 + $0x1230] sm:$0xff]
        %v1009 = vld [vmem:[%s372 + $0x1238] sm:$0xff]
        %v1010 = vld [vmem:[%s372 + $0x1240] sm:$0xff]
        %v1011 = vld [vmem:[%s372 + $0x1248] sm:$0xff]
        %v1012 = vld [vmem:[%s372 + $0x1250] sm:$0xff]
        %v1013 = vld [vmem:[%s372 + $0x1258] sm:$0xff]
        %v1014 = vld [vmem:[%s372 + $0x1260] sm:$0xff]
        %v1015 = vld [vmem:[%s372 + $0x1268] sm:$0xff]
        %v1016 = vld [vmem:[%s372 + $0x1270] sm:$0xff]
        %v1017 = vld [vmem:[%s372 + $0x1278] sm:$0xff]
        %v1018 = vld [vmem:[%s372 + $0x1280] sm:$0xff]
        %v1019 = vld [vmem:[%s372 + $0x1288] sm:$0xff]
        %v1020 = vld [vmem:[%s372 + $0x1290] sm:$0xff]
        %v1021 = vld [vmem:[%s372 + $0x1298] sm:$0xff]
        %v1022 = vld [vmem:[%s372 + $0x12a0] sm:$0xff]
        %v1023 = vld [vmem:[%s372 + $0x12a8] sm:$0xff]
        %v1024 = vld [vmem:[%s372 + $0x12b0] sm:$0xff]
        %v1025 = vld [vmem:[%s372 + $0x12b8] sm:$0xff]
        %v1026 = vld [vmem:[%s372 + $0x12c0] sm:$0xff]
        %v1027 = vld [vmem:[%s372 + $0x12c8] sm:$0xff]
        %v1028 = vld [vmem:[%s372 + $0x12d0] sm:$0xff]
        %v1029 = vld [vmem:[%s372 + $0x12d8] sm:$0xff]
        %v1030 = vld [vmem:[%s372 + $0x12e0] sm:$0xff]
        %v1031 = vld [vmem:[%s372 + $0x12e8] sm:$0xff]
        %v1032 = vld [vmem:[%s372 + $0x12f0] sm:$0xff]
        %v1033 = vld [vmem:[%s372 + $0x12f8] sm:$0xff]
        %v1034 = vld [vmem:[%s372 + $0x1300] sm:$0xff]
        %v1035 = vld [vmem:[%s372 + $0x1308] sm:$0xff]
        %v1036 = vld [vmem:[%s372 + $0x1310] sm:$0xff]
        %v1037 = vld [vmem:[%s372 + $0x1318] sm:$0xff]
        %v1038 = vld [vmem:[%s372 + $0x1320] sm:$0xff]
        %v1039 = vld [vmem:[%s372 + $0x1328] sm:$0xff]
        %v1040 = vld [vmem:[%s372 + $0x1330] sm:$0xff]
        %v1041 = vld [vmem:[%s372 + $0x1338] sm:$0xff]
        %v1042 = vld [vmem:[%s372 + $0x1340] sm:$0xff]
        %v1043 = vld [vmem:[%s372 + $0x1348] sm:$0xff]
        %v1044 = vld [vmem:[%s372 + $0x1350] sm:$0xff]
        %v1045 = vld [vmem:[%s372 + $0x1358] sm:$0xff]
        %v1046 = vld [vmem:[%s372 + $0x1360] sm:$0xff]
        %v1047 = vld [vmem:[%s372 + $0x1368] sm:$0xff]
        %v1048 = vld [vmem:[%s372 + $0x1370] sm:$0xff]
        %v1049 = vld [vmem:[%s372 + $0x1378] sm:$0xff]
        %v1050 = vld [vmem:[%s372 + $0x1380] sm:$0xff]
        %v1051 = vld [vmem:[%s372 + $0x1388] sm:$0xff]
        %v1052 = vld [vmem:[%s372 + $0x1390] sm:$0xff]
        %v1053 = vld [vmem:[%s372 + $0x1398] sm:$0xff]
        %v1054 = vld [vmem:[%s372 + $0x13a0] sm:$0xff]
        %v1055 = vld [vmem:[%s372 + $0x13a8] sm:$0xff]
        %v1056 = vld [vmem:[%s372 + $0x13b0] sm:$0xff]
        %v1057 = vld [vmem:[%s372 + $0x13b8] sm:$0xff]
        %v1058 = vld [vmem:[%s372 + $0x13c0] sm:$0xff]
        %v1059 = vld [vmem:[%s372 + $0x13c8] sm:$0xff]
        %v1060 = vld [vmem:[%s372 + $0x13d0] sm:$0xff]
        %v1061 = vld [vmem:[%s372 + $0x13d8] sm:$0xff]
        %v1062 = vld [vmem:[%s372 + $0x13e0] sm:$0xff]
        %v1063 = vld [vmem:[%s372 + $0x13e8] sm:$0xff]
        %v1064 = vld [vmem:[%s372 + $0x13f0] sm:$0xff]
        %v1065 = vld [vmem:[%s372 + $0x13f8] sm:$0xff]
        %v1066 = vld [vmem:[%s372 + $0x1400] sm:$0xff]
        %v1067 = vld [vmem:[%s372 + $0x1408] sm:$0xff]
        %v1068 = vld [vmem:[%s372 + $0x1410] sm:$0xff]
        %v1069 = vld [vmem:[%s372 + $0x1418] sm:$0xff]
        %v1070 = vld [vmem:[%s372 + $0x1420] sm:$0xff]
        %v1071 = vld [vmem:[%s372 + $0x1428] sm:$0xff]
        %v1072 = vld [vmem:[%s372 + $0x1430] sm:$0xff]
        %v1073 = vld [vmem:[%s372 + $0x1438] sm:$0xff]
        %v1074 = vld [vmem:[%s372 + $0x1440] sm:$0xff]
        %v1075 = vld [vmem:[%s372 + $0x1448] sm:$0xff]
        %v1076 = vld [vmem:[%s372 + $0x1450] sm:$0xff]
        %v1077 = vld [vmem:[%s372 + $0x1458] sm:$0xff]
        %v1078 = vld [vmem:[%s372 + $0x1460] sm:$0xff]
        %v1079 = vld [vmem:[%s372 + $0x1468] sm:$0xff]
        %v1080 = vld [vmem:[%s372 + $0x1470] sm:$0xff]
        %v1081 = vld [vmem:[%s372 + $0x1478] sm:$0xff]
        %v1082 = vld [vmem:[%s372 + $0x1480] sm:$0xff]
        %v1083 = vld [vmem:[%s372 + $0x1488] sm:$0xff]
        %v1084 = vld [vmem:[%s372 + $0x1490] sm:$0xff]
        %v1085 = vld [vmem:[%s372 + $0x1498] sm:$0xff]
        %v1086 = vld [vmem:[%s372 + $0x14a0] sm:$0xff]
        %v1087 = vld [vmem:[%s372 + $0x14a8] sm:$0xff]
        %v1088 = vld [vmem:[%s372 + $0x14b0] sm:$0xff]
        %v1089 = vld [vmem:[%s372 + $0x14b8] sm:$0xff]
        %v1090 = vld [vmem:[%s372 + $0x14c0] sm:$0xff]
        %v1091 = vld [vmem:[%s372 + $0x14c8] sm:$0xff]
        %v1092 = vld [vmem:[%s372 + $0x14d0] sm:$0xff]
        %v1093 = vld [vmem:[%s372 + $0x14d8] sm:$0xff]
        %v1094 = vld [vmem:[%s372 + $0x14e0] sm:$0xff]
        %v1095 = vld [vmem:[%s372 + $0x14e8] sm:$0xff]
        %v1096 = vld [vmem:[%s372 + $0x14f0] sm:$0xff]
        %v1097 = vld [vmem:[%s372 + $0x14f8] sm:$0xff]
        %v1098 = vld [vmem:[%s372 + $0x1500] sm:$0xff]
        %v1099 = vld [vmem:[%s372 + $0x1508] sm:$0xff]
        %v1100 = vld [vmem:[%s372 + $0x1510] sm:$0xff]
        %v1101 = vld [vmem:[%s372 + $0x1518] sm:$0xff]
        %v1102 = vld [vmem:[%s372 + $0x1520] sm:$0xff]
        %v1103 = vld [vmem:[%s372 + $0x1528] sm:$0xff]
        %v1104 = vld [vmem:[%s372 + $0x1530] sm:$0xff]
        %v1105 = vld [vmem:[%s372 + $0x1538] sm:$0xff]
        %v1106 = vld [vmem:[%s372 + $0x1540] sm:$0xff]
        %v1107 = vld [vmem:[%s372 + $0x1548] sm:$0xff]
        %v1108 = vld [vmem:[%s372 + $0x1550] sm:$0xff]
        %v1109 = vld [vmem:[%s372 + $0x1558] sm:$0xff]
        %v1110 = vld [vmem:[%s372 + $0x1560] sm:$0xff]
        %v1111 = vld [vmem:[%s372 + $0x1568] sm:$0xff]
        %v1112 = vld [vmem:[%s372 + $0x1570] sm:$0xff]
        %v1113 = vld [vmem:[%s372 + $0x1578] sm:$0xff]
        %v1114 = vld [vmem:[%s372 + $0x1580] sm:$0xff]
        %v1115 = vld [vmem:[%s372 + $0x1588] sm:$0xff]
        %v1116 = vld [vmem:[%s372 + $0x1590] sm:$0xff]
        %v1117 = vld [vmem:[%s372 + $0x1598] sm:$0xff]
        %v1118 = vld [vmem:[%s372 + $0x15a0] sm:$0xff]
        %v1119 = vld [vmem:[%s372 + $0x15a8] sm:$0xff]
        %v1120 = vld [vmem:[%s372 + $0x15b0] sm:$0xff]
        %v1121 = vld [vmem:[%s372 + $0x15b8] sm:$0xff]
        %v1122 = vld [vmem:[%s372 + $0x15c0] sm:$0xff]
        %v1123 = vld [vmem:[%s372 + $0x15c8] sm:$0xff]
        %v1124 = vld [vmem:[%s372 + $0x15d0] sm:$0xff]
        %v1125 = vld [vmem:[%s372 + $0x15d8] sm:$0xff]
        %v1126 = vld [vmem:[%s372 + $0x15e0] sm:$0xff]
        %v1127 = vld [vmem:[%s372 + $0x15e8] sm:$0xff]
        %v1128 = vld [vmem:[%s372 + $0x15f0] sm:$0xff]
        %v1129 = vld [vmem:[%s372 + $0x15f8] sm:$0xff]
        %v1130 = vld [vmem:[%s372 + $0x1600] sm:$0xff]
        %v1131 = vld [vmem:[%s372 + $0x1608] sm:$0xff]
        %v1132 = vld [vmem:[%s372 + $0x1610] sm:$0xff]
        %v1133 = vld [vmem:[%s372 + $0x1618] sm:$0xff]
        %v1134 = vld [vmem:[%s372 + $0x1620] sm:$0xff]
        %v1135 = vld [vmem:[%s372 + $0x1628] sm:$0xff]
        %v1136 = vld [vmem:[%s372 + $0x1630] sm:$0xff]
        %v1137 = vld [vmem:[%s372 + $0x1638] sm:$0xff]
        %v1138 = vld [vmem:[%s372 + $0x1640] sm:$0xff]
        %v1139 = vld [vmem:[%s372 + $0x1648] sm:$0xff]
        %v1140 = vld [vmem:[%s372 + $0x1650] sm:$0xff]
        %v1141 = vld [vmem:[%s372 + $0x1658] sm:$0xff]
        %v1142 = vld [vmem:[%s372 + $0x1660] sm:$0xff]
        %v1143 = vld [vmem:[%s372 + $0x1668] sm:$0xff]
        %v1144 = vld [vmem:[%s372 + $0x1670] sm:$0xff]
        %v1145 = vld [vmem:[%s372 + $0x1678] sm:$0xff]
        %v1146 = vld [vmem:[%s372 + $0x1680] sm:$0xff]
        %v1147 = vld [vmem:[%s372 + $0x1688] sm:$0xff]
        %v1148 = vld [vmem:[%s372 + $0x1690] sm:$0xff]
        %v1149 = vld [vmem:[%s372 + $0x1698] sm:$0xff]
        %v1150 = vld [vmem:[%s372 + $0x16a0] sm:$0xff]
        %v1151 = vld [vmem:[%s372 + $0x16a8] sm:$0xff]
        %v1152 = vld [vmem:[%s372 + $0x16b0] sm:$0xff]
        %v1153 = vld [vmem:[%s372 + $0x16b8] sm:$0xff]
        %v1154 = vld [vmem:[%s372 + $0x16c0] sm:$0xff]
        %v1155 = vld [vmem:[%s372 + $0x16c8] sm:$0xff]
        %v1156 = vld [vmem:[%s372 + $0x16d0] sm:$0xff]
        %v1157 = vld [vmem:[%s372 + $0x16d8] sm:$0xff]
        %v1158 = vld [vmem:[%s372 + $0x16e0] sm:$0xff]
        %v1159 = vld [vmem:[%s372 + $0x16e8] sm:$0xff]
        %v1160 = vld [vmem:[%s372 + $0x16f0] sm:$0xff]
        %v1161 = vld [vmem:[%s372 + $0x16f8] sm:$0xff]
        %v1162 = vld [vmem:[%s372 + $0x1700] sm:$0xff]
        %v1163 = vld [vmem:[%s372 + $0x1708] sm:$0xff]
        %v1164 = vld [vmem:[%s372 + $0x1710] sm:$0xff]
        %v1165 = vld [vmem:[%s372 + $0x1718] sm:$0xff]
        %v1166 = vld [vmem:[%s372 + $0x1720] sm:$0xff]
        %v1167 = vld [vmem:[%s372 + $0x1728] sm:$0xff]
        %v1168 = vld [vmem:[%s372 + $0x1730] sm:$0xff]
        %v1169 = vld [vmem:[%s372 + $0x1738] sm:$0xff]
        %v1170 = vld [vmem:[%s372 + $0x1740] sm:$0xff]
        %v1171 = vld [vmem:[%s372 + $0x1748] sm:$0xff]
        %v1172 = vld [vmem:[%s372 + $0x1750] sm:$0xff]
        %v1173 = vld [vmem:[%s372 + $0x1758] sm:$0xff]
        %v1174 = vld [vmem:[%s372 + $0x1760] sm:$0xff]
        %v1175 = vld [vmem:[%s372 + $0x1768] sm:$0xff]
        %v1176 = vld [vmem:[%s372 + $0x1770] sm:$0xff]
        %v1177 = vld [vmem:[%s372 + $0x1778] sm:$0xff]
        %v1178 = vld [vmem:[%s372 + $0x1780] sm:$0xff]
        %v1179 = vld [vmem:[%s372 + $0x1788] sm:$0xff]
        %v1180 = vld [vmem:[%s372 + $0x1790] sm:$0xff]
        %v1181 = vld [vmem:[%s372 + $0x1798] sm:$0xff]
        %v1182 = vld [vmem:[%s372 + $0x17a0] sm:$0xff]
        %v1183 = vld [vmem:[%s372 + $0x17a8] sm:$0xff]
        %v1184 = vld [vmem:[%s372 + $0x17b0] sm:$0xff]
        %v1185 = vld [vmem:[%s372 + $0x17b8] sm:$0xff]
        %v1186 = vld [vmem:[%s372 + $0x17c0] sm:$0xff]
        %v1187 = vld [vmem:[%s372 + $0x17c8] sm:$0xff]
        %v1188 = vld [vmem:[%s372 + $0x17d0] sm:$0xff]
        %v1189 = vld [vmem:[%s372 + $0x17d8] sm:$0xff]
        %v1190 = vld [vmem:[%s372 + $0x17e0] sm:$0xff]
        %v1191 = vld [vmem:[%s372 + $0x17e8] sm:$0xff]
        %v1192 = vld [vmem:[%s372 + $0x17f0] sm:$0xff]
        %v1193 = vld [vmem:[%s372 + $0x17f8] sm:$0xff]
        %v1194 = vld [vmem:[%s372 + $0x1800] sm:$0xff]
        %v1195 = vld [vmem:[%s372 + $0x1808] sm:$0xff]
        %v1196 = vld [vmem:[%s372 + $0x1810] sm:$0xff]
        %v1197 = vld [vmem:[%s372 + $0x1818] sm:$0xff]
        %v1198 = vld [vmem:[%s372 + $0x1820] sm:$0xff]
        %v1199 = vld [vmem:[%s372 + $0x1828] sm:$0xff]
        %v1200 = vld [vmem:[%s372 + $0x1830] sm:$0xff]
        %v1201 = vld [vmem:[%s372 + $0x1838] sm:$0xff]
        %v1202 = vld [vmem:[%s372 + $0x1840] sm:$0xff]
        %v1203 = vld [vmem:[%s372 + $0x1848] sm:$0xff]
        %v1204 = vld [vmem:[%s372 + $0x1850] sm:$0xff]
        %v1205 = vld [vmem:[%s372 + $0x1858] sm:$0xff]
        %v1206 = vld [vmem:[%s372 + $0x1860] sm:$0xff]
        %v1207 = vld [vmem:[%s372 + $0x1868] sm:$0xff]
        %v1208 = vld [vmem:[%s372 + $0x1870] sm:$0xff]
        %v1209 = vld [vmem:[%s372 + $0x1878] sm:$0xff]
        %v1210 = vld [vmem:[%s372 + $0x1880] sm:$0xff]
        %v1211 = vld [vmem:[%s372 + $0x1888] sm:$0xff]
        %v1212 = vld [vmem:[%s372 + $0x1890] sm:$0xff]
        %v1213 = vld [vmem:[%s372 + $0x1898] sm:$0xff]
        %v1214 = vld [vmem:[%s372 + $0x18a0] sm:$0xff]
        %v1215 = vld [vmem:[%s372 + $0x18a8] sm:$0xff]
        %v1216 = vld [vmem:[%s372 + $0x18b0] sm:$0xff]
        %v1217 = vld [vmem:[%s372 + $0x18b8] sm:$0xff]
        %v1218 = vld [vmem:[%s372 + $0x18c0] sm:$0xff]
        %v1219 = vld [vmem:[%s372 + $0x18c8] sm:$0xff]
        %v1220 = vld [vmem:[%s372 + $0x18d0] sm:$0xff]
        %v1221 = vld [vmem:[%s372 + $0x18d8] sm:$0xff]
        %v1222 = vld [vmem:[%s372 + $0x18e0] sm:$0xff]
        %v1223 = vld [vmem:[%s372 + $0x18e8] sm:$0xff]
        %v1224 = vld [vmem:[%s372 + $0x18f0] sm:$0xff]
        %v1225 = vld [vmem:[%s372 + $0x18f8] sm:$0xff]
        %v1226 = vld [vmem:[%s372 + $0x1900] sm:$0xff]
        %v1227 = vld [vmem:[%s372 + $0x1908] sm:$0xff]
        %v1228 = vld [vmem:[%s372 + $0x1910] sm:$0xff]
        %v1229 = vld [vmem:[%s372 + $0x1918] sm:$0xff]
        %v1230 = vld [vmem:[%s372 + $0x1920] sm:$0xff]
        %v1231 = vld [vmem:[%s372 + $0x1928] sm:$0xff]
        %v1232 = vld [vmem:[%s372 + $0x1930] sm:$0xff]
        %v1233 = vld [vmem:[%s372 + $0x1938] sm:$0xff]
        %v1234 = vld [vmem:[%s372 + $0x1940] sm:$0xff]
        %v1235 = vld [vmem:[%s372 + $0x1948] sm:$0xff]
        %v1236 = vld [vmem:[%s372 + $0x1950] sm:$0xff]
        %v1237 = vld [vmem:[%s372 + $0x1958] sm:$0xff]
        %v1238 = vld [vmem:[%s372 + $0x1960] sm:$0xff]
        %v1239 = vld [vmem:[%s372 + $0x1968] sm:$0xff]
        %v1240 = vld [vmem:[%s372 + $0x1970] sm:$0xff]
        %v1241 = vld [vmem:[%s372 + $0x1978] sm:$0xff]
        %v1242 = vld [vmem:[%s372 + $0x1980] sm:$0xff]
        %v1243 = vld [vmem:[%s372 + $0x1988] sm:$0xff]
        %v1244 = vld [vmem:[%s372 + $0x1990] sm:$0xff]
        %v1245 = vld [vmem:[%s372 + $0x1998] sm:$0xff]
        %v1246 = vld [vmem:[%s372 + $0x19a0] sm:$0xff]
        %v1247 = vld [vmem:[%s372 + $0x19a8] sm:$0xff]
        %v1248 = vld [vmem:[%s372 + $0x19b0] sm:$0xff]
        %v1249 = vld [vmem:[%s372 + $0x19b8] sm:$0xff]
        %v1250 = vld [vmem:[%s372 + $0x19c0] sm:$0xff]
        %v1251 = vld [vmem:[%s372 + $0x19c8] sm:$0xff]
        %v1252 = vld [vmem:[%s372 + $0x19d0] sm:$0xff]
        %v1253 = vld [vmem:[%s372 + $0x19d8] sm:$0xff]
        %v1254 = vld [vmem:[%s372 + $0x19e0] sm:$0xff]
        %v1255 = vld [vmem:[%s372 + $0x19e8] sm:$0xff]
        %v1256 = vld [vmem:[%s372 + $0x19f0] sm:$0xff]
        %v1257 = vld [vmem:[%s372 + $0x19f8] sm:$0xff]
        %v1258 = vld [vmem:[%s372 + $0x1a00] sm:$0xff]
        %v1259 = vld [vmem:[%s372 + $0x1a08] sm:$0xff]
        %v1260 = vld [vmem:[%s372 + $0x1a10] sm:$0xff]
        %v1261 = vld [vmem:[%s372 + $0x1a18] sm:$0xff]
        %v1262 = vld [vmem:[%s372 + $0x1a20] sm:$0xff]
        %v1263 = vld [vmem:[%s372 + $0x1a28] sm:$0xff]
        %v1264 = vld [vmem:[%s372 + $0x1a30] sm:$0xff]
        %v1265 = vld [vmem:[%s372 + $0x1a38] sm:$0xff]
        %v1266 = vld [vmem:[%s372 + $0x1a40] sm:$0xff]
        %v1267 = vld [vmem:[%s372 + $0x1a48] sm:$0xff]
        %v1268 = vld [vmem:[%s372 + $0x1a50] sm:$0xff]
        %v1269 = vld [vmem:[%s372 + $0x1a58] sm:$0xff]
        %v1270 = vld [vmem:[%s372 + $0x1a60] sm:$0xff]
        %v1271 = vld [vmem:[%s372 + $0x1a68] sm:$0xff]
        %v1272 = vld [vmem:[%s372 + $0x1a70] sm:$0xff]
        %v1273 = vld [vmem:[%s372 + $0x1a78] sm:$0xff]
        %v1274 = vld [vmem:[%s372 + $0x1a80] sm:$0xff]
        %v1275 = vld [vmem:[%s372 + $0x1a88] sm:$0xff]
        %v1276 = vld [vmem:[%s372 + $0x1a90] sm:$0xff]
        %v1277 = vld [vmem:[%s372 + $0x1a98] sm:$0xff]
        %v1278 = vld [vmem:[%s372 + $0x1aa0] sm:$0xff]
        %v1279 = vld [vmem:[%s372 + $0x1aa8] sm:$0xff]
        %v1280 = vld [vmem:[%s372 + $0x1ab0] sm:$0xff]
        %v1281 = vld [vmem:[%s372 + $0x1ab8] sm:$0xff]
        %v1282 = vld [vmem:[%s372 + $0x1ac0] sm:$0xff]
        %v1283 = vld [vmem:[%s372 + $0x1ac8] sm:$0xff]
        %v1284 = vld [vmem:[%s372 + $0x1ad0] sm:$0xff]
        %v1285 = vld [vmem:[%s372 + $0x1ad8] sm:$0xff]
        %v1286 = vld [vmem:[%s372 + $0x1ae0] sm:$0xff]
        %v1287 = vld [vmem:[%s372 + $0x1ae8] sm:$0xff]
        %v1288 = vld [vmem:[%s372 + $0x1af0] sm:$0xff]
        %v1289 = vld [vmem:[%s372 + $0x1af8] sm:$0xff]
        %v1290 = vld [vmem:[%s372 + $0x1b00] sm:$0xff]
        %v1291 = vld [vmem:[%s372 + $0x1b08] sm:$0xff]
        %v1292 = vld [vmem:[%s372 + $0x1b10] sm:$0xff]
        %v1293 = vld [vmem:[%s372 + $0x1b18] sm:$0xff]
        %v1294 = vld [vmem:[%s372 + $0x1b20] sm:$0xff]
        %v1295 = vld [vmem:[%s372 + $0x1b28] sm:$0xff]
        %v1296 = vld [vmem:[%s372 + $0x1b30] sm:$0xff]
        %v1297 = vld [vmem:[%s372 + $0x1b38] sm:$0xff]
        %v1298 = vld [vmem:[%s372 + $0x1b40] sm:$0xff]
        %v1299 = vld [vmem:[%s372 + $0x1b48] sm:$0xff]
        %v1300 = vld [vmem:[%s372 + $0x1b50] sm:$0xff]
        %v1301 = vld [vmem:[%s372 + $0x1b58] sm:$0xff]
        %v1302 = vld [vmem:[%s372 + $0x1b60] sm:$0xff]
        %v1303 = vld [vmem:[%s372 + $0x1b68] sm:$0xff]
        %v1304 = vld [vmem:[%s372 + $0x1b70] sm:$0xff]
        %v1305 = vld [vmem:[%s372 + $0x1b78] sm:$0xff]
        %v1306 = vld [vmem:[%s372 + $0x1b80] sm:$0xff]
        %v1307 = vld [vmem:[%s372 + $0x1b88] sm:$0xff]
        %v1308 = vld [vmem:[%s372 + $0x1b90] sm:$0xff]
        %v1309 = vld [vmem:[%s372 + $0x1b98] sm:$0xff]
        %v1310 = vld [vmem:[%s372 + $0x1ba0] sm:$0xff]
        %v1311 = vld [vmem:[%s372 + $0x1ba8] sm:$0xff]
        %v1312 = vld [vmem:[%s372 + $0x1bb0] sm:$0xff]
        %v1313 = vld [vmem:[%s372 + $0x1bb8] sm:$0xff]
        %v1314 = vld [vmem:[%s372 + $0x1bc0] sm:$0xff]
        %v1315 = vld [vmem:[%s372 + $0x1bc8] sm:$0xff]
        %v1316 = vld [vmem:[%s372 + $0x1bd0] sm:$0xff]
        %v1317 = vld [vmem:[%s372 + $0x1bd8] sm:$0xff]
        %v1318 = vld [vmem:[%s372 + $0x1be0] sm:$0xff]
        %v1319 = vld [vmem:[%s372 + $0x1be8] sm:$0xff]
        %v1320 = vld [vmem:[%s372 + $0x1bf0] sm:$0xff]
        %v1321 = vld [vmem:[%s372 + $0x1bf8] sm:$0xff]
        %v1322 = vld [vmem:[%s372 + $0x1c00] sm:$0xff]
        %v1323 = vld [vmem:[%s372 + $0x1c08] sm:$0xff]
        %v1324 = vld [vmem:[%s372 + $0x1c10] sm:$0xff]
        %v1325 = vld [vmem:[%s372 + $0x1c18] sm:$0xff]
        %v1326 = vld [vmem:[%s372 + $0x1c20] sm:$0xff]
        %v1327 = vld [vmem:[%s372 + $0x1c28] sm:$0xff]
        %v1328 = vld [vmem:[%s372 + $0x1c30] sm:$0xff]
        %v1329 = vld [vmem:[%s372 + $0x1c38] sm:$0xff]
        %v1330 = vld [vmem:[%s372 + $0x1c40] sm:$0xff]
        %v1331 = vld [vmem:[%s372 + $0x1c48] sm:$0xff]
        %v1332 = vld [vmem:[%s372 + $0x1c50] sm:$0xff]
        %v1333 = vld [vmem:[%s372 + $0x1c58] sm:$0xff]
        %v1334 = vld [vmem:[%s372 + $0x1c60] sm:$0xff]
        %v1335 = vld [vmem:[%s372 + $0x1c68] sm:$0xff]
        %v1336 = vld [vmem:[%s372 + $0x1c70] sm:$0xff]
        %v1337 = vld [vmem:[%s372 + $0x1c78] sm:$0xff]
        %v1338 = vld [vmem:[%s372 + $0x1c80] sm:$0xff]
        %v1339 = vld [vmem:[%s372 + $0x1c88] sm:$0xff]
        %v1340 = vld [vmem:[%s372 + $0x1c90] sm:$0xff]
        %v1341 = vld [vmem:[%s372 + $0x1c98] sm:$0xff]
        %v1342 = vld [vmem:[%s372 + $0x1ca0] sm:$0xff]
        %v1343 = vld [vmem:[%s372 + $0x1ca8] sm:$0xff]
        %v1344 = vld [vmem:[%s372 + $0x1cb0] sm:$0xff]
        %v1345 = vld [vmem:[%s372 + $0x1cb8] sm:$0xff]
        %v1346 = vld [vmem:[%s372 + $0x1cc0] sm:$0xff]
        %v1347 = vld [vmem:[%s372 + $0x1cc8] sm:$0xff]
        %v1348 = vld [vmem:[%s372 + $0x1cd0] sm:$0xff]
        %v1349 = vld [vmem:[%s372 + $0x1cd8] sm:$0xff]
        %v1350 = vld [vmem:[%s372 + $0x1ce0] sm:$0xff]
        %v1351 = vld [vmem:[%s372 + $0x1ce8] sm:$0xff]
        %v1352 = vld [vmem:[%s372 + $0x1cf0] sm:$0xff]
        %v1353 = vld [vmem:[%s372 + $0x1cf8] sm:$0xff]
        %v1354 = vld [vmem:[%s372 + $0x1d00] sm:$0xff]
        %v1355 = vld [vmem:[%s372 + $0x1d08] sm:$0xff]
        %v1356 = vld [vmem:[%s372 + $0x1d10] sm:$0xff]
        %v1357 = vld [vmem:[%s372 + $0x1d18] sm:$0xff]
        %v1358 = vld [vmem:[%s372 + $0x1d20] sm:$0xff]
        %v1359 = vld [vmem:[%s372 + $0x1d28] sm:$0xff]
        %v1360 = vld [vmem:[%s372 + $0x1d30] sm:$0xff]
        %v1361 = vld [vmem:[%s372 + $0x1d38] sm:$0xff]
        %v1362 = vld [vmem:[%s372 + $0x1d40] sm:$0xff]
        %v1363 = vld [vmem:[%s372 + $0x1d48] sm:$0xff]
        %v1364 = vld [vmem:[%s372 + $0x1d50] sm:$0xff]
        %v1365 = vld [vmem:[%s372 + $0x1d58] sm:$0xff]
        %v1366 = vld [vmem:[%s372 + $0x1d60] sm:$0xff]
        %v1367 = vld [vmem:[%s372 + $0x1d68] sm:$0xff]
        %v1368 = vld [vmem:[%s372 + $0x1d70] sm:$0xff]
        %v1369 = vld [vmem:[%s372 + $0x1d78] sm:$0xff]
        %v1370 = vld [vmem:[%s372 + $0x1d80] sm:$0xff]
        %v1371 = vld [vmem:[%s372 + $0x1d88] sm:$0xff]
        %v1372 = vld [vmem:[%s372 + $0x1d90] sm:$0xff]
        %v1373 = vld [vmem:[%s372 + $0x1d98] sm:$0xff]
        %v1374 = vld [vmem:[%s372 + $0x1da0] sm:$0xff]
        %v1375 = vld [vmem:[%s372 + $0x1da8] sm:$0xff]
        %v1376 = vld [vmem:[%s372 + $0x1db0] sm:$0xff]
        %v1377 = vld [vmem:[%s372 + $0x1db8] sm:$0xff]
        %v1378 = vld [vmem:[%s372 + $0x1dc0] sm:$0xff]
        %v1379 = vld [vmem:[%s372 + $0x1dc8] sm:$0xff]
        %v1380 = vld [vmem:[%s372 + $0x1dd0] sm:$0xff]
        %v1381 = vld [vmem:[%s372 + $0x1dd8] sm:$0xff]
        %v1382 = vld [vmem:[%s372 + $0x1de0] sm:$0xff]
        %v1383 = vld [vmem:[%s372 + $0x1de8] sm:$0xff]
        %v1384 = vld [vmem:[%s372 + $0x1df0] sm:$0xff]
        %v1385 = vld [vmem:[%s372 + $0x1df8] sm:$0xff]
        %v1386 = vld [vmem:[%s372 + $0x1e00] sm:$0xff]
        %v1387 = vld [vmem:[%s372 + $0x1e08] sm:$0xff]
        %v1388 = vld [vmem:[%s372 + $0x1e10] sm:$0xff]
        %v1389 = vld [vmem:[%s372 + $0x1e18] sm:$0xff]
        %v1390 = vld [vmem:[%s372 + $0x1e20] sm:$0xff]
        %v1391 = vld [vmem:[%s372 + $0x1e28] sm:$0xff]
        %v1392 = vld [vmem:[%s372 + $0x1e30] sm:$0xff]
        %v1393 = vld [vmem:[%s372 + $0x1e38] sm:$0xff]
        %v1394 = vld [vmem:[%s372 + $0x1e40] sm:$0xff]
        %v1395 = vld [vmem:[%s372 + $0x1e48] sm:$0xff]
        %v1396 = vld [vmem:[%s372 + $0x1e50] sm:$0xff]
        %v1397 = vld [vmem:[%s372 + $0x1e58] sm:$0xff]
        %v1398 = vld [vmem:[%s372 + $0x1e60] sm:$0xff]
        %v1399 = vld [vmem:[%s372 + $0x1e68] sm:$0xff]
        %v1400 = vld [vmem:[%s372 + $0x1e70] sm:$0xff]
        %v1401 = vld [vmem:[%s372 + $0x1e78] sm:$0xff]
        %v1402 = vld [vmem:[%s372 + $0x1e80] sm:$0xff]
        %v1403 = vld [vmem:[%s372 + $0x1e88] sm:$0xff]
        %v1404 = vld [vmem:[%s372 + $0x1e90] sm:$0xff]
        %v1405 = vld [vmem:[%s372 + $0x1e98] sm:$0xff]
        %v1406 = vld [vmem:[%s372 + $0x1ea0] sm:$0xff]
        %v1407 = vld [vmem:[%s372 + $0x1ea8] sm:$0xff]
        %v1408 = vld [vmem:[%s372 + $0x1eb0] sm:$0xff]
        %v1409 = vld [vmem:[%s372 + $0x1eb8] sm:$0xff]
        %v1410 = vld [vmem:[%s372 + $0x1ec0] sm:$0xff]
        %v1411 = vld [vmem:[%s372 + $0x1ec8] sm:$0xff]
        %v1412 = vld [vmem:[%s372 + $0x1ed0] sm:$0xff]
        %v1413 = vld [vmem:[%s372 + $0x1ed8] sm:$0xff]
        %v1414 = vld [vmem:[%s372 + $0x1ee0] sm:$0xff]
        %v1415 = vld [vmem:[%s372 + $0x1ee8] sm:$0xff]
        %v1416 = vld [vmem:[%s372 + $0x1ef0] sm:$0xff]
        %v1417 = vld [vmem:[%s372 + $0x1ef8] sm:$0xff]
        %v1418 = vld [vmem:[%s372 + $0x1f00] sm:$0xff]
        %v1419 = vld [vmem:[%s372 + $0x1f08] sm:$0xff]
        %v1420 = vld [vmem:[%s372 + $0x1f10] sm:$0xff]
        %v1421 = vld [vmem:[%s372 + $0x1f18] sm:$0xff]
        %v1422 = vld [vmem:[%s372 + $0x1f20] sm:$0xff]
        %v1423 = vld [vmem:[%s372 + $0x1f28] sm:$0xff]
        %v1424 = vld [vmem:[%s372 + $0x1f30] sm:$0xff]
        %v1425 = vld [vmem:[%s372 + $0x1f38] sm:$0xff]
        %v1426 = vld [vmem:[%s372 + $0x1f40] sm:$0xff]
        %v1427 = vld [vmem:[%s372 + $0x1f48] sm:$0xff]
        %v1428 = vld [vmem:[%s372 + $0x1f50] sm:$0xff]
        %v1429 = vld [vmem:[%s372 + $0x1f58] sm:$0xff]
        %v1430 = vld [vmem:[%s372 + $0x1f60] sm:$0xff]
        %v1431 = vld [vmem:[%s372 + $0x1f68] sm:$0xff]
        %v1432 = vld [vmem:[%s372 + $0x1f70] sm:$0xff]
        %v1433 = vld [vmem:[%s372 + $0x1f78] sm:$0xff]
        %v1434 = vld [vmem:[%s372 + $0x1f80] sm:$0xff]
        %v1435 = vld [vmem:[%s372 + $0x1f88] sm:$0xff]
        %v1436 = vld [vmem:[%s372 + $0x1f90] sm:$0xff]
        %v1437 = vld [vmem:[%s372 + $0x1f98] sm:$0xff]
        %v1438 = vld [vmem:[%s372 + $0x1fa0] sm:$0xff]
        %v1439 = vld [vmem:[%s372 + $0x1fa8] sm:$0xff]
        %v1440 = vld [vmem:[%s372 + $0x1fb0] sm:$0xff]
        %v1441 = vld [vmem:[%s372 + $0x1fb8] sm:$0xff]
        %v1442 = vld [vmem:[%s372 + $0x1fc0] sm:$0xff]
        %v1443 = vld [vmem:[%s372 + $0x1fc8] sm:$0xff]
        %v1444 = vld [vmem:[%s372 + $0x1fd0] sm:$0xff]
        %v1445 = vld [vmem:[%s372 + $0x1fd8] sm:$0xff]
        %v1446 = vld [vmem:[%s372 + $0x1fe0] sm:$0xff]
        %v1447 = vld [vmem:[%s372 + $0x1fe8] sm:$0xff]
        %v1448 = vld [vmem:[%s372 + $0x1ff0] sm:$0xff]
        %v1449 = vld [vmem:[%s372 + $0x1ff8] sm:$0xff]
        %v1482 = vunpack.c.l.b16 %v394
        %v1483 = vunpack.c.h.b16 %v394
        %v1484 = vunpack.c.l.b16 %v395
        %v1485 = vunpack.c.h.b16 %v395
        %v1486 = vunpack.c.l.b16 %v396
        %v1487 = vunpack.c.h.b16 %v396
        %v1488 = vunpack.c.l.b16 %v397
        %v1489 = vunpack.c.h.b16 %v397
        %v1490 = vunpack.c.l.b16 %v398
        %v1491 = vunpack.c.h.b16 %v398
        %v1492 = vunpack.c.l.b16 %v399
        %v1493 = vunpack.c.h.b16 %v399
        %v1494 = vunpack.c.l.b16 %v400
        %v1495 = vunpack.c.h.b16 %v400
        %v1496 = vunpack.c.l.b16 %v401
        %v1497 = vunpack.c.h.b16 %v401
        %v1498 = vunpack.c.l.b16 %v402
        %v1499 = vunpack.c.h.b16 %v402
        %v1500 = vunpack.c.l.b16 %v403
        %v1501 = vunpack.c.h.b16 %v403
        %v1502 = vunpack.c.l.b16 %v404
        %v1503 = vunpack.c.h.b16 %v404
        %v1504 = vunpack.c.l.b16 %v405
        %v1505 = vunpack.c.h.b16 %v405
        %v1506 = vunpack.c.l.b16 %v406
        %v1507 = vunpack.c.h.b16 %v406
        %v1508 = vunpack.c.l.b16 %v407
        %v1509 = vunpack.c.h.b16 %v407
        %v1510 = vunpack.c.l.b16 %v408
        %v1511 = vunpack.c.h.b16 %v408
        %v1512 = vunpack.c.l.b16 %v409
        %v1513 = vunpack.c.h.b16 %v409
        %v1514 = vunpack.c.l.b16 %v410
        %v1515 = vunpack.c.h.b16 %v410
        %v1516 = vunpack.c.l.b16 %v411
        %v1517 = vunpack.c.h.b16 %v411
        %v1518 = vunpack.c.l.b16 %v412
        %v1519 = vunpack.c.h.b16 %v412
        %v1520 = vunpack.c.l.b16 %v413
        %v1521 = vunpack.c.h.b16 %v413
        %v1522 = vunpack.c.l.b16 %v414
        %v1523 = vunpack.c.h.b16 %v414
        %v1524 = vunpack.c.l.b16 %v415
        %v1525 = vunpack.c.h.b16 %v415
        %v1526 = vunpack.c.l.b16 %v416
        %v1527 = vunpack.c.h.b16 %v416
        %v1528 = vunpack.c.l.b16 %v417
        %v1529 = vunpack.c.h.b16 %v417
        %v1530 = vunpack.c.l.b16 %v418
        %v1531 = vunpack.c.h.b16 %v418
        %v1532 = vunpack.c.l.b16 %v419
        %v1533 = vunpack.c.h.b16 %v419
        %v1534 = vunpack.c.l.b16 %v420
        %v1535 = vunpack.c.h.b16 %v420
        %v1536 = vunpack.c.l.b16 %v421
        %v1537 = vunpack.c.h.b16 %v421
        %v1538 = vunpack.c.l.b16 %v422
        %v1539 = vunpack.c.h.b16 %v422
        %v1540 = vunpack.c.l.b16 %v423
        %v1541 = vunpack.c.h.b16 %v423
        %v1542 = vunpack.c.l.b16 %v424
        %v1543 = vunpack.c.h.b16 %v424
        %v1544 = vunpack.c.l.b16 %v425
        %v1545 = vunpack.c.h.b16 %v425
        %v1546 = vpack.c.b16 %v1514, %v1482
        %v1547 = vpack.c.b16 %v1515, %v1483
        %v1548 = vpack.c.b16 %v1516, %v1484
        %v1549 = vpack.c.b16 %v1517, %v1485
        %v1550 = vpack.c.b16 %v1518, %v1486
        %v1551 = vpack.c.b16 %v1519, %v1487
        %v1552 = vpack.c.b16 %v1520, %v1488
        %v1553 = vpack.c.b16 %v1521, %v1489
        %v1554 = vpack.c.b16 %v1522, %v1490
        %v1555 = vpack.c.b16 %v1523, %v1491
        %v1556 = vpack.c.b16 %v1524, %v1492
        %v1557 = vpack.c.b16 %v1525, %v1493
        %v1558 = vpack.c.b16 %v1526, %v1494
        %v1559 = vpack.c.b16 %v1527, %v1495
        %v1560 = vpack.c.b16 %v1528, %v1496
        %v1561 = vpack.c.b16 %v1529, %v1497
        %v1562 = vpack.c.b16 %v1530, %v1498
        %v1563 = vpack.c.b16 %v1531, %v1499
        %v1564 = vpack.c.b16 %v1532, %v1500
        %v1565 = vpack.c.b16 %v1533, %v1501
        %v1566 = vpack.c.b16 %v1534, %v1502
        %v1567 = vpack.c.b16 %v1535, %v1503
        %v1568 = vpack.c.b16 %v1536, %v1504
        %v1569 = vpack.c.b16 %v1537, %v1505
        %v1570 = vpack.c.b16 %v1538, %v1506
        %v1571 = vpack.c.b16 %v1539, %v1507
        %v1572 = vpack.c.b16 %v1540, %v1508
        %v1573 = vpack.c.b16 %v1541, %v1509
        %v1574 = vpack.c.b16 %v1542, %v1510
        %v1575 = vpack.c.b16 %v1543, %v1511
        %v1576 = vpack.c.b16 %v1544, %v1512
        %v1577 = vpack.c.b16 %v1545, %v1513
        %v2634 = vunpack.c.l.b16 %v426
        %v2635 = vunpack.c.h.b16 %v426
        %v2636 = vunpack.c.l.b16 %v427
        %v2637 = vunpack.c.h.b16 %v427
        %v2638 = vunpack.c.l.b16 %v428
        %v2639 = vunpack.c.h.b16 %v428
        %v2640 = vunpack.c.l.b16 %v429
        %v2641 = vunpack.c.h.b16 %v429
        %v2642 = vunpack.c.l.b16 %v430
        %v2643 = vunpack.c.h.b16 %v430
        %v2644 = vunpack.c.l.b16 %v431
        %v2645 = vunpack.c.h.b16 %v431
        %v2646 = vunpack.c.l.b16 %v432
        %v2647 = vunpack.c.h.b16 %v432
        %v2648 = vunpack.c.l.b16 %v433
        %v2649 = vunpack.c.h.b16 %v433
        %v2650 = vunpack.c.l.b16 %v434
        %v2651 = vunpack.c.h.b16 %v434
        %v2652 = vunpack.c.l.b16 %v435
        %v2653 = vunpack.c.h.b16 %v435
        %v2654 = vunpack.c.l.b16 %v436
        %v2655 = vunpack.c.h.b16 %v436
        %v2656 = vunpack.c.l.b16 %v437
        %v2657 = vunpack.c.h.b16 %v437
        %v2658 = vunpack.c.l.b16 %v438
        %v2659 = vunpack.c.h.b16 %v438
        %v2660 = vunpack.c.l.b16 %v439
        %v2661 = vunpack.c.h.b16 %v439
        %v2662 = vunpack.c.l.b16 %v440
        %v2663 = vunpack.c.h.b16 %v440
        %v2664 = vunpack.c.l.b16 %v441
        %v2665 = vunpack.c.h.b16 %v441
        %v2666 = vunpack.c.l.b16 %v442
        %v2667 = vunpack.c.h.b16 %v442
        %v2668 = vunpack.c.l.b16 %v443
        %v2669 = vunpack.c.h.b16 %v443
        %v2670 = vunpack.c.l.b16 %v444
        %v2671 = vunpack.c.h.b16 %v444
        %v2672 = vunpack.c.l.b16 %v445
        %v2673 = vunpack.c.h.b16 %v445
        %v2674 = vunpack.c.l.b16 %v446
        %v2675 = vunpack.c.h.b16 %v446
        %v2676 = vunpack.c.l.b16 %v447
        %v2677 = vunpack.c.h.b16 %v447
        %v2678 = vunpack.c.l.b16 %v448
        %v2679 = vunpack.c.h.b16 %v448
        %v2680 = vunpack.c.l.b16 %v449
        %v2681 = vunpack.c.h.b16 %v449
        %v2682 = vunpack.c.l.b16 %v450
        %v2683 = vunpack.c.h.b16 %v450
        %v2684 = vunpack.c.l.b16 %v451
        %v2685 = vunpack.c.h.b16 %v451
        %v2686 = vunpack.c.l.b16 %v452
        %v2687 = vunpack.c.h.b16 %v452
        %v2688 = vunpack.c.l.b16 %v453
        %v2689 = vunpack.c.h.b16 %v453
        %v2690 = vunpack.c.l.b16 %v454
        %v2691 = vunpack.c.h.b16 %v454
        %v2692 = vunpack.c.l.b16 %v455
        %v2693 = vunpack.c.h.b16 %v455
        %v2694 = vunpack.c.l.b16 %v456
        %v2695 = vunpack.c.h.b16 %v456
        %v2696 = vunpack.c.l.b16 %v457
        %v2697 = vunpack.c.h.b16 %v457
        %v2698 = vunpack.c.l.b16 %v458
        %v2699 = vunpack.c.h.b16 %v458
        %v2700 = vunpack.c.l.b16 %v459
        %v2701 = vunpack.c.h.b16 %v459
        %v2702 = vunpack.c.l.b16 %v460
        %v2703 = vunpack.c.h.b16 %v460
        %v2704 = vunpack.c.l.b16 %v461
        %v2705 = vunpack.c.h.b16 %v461
        %v2706 = vunpack.c.l.b16 %v462
        %v2707 = vunpack.c.h.b16 %v462
        %v2708 = vunpack.c.l.b16 %v463
        %v2709 = vunpack.c.h.b16 %v463
        %v2710 = vunpack.c.l.b16 %v464
        %v2711 = vunpack.c.h.b16 %v464
        %v2712 = vunpack.c.l.b16 %v465
        %v2713 = vunpack.c.h.b16 %v465
        %v2714 = vunpack.c.l.b16 %v466
        %v2715 = vunpack.c.h.b16 %v466
        %v2716 = vunpack.c.l.b16 %v467
        %v2717 = vunpack.c.h.b16 %v467
        %v2718 = vunpack.c.l.b16 %v468
        %v2719 = vunpack.c.h.b16 %v468
        %v2720 = vunpack.c.l.b16 %v469
        %v2721 = vunpack.c.h.b16 %v469
        %v2722 = vunpack.c.l.b16 %v470
        %v2723 = vunpack.c.h.b16 %v470
        %v2724 = vunpack.c.l.b16 %v471
        %v2725 = vunpack.c.h.b16 %v471
        %v2726 = vunpack.c.l.b16 %v472
        %v2727 = vunpack.c.h.b16 %v472
        %v2728 = vunpack.c.l.b16 %v473
        %v2729 = vunpack.c.h.b16 %v473
        %v2730 = vunpack.c.l.b16 %v474
        %v2731 = vunpack.c.h.b16 %v474
        %v2732 = vunpack.c.l.b16 %v475
        %v2733 = vunpack.c.h.b16 %v475
        %v2734 = vunpack.c.l.b16 %v476
        %v2735 = vunpack.c.h.b16 %v476
        %v2736 = vunpack.c.l.b16 %v477
        %v2737 = vunpack.c.h.b16 %v477
        %v2738 = vunpack.c.l.b16 %v478
        %v2739 = vunpack.c.h.b16 %v478
        %v2740 = vunpack.c.l.b16 %v479
        %v2741 = vunpack.c.h.b16 %v479
        %v2742 = vunpack.c.l.b16 %v480
        %v2743 = vunpack.c.h.b16 %v480
        %v2744 = vunpack.c.l.b16 %v481
        %v2745 = vunpack.c.h.b16 %v481
        %v2746 = vunpack.c.l.b16 %v482
        %v2747 = vunpack.c.h.b16 %v482
        %v2748 = vunpack.c.l.b16 %v483
        %v2749 = vunpack.c.h.b16 %v483
        %v2750 = vunpack.c.l.b16 %v484
        %v2751 = vunpack.c.h.b16 %v484
        %v2752 = vunpack.c.l.b16 %v485
        %v2753 = vunpack.c.h.b16 %v485
        %v2754 = vunpack.c.l.b16 %v486
        %v2755 = vunpack.c.h.b16 %v486
        %v2756 = vunpack.c.l.b16 %v487
        %v2757 = vunpack.c.h.b16 %v487
        %v2758 = vunpack.c.l.b16 %v488
        %v2759 = vunpack.c.h.b16 %v488
        %v2760 = vunpack.c.l.b16 %v489
        %v2761 = vunpack.c.h.b16 %v489
        %v2762 = vunpack.c.l.b16 %v490
        %v2763 = vunpack.c.h.b16 %v490
        %v2764 = vunpack.c.l.b16 %v491
        %v2765 = vunpack.c.h.b16 %v491
        %v2766 = vunpack.c.l.b16 %v492
        %v2767 = vunpack.c.h.b16 %v492
        %v2768 = vunpack.c.l.b16 %v493
        %v2769 = vunpack.c.h.b16 %v493
        %v2770 = vunpack.c.l.b16 %v494
        %v2771 = vunpack.c.h.b16 %v494
        %v2772 = vunpack.c.l.b16 %v495
        %v2773 = vunpack.c.h.b16 %v495
        %v2774 = vunpack.c.l.b16 %v496
        %v2775 = vunpack.c.h.b16 %v496
        %v2776 = vunpack.c.l.b16 %v497
        %v2777 = vunpack.c.h.b16 %v497
        %v2778 = vunpack.c.l.b16 %v498
        %v2779 = vunpack.c.h.b16 %v498
        %v2780 = vunpack.c.l.b16 %v499
        %v2781 = vunpack.c.h.b16 %v499
        %v2782 = vunpack.c.l.b16 %v500
        %v2783 = vunpack.c.h.b16 %v500
        %v2784 = vunpack.c.l.b16 %v501
        %v2785 = vunpack.c.h.b16 %v501
        %v2786 = vunpack.c.l.b16 %v502
        %v2787 = vunpack.c.h.b16 %v502
        %v2788 = vunpack.c.l.b16 %v503
        %v2789 = vunpack.c.h.b16 %v503
        %v2790 = vunpack.c.l.b16 %v504
        %v2791 = vunpack.c.h.b16 %v504
        %v2792 = vunpack.c.l.b16 %v505
        %v2793 = vunpack.c.h.b16 %v505
        %v2794 = vunpack.c.l.b16 %v506
        %v2795 = vunpack.c.h.b16 %v506
        %v2796 = vunpack.c.l.b16 %v507
        %v2797 = vunpack.c.h.b16 %v507
        %v2798 = vunpack.c.l.b16 %v508
        %v2799 = vunpack.c.h.b16 %v508
        %v2800 = vunpack.c.l.b16 %v509
        %v2801 = vunpack.c.h.b16 %v509
        %v2802 = vunpack.c.l.b16 %v510
        %v2803 = vunpack.c.h.b16 %v510
        %v2804 = vunpack.c.l.b16 %v511
        %v2805 = vunpack.c.h.b16 %v511
        %v2806 = vunpack.c.l.b16 %v512
        %v2807 = vunpack.c.h.b16 %v512
        %v2808 = vunpack.c.l.b16 %v513
        %v2809 = vunpack.c.h.b16 %v513
        %v2810 = vunpack.c.l.b16 %v514
        %v2811 = vunpack.c.h.b16 %v514
        %v2812 = vunpack.c.l.b16 %v515
        %v2813 = vunpack.c.h.b16 %v515
        %v2814 = vunpack.c.l.b16 %v516
        %v2815 = vunpack.c.h.b16 %v516
        %v2816 = vunpack.c.l.b16 %v517
        %v2817 = vunpack.c.h.b16 %v517
        %v2818 = vunpack.c.l.b16 %v518
        %v2819 = vunpack.c.h.b16 %v518
        %v2820 = vunpack.c.l.b16 %v519
        %v2821 = vunpack.c.h.b16 %v519
        %v2822 = vunpack.c.l.b16 %v520
        %v2823 = vunpack.c.h.b16 %v520
        %v2824 = vunpack.c.l.b16 %v521
        %v2825 = vunpack.c.h.b16 %v521
        %v2826 = vunpack.c.l.b16 %v522
        %v2827 = vunpack.c.h.b16 %v522
        %v2828 = vunpack.c.l.b16 %v523
        %v2829 = vunpack.c.h.b16 %v523
        %v2830 = vunpack.c.l.b16 %v524
        %v2831 = vunpack.c.h.b16 %v524
        %v2832 = vunpack.c.l.b16 %v525
        %v2833 = vunpack.c.h.b16 %v525
        %v2834 = vunpack.c.l.b16 %v526
        %v2835 = vunpack.c.h.b16 %v526
        %v2836 = vunpack.c.l.b16 %v527
        %v2837 = vunpack.c.h.b16 %v527
        %v2838 = vunpack.c.l.b16 %v528
        %v2839 = vunpack.c.h.b16 %v528
        %v2840 = vunpack.c.l.b16 %v529
        %v2841 = vunpack.c.h.b16 %v529
        %v2842 = vunpack.c.l.b16 %v530
        %v2843 = vunpack.c.h.b16 %v530
        %v2844 = vunpack.c.l.b16 %v531
        %v2845 = vunpack.c.h.b16 %v531
        %v2846 = vunpack.c.l.b16 %v532
        %v2847 = vunpack.c.h.b16 %v532
        %v2848 = vunpack.c.l.b16 %v533
        %v2849 = vunpack.c.h.b16 %v533
        %v2850 = vunpack.c.l.b16 %v534
        %v2851 = vunpack.c.h.b16 %v534
        %v2852 = vunpack.c.l.b16 %v535
        %v2853 = vunpack.c.h.b16 %v535
        %v2854 = vunpack.c.l.b16 %v536
        %v2855 = vunpack.c.h.b16 %v536
        %v2856 = vunpack.c.l.b16 %v537
        %v2857 = vunpack.c.h.b16 %v537
        %v2858 = vunpack.c.l.b16 %v538
        %v2859 = vunpack.c.h.b16 %v538
        %v2860 = vunpack.c.l.b16 %v539
        %v2861 = vunpack.c.h.b16 %v539
        %v2862 = vunpack.c.l.b16 %v540
        %v2863 = vunpack.c.h.b16 %v540
        %v2864 = vunpack.c.l.b16 %v541
        %v2865 = vunpack.c.h.b16 %v541
        %v2866 = vunpack.c.l.b16 %v542
        %v2867 = vunpack.c.h.b16 %v542
        %v2868 = vunpack.c.l.b16 %v543
        %v2869 = vunpack.c.h.b16 %v543
        %v2870 = vunpack.c.l.b16 %v544
        %v2871 = vunpack.c.h.b16 %v544
        %v2872 = vunpack.c.l.b16 %v545
        %v2873 = vunpack.c.h.b16 %v545
        %v2874 = vunpack.c.l.b16 %v546
        %v2875 = vunpack.c.h.b16 %v546
        %v2876 = vunpack.c.l.b16 %v547
        %v2877 = vunpack.c.h.b16 %v547
        %v2878 = vunpack.c.l.b16 %v548
        %v2879 = vunpack.c.h.b16 %v548
        %v2880 = vunpack.c.l.b16 %v549
        %v2881 = vunpack.c.h.b16 %v549
        %v2882 = vunpack.c.l.b16 %v550
        %v2883 = vunpack.c.h.b16 %v550
        %v2884 = vunpack.c.l.b16 %v551
        %v2885 = vunpack.c.h.b16 %v551
        %v2886 = vunpack.c.l.b16 %v552
        %v2887 = vunpack.c.h.b16 %v552
        %v2888 = vunpack.c.l.b16 %v553
        %v2889 = vunpack.c.h.b16 %v553
        %v2890 = vunpack.c.l.b16 %v554
        %v2891 = vunpack.c.h.b16 %v554
        %v2892 = vunpack.c.l.b16 %v555
        %v2893 = vunpack.c.h.b16 %v555
        %v2894 = vunpack.c.l.b16 %v556
        %v2895 = vunpack.c.h.b16 %v556
        %v2896 = vunpack.c.l.b16 %v557
        %v2897 = vunpack.c.h.b16 %v557
        %v2898 = vunpack.c.l.b16 %v558
        %v2899 = vunpack.c.h.b16 %v558
        %v2900 = vunpack.c.l.b16 %v559
        %v2901 = vunpack.c.h.b16 %v559
        %v2902 = vunpack.c.l.b16 %v560
        %v2903 = vunpack.c.h.b16 %v560
        %v2904 = vunpack.c.l.b16 %v561
        %v2905 = vunpack.c.h.b16 %v561
        %v2906 = vunpack.c.l.b16 %v562
        %v2907 = vunpack.c.h.b16 %v562
        %v2908 = vunpack.c.l.b16 %v563
        %v2909 = vunpack.c.h.b16 %v563
        %v2910 = vunpack.c.l.b16 %v564
        %v2911 = vunpack.c.h.b16 %v564
        %v2912 = vunpack.c.l.b16 %v565
        %v2913 = vunpack.c.h.b16 %v565
        %v2914 = vunpack.c.l.b16 %v566
        %v2915 = vunpack.c.h.b16 %v566
        %v2916 = vunpack.c.l.b16 %v567
        %v2917 = vunpack.c.h.b16 %v567
        %v2918 = vunpack.c.l.b16 %v568
        %v2919 = vunpack.c.h.b16 %v568
        %v2920 = vunpack.c.l.b16 %v569
        %v2921 = vunpack.c.h.b16 %v569
        %v2922 = vunpack.c.l.b16 %v570
        %v2923 = vunpack.c.h.b16 %v570
        %v2924 = vunpack.c.l.b16 %v571
        %v2925 = vunpack.c.h.b16 %v571
        %v2926 = vunpack.c.l.b16 %v572
        %v2927 = vunpack.c.h.b16 %v572
        %v2928 = vunpack.c.l.b16 %v573
        %v2929 = vunpack.c.h.b16 %v573
        %v2930 = vunpack.c.l.b16 %v574
        %v2931 = vunpack.c.h.b16 %v574
        %v2932 = vunpack.c.l.b16 %v575
        %v2933 = vunpack.c.h.b16 %v575
        %v2934 = vunpack.c.l.b16 %v576
        %v2935 = vunpack.c.h.b16 %v576
        %v2936 = vunpack.c.l.b16 %v577
        %v2937 = vunpack.c.h.b16 %v577
        %v2938 = vunpack.c.l.b16 %v578
        %v2939 = vunpack.c.h.b16 %v578
        %v2940 = vunpack.c.l.b16 %v579
        %v2941 = vunpack.c.h.b16 %v579
        %v2942 = vunpack.c.l.b16 %v580
        %v2943 = vunpack.c.h.b16 %v580
        %v2944 = vunpack.c.l.b16 %v581
        %v2945 = vunpack.c.h.b16 %v581
        %v2946 = vunpack.c.l.b16 %v582
        %v2947 = vunpack.c.h.b16 %v582
        %v2948 = vunpack.c.l.b16 %v583
        %v2949 = vunpack.c.h.b16 %v583
        %v2950 = vunpack.c.l.b16 %v584
        %v2951 = vunpack.c.h.b16 %v584
        %v2952 = vunpack.c.l.b16 %v585
        %v2953 = vunpack.c.h.b16 %v585
        %v2954 = vunpack.c.l.b16 %v586
        %v2955 = vunpack.c.h.b16 %v586
        %v2956 = vunpack.c.l.b16 %v587
        %v2957 = vunpack.c.h.b16 %v587
        %v2958 = vunpack.c.l.b16 %v588
        %v2959 = vunpack.c.h.b16 %v588
        %v2960 = vunpack.c.l.b16 %v589
        %v2961 = vunpack.c.h.b16 %v589
        %v2962 = vunpack.c.l.b16 %v590
        %v2963 = vunpack.c.h.b16 %v590
        %v2964 = vunpack.c.l.b16 %v591
        %v2965 = vunpack.c.h.b16 %v591
        %v2966 = vunpack.c.l.b16 %v592
        %v2967 = vunpack.c.h.b16 %v592
        %v2968 = vunpack.c.l.b16 %v593
        %v2969 = vunpack.c.h.b16 %v593
        %v2970 = vunpack.c.l.b16 %v594
        %v2971 = vunpack.c.h.b16 %v594
        %v2972 = vunpack.c.l.b16 %v595
        %v2973 = vunpack.c.h.b16 %v595
        %v2974 = vunpack.c.l.b16 %v596
        %v2975 = vunpack.c.h.b16 %v596
        %v2976 = vunpack.c.l.b16 %v597
        %v2977 = vunpack.c.h.b16 %v597
        %v2978 = vunpack.c.l.b16 %v598
        %v2979 = vunpack.c.h.b16 %v598
        %v2980 = vunpack.c.l.b16 %v599
        %v2981 = vunpack.c.h.b16 %v599
        %v2982 = vunpack.c.l.b16 %v600
        %v2983 = vunpack.c.h.b16 %v600
        %v2984 = vunpack.c.l.b16 %v601
        %v2985 = vunpack.c.h.b16 %v601
        %v2986 = vunpack.c.l.b16 %v602
        %v2987 = vunpack.c.h.b16 %v602
        %v2988 = vunpack.c.l.b16 %v603
        %v2989 = vunpack.c.h.b16 %v603
        %v2990 = vunpack.c.l.b16 %v604
        %v2991 = vunpack.c.h.b16 %v604
        %v2992 = vunpack.c.l.b16 %v605
        %v2993 = vunpack.c.h.b16 %v605
        %v2994 = vunpack.c.l.b16 %v606
        %v2995 = vunpack.c.h.b16 %v606
        %v2996 = vunpack.c.l.b16 %v607
        %v2997 = vunpack.c.h.b16 %v607
        %v2998 = vunpack.c.l.b16 %v608
        %v2999 = vunpack.c.h.b16 %v608
        %v3000 = vunpack.c.l.b16 %v609
        %v3001 = vunpack.c.h.b16 %v609
        %v3002 = vunpack.c.l.b16 %v610
        %v3003 = vunpack.c.h.b16 %v610
        %v3004 = vunpack.c.l.b16 %v611
        %v3005 = vunpack.c.h.b16 %v611
        %v3006 = vunpack.c.l.b16 %v612
        %v3007 = vunpack.c.h.b16 %v612
        %v3008 = vunpack.c.l.b16 %v613
        %v3009 = vunpack.c.h.b16 %v613
        %v3010 = vunpack.c.l.b16 %v614
        %v3011 = vunpack.c.h.b16 %v614
        %v3012 = vunpack.c.l.b16 %v615
        %v3013 = vunpack.c.h.b16 %v615
        %v3014 = vunpack.c.l.b16 %v616
        %v3015 = vunpack.c.h.b16 %v616
        %v3016 = vunpack.c.l.b16 %v617
        %v3017 = vunpack.c.h.b16 %v617
        %v3018 = vunpack.c.l.b16 %v618
        %v3019 = vunpack.c.h.b16 %v618
        %v3020 = vunpack.c.l.b16 %v619
        %v3021 = vunpack.c.h.b16 %v619
        %v3022 = vunpack.c.l.b16 %v620
        %v3023 = vunpack.c.h.b16 %v620
        %v3024 = vunpack.c.l.b16 %v621
        %v3025 = vunpack.c.h.b16 %v621
        %v3026 = vunpack.c.l.b16 %v622
        %v3027 = vunpack.c.h.b16 %v622
        %v3028 = vunpack.c.l.b16 %v623
        %v3029 = vunpack.c.h.b16 %v623
        %v3030 = vunpack.c.l.b16 %v624
        %v3031 = vunpack.c.h.b16 %v624
        %v3032 = vunpack.c.l.b16 %v625
        %v3033 = vunpack.c.h.b16 %v625
        %v3034 = vunpack.c.l.b16 %v626
        %v3035 = vunpack.c.h.b16 %v626
        %v3036 = vunpack.c.l.b16 %v627
        %v3037 = vunpack.c.h.b16 %v627
        %v3038 = vunpack.c.l.b16 %v628
        %v3039 = vunpack.c.h.b16 %v628
        %v3040 = vunpack.c.l.b16 %v629
        %v3041 = vunpack.c.h.b16 %v629
        %v3042 = vunpack.c.l.b16 %v630
        %v3043 = vunpack.c.h.b16 %v630
        %v3044 = vunpack.c.l.b16 %v631
        %v3045 = vunpack.c.h.b16 %v631
        %v3046 = vunpack.c.l.b16 %v632
        %v3047 = vunpack.c.h.b16 %v632
        %v3048 = vunpack.c.l.b16 %v633
        %v3049 = vunpack.c.h.b16 %v633
        %v3050 = vunpack.c.l.b16 %v634
        %v3051 = vunpack.c.h.b16 %v634
        %v3052 = vunpack.c.l.b16 %v635
        %v3053 = vunpack.c.h.b16 %v635
        %v3054 = vunpack.c.l.b16 %v636
        %v3055 = vunpack.c.h.b16 %v636
        %v3056 = vunpack.c.l.b16 %v637
        %v3057 = vunpack.c.h.b16 %v637
        %v3058 = vunpack.c.l.b16 %v638
        %v3059 = vunpack.c.h.b16 %v638
        %v3060 = vunpack.c.l.b16 %v639
        %v3061 = vunpack.c.h.b16 %v639
        %v3062 = vunpack.c.l.b16 %v640
        %v3063 = vunpack.c.h.b16 %v640
        %v3064 = vunpack.c.l.b16 %v641
        %v3065 = vunpack.c.h.b16 %v641
        %v3066 = vunpack.c.l.b16 %v642
        %v3067 = vunpack.c.h.b16 %v642
        %v3068 = vunpack.c.l.b16 %v643
        %v3069 = vunpack.c.h.b16 %v643
        %v3070 = vunpack.c.l.b16 %v644
        %v3071 = vunpack.c.h.b16 %v644
        %v3072 = vunpack.c.l.b16 %v645
        %v3073 = vunpack.c.h.b16 %v645
        %v3074 = vunpack.c.l.b16 %v646
        %v3075 = vunpack.c.h.b16 %v646
        %v3076 = vunpack.c.l.b16 %v647
        %v3077 = vunpack.c.h.b16 %v647
        %v3078 = vunpack.c.l.b16 %v648
        %v3079 = vunpack.c.h.b16 %v648
        %v3080 = vunpack.c.l.b16 %v649
        %v3081 = vunpack.c.h.b16 %v649
        %v3082 = vunpack.c.l.b16 %v650
        %v3083 = vunpack.c.h.b16 %v650
        %v3084 = vunpack.c.l.b16 %v651
        %v3085 = vunpack.c.h.b16 %v651
        %v3086 = vunpack.c.l.b16 %v652
        %v3087 = vunpack.c.h.b16 %v652
        %v3088 = vunpack.c.l.b16 %v653
        %v3089 = vunpack.c.h.b16 %v653
        %v3090 = vunpack.c.l.b16 %v654
        %v3091 = vunpack.c.h.b16 %v654
        %v3092 = vunpack.c.l.b16 %v655
        %v3093 = vunpack.c.h.b16 %v655
        %v3094 = vunpack.c.l.b16 %v656
        %v3095 = vunpack.c.h.b16 %v656
        %v3096 = vunpack.c.l.b16 %v657
        %v3097 = vunpack.c.h.b16 %v657
        %v3098 = vunpack.c.l.b16 %v658
        %v3099 = vunpack.c.h.b16 %v658
        %v3100 = vunpack.c.l.b16 %v659
        %v3101 = vunpack.c.h.b16 %v659
        %v3102 = vunpack.c.l.b16 %v660
        %v3103 = vunpack.c.h.b16 %v660
        %v3104 = vunpack.c.l.b16 %v661
        %v3105 = vunpack.c.h.b16 %v661
        %v3106 = vunpack.c.l.b16 %v662
        %v3107 = vunpack.c.h.b16 %v662
        %v3108 = vunpack.c.l.b16 %v663
        %v3109 = vunpack.c.h.b16 %v663
        %v3110 = vunpack.c.l.b16 %v664
        %v3111 = vunpack.c.h.b16 %v664
        %v3112 = vunpack.c.l.b16 %v665
        %v3113 = vunpack.c.h.b16 %v665
        %v3114 = vunpack.c.l.b16 %v666
        %v3115 = vunpack.c.h.b16 %v666
        %v3116 = vunpack.c.l.b16 %v667
        %v3117 = vunpack.c.h.b16 %v667
        %v3118 = vunpack.c.l.b16 %v668
        %v3119 = vunpack.c.h.b16 %v668
        %v3120 = vunpack.c.l.b16 %v669
        %v3121 = vunpack.c.h.b16 %v669
        %v3122 = vunpack.c.l.b16 %v670
        %v3123 = vunpack.c.h.b16 %v670
        %v3124 = vunpack.c.l.b16 %v671
        %v3125 = vunpack.c.h.b16 %v671
        %v3126 = vunpack.c.l.b16 %v672
        %v3127 = vunpack.c.h.b16 %v672
        %v3128 = vunpack.c.l.b16 %v673
        %v3129 = vunpack.c.h.b16 %v673
        %v3130 = vunpack.c.l.b16 %v674
        %v3131 = vunpack.c.h.b16 %v674
        %v3132 = vunpack.c.l.b16 %v675
        %v3133 = vunpack.c.h.b16 %v675
        %v3134 = vunpack.c.l.b16 %v676
        %v3135 = vunpack.c.h.b16 %v676
        %v3136 = vunpack.c.l.b16 %v677
        %v3137 = vunpack.c.h.b16 %v677
        %v3138 = vunpack.c.l.b16 %v678
        %v3139 = vunpack.c.h.b16 %v678
        %v3140 = vunpack.c.l.b16 %v679
        %v3141 = vunpack.c.h.b16 %v679
        %v3142 = vunpack.c.l.b16 %v680
        %v3143 = vunpack.c.h.b16 %v680
        %v3144 = vunpack.c.l.b16 %v681
        %v3145 = vunpack.c.h.b16 %v681
        %v3146 = vunpack.c.l.b16 %v682
        %v3147 = vunpack.c.h.b16 %v682
        %v3148 = vunpack.c.l.b16 %v683
        %v3149 = vunpack.c.h.b16 %v683
        %v3150 = vunpack.c.l.b16 %v684
        %v3151 = vunpack.c.h.b16 %v684
        %v3152 = vunpack.c.l.b16 %v685
        %v3153 = vunpack.c.h.b16 %v685
        %v3154 = vunpack.c.l.b16 %v686
        %v3155 = vunpack.c.h.b16 %v686
        %v3156 = vunpack.c.l.b16 %v687
        %v3157 = vunpack.c.h.b16 %v687
        %v3158 = vunpack.c.l.b16 %v688
        %v3159 = vunpack.c.h.b16 %v688
        %v3160 = vunpack.c.l.b16 %v689
        %v3161 = vunpack.c.h.b16 %v689
        %v3162 = vunpack.c.l.b16 %v690
        %v3163 = vunpack.c.h.b16 %v690
        %v3164 = vunpack.c.l.b16 %v691
        %v3165 = vunpack.c.h.b16 %v691
        %v3166 = vunpack.c.l.b16 %v692
        %v3167 = vunpack.c.h.b16 %v692
        %v3168 = vunpack.c.l.b16 %v693
        %v3169 = vunpack.c.h.b16 %v693
        %v3170 = vunpack.c.l.b16 %v694
        %v3171 = vunpack.c.h.b16 %v694
        %v3172 = vunpack.c.l.b16 %v695
        %v3173 = vunpack.c.h.b16 %v695
        %v3174 = vunpack.c.l.b16 %v696
        %v3175 = vunpack.c.h.b16 %v696
        %v3176 = vunpack.c.l.b16 %v697
        %v3177 = vunpack.c.h.b16 %v697
        %v3178 = vunpack.c.l.b16 %v698
        %v3179 = vunpack.c.h.b16 %v698
        %v3180 = vunpack.c.l.b16 %v699
        %v3181 = vunpack.c.h.b16 %v699
        %v3182 = vunpack.c.l.b16 %v700
        %v3183 = vunpack.c.h.b16 %v700
        %v3184 = vunpack.c.l.b16 %v701
        %v3185 = vunpack.c.h.b16 %v701
        %v3186 = vunpack.c.l.b16 %v702
        %v3187 = vunpack.c.h.b16 %v702
        %v3188 = vunpack.c.l.b16 %v703
        %v3189 = vunpack.c.h.b16 %v703
        %v3190 = vunpack.c.l.b16 %v704
        %v3191 = vunpack.c.h.b16 %v704
        %v3192 = vunpack.c.l.b16 %v705
        %v3193 = vunpack.c.h.b16 %v705
        %v3194 = vunpack.c.l.b16 %v706
        %v3195 = vunpack.c.h.b16 %v706
        %v3196 = vunpack.c.l.b16 %v707
        %v3197 = vunpack.c.h.b16 %v707
        %v3198 = vunpack.c.l.b16 %v708
        %v3199 = vunpack.c.h.b16 %v708
        %v3200 = vunpack.c.l.b16 %v709
        %v3201 = vunpack.c.h.b16 %v709
        %v3202 = vunpack.c.l.b16 %v710
        %v3203 = vunpack.c.h.b16 %v710
        %v3204 = vunpack.c.l.b16 %v711
        %v3205 = vunpack.c.h.b16 %v711
        %v3206 = vunpack.c.l.b16 %v712
        %v3207 = vunpack.c.h.b16 %v712
        %v3208 = vunpack.c.l.b16 %v713
        %v3209 = vunpack.c.h.b16 %v713
        %v3210 = vunpack.c.l.b16 %v714
        %v3211 = vunpack.c.h.b16 %v714
        %v3212 = vunpack.c.l.b16 %v715
        %v3213 = vunpack.c.h.b16 %v715
        %v3214 = vunpack.c.l.b16 %v716
        %v3215 = vunpack.c.h.b16 %v716
        %v3216 = vunpack.c.l.b16 %v717
        %v3217 = vunpack.c.h.b16 %v717
        %v3218 = vunpack.c.l.b16 %v718
        %v3219 = vunpack.c.h.b16 %v718
        %v3220 = vunpack.c.l.b16 %v719
        %v3221 = vunpack.c.h.b16 %v719
        %v3222 = vunpack.c.l.b16 %v720
        %v3223 = vunpack.c.h.b16 %v720
        %v3224 = vunpack.c.l.b16 %v721
        %v3225 = vunpack.c.h.b16 %v721
        %v3226 = vunpack.c.l.b16 %v722
        %v3227 = vunpack.c.h.b16 %v722
        %v3228 = vunpack.c.l.b16 %v723
        %v3229 = vunpack.c.h.b16 %v723
        %v3230 = vunpack.c.l.b16 %v724
        %v3231 = vunpack.c.h.b16 %v724
        %v3232 = vunpack.c.l.b16 %v725
        %v3233 = vunpack.c.h.b16 %v725
        %v3234 = vunpack.c.l.b16 %v726
        %v3235 = vunpack.c.h.b16 %v726
        %v3236 = vunpack.c.l.b16 %v727
        %v3237 = vunpack.c.h.b16 %v727
        %v3238 = vunpack.c.l.b16 %v728
        %v3239 = vunpack.c.h.b16 %v728
        %v3240 = vunpack.c.l.b16 %v729
        %v3241 = vunpack.c.h.b16 %v729
        %v3242 = vunpack.c.l.b16 %v730
        %v3243 = vunpack.c.h.b16 %v730
        %v3244 = vunpack.c.l.b16 %v731
        %v3245 = vunpack.c.h.b16 %v731
        %v3246 = vunpack.c.l.b16 %v732
        %v3247 = vunpack.c.h.b16 %v732
        %v3248 = vunpack.c.l.b16 %v733
        %v3249 = vunpack.c.h.b16 %v733
        %v3250 = vunpack.c.l.b16 %v734
        %v3251 = vunpack.c.h.b16 %v734
        %v3252 = vunpack.c.l.b16 %v735
        %v3253 = vunpack.c.h.b16 %v735
        %v3254 = vunpack.c.l.b16 %v736
        %v3255 = vunpack.c.h.b16 %v736
        %v3256 = vunpack.c.l.b16 %v737
        %v3257 = vunpack.c.h.b16 %v737
        %v3258 = vunpack.c.l.b16 %v738
        %v3259 = vunpack.c.h.b16 %v738
        %v3260 = vunpack.c.l.b16 %v739
        %v3261 = vunpack.c.h.b16 %v739
        %v3262 = vunpack.c.l.b16 %v740
        %v3263 = vunpack.c.h.b16 %v740
        %v3264 = vunpack.c.l.b16 %v741
        %v3265 = vunpack.c.h.b16 %v741
        %v3266 = vunpack.c.l.b16 %v742
        %v3267 = vunpack.c.h.b16 %v742
        %v3268 = vunpack.c.l.b16 %v743
        %v3269 = vunpack.c.h.b16 %v743
        %v3270 = vunpack.c.l.b16 %v744
        %v3271 = vunpack.c.h.b16 %v744
        %v3272 = vunpack.c.l.b16 %v745
        %v3273 = vunpack.c.h.b16 %v745
        %v3274 = vunpack.c.l.b16 %v746
        %v3275 = vunpack.c.h.b16 %v746
        %v3276 = vunpack.c.l.b16 %v747
        %v3277 = vunpack.c.h.b16 %v747
        %v3278 = vunpack.c.l.b16 %v748
        %v3279 = vunpack.c.h.b16 %v748
        %v3280 = vunpack.c.l.b16 %v749
        %v3281 = vunpack.c.h.b16 %v749
        %v3282 = vunpack.c.l.b16 %v750
        %v3283 = vunpack.c.h.b16 %v750
        %v3284 = vunpack.c.l.b16 %v751
        %v3285 = vunpack.c.h.b16 %v751
        %v3286 = vunpack.c.l.b16 %v752
        %v3287 = vunpack.c.h.b16 %v752
        %v3288 = vunpack.c.l.b16 %v753
        %v3289 = vunpack.c.h.b16 %v753
        %v3290 = vunpack.c.l.b16 %v754
        %v3291 = vunpack.c.h.b16 %v754
        %v3292 = vunpack.c.l.b16 %v755
        %v3293 = vunpack.c.h.b16 %v755
        %v3294 = vunpack.c.l.b16 %v756
        %v3295 = vunpack.c.h.b16 %v756
        %v3296 = vunpack.c.l.b16 %v757
        %v3297 = vunpack.c.h.b16 %v757
        %v3298 = vunpack.c.l.b16 %v758
        %v3299 = vunpack.c.h.b16 %v758
        %v3300 = vunpack.c.l.b16 %v759
        %v3301 = vunpack.c.h.b16 %v759
        %v3302 = vunpack.c.l.b16 %v760
        %v3303 = vunpack.c.h.b16 %v760
        %v3304 = vunpack.c.l.b16 %v761
        %v3305 = vunpack.c.h.b16 %v761
        %v3306 = vunpack.c.l.b16 %v762
        %v3307 = vunpack.c.h.b16 %v762
        %v3308 = vunpack.c.l.b16 %v763
        %v3309 = vunpack.c.h.b16 %v763
        %v3310 = vunpack.c.l.b16 %v764
        %v3311 = vunpack.c.h.b16 %v764
        %v3312 = vunpack.c.l.b16 %v765
        %v3313 = vunpack.c.h.b16 %v765
        %v3314 = vunpack.c.l.b16 %v766
        %v3315 = vunpack.c.h.b16 %v766
        %v3316 = vunpack.c.l.b16 %v767
        %v3317 = vunpack.c.h.b16 %v767
        %v3318 = vunpack.c.l.b16 %v768
        %v3319 = vunpack.c.h.b16 %v768
        %v3320 = vunpack.c.l.b16 %v769
        %v3321 = vunpack.c.h.b16 %v769
        %v3322 = vunpack.c.l.b16 %v770
        %v3323 = vunpack.c.h.b16 %v770
        %v3324 = vunpack.c.l.b16 %v771
        %v3325 = vunpack.c.h.b16 %v771
        %v3326 = vunpack.c.l.b16 %v772
        %v3327 = vunpack.c.h.b16 %v772
        %v3328 = vunpack.c.l.b16 %v773
        %v3329 = vunpack.c.h.b16 %v773
        %v3330 = vunpack.c.l.b16 %v774
        %v3331 = vunpack.c.h.b16 %v774
        %v3332 = vunpack.c.l.b16 %v775
        %v3333 = vunpack.c.h.b16 %v775
        %v3334 = vunpack.c.l.b16 %v776
        %v3335 = vunpack.c.h.b16 %v776
        %v3336 = vunpack.c.l.b16 %v777
        %v3337 = vunpack.c.h.b16 %v777
        %v3338 = vunpack.c.l.b16 %v778
        %v3339 = vunpack.c.h.b16 %v778
        %v3340 = vunpack.c.l.b16 %v779
        %v3341 = vunpack.c.h.b16 %v779
        %v3342 = vunpack.c.l.b16 %v780
        %v3343 = vunpack.c.h.b16 %v780
        %v3344 = vunpack.c.l.b16 %v781
        %v3345 = vunpack.c.h.b16 %v781
        %v3346 = vunpack.c.l.b16 %v782
        %v3347 = vunpack.c.h.b16 %v782
        %v3348 = vunpack.c.l.b16 %v783
        %v3349 = vunpack.c.h.b16 %v783
        %v3350 = vunpack.c.l.b16 %v784
        %v3351 = vunpack.c.h.b16 %v784
        %v3352 = vunpack.c.l.b16 %v785
        %v3353 = vunpack.c.h.b16 %v785
        %v3354 = vunpack.c.l.b16 %v786
        %v3355 = vunpack.c.h.b16 %v786
        %v3356 = vunpack.c.l.b16 %v787
        %v3357 = vunpack.c.h.b16 %v787
        %v3358 = vunpack.c.l.b16 %v788
        %v3359 = vunpack.c.h.b16 %v788
        %v3360 = vunpack.c.l.b16 %v789
        %v3361 = vunpack.c.h.b16 %v789
        %v3362 = vunpack.c.l.b16 %v790
        %v3363 = vunpack.c.h.b16 %v790
        %v3364 = vunpack.c.l.b16 %v791
        %v3365 = vunpack.c.h.b16 %v791
        %v3366 = vunpack.c.l.b16 %v792
        %v3367 = vunpack.c.h.b16 %v792
        %v3368 = vunpack.c.l.b16 %v793
        %v3369 = vunpack.c.h.b16 %v793
        %v3370 = vunpack.c.l.b16 %v794
        %v3371 = vunpack.c.h.b16 %v794
        %v3372 = vunpack.c.l.b16 %v795
        %v3373 = vunpack.c.h.b16 %v795
        %v3374 = vunpack.c.l.b16 %v796
        %v3375 = vunpack.c.h.b16 %v796
        %v3376 = vunpack.c.l.b16 %v797
        %v3377 = vunpack.c.h.b16 %v797
        %v3378 = vunpack.c.l.b16 %v798
        %v3379 = vunpack.c.h.b16 %v798
        %v3380 = vunpack.c.l.b16 %v799
        %v3381 = vunpack.c.h.b16 %v799
        %v3382 = vunpack.c.l.b16 %v800
        %v3383 = vunpack.c.h.b16 %v800
        %v3384 = vunpack.c.l.b16 %v801
        %v3385 = vunpack.c.h.b16 %v801
        %v3386 = vunpack.c.l.b16 %v802
        %v3387 = vunpack.c.h.b16 %v802
        %v3388 = vunpack.c.l.b16 %v803
        %v3389 = vunpack.c.h.b16 %v803
        %v3390 = vunpack.c.l.b16 %v804
        %v3391 = vunpack.c.h.b16 %v804
        %v3392 = vunpack.c.l.b16 %v805
        %v3393 = vunpack.c.h.b16 %v805
        %v3394 = vunpack.c.l.b16 %v806
        %v3395 = vunpack.c.h.b16 %v806
        %v3396 = vunpack.c.l.b16 %v807
        %v3397 = vunpack.c.h.b16 %v807
        %v3398 = vunpack.c.l.b16 %v808
        %v3399 = vunpack.c.h.b16 %v808
        %v3400 = vunpack.c.l.b16 %v809
        %v3401 = vunpack.c.h.b16 %v809
        %v3402 = vunpack.c.l.b16 %v810
        %v3403 = vunpack.c.h.b16 %v810
        %v3404 = vunpack.c.l.b16 %v811
        %v3405 = vunpack.c.h.b16 %v811
        %v3406 = vunpack.c.l.b16 %v812
        %v3407 = vunpack.c.h.b16 %v812
        %v3408 = vunpack.c.l.b16 %v813
        %v3409 = vunpack.c.h.b16 %v813
        %v3410 = vunpack.c.l.b16 %v814
        %v3411 = vunpack.c.h.b16 %v814
        %v3412 = vunpack.c.l.b16 %v815
        %v3413 = vunpack.c.h.b16 %v815
        %v3414 = vunpack.c.l.b16 %v816
        %v3415 = vunpack.c.h.b16 %v816
        %v3416 = vunpack.c.l.b16 %v817
        %v3417 = vunpack.c.h.b16 %v817
        %v3418 = vunpack.c.l.b16 %v818
        %v3419 = vunpack.c.h.b16 %v818
        %v3420 = vunpack.c.l.b16 %v819
        %v3421 = vunpack.c.h.b16 %v819
        %v3422 = vunpack.c.l.b16 %v820
        %v3423 = vunpack.c.h.b16 %v820
        %v3424 = vunpack.c.l.b16 %v821
        %v3425 = vunpack.c.h.b16 %v821
        %v3426 = vunpack.c.l.b16 %v822
        %v3427 = vunpack.c.h.b16 %v822
        %v3428 = vunpack.c.l.b16 %v823
        %v3429 = vunpack.c.h.b16 %v823
        %v3430 = vunpack.c.l.b16 %v824
        %v3431 = vunpack.c.h.b16 %v824
        %v3432 = vunpack.c.l.b16 %v825
        %v3433 = vunpack.c.h.b16 %v825
        %v3434 = vunpack.c.l.b16 %v826
        %v3435 = vunpack.c.h.b16 %v826
        %v3436 = vunpack.c.l.b16 %v827
        %v3437 = vunpack.c.h.b16 %v827
        %v3438 = vunpack.c.l.b16 %v828
        %v3439 = vunpack.c.h.b16 %v828
        %v3440 = vunpack.c.l.b16 %v829
        %v3441 = vunpack.c.h.b16 %v829
        %v3442 = vunpack.c.l.b16 %v830
        %v3443 = vunpack.c.h.b16 %v830
        %v3444 = vunpack.c.l.b16 %v831
        %v3445 = vunpack.c.h.b16 %v831
        %v3446 = vunpack.c.l.b16 %v832
        %v3447 = vunpack.c.h.b16 %v832
        %v3448 = vunpack.c.l.b16 %v833
        %v3449 = vunpack.c.h.b16 %v833
        %v3450 = vunpack.c.l.b16 %v834
        %v3451 = vunpack.c.h.b16 %v834
        %v3452 = vunpack.c.l.b16 %v835
        %v3453 = vunpack.c.h.b16 %v835
        %v3454 = vunpack.c.l.b16 %v836
        %v3455 = vunpack.c.h.b16 %v836
        %v3456 = vunpack.c.l.b16 %v837
        %v3457 = vunpack.c.h.b16 %v837
        %v3458 = vunpack.c.l.b16 %v838
        %v3459 = vunpack.c.h.b16 %v838
        %v3460 = vunpack.c.l.b16 %v839
        %v3461 = vunpack.c.h.b16 %v839
        %v3462 = vunpack.c.l.b16 %v840
        %v3463 = vunpack.c.h.b16 %v840
        %v3464 = vunpack.c.l.b16 %v841
        %v3465 = vunpack.c.h.b16 %v841
        %v3466 = vunpack.c.l.b16 %v842
        %v3467 = vunpack.c.h.b16 %v842
        %v3468 = vunpack.c.l.b16 %v843
        %v3469 = vunpack.c.h.b16 %v843
        %v3470 = vunpack.c.l.b16 %v844
        %v3471 = vunpack.c.h.b16 %v844
        %v3472 = vunpack.c.l.b16 %v845
        %v3473 = vunpack.c.h.b16 %v845
        %v3474 = vunpack.c.l.b16 %v846
        %v3475 = vunpack.c.h.b16 %v846
        %v3476 = vunpack.c.l.b16 %v847
        %v3477 = vunpack.c.h.b16 %v847
        %v3478 = vunpack.c.l.b16 %v848
        %v3479 = vunpack.c.h.b16 %v848
        %v3480 = vunpack.c.l.b16 %v849
        %v3481 = vunpack.c.h.b16 %v849
        %v3482 = vunpack.c.l.b16 %v850
        %v3483 = vunpack.c.h.b16 %v850
        %v3484 = vunpack.c.l.b16 %v851
        %v3485 = vunpack.c.h.b16 %v851
        %v3486 = vunpack.c.l.b16 %v852
        %v3487 = vunpack.c.h.b16 %v852
        %v3488 = vunpack.c.l.b16 %v853
        %v3489 = vunpack.c.h.b16 %v853
        %v3490 = vunpack.c.l.b16 %v854
        %v3491 = vunpack.c.h.b16 %v854
        %v3492 = vunpack.c.l.b16 %v855
        %v3493 = vunpack.c.h.b16 %v855
        %v3494 = vunpack.c.l.b16 %v856
        %v3495 = vunpack.c.h.b16 %v856
        %v3496 = vunpack.c.l.b16 %v857
        %v3497 = vunpack.c.h.b16 %v857
        %v3498 = vunpack.c.l.b16 %v858
        %v3499 = vunpack.c.h.b16 %v858
        %v3500 = vunpack.c.l.b16 %v859
        %v3501 = vunpack.c.h.b16 %v859
        %v3502 = vunpack.c.l.b16 %v860
        %v3503 = vunpack.c.h.b16 %v860
        %v3504 = vunpack.c.l.b16 %v861
        %v3505 = vunpack.c.h.b16 %v861
        %v3506 = vunpack.c.l.b16 %v862
        %v3507 = vunpack.c.h.b16 %v862
        %v3508 = vunpack.c.l.b16 %v863
        %v3509 = vunpack.c.h.b16 %v863
        %v3510 = vunpack.c.l.b16 %v864
        %v3511 = vunpack.c.h.b16 %v864
        %v3512 = vunpack.c.l.b16 %v865
        %v3513 = vunpack.c.h.b16 %v865
        %v3514 = vunpack.c.l.b16 %v866
        %v3515 = vunpack.c.h.b16 %v866
        %v3516 = vunpack.c.l.b16 %v867
        %v3517 = vunpack.c.h.b16 %v867
        %v3518 = vunpack.c.l.b16 %v868
        %v3519 = vunpack.c.h.b16 %v868
        %v3520 = vunpack.c.l.b16 %v869
        %v3521 = vunpack.c.h.b16 %v869
        %v3522 = vunpack.c.l.b16 %v870
        %v3523 = vunpack.c.h.b16 %v870
        %v3524 = vunpack.c.l.b16 %v871
        %v3525 = vunpack.c.h.b16 %v871
        %v3526 = vunpack.c.l.b16 %v872
        %v3527 = vunpack.c.h.b16 %v872
        %v3528 = vunpack.c.l.b16 %v873
        %v3529 = vunpack.c.h.b16 %v873
        %v3530 = vunpack.c.l.b16 %v874
        %v3531 = vunpack.c.h.b16 %v874
        %v3532 = vunpack.c.l.b16 %v875
        %v3533 = vunpack.c.h.b16 %v875
        %v3534 = vunpack.c.l.b16 %v876
        %v3535 = vunpack.c.h.b16 %v876
        %v3536 = vunpack.c.l.b16 %v877
        %v3537 = vunpack.c.h.b16 %v877
        %v3538 = vunpack.c.l.b16 %v878
        %v3539 = vunpack.c.h.b16 %v878
        %v3540 = vunpack.c.l.b16 %v879
        %v3541 = vunpack.c.h.b16 %v879
        %v3542 = vunpack.c.l.b16 %v880
        %v3543 = vunpack.c.h.b16 %v880
        %v3544 = vunpack.c.l.b16 %v881
        %v3545 = vunpack.c.h.b16 %v881
        %v3546 = vunpack.c.l.b16 %v882
        %v3547 = vunpack.c.h.b16 %v882
        %v3548 = vunpack.c.l.b16 %v883
        %v3549 = vunpack.c.h.b16 %v883
        %v3550 = vunpack.c.l.b16 %v884
        %v3551 = vunpack.c.h.b16 %v884
        %v3552 = vunpack.c.l.b16 %v885
        %v3553 = vunpack.c.h.b16 %v885
        %v3554 = vunpack.c.l.b16 %v886
        %v3555 = vunpack.c.h.b16 %v886
        %v3556 = vunpack.c.l.b16 %v887
        %v3557 = vunpack.c.h.b16 %v887
        %v3558 = vunpack.c.l.b16 %v888
        %v3559 = vunpack.c.h.b16 %v888
        %v3560 = vunpack.c.l.b16 %v889
        %v3561 = vunpack.c.h.b16 %v889
        %v3562 = vunpack.c.l.b16 %v890
        %v3563 = vunpack.c.h.b16 %v890
        %v3564 = vunpack.c.l.b16 %v891
        %v3565 = vunpack.c.h.b16 %v891
        %v3566 = vunpack.c.l.b16 %v892
        %v3567 = vunpack.c.h.b16 %v892
        %v3568 = vunpack.c.l.b16 %v893
        %v3569 = vunpack.c.h.b16 %v893
        %v3570 = vunpack.c.l.b16 %v894
        %v3571 = vunpack.c.h.b16 %v894
        %v3572 = vunpack.c.l.b16 %v895
        %v3573 = vunpack.c.h.b16 %v895
        %v3574 = vunpack.c.l.b16 %v896
        %v3575 = vunpack.c.h.b16 %v896
        %v3576 = vunpack.c.l.b16 %v897
        %v3577 = vunpack.c.h.b16 %v897
        %v3578 = vunpack.c.l.b16 %v898
        %v3579 = vunpack.c.h.b16 %v898
        %v3580 = vunpack.c.l.b16 %v899
        %v3581 = vunpack.c.h.b16 %v899
        %v3582 = vunpack.c.l.b16 %v900
        %v3583 = vunpack.c.h.b16 %v900
        %v3584 = vunpack.c.l.b16 %v901
        %v3585 = vunpack.c.h.b16 %v901
        %v3586 = vunpack.c.l.b16 %v902
        %v3587 = vunpack.c.h.b16 %v902
        %v3588 = vunpack.c.l.b16 %v903
        %v3589 = vunpack.c.h.b16 %v903
        %v3590 = vunpack.c.l.b16 %v904
        %v3591 = vunpack.c.h.b16 %v904
        %v3592 = vunpack.c.l.b16 %v905
        %v3593 = vunpack.c.h.b16 %v905
        %v3594 = vunpack.c.l.b16 %v906
        %v3595 = vunpack.c.h.b16 %v906
        %v3596 = vunpack.c.l.b16 %v907
        %v3597 = vunpack.c.h.b16 %v907
        %v3598 = vunpack.c.l.b16 %v908
        %v3599 = vunpack.c.h.b16 %v908
        %v3600 = vunpack.c.l.b16 %v909
        %v3601 = vunpack.c.h.b16 %v909
        %v3602 = vunpack.c.l.b16 %v910
        %v3603 = vunpack.c.h.b16 %v910
        %v3604 = vunpack.c.l.b16 %v911
        %v3605 = vunpack.c.h.b16 %v911
        %v3606 = vunpack.c.l.b16 %v912
        %v3607 = vunpack.c.h.b16 %v912
        %v3608 = vunpack.c.l.b16 %v913
        %v3609 = vunpack.c.h.b16 %v913
        %v3610 = vunpack.c.l.b16 %v914
        %v3611 = vunpack.c.h.b16 %v914
        %v3612 = vunpack.c.l.b16 %v915
        %v3613 = vunpack.c.h.b16 %v915
        %v3614 = vunpack.c.l.b16 %v916
        %v3615 = vunpack.c.h.b16 %v916
        %v3616 = vunpack.c.l.b16 %v917
        %v3617 = vunpack.c.h.b16 %v917
        %v3618 = vunpack.c.l.b16 %v918
        %v3619 = vunpack.c.h.b16 %v918
        %v3620 = vunpack.c.l.b16 %v919
        %v3621 = vunpack.c.h.b16 %v919
        %v3622 = vunpack.c.l.b16 %v920
        %v3623 = vunpack.c.h.b16 %v920
        %v3624 = vunpack.c.l.b16 %v921
        %v3625 = vunpack.c.h.b16 %v921
        %v3626 = vunpack.c.l.b16 %v922
        %v3627 = vunpack.c.h.b16 %v922
        %v3628 = vunpack.c.l.b16 %v923
        %v3629 = vunpack.c.h.b16 %v923
        %v3630 = vunpack.c.l.b16 %v924
        %v3631 = vunpack.c.h.b16 %v924
        %v3632 = vunpack.c.l.b16 %v925
        %v3633 = vunpack.c.h.b16 %v925
        %v3634 = vunpack.c.l.b16 %v926
        %v3635 = vunpack.c.h.b16 %v926
        %v3636 = vunpack.c.l.b16 %v927
        %v3637 = vunpack.c.h.b16 %v927
        %v3638 = vunpack.c.l.b16 %v928
        %v3639 = vunpack.c.h.b16 %v928
        %v3640 = vunpack.c.l.b16 %v929
        %v3641 = vunpack.c.h.b16 %v929
        %v3642 = vunpack.c.l.b16 %v930
        %v3643 = vunpack.c.h.b16 %v930
        %v3644 = vunpack.c.l.b16 %v931
        %v3645 = vunpack.c.h.b16 %v931
        %v3646 = vunpack.c.l.b16 %v932
        %v3647 = vunpack.c.h.b16 %v932
        %v3648 = vunpack.c.l.b16 %v933
        %v3649 = vunpack.c.h.b16 %v933
        %v3650 = vunpack.c.l.b16 %v934
        %v3651 = vunpack.c.h.b16 %v934
        %v3652 = vunpack.c.l.b16 %v935
        %v3653 = vunpack.c.h.b16 %v935
        %v3654 = vunpack.c.l.b16 %v936
        %v3655 = vunpack.c.h.b16 %v936
        %v3656 = vunpack.c.l.b16 %v937
        %v3657 = vunpack.c.h.b16 %v937
        %v3658 = vunpack.c.l.b16 %v938
        %v3659 = vunpack.c.h.b16 %v938
        %v3660 = vunpack.c.l.b16 %v939
        %v3661 = vunpack.c.h.b16 %v939
        %v3662 = vunpack.c.l.b16 %v940
        %v3663 = vunpack.c.h.b16 %v940
        %v3664 = vunpack.c.l.b16 %v941
        %v3665 = vunpack.c.h.b16 %v941
        %v3666 = vunpack.c.l.b16 %v942
        %v3667 = vunpack.c.h.b16 %v942
        %v3668 = vunpack.c.l.b16 %v943
        %v3669 = vunpack.c.h.b16 %v943
        %v3670 = vunpack.c.l.b16 %v944
        %v3671 = vunpack.c.h.b16 %v944
        %v3672 = vunpack.c.l.b16 %v945
        %v3673 = vunpack.c.h.b16 %v945
        %v3674 = vunpack.c.l.b16 %v946
        %v3675 = vunpack.c.h.b16 %v946
        %v3676 = vunpack.c.l.b16 %v947
        %v3677 = vunpack.c.h.b16 %v947
        %v3678 = vunpack.c.l.b16 %v948
        %v3679 = vunpack.c.h.b16 %v948
        %v3680 = vunpack.c.l.b16 %v949
        %v3681 = vunpack.c.h.b16 %v949
        %v3682 = vunpack.c.l.b16 %v950
        %v3683 = vunpack.c.h.b16 %v950
        %v3684 = vunpack.c.l.b16 %v951
        %v3685 = vunpack.c.h.b16 %v951
        %v3686 = vunpack.c.l.b16 %v952
        %v3687 = vunpack.c.h.b16 %v952
        %v3688 = vunpack.c.l.b16 %v953
        %v3689 = vunpack.c.h.b16 %v953
        %v3690 = vunpack.c.l.b16 %v954
        %v3691 = vunpack.c.h.b16 %v954
        %v3692 = vunpack.c.l.b16 %v955
        %v3693 = vunpack.c.h.b16 %v955
        %v3694 = vunpack.c.l.b16 %v956
        %v3695 = vunpack.c.h.b16 %v956
        %v3696 = vunpack.c.l.b16 %v957
        %v3697 = vunpack.c.h.b16 %v957
        %v3698 = vunpack.c.l.b16 %v958
        %v3699 = vunpack.c.h.b16 %v958
        %v3700 = vunpack.c.l.b16 %v959
        %v3701 = vunpack.c.h.b16 %v959
        %v3702 = vunpack.c.l.b16 %v960
        %v3703 = vunpack.c.h.b16 %v960
        %v3704 = vunpack.c.l.b16 %v961
        %v3705 = vunpack.c.h.b16 %v961
        %v3706 = vunpack.c.l.b16 %v962
        %v3707 = vunpack.c.h.b16 %v962
        %v3708 = vunpack.c.l.b16 %v963
        %v3709 = vunpack.c.h.b16 %v963
        %v3710 = vunpack.c.l.b16 %v964
        %v3711 = vunpack.c.h.b16 %v964
        %v3712 = vunpack.c.l.b16 %v965
        %v3713 = vunpack.c.h.b16 %v965
        %v3714 = vunpack.c.l.b16 %v966
        %v3715 = vunpack.c.h.b16 %v966
        %v3716 = vunpack.c.l.b16 %v967
        %v3717 = vunpack.c.h.b16 %v967
        %v3718 = vunpack.c.l.b16 %v968
        %v3719 = vunpack.c.h.b16 %v968
        %v3720 = vunpack.c.l.b16 %v969
        %v3721 = vunpack.c.h.b16 %v969
        %v3722 = vunpack.c.l.b16 %v970
        %v3723 = vunpack.c.h.b16 %v970
        %v3724 = vunpack.c.l.b16 %v971
        %v3725 = vunpack.c.h.b16 %v971
        %v3726 = vunpack.c.l.b16 %v972
        %v3727 = vunpack.c.h.b16 %v972
        %v3728 = vunpack.c.l.b16 %v973
        %v3729 = vunpack.c.h.b16 %v973
        %v3730 = vunpack.c.l.b16 %v974
        %v3731 = vunpack.c.h.b16 %v974
        %v3732 = vunpack.c.l.b16 %v975
        %v3733 = vunpack.c.h.b16 %v975
        %v3734 = vunpack.c.l.b16 %v976
        %v3735 = vunpack.c.h.b16 %v976
        %v3736 = vunpack.c.l.b16 %v977
        %v3737 = vunpack.c.h.b16 %v977
        %v3738 = vunpack.c.l.b16 %v978
        %v3739 = vunpack.c.h.b16 %v978
        %v3740 = vunpack.c.l.b16 %v979
        %v3741 = vunpack.c.h.b16 %v979
        %v3742 = vunpack.c.l.b16 %v980
        %v3743 = vunpack.c.h.b16 %v980
        %v3744 = vunpack.c.l.b16 %v981
        %v3745 = vunpack.c.h.b16 %v981
        %v3746 = vunpack.c.l.b16 %v982
        %v3747 = vunpack.c.h.b16 %v982
        %v3748 = vunpack.c.l.b16 %v983
        %v3749 = vunpack.c.h.b16 %v983
        %v3750 = vunpack.c.l.b16 %v984
        %v3751 = vunpack.c.h.b16 %v984
        %v3752 = vunpack.c.l.b16 %v985
        %v3753 = vunpack.c.h.b16 %v985
        %v3754 = vunpack.c.l.b16 %v986
        %v3755 = vunpack.c.h.b16 %v986
        %v3756 = vunpack.c.l.b16 %v987
        %v3757 = vunpack.c.h.b16 %v987
        %v3758 = vunpack.c.l.b16 %v988
        %v3759 = vunpack.c.h.b16 %v988
        %v3760 = vunpack.c.l.b16 %v989
        %v3761 = vunpack.c.h.b16 %v989
        %v3762 = vunpack.c.l.b16 %v990
        %v3763 = vunpack.c.h.b16 %v990
        %v3764 = vunpack.c.l.b16 %v991
        %v3765 = vunpack.c.h.b16 %v991
        %v3766 = vunpack.c.l.b16 %v992
        %v3767 = vunpack.c.h.b16 %v992
        %v3768 = vunpack.c.l.b16 %v993
        %v3769 = vunpack.c.h.b16 %v993
        %v3770 = vunpack.c.l.b16 %v994
        %v3771 = vunpack.c.h.b16 %v994
        %v3772 = vunpack.c.l.b16 %v995
        %v3773 = vunpack.c.h.b16 %v995
        %v3774 = vunpack.c.l.b16 %v996
        %v3775 = vunpack.c.h.b16 %v996
        %v3776 = vunpack.c.l.b16 %v997
        %v3777 = vunpack.c.h.b16 %v997
        %v3778 = vunpack.c.l.b16 %v998
        %v3779 = vunpack.c.h.b16 %v998
        %v3780 = vunpack.c.l.b16 %v999
        %v3781 = vunpack.c.h.b16 %v999
        %v3782 = vunpack.c.l.b16 %v1000
        %v3783 = vunpack.c.h.b16 %v1000
        %v3784 = vunpack.c.l.b16 %v1001
        %v3785 = vunpack.c.h.b16 %v1001
        %v3786 = vunpack.c.l.b16 %v1002
        %v3787 = vunpack.c.h.b16 %v1002
        %v3788 = vunpack.c.l.b16 %v1003
        %v3789 = vunpack.c.h.b16 %v1003
        %v3790 = vunpack.c.l.b16 %v1004
        %v3791 = vunpack.c.h.b16 %v1004
        %v3792 = vunpack.c.l.b16 %v1005
        %v3793 = vunpack.c.h.b16 %v1005
        %v3794 = vunpack.c.l.b16 %v1006
        %v3795 = vunpack.c.h.b16 %v1006
        %v3796 = vunpack.c.l.b16 %v1007
        %v3797 = vunpack.c.h.b16 %v1007
        %v3798 = vunpack.c.l.b16 %v1008
        %v3799 = vunpack.c.h.b16 %v1008
        %v3800 = vunpack.c.l.b16 %v1009
        %v3801 = vunpack.c.h.b16 %v1009
        %v3802 = vunpack.c.l.b16 %v1010
        %v3803 = vunpack.c.h.b16 %v1010
        %v3804 = vunpack.c.l.b16 %v1011
        %v3805 = vunpack.c.h.b16 %v1011
        %v3806 = vunpack.c.l.b16 %v1012
        %v3807 = vunpack.c.h.b16 %v1012
        %v3808 = vunpack.c.l.b16 %v1013
        %v3809 = vunpack.c.h.b16 %v1013
        %v3810 = vunpack.c.l.b16 %v1014
        %v3811 = vunpack.c.h.b16 %v1014
        %v3812 = vunpack.c.l.b16 %v1015
        %v3813 = vunpack.c.h.b16 %v1015
        %v3814 = vunpack.c.l.b16 %v1016
        %v3815 = vunpack.c.h.b16 %v1016
        %v3816 = vunpack.c.l.b16 %v1017
        %v3817 = vunpack.c.h.b16 %v1017
        %v3818 = vunpack.c.l.b16 %v1018
        %v3819 = vunpack.c.h.b16 %v1018
        %v3820 = vunpack.c.l.b16 %v1019
        %v3821 = vunpack.c.h.b16 %v1019
        %v3822 = vunpack.c.l.b16 %v1020
        %v3823 = vunpack.c.h.b16 %v1020
        %v3824 = vunpack.c.l.b16 %v1021
        %v3825 = vunpack.c.h.b16 %v1021
        %v3826 = vunpack.c.l.b16 %v1022
        %v3827 = vunpack.c.h.b16 %v1022
        %v3828 = vunpack.c.l.b16 %v1023
        %v3829 = vunpack.c.h.b16 %v1023
        %v3830 = vunpack.c.l.b16 %v1024
        %v3831 = vunpack.c.h.b16 %v1024
        %v3832 = vunpack.c.l.b16 %v1025
        %v3833 = vunpack.c.h.b16 %v1025
        %v3834 = vunpack.c.l.b16 %v1026
        %v3835 = vunpack.c.h.b16 %v1026
        %v3836 = vunpack.c.l.b16 %v1027
        %v3837 = vunpack.c.h.b16 %v1027
        %v3838 = vunpack.c.l.b16 %v1028
        %v3839 = vunpack.c.h.b16 %v1028
        %v3840 = vunpack.c.l.b16 %v1029
        %v3841 = vunpack.c.h.b16 %v1029
        %v3842 = vunpack.c.l.b16 %v1030
        %v3843 = vunpack.c.h.b16 %v1030
        %v3844 = vunpack.c.l.b16 %v1031
        %v3845 = vunpack.c.h.b16 %v1031
        %v3846 = vunpack.c.l.b16 %v1032
        %v3847 = vunpack.c.h.b16 %v1032
        %v3848 = vunpack.c.l.b16 %v1033
        %v3849 = vunpack.c.h.b16 %v1033
        %v3850 = vunpack.c.l.b16 %v1034
        %v3851 = vunpack.c.h.b16 %v1034
        %v3852 = vunpack.c.l.b16 %v1035
        %v3853 = vunpack.c.h.b16 %v1035
        %v3854 = vunpack.c.l.b16 %v1036
        %v3855 = vunpack.c.h.b16 %v1036
        %v3856 = vunpack.c.l.b16 %v1037
        %v3857 = vunpack.c.h.b16 %v1037
        %v3858 = vunpack.c.l.b16 %v1038
        %v3859 = vunpack.c.h.b16 %v1038
        %v3860 = vunpack.c.l.b16 %v1039
        %v3861 = vunpack.c.h.b16 %v1039
        %v3862 = vunpack.c.l.b16 %v1040
        %v3863 = vunpack.c.h.b16 %v1040
        %v3864 = vunpack.c.l.b16 %v1041
        %v3865 = vunpack.c.h.b16 %v1041
        %v3866 = vunpack.c.l.b16 %v1042
        %v3867 = vunpack.c.h.b16 %v1042
        %v3868 = vunpack.c.l.b16 %v1043
        %v3869 = vunpack.c.h.b16 %v1043
        %v3870 = vunpack.c.l.b16 %v1044
        %v3871 = vunpack.c.h.b16 %v1044
        %v3872 = vunpack.c.l.b16 %v1045
        %v3873 = vunpack.c.h.b16 %v1045
        %v3874 = vunpack.c.l.b16 %v1046
        %v3875 = vunpack.c.h.b16 %v1046
        %v3876 = vunpack.c.l.b16 %v1047
        %v3877 = vunpack.c.h.b16 %v1047
        %v3878 = vunpack.c.l.b16 %v1048
        %v3879 = vunpack.c.h.b16 %v1048
        %v3880 = vunpack.c.l.b16 %v1049
        %v3881 = vunpack.c.h.b16 %v1049
        %v3882 = vunpack.c.l.b16 %v1050
        %v3883 = vunpack.c.h.b16 %v1050
        %v3884 = vunpack.c.l.b16 %v1051
        %v3885 = vunpack.c.h.b16 %v1051
        %v3886 = vunpack.c.l.b16 %v1052
        %v3887 = vunpack.c.h.b16 %v1052
        %v3888 = vunpack.c.l.b16 %v1053
        %v3889 = vunpack.c.h.b16 %v1053
        %v3890 = vunpack.c.l.b16 %v1054
        %v3891 = vunpack.c.h.b16 %v1054
        %v3892 = vunpack.c.l.b16 %v1055
        %v3893 = vunpack.c.h.b16 %v1055
        %v3894 = vunpack.c.l.b16 %v1056
        %v3895 = vunpack.c.h.b16 %v1056
        %v3896 = vunpack.c.l.b16 %v1057
        %v3897 = vunpack.c.h.b16 %v1057
        %v3898 = vunpack.c.l.b16 %v1058
        %v3899 = vunpack.c.h.b16 %v1058
        %v3900 = vunpack.c.l.b16 %v1059
        %v3901 = vunpack.c.h.b16 %v1059
        %v3902 = vunpack.c.l.b16 %v1060
        %v3903 = vunpack.c.h.b16 %v1060
        %v3904 = vunpack.c.l.b16 %v1061
        %v3905 = vunpack.c.h.b16 %v1061
        %v3906 = vunpack.c.l.b16 %v1062
        %v3907 = vunpack.c.h.b16 %v1062
        %v3908 = vunpack.c.l.b16 %v1063
        %v3909 = vunpack.c.h.b16 %v1063
        %v3910 = vunpack.c.l.b16 %v1064
        %v3911 = vunpack.c.h.b16 %v1064
        %v3912 = vunpack.c.l.b16 %v1065
        %v3913 = vunpack.c.h.b16 %v1065
        %v3914 = vunpack.c.l.b16 %v1066
        %v3915 = vunpack.c.h.b16 %v1066
        %v3916 = vunpack.c.l.b16 %v1067
        %v3917 = vunpack.c.h.b16 %v1067
        %v3918 = vunpack.c.l.b16 %v1068
        %v3919 = vunpack.c.h.b16 %v1068
        %v3920 = vunpack.c.l.b16 %v1069
        %v3921 = vunpack.c.h.b16 %v1069
        %v3922 = vunpack.c.l.b16 %v1070
        %v3923 = vunpack.c.h.b16 %v1070
        %v3924 = vunpack.c.l.b16 %v1071
        %v3925 = vunpack.c.h.b16 %v1071
        %v3926 = vunpack.c.l.b16 %v1072
        %v3927 = vunpack.c.h.b16 %v1072
        %v3928 = vunpack.c.l.b16 %v1073
        %v3929 = vunpack.c.h.b16 %v1073
        %v3930 = vunpack.c.l.b16 %v1074
        %v3931 = vunpack.c.h.b16 %v1074
        %v3932 = vunpack.c.l.b16 %v1075
        %v3933 = vunpack.c.h.b16 %v1075
        %v3934 = vunpack.c.l.b16 %v1076
        %v3935 = vunpack.c.h.b16 %v1076
        %v3936 = vunpack.c.l.b16 %v1077
        %v3937 = vunpack.c.h.b16 %v1077
        %v3938 = vunpack.c.l.b16 %v1078
        %v3939 = vunpack.c.h.b16 %v1078
        %v3940 = vunpack.c.l.b16 %v1079
        %v3941 = vunpack.c.h.b16 %v1079
        %v3942 = vunpack.c.l.b16 %v1080
        %v3943 = vunpack.c.h.b16 %v1080
        %v3944 = vunpack.c.l.b16 %v1081
        %v3945 = vunpack.c.h.b16 %v1081
        %v3946 = vunpack.c.l.b16 %v1082
        %v3947 = vunpack.c.h.b16 %v1082
        %v3948 = vunpack.c.l.b16 %v1083
        %v3949 = vunpack.c.h.b16 %v1083
        %v3950 = vunpack.c.l.b16 %v1084
        %v3951 = vunpack.c.h.b16 %v1084
        %v3952 = vunpack.c.l.b16 %v1085
        %v3953 = vunpack.c.h.b16 %v1085
        %v3954 = vunpack.c.l.b16 %v1086
        %v3955 = vunpack.c.h.b16 %v1086
        %v3956 = vunpack.c.l.b16 %v1087
        %v3957 = vunpack.c.h.b16 %v1087
        %v3958 = vunpack.c.l.b16 %v1088
        %v3959 = vunpack.c.h.b16 %v1088
        %v3960 = vunpack.c.l.b16 %v1089
        %v3961 = vunpack.c.h.b16 %v1089
        %v3962 = vunpack.c.l.b16 %v1090
        %v3963 = vunpack.c.h.b16 %v1090
        %v3964 = vunpack.c.l.b16 %v1091
        %v3965 = vunpack.c.h.b16 %v1091
        %v3966 = vunpack.c.l.b16 %v1092
        %v3967 = vunpack.c.h.b16 %v1092
        %v3968 = vunpack.c.l.b16 %v1093
        %v3969 = vunpack.c.h.b16 %v1093
        %v3970 = vunpack.c.l.b16 %v1094
        %v3971 = vunpack.c.h.b16 %v1094
        %v3972 = vunpack.c.l.b16 %v1095
        %v3973 = vunpack.c.h.b16 %v1095
        %v3974 = vunpack.c.l.b16 %v1096
        %v3975 = vunpack.c.h.b16 %v1096
        %v3976 = vunpack.c.l.b16 %v1097
        %v3977 = vunpack.c.h.b16 %v1097
        %v3978 = vunpack.c.l.b16 %v1098
        %v3979 = vunpack.c.h.b16 %v1098
        %v3980 = vunpack.c.l.b16 %v1099
        %v3981 = vunpack.c.h.b16 %v1099
        %v3982 = vunpack.c.l.b16 %v1100
        %v3983 = vunpack.c.h.b16 %v1100
        %v3984 = vunpack.c.l.b16 %v1101
        %v3985 = vunpack.c.h.b16 %v1101
        %v3986 = vunpack.c.l.b16 %v1102
        %v3987 = vunpack.c.h.b16 %v1102
        %v3988 = vunpack.c.l.b16 %v1103
        %v3989 = vunpack.c.h.b16 %v1103
        %v3990 = vunpack.c.l.b16 %v1104
        %v3991 = vunpack.c.h.b16 %v1104
        %v3992 = vunpack.c.l.b16 %v1105
        %v3993 = vunpack.c.h.b16 %v1105
        %v3994 = vunpack.c.l.b16 %v1106
        %v3995 = vunpack.c.h.b16 %v1106
        %v3996 = vunpack.c.l.b16 %v1107
        %v3997 = vunpack.c.h.b16 %v1107
        %v3998 = vunpack.c.l.b16 %v1108
        %v3999 = vunpack.c.h.b16 %v1108
        %v4000 = vunpack.c.l.b16 %v1109
        %v4001 = vunpack.c.h.b16 %v1109
        %v4002 = vunpack.c.l.b16 %v1110
        %v4003 = vunpack.c.h.b16 %v1110
        %v4004 = vunpack.c.l.b16 %v1111
        %v4005 = vunpack.c.h.b16 %v1111
        %v4006 = vunpack.c.l.b16 %v1112
        %v4007 = vunpack.c.h.b16 %v1112
        %v4008 = vunpack.c.l.b16 %v1113
        %v4009 = vunpack.c.h.b16 %v1113
        %v4010 = vunpack.c.l.b16 %v1114
        %v4011 = vunpack.c.h.b16 %v1114
        %v4012 = vunpack.c.l.b16 %v1115
        %v4013 = vunpack.c.h.b16 %v1115
        %v4014 = vunpack.c.l.b16 %v1116
        %v4015 = vunpack.c.h.b16 %v1116
        %v4016 = vunpack.c.l.b16 %v1117
        %v4017 = vunpack.c.h.b16 %v1117
        %v4018 = vunpack.c.l.b16 %v1118
        %v4019 = vunpack.c.h.b16 %v1118
        %v4020 = vunpack.c.l.b16 %v1119
        %v4021 = vunpack.c.h.b16 %v1119
        %v4022 = vunpack.c.l.b16 %v1120
        %v4023 = vunpack.c.h.b16 %v1120
        %v4024 = vunpack.c.l.b16 %v1121
        %v4025 = vunpack.c.h.b16 %v1121
        %v4026 = vunpack.c.l.b16 %v1122
        %v4027 = vunpack.c.h.b16 %v1122
        %v4028 = vunpack.c.l.b16 %v1123
        %v4029 = vunpack.c.h.b16 %v1123
        %v4030 = vunpack.c.l.b16 %v1124
        %v4031 = vunpack.c.h.b16 %v1124
        %v4032 = vunpack.c.l.b16 %v1125
        %v4033 = vunpack.c.h.b16 %v1125
        %v4034 = vunpack.c.l.b16 %v1126
        %v4035 = vunpack.c.h.b16 %v1126
        %v4036 = vunpack.c.l.b16 %v1127
        %v4037 = vunpack.c.h.b16 %v1127
        %v4038 = vunpack.c.l.b16 %v1128
        %v4039 = vunpack.c.h.b16 %v1128
        %v4040 = vunpack.c.l.b16 %v1129
        %v4041 = vunpack.c.h.b16 %v1129
        %v4042 = vunpack.c.l.b16 %v1130
        %v4043 = vunpack.c.h.b16 %v1130
        %v4044 = vunpack.c.l.b16 %v1131
        %v4045 = vunpack.c.h.b16 %v1131
        %v4046 = vunpack.c.l.b16 %v1132
        %v4047 = vunpack.c.h.b16 %v1132
        %v4048 = vunpack.c.l.b16 %v1133
        %v4049 = vunpack.c.h.b16 %v1133
        %v4050 = vunpack.c.l.b16 %v1134
        %v4051 = vunpack.c.h.b16 %v1134
        %v4052 = vunpack.c.l.b16 %v1135
        %v4053 = vunpack.c.h.b16 %v1135
        %v4054 = vunpack.c.l.b16 %v1136
        %v4055 = vunpack.c.h.b16 %v1136
        %v4056 = vunpack.c.l.b16 %v1137
        %v4057 = vunpack.c.h.b16 %v1137
        %v4058 = vunpack.c.l.b16 %v1138
        %v4059 = vunpack.c.h.b16 %v1138
        %v4060 = vunpack.c.l.b16 %v1139
        %v4061 = vunpack.c.h.b16 %v1139
        %v4062 = vunpack.c.l.b16 %v1140
        %v4063 = vunpack.c.h.b16 %v1140
        %v4064 = vunpack.c.l.b16 %v1141
        %v4065 = vunpack.c.h.b16 %v1141
        %v4066 = vunpack.c.l.b16 %v1142
        %v4067 = vunpack.c.h.b16 %v1142
        %v4068 = vunpack.c.l.b16 %v1143
        %v4069 = vunpack.c.h.b16 %v1143
        %v4070 = vunpack.c.l.b16 %v1144
        %v4071 = vunpack.c.h.b16 %v1144
        %v4072 = vunpack.c.l.b16 %v1145
        %v4073 = vunpack.c.h.b16 %v1145
        %v4074 = vunpack.c.l.b16 %v1146
        %v4075 = vunpack.c.h.b16 %v1146
        %v4076 = vunpack.c.l.b16 %v1147
        %v4077 = vunpack.c.h.b16 %v1147
        %v4078 = vunpack.c.l.b16 %v1148
        %v4079 = vunpack.c.h.b16 %v1148
        %v4080 = vunpack.c.l.b16 %v1149
        %v4081 = vunpack.c.h.b16 %v1149
        %v4082 = vunpack.c.l.b16 %v1150
        %v4083 = vunpack.c.h.b16 %v1150
        %v4084 = vunpack.c.l.b16 %v1151
        %v4085 = vunpack.c.h.b16 %v1151
        %v4086 = vunpack.c.l.b16 %v1152
        %v4087 = vunpack.c.h.b16 %v1152
        %v4088 = vunpack.c.l.b16 %v1153
        %v4089 = vunpack.c.h.b16 %v1153
        %v4090 = vunpack.c.l.b16 %v1154
        %v4091 = vunpack.c.h.b16 %v1154
        %v4092 = vunpack.c.l.b16 %v1155
        %v4093 = vunpack.c.h.b16 %v1155
        %v4094 = vunpack.c.l.b16 %v1156
        %v4095 = vunpack.c.h.b16 %v1156
        %v4096 = vunpack.c.l.b16 %v1157
        %v4097 = vunpack.c.h.b16 %v1157
        %v4098 = vunpack.c.l.b16 %v1158
        %v4099 = vunpack.c.h.b16 %v1158
        %v4100 = vunpack.c.l.b16 %v1159
        %v4101 = vunpack.c.h.b16 %v1159
        %v4102 = vunpack.c.l.b16 %v1160
        %v4103 = vunpack.c.h.b16 %v1160
        %v4104 = vunpack.c.l.b16 %v1161
        %v4105 = vunpack.c.h.b16 %v1161
        %v4106 = vunpack.c.l.b16 %v1162
        %v4107 = vunpack.c.h.b16 %v1162
        %v4108 = vunpack.c.l.b16 %v1163
        %v4109 = vunpack.c.h.b16 %v1163
        %v4110 = vunpack.c.l.b16 %v1164
        %v4111 = vunpack.c.h.b16 %v1164
        %v4112 = vunpack.c.l.b16 %v1165
        %v4113 = vunpack.c.h.b16 %v1165
        %v4114 = vunpack.c.l.b16 %v1166
        %v4115 = vunpack.c.h.b16 %v1166
        %v4116 = vunpack.c.l.b16 %v1167
        %v4117 = vunpack.c.h.b16 %v1167
        %v4118 = vunpack.c.l.b16 %v1168
        %v4119 = vunpack.c.h.b16 %v1168
        %v4120 = vunpack.c.l.b16 %v1169
        %v4121 = vunpack.c.h.b16 %v1169
        %v4122 = vunpack.c.l.b16 %v1170
        %v4123 = vunpack.c.h.b16 %v1170
        %v4124 = vunpack.c.l.b16 %v1171
        %v4125 = vunpack.c.h.b16 %v1171
        %v4126 = vunpack.c.l.b16 %v1172
        %v4127 = vunpack.c.h.b16 %v1172
        %v4128 = vunpack.c.l.b16 %v1173
        %v4129 = vunpack.c.h.b16 %v1173
        %v4130 = vunpack.c.l.b16 %v1174
        %v4131 = vunpack.c.h.b16 %v1174
        %v4132 = vunpack.c.l.b16 %v1175
        %v4133 = vunpack.c.h.b16 %v1175
        %v4134 = vunpack.c.l.b16 %v1176
        %v4135 = vunpack.c.h.b16 %v1176
        %v4136 = vunpack.c.l.b16 %v1177
        %v4137 = vunpack.c.h.b16 %v1177
        %v4138 = vunpack.c.l.b16 %v1178
        %v4139 = vunpack.c.h.b16 %v1178
        %v4140 = vunpack.c.l.b16 %v1179
        %v4141 = vunpack.c.h.b16 %v1179
        %v4142 = vunpack.c.l.b16 %v1180
        %v4143 = vunpack.c.h.b16 %v1180
        %v4144 = vunpack.c.l.b16 %v1181
        %v4145 = vunpack.c.h.b16 %v1181
        %v4146 = vunpack.c.l.b16 %v1182
        %v4147 = vunpack.c.h.b16 %v1182
        %v4148 = vunpack.c.l.b16 %v1183
        %v4149 = vunpack.c.h.b16 %v1183
        %v4150 = vunpack.c.l.b16 %v1184
        %v4151 = vunpack.c.h.b16 %v1184
        %v4152 = vunpack.c.l.b16 %v1185
        %v4153 = vunpack.c.h.b16 %v1185
        %v4154 = vunpack.c.l.b16 %v1186
        %v4155 = vunpack.c.h.b16 %v1186
        %v4156 = vunpack.c.l.b16 %v1187
        %v4157 = vunpack.c.h.b16 %v1187
        %v4158 = vunpack.c.l.b16 %v1188
        %v4159 = vunpack.c.h.b16 %v1188
        %v4160 = vunpack.c.l.b16 %v1189
        %v4161 = vunpack.c.h.b16 %v1189
        %v4162 = vunpack.c.l.b16 %v1190
        %v4163 = vunpack.c.h.b16 %v1190
        %v4164 = vunpack.c.l.b16 %v1191
        %v4165 = vunpack.c.h.b16 %v1191
        %v4166 = vunpack.c.l.b16 %v1192
        %v4167 = vunpack.c.h.b16 %v1192
        %v4168 = vunpack.c.l.b16 %v1193
        %v4169 = vunpack.c.h.b16 %v1193
        %v4170 = vunpack.c.l.b16 %v1194
        %v4171 = vunpack.c.h.b16 %v1194
        %v4172 = vunpack.c.l.b16 %v1195
        %v4173 = vunpack.c.h.b16 %v1195
        %v4174 = vunpack.c.l.b16 %v1196
        %v4175 = vunpack.c.h.b16 %v1196
        %v4176 = vunpack.c.l.b16 %v1197
        %v4177 = vunpack.c.h.b16 %v1197
        %v4178 = vunpack.c.l.b16 %v1198
        %v4179 = vunpack.c.h.b16 %v1198
        %v4180 = vunpack.c.l.b16 %v1199
        %v4181 = vunpack.c.h.b16 %v1199
        %v4182 = vunpack.c.l.b16 %v1200
        %v4183 = vunpack.c.h.b16 %v1200
        %v4184 = vunpack.c.l.b16 %v1201
        %v4185 = vunpack.c.h.b16 %v1201
        %v4186 = vunpack.c.l.b16 %v1202
        %v4187 = vunpack.c.h.b16 %v1202
        %v4188 = vunpack.c.l.b16 %v1203
        %v4189 = vunpack.c.h.b16 %v1203
        %v4190 = vunpack.c.l.b16 %v1204
        %v4191 = vunpack.c.h.b16 %v1204
        %v4192 = vunpack.c.l.b16 %v1205
        %v4193 = vunpack.c.h.b16 %v1205
        %v4194 = vunpack.c.l.b16 %v1206
        %v4195 = vunpack.c.h.b16 %v1206
        %v4196 = vunpack.c.l.b16 %v1207
        %v4197 = vunpack.c.h.b16 %v1207
        %v4198 = vunpack.c.l.b16 %v1208
        %v4199 = vunpack.c.h.b16 %v1208
        %v4200 = vunpack.c.l.b16 %v1209
        %v4201 = vunpack.c.h.b16 %v1209
        %v4202 = vunpack.c.l.b16 %v1210
        %v4203 = vunpack.c.h.b16 %v1210
        %v4204 = vunpack.c.l.b16 %v1211
        %v4205 = vunpack.c.h.b16 %v1211
        %v4206 = vunpack.c.l.b16 %v1212
        %v4207 = vunpack.c.h.b16 %v1212
        %v4208 = vunpack.c.l.b16 %v1213
        %v4209 = vunpack.c.h.b16 %v1213
        %v4210 = vunpack.c.l.b16 %v1214
        %v4211 = vunpack.c.h.b16 %v1214
        %v4212 = vunpack.c.l.b16 %v1215
        %v4213 = vunpack.c.h.b16 %v1215
        %v4214 = vunpack.c.l.b16 %v1216
        %v4215 = vunpack.c.h.b16 %v1216
        %v4216 = vunpack.c.l.b16 %v1217
        %v4217 = vunpack.c.h.b16 %v1217
        %v4218 = vunpack.c.l.b16 %v1218
        %v4219 = vunpack.c.h.b16 %v1218
        %v4220 = vunpack.c.l.b16 %v1219
        %v4221 = vunpack.c.h.b16 %v1219
        %v4222 = vunpack.c.l.b16 %v1220
        %v4223 = vunpack.c.h.b16 %v1220
        %v4224 = vunpack.c.l.b16 %v1221
        %v4225 = vunpack.c.h.b16 %v1221
        %v4226 = vunpack.c.l.b16 %v1222
        %v4227 = vunpack.c.h.b16 %v1222
        %v4228 = vunpack.c.l.b16 %v1223
        %v4229 = vunpack.c.h.b16 %v1223
        %v4230 = vunpack.c.l.b16 %v1224
        %v4231 = vunpack.c.h.b16 %v1224
        %v4232 = vunpack.c.l.b16 %v1225
        %v4233 = vunpack.c.h.b16 %v1225
        %v4234 = vunpack.c.l.b16 %v1226
        %v4235 = vunpack.c.h.b16 %v1226
        %v4236 = vunpack.c.l.b16 %v1227
        %v4237 = vunpack.c.h.b16 %v1227
        %v4238 = vunpack.c.l.b16 %v1228
        %v4239 = vunpack.c.h.b16 %v1228
        %v4240 = vunpack.c.l.b16 %v1229
        %v4241 = vunpack.c.h.b16 %v1229
        %v4242 = vunpack.c.l.b16 %v1230
        %v4243 = vunpack.c.h.b16 %v1230
        %v4244 = vunpack.c.l.b16 %v1231
        %v4245 = vunpack.c.h.b16 %v1231
        %v4246 = vunpack.c.l.b16 %v1232
        %v4247 = vunpack.c.h.b16 %v1232
        %v4248 = vunpack.c.l.b16 %v1233
        %v4249 = vunpack.c.h.b16 %v1233
        %v4250 = vunpack.c.l.b16 %v1234
        %v4251 = vunpack.c.h.b16 %v1234
        %v4252 = vunpack.c.l.b16 %v1235
        %v4253 = vunpack.c.h.b16 %v1235
        %v4254 = vunpack.c.l.b16 %v1236
        %v4255 = vunpack.c.h.b16 %v1236
        %v4256 = vunpack.c.l.b16 %v1237
        %v4257 = vunpack.c.h.b16 %v1237
        %v4258 = vunpack.c.l.b16 %v1238
        %v4259 = vunpack.c.h.b16 %v1238
        %v4260 = vunpack.c.l.b16 %v1239
        %v4261 = vunpack.c.h.b16 %v1239
        %v4262 = vunpack.c.l.b16 %v1240
        %v4263 = vunpack.c.h.b16 %v1240
        %v4264 = vunpack.c.l.b16 %v1241
        %v4265 = vunpack.c.h.b16 %v1241
        %v4266 = vunpack.c.l.b16 %v1242
        %v4267 = vunpack.c.h.b16 %v1242
        %v4268 = vunpack.c.l.b16 %v1243
        %v4269 = vunpack.c.h.b16 %v1243
        %v4270 = vunpack.c.l.b16 %v1244
        %v4271 = vunpack.c.h.b16 %v1244
        %v4272 = vunpack.c.l.b16 %v1245
        %v4273 = vunpack.c.h.b16 %v1245
        %v4274 = vunpack.c.l.b16 %v1246
        %v4275 = vunpack.c.h.b16 %v1246
        %v4276 = vunpack.c.l.b16 %v1247
        %v4277 = vunpack.c.h.b16 %v1247
        %v4278 = vunpack.c.l.b16 %v1248
        %v4279 = vunpack.c.h.b16 %v1248
        %v4280 = vunpack.c.l.b16 %v1249
        %v4281 = vunpack.c.h.b16 %v1249
        %v4282 = vunpack.c.l.b16 %v1250
        %v4283 = vunpack.c.h.b16 %v1250
        %v4284 = vunpack.c.l.b16 %v1251
        %v4285 = vunpack.c.h.b16 %v1251
        %v4286 = vunpack.c.l.b16 %v1252
        %v4287 = vunpack.c.h.b16 %v1252
        %v4288 = vunpack.c.l.b16 %v1253
        %v4289 = vunpack.c.h.b16 %v1253
        %v4290 = vunpack.c.l.b16 %v1254
        %v4291 = vunpack.c.h.b16 %v1254
        %v4292 = vunpack.c.l.b16 %v1255
        %v4293 = vunpack.c.h.b16 %v1255
        %v4294 = vunpack.c.l.b16 %v1256
        %v4295 = vunpack.c.h.b16 %v1256
        %v4296 = vunpack.c.l.b16 %v1257
        %v4297 = vunpack.c.h.b16 %v1257
        %v4298 = vunpack.c.l.b16 %v1258
        %v4299 = vunpack.c.h.b16 %v1258
        %v4300 = vunpack.c.l.b16 %v1259
        %v4301 = vunpack.c.h.b16 %v1259
        %v4302 = vunpack.c.l.b16 %v1260
        %v4303 = vunpack.c.h.b16 %v1260
        %v4304 = vunpack.c.l.b16 %v1261
        %v4305 = vunpack.c.h.b16 %v1261
        %v4306 = vunpack.c.l.b16 %v1262
        %v4307 = vunpack.c.h.b16 %v1262
        %v4308 = vunpack.c.l.b16 %v1263
        %v4309 = vunpack.c.h.b16 %v1263
        %v4310 = vunpack.c.l.b16 %v1264
        %v4311 = vunpack.c.h.b16 %v1264
        %v4312 = vunpack.c.l.b16 %v1265
        %v4313 = vunpack.c.h.b16 %v1265
        %v4314 = vunpack.c.l.b16 %v1266
        %v4315 = vunpack.c.h.b16 %v1266
        %v4316 = vunpack.c.l.b16 %v1267
        %v4317 = vunpack.c.h.b16 %v1267
        %v4318 = vunpack.c.l.b16 %v1268
        %v4319 = vunpack.c.h.b16 %v1268
        %v4320 = vunpack.c.l.b16 %v1269
        %v4321 = vunpack.c.h.b16 %v1269
        %v4322 = vunpack.c.l.b16 %v1270
        %v4323 = vunpack.c.h.b16 %v1270
        %v4324 = vunpack.c.l.b16 %v1271
        %v4325 = vunpack.c.h.b16 %v1271
        %v4326 = vunpack.c.l.b16 %v1272
        %v4327 = vunpack.c.h.b16 %v1272
        %v4328 = vunpack.c.l.b16 %v1273
        %v4329 = vunpack.c.h.b16 %v1273
        %v4330 = vunpack.c.l.b16 %v1274
        %v4331 = vunpack.c.h.b16 %v1274
        %v4332 = vunpack.c.l.b16 %v1275
        %v4333 = vunpack.c.h.b16 %v1275
        %v4334 = vunpack.c.l.b16 %v1276
        %v4335 = vunpack.c.h.b16 %v1276
        %v4336 = vunpack.c.l.b16 %v1277
        %v4337 = vunpack.c.h.b16 %v1277
        %v4338 = vunpack.c.l.b16 %v1278
        %v4339 = vunpack.c.h.b16 %v1278
        %v4340 = vunpack.c.l.b16 %v1279
        %v4341 = vunpack.c.h.b16 %v1279
        %v4342 = vunpack.c.l.b16 %v1280
        %v4343 = vunpack.c.h.b16 %v1280
        %v4344 = vunpack.c.l.b16 %v1281
        %v4345 = vunpack.c.h.b16 %v1281
        %v4346 = vunpack.c.l.b16 %v1282
        %v4347 = vunpack.c.h.b16 %v1282
        %v4348 = vunpack.c.l.b16 %v1283
        %v4349 = vunpack.c.h.b16 %v1283
        %v4350 = vunpack.c.l.b16 %v1284
        %v4351 = vunpack.c.h.b16 %v1284
        %v4352 = vunpack.c.l.b16 %v1285
        %v4353 = vunpack.c.h.b16 %v1285
        %v4354 = vunpack.c.l.b16 %v1286
        %v4355 = vunpack.c.h.b16 %v1286
        %v4356 = vunpack.c.l.b16 %v1287
        %v4357 = vunpack.c.h.b16 %v1287
        %v4358 = vunpack.c.l.b16 %v1288
        %v4359 = vunpack.c.h.b16 %v1288
        %v4360 = vunpack.c.l.b16 %v1289
        %v4361 = vunpack.c.h.b16 %v1289
        %v4362 = vunpack.c.l.b16 %v1290
        %v4363 = vunpack.c.h.b16 %v1290
        %v4364 = vunpack.c.l.b16 %v1291
        %v4365 = vunpack.c.h.b16 %v1291
        %v4366 = vunpack.c.l.b16 %v1292
        %v4367 = vunpack.c.h.b16 %v1292
        %v4368 = vunpack.c.l.b16 %v1293
        %v4369 = vunpack.c.h.b16 %v1293
        %v4370 = vunpack.c.l.b16 %v1294
        %v4371 = vunpack.c.h.b16 %v1294
        %v4372 = vunpack.c.l.b16 %v1295
        %v4373 = vunpack.c.h.b16 %v1295
        %v4374 = vunpack.c.l.b16 %v1296
        %v4375 = vunpack.c.h.b16 %v1296
        %v4376 = vunpack.c.l.b16 %v1297
        %v4377 = vunpack.c.h.b16 %v1297
        %v4378 = vunpack.c.l.b16 %v1298
        %v4379 = vunpack.c.h.b16 %v1298
        %v4380 = vunpack.c.l.b16 %v1299
        %v4381 = vunpack.c.h.b16 %v1299
        %v4382 = vunpack.c.l.b16 %v1300
        %v4383 = vunpack.c.h.b16 %v1300
        %v4384 = vunpack.c.l.b16 %v1301
        %v4385 = vunpack.c.h.b16 %v1301
        %v4386 = vunpack.c.l.b16 %v1302
        %v4387 = vunpack.c.h.b16 %v1302
        %v4388 = vunpack.c.l.b16 %v1303
        %v4389 = vunpack.c.h.b16 %v1303
        %v4390 = vunpack.c.l.b16 %v1304
        %v4391 = vunpack.c.h.b16 %v1304
        %v4392 = vunpack.c.l.b16 %v1305
        %v4393 = vunpack.c.h.b16 %v1305
        %v4394 = vunpack.c.l.b16 %v1306
        %v4395 = vunpack.c.h.b16 %v1306
        %v4396 = vunpack.c.l.b16 %v1307
        %v4397 = vunpack.c.h.b16 %v1307
        %v4398 = vunpack.c.l.b16 %v1308
        %v4399 = vunpack.c.h.b16 %v1308
        %v4400 = vunpack.c.l.b16 %v1309
        %v4401 = vunpack.c.h.b16 %v1309
        %v4402 = vunpack.c.l.b16 %v1310
        %v4403 = vunpack.c.h.b16 %v1310
        %v4404 = vunpack.c.l.b16 %v1311
        %v4405 = vunpack.c.h.b16 %v1311
        %v4406 = vunpack.c.l.b16 %v1312
        %v4407 = vunpack.c.h.b16 %v1312
        %v4408 = vunpack.c.l.b16 %v1313
        %v4409 = vunpack.c.h.b16 %v1313
        %v4410 = vunpack.c.l.b16 %v1314
        %v4411 = vunpack.c.h.b16 %v1314
        %v4412 = vunpack.c.l.b16 %v1315
        %v4413 = vunpack.c.h.b16 %v1315
        %v4414 = vunpack.c.l.b16 %v1316
        %v4415 = vunpack.c.h.b16 %v1316
        %v4416 = vunpack.c.l.b16 %v1317
        %v4417 = vunpack.c.h.b16 %v1317
        %v4418 = vunpack.c.l.b16 %v1318
        %v4419 = vunpack.c.h.b16 %v1318
        %v4420 = vunpack.c.l.b16 %v1319
        %v4421 = vunpack.c.h.b16 %v1319
        %v4422 = vunpack.c.l.b16 %v1320
        %v4423 = vunpack.c.h.b16 %v1320
        %v4424 = vunpack.c.l.b16 %v1321
        %v4425 = vunpack.c.h.b16 %v1321
        %v4426 = vunpack.c.l.b16 %v1322
        %v4427 = vunpack.c.h.b16 %v1322
        %v4428 = vunpack.c.l.b16 %v1323
        %v4429 = vunpack.c.h.b16 %v1323
        %v4430 = vunpack.c.l.b16 %v1324
        %v4431 = vunpack.c.h.b16 %v1324
        %v4432 = vunpack.c.l.b16 %v1325
        %v4433 = vunpack.c.h.b16 %v1325
        %v4434 = vunpack.c.l.b16 %v1326
        %v4435 = vunpack.c.h.b16 %v1326
        %v4436 = vunpack.c.l.b16 %v1327
        %v4437 = vunpack.c.h.b16 %v1327
        %v4438 = vunpack.c.l.b16 %v1328
        %v4439 = vunpack.c.h.b16 %v1328
        %v4440 = vunpack.c.l.b16 %v1329
        %v4441 = vunpack.c.h.b16 %v1329
        %v4442 = vunpack.c.l.b16 %v1330
        %v4443 = vunpack.c.h.b16 %v1330
        %v4444 = vunpack.c.l.b16 %v1331
        %v4445 = vunpack.c.h.b16 %v1331
        %v4446 = vunpack.c.l.b16 %v1332
        %v4447 = vunpack.c.h.b16 %v1332
        %v4448 = vunpack.c.l.b16 %v1333
        %v4449 = vunpack.c.h.b16 %v1333
        %v4450 = vunpack.c.l.b16 %v1334
        %v4451 = vunpack.c.h.b16 %v1334
        %v4452 = vunpack.c.l.b16 %v1335
        %v4453 = vunpack.c.h.b16 %v1335
        %v4454 = vunpack.c.l.b16 %v1336
        %v4455 = vunpack.c.h.b16 %v1336
        %v4456 = vunpack.c.l.b16 %v1337
        %v4457 = vunpack.c.h.b16 %v1337
        %v4458 = vunpack.c.l.b16 %v1338
        %v4459 = vunpack.c.h.b16 %v1338
        %v4460 = vunpack.c.l.b16 %v1339
        %v4461 = vunpack.c.h.b16 %v1339
        %v4462 = vunpack.c.l.b16 %v1340
        %v4463 = vunpack.c.h.b16 %v1340
        %v4464 = vunpack.c.l.b16 %v1341
        %v4465 = vunpack.c.h.b16 %v1341
        %v4466 = vunpack.c.l.b16 %v1342
        %v4467 = vunpack.c.h.b16 %v1342
        %v4468 = vunpack.c.l.b16 %v1343
        %v4469 = vunpack.c.h.b16 %v1343
        %v4470 = vunpack.c.l.b16 %v1344
        %v4471 = vunpack.c.h.b16 %v1344
        %v4472 = vunpack.c.l.b16 %v1345
        %v4473 = vunpack.c.h.b16 %v1345
        %v4474 = vunpack.c.l.b16 %v1346
        %v4475 = vunpack.c.h.b16 %v1346
        %v4476 = vunpack.c.l.b16 %v1347
        %v4477 = vunpack.c.h.b16 %v1347
        %v4478 = vunpack.c.l.b16 %v1348
        %v4479 = vunpack.c.h.b16 %v1348
        %v4480 = vunpack.c.l.b16 %v1349
        %v4481 = vunpack.c.h.b16 %v1349
        %v4482 = vunpack.c.l.b16 %v1350
        %v4483 = vunpack.c.h.b16 %v1350
        %v4484 = vunpack.c.l.b16 %v1351
        %v4485 = vunpack.c.h.b16 %v1351
        %v4486 = vunpack.c.l.b16 %v1352
        %v4487 = vunpack.c.h.b16 %v1352
        %v4488 = vunpack.c.l.b16 %v1353
        %v4489 = vunpack.c.h.b16 %v1353
        %v4490 = vunpack.c.l.b16 %v1354
        %v4491 = vunpack.c.h.b16 %v1354
        %v4492 = vunpack.c.l.b16 %v1355
        %v4493 = vunpack.c.h.b16 %v1355
        %v4494 = vunpack.c.l.b16 %v1356
        %v4495 = vunpack.c.h.b16 %v1356
        %v4496 = vunpack.c.l.b16 %v1357
        %v4497 = vunpack.c.h.b16 %v1357
        %v4498 = vunpack.c.l.b16 %v1358
        %v4499 = vunpack.c.h.b16 %v1358
        %v4500 = vunpack.c.l.b16 %v1359
        %v4501 = vunpack.c.h.b16 %v1359
        %v4502 = vunpack.c.l.b16 %v1360
        %v4503 = vunpack.c.h.b16 %v1360
        %v4504 = vunpack.c.l.b16 %v1361
        %v4505 = vunpack.c.h.b16 %v1361
        %v4506 = vunpack.c.l.b16 %v1362
        %v4507 = vunpack.c.h.b16 %v1362
        %v4508 = vunpack.c.l.b16 %v1363
        %v4509 = vunpack.c.h.b16 %v1363
        %v4510 = vunpack.c.l.b16 %v1364
        %v4511 = vunpack.c.h.b16 %v1364
        %v4512 = vunpack.c.l.b16 %v1365
        %v4513 = vunpack.c.h.b16 %v1365
        %v4514 = vunpack.c.l.b16 %v1366
        %v4515 = vunpack.c.h.b16 %v1366
        %v4516 = vunpack.c.l.b16 %v1367
        %v4517 = vunpack.c.h.b16 %v1367
        %v4518 = vunpack.c.l.b16 %v1368
        %v4519 = vunpack.c.h.b16 %v1368
        %v4520 = vunpack.c.l.b16 %v1369
        %v4521 = vunpack.c.h.b16 %v1369
        %v4522 = vunpack.c.l.b16 %v1370
        %v4523 = vunpack.c.h.b16 %v1370
        %v4524 = vunpack.c.l.b16 %v1371
        %v4525 = vunpack.c.h.b16 %v1371
        %v4526 = vunpack.c.l.b16 %v1372
        %v4527 = vunpack.c.h.b16 %v1372
        %v4528 = vunpack.c.l.b16 %v1373
        %v4529 = vunpack.c.h.b16 %v1373
        %v4530 = vunpack.c.l.b16 %v1374
        %v4531 = vunpack.c.h.b16 %v1374
        %v4532 = vunpack.c.l.b16 %v1375
        %v4533 = vunpack.c.h.b16 %v1375
        %v4534 = vunpack.c.l.b16 %v1376
        %v4535 = vunpack.c.h.b16 %v1376
        %v4536 = vunpack.c.l.b16 %v1377
        %v4537 = vunpack.c.h.b16 %v1377
        %v4538 = vunpack.c.l.b16 %v1378
        %v4539 = vunpack.c.h.b16 %v1378
        %v4540 = vunpack.c.l.b16 %v1379
        %v4541 = vunpack.c.h.b16 %v1379
        %v4542 = vunpack.c.l.b16 %v1380
        %v4543 = vunpack.c.h.b16 %v1380
        %v4544 = vunpack.c.l.b16 %v1381
        %v4545 = vunpack.c.h.b16 %v1381
        %v4546 = vunpack.c.l.b16 %v1382
        %v4547 = vunpack.c.h.b16 %v1382
        %v4548 = vunpack.c.l.b16 %v1383
        %v4549 = vunpack.c.h.b16 %v1383
        %v4550 = vunpack.c.l.b16 %v1384
        %v4551 = vunpack.c.h.b16 %v1384
        %v4552 = vunpack.c.l.b16 %v1385
        %v4553 = vunpack.c.h.b16 %v1385
        %v4554 = vunpack.c.l.b16 %v1386
        %v4555 = vunpack.c.h.b16 %v1386
        %v4556 = vunpack.c.l.b16 %v1387
        %v4557 = vunpack.c.h.b16 %v1387
        %v4558 = vunpack.c.l.b16 %v1388
        %v4559 = vunpack.c.h.b16 %v1388
        %v4560 = vunpack.c.l.b16 %v1389
        %v4561 = vunpack.c.h.b16 %v1389
        %v4562 = vunpack.c.l.b16 %v1390
        %v4563 = vunpack.c.h.b16 %v1390
        %v4564 = vunpack.c.l.b16 %v1391
        %v4565 = vunpack.c.h.b16 %v1391
        %v4566 = vunpack.c.l.b16 %v1392
        %v4567 = vunpack.c.h.b16 %v1392
        %v4568 = vunpack.c.l.b16 %v1393
        %v4569 = vunpack.c.h.b16 %v1393
        %v4570 = vunpack.c.l.b16 %v1394
        %v4571 = vunpack.c.h.b16 %v1394
        %v4572 = vunpack.c.l.b16 %v1395
        %v4573 = vunpack.c.h.b16 %v1395
        %v4574 = vunpack.c.l.b16 %v1396
        %v4575 = vunpack.c.h.b16 %v1396
        %v4576 = vunpack.c.l.b16 %v1397
        %v4577 = vunpack.c.h.b16 %v1397
        %v4578 = vunpack.c.l.b16 %v1398
        %v4579 = vunpack.c.h.b16 %v1398
        %v4580 = vunpack.c.l.b16 %v1399
        %v4581 = vunpack.c.h.b16 %v1399
        %v4582 = vunpack.c.l.b16 %v1400
        %v4583 = vunpack.c.h.b16 %v1400
        %v4584 = vunpack.c.l.b16 %v1401
        %v4585 = vunpack.c.h.b16 %v1401
        %v4586 = vunpack.c.l.b16 %v1402
        %v4587 = vunpack.c.h.b16 %v1402
        %v4588 = vunpack.c.l.b16 %v1403
        %v4589 = vunpack.c.h.b16 %v1403
        %v4590 = vunpack.c.l.b16 %v1404
        %v4591 = vunpack.c.h.b16 %v1404
        %v4592 = vunpack.c.l.b16 %v1405
        %v4593 = vunpack.c.h.b16 %v1405
        %v4594 = vunpack.c.l.b16 %v1406
        %v4595 = vunpack.c.h.b16 %v1406
        %v4596 = vunpack.c.l.b16 %v1407
        %v4597 = vunpack.c.h.b16 %v1407
        %v4598 = vunpack.c.l.b16 %v1408
        %v4599 = vunpack.c.h.b16 %v1408
        %v4600 = vunpack.c.l.b16 %v1409
        %v4601 = vunpack.c.h.b16 %v1409
        %v4602 = vunpack.c.l.b16 %v1410
        %v4603 = vunpack.c.h.b16 %v1410
        %v4604 = vunpack.c.l.b16 %v1411
        %v4605 = vunpack.c.h.b16 %v1411
        %v4606 = vunpack.c.l.b16 %v1412
        %v4607 = vunpack.c.h.b16 %v1412
        %v4608 = vunpack.c.l.b16 %v1413
        %v4609 = vunpack.c.h.b16 %v1413
        %v4610 = vunpack.c.l.b16 %v1414
        %v4611 = vunpack.c.h.b16 %v1414
        %v4612 = vunpack.c.l.b16 %v1415
        %v4613 = vunpack.c.h.b16 %v1415
        %v4614 = vunpack.c.l.b16 %v1416
        %v4615 = vunpack.c.h.b16 %v1416
        %v4616 = vunpack.c.l.b16 %v1417
        %v4617 = vunpack.c.h.b16 %v1417
        %v4618 = vunpack.c.l.b16 %v1418
        %v4619 = vunpack.c.h.b16 %v1418
        %v4620 = vunpack.c.l.b16 %v1419
        %v4621 = vunpack.c.h.b16 %v1419
        %v4622 = vunpack.c.l.b16 %v1420
        %v4623 = vunpack.c.h.b16 %v1420
        %v4624 = vunpack.c.l.b16 %v1421
        %v4625 = vunpack.c.h.b16 %v1421
        %v4626 = vunpack.c.l.b16 %v1422
        %v4627 = vunpack.c.h.b16 %v1422
        %v4628 = vunpack.c.l.b16 %v1423
        %v4629 = vunpack.c.h.b16 %v1423
        %v4630 = vunpack.c.l.b16 %v1424
        %v4631 = vunpack.c.h.b16 %v1424
        %v4632 = vunpack.c.l.b16 %v1425
        %v4633 = vunpack.c.h.b16 %v1425
        %v4634 = vunpack.c.l.b16 %v1426
        %v4635 = vunpack.c.h.b16 %v1426
        %v4636 = vunpack.c.l.b16 %v1427
        %v4637 = vunpack.c.h.b16 %v1427
        %v4638 = vunpack.c.l.b16 %v1428
        %v4639 = vunpack.c.h.b16 %v1428
        %v4640 = vunpack.c.l.b16 %v1429
        %v4641 = vunpack.c.h.b16 %v1429
        %v4642 = vunpack.c.l.b16 %v1430
        %v4643 = vunpack.c.h.b16 %v1430
        %v4644 = vunpack.c.l.b16 %v1431
        %v4645 = vunpack.c.h.b16 %v1431
        %v4646 = vunpack.c.l.b16 %v1432
        %v4647 = vunpack.c.h.b16 %v1432
        %v4648 = vunpack.c.l.b16 %v1433
        %v4649 = vunpack.c.h.b16 %v1433
        %v4650 = vunpack.c.l.b16 %v1434
        %v4651 = vunpack.c.h.b16 %v1434
        %v4652 = vunpack.c.l.b16 %v1435
        %v4653 = vunpack.c.h.b16 %v1435
        %v4654 = vunpack.c.l.b16 %v1436
        %v4655 = vunpack.c.h.b16 %v1436
        %v4656 = vunpack.c.l.b16 %v1437
        %v4657 = vunpack.c.h.b16 %v1437
        %v4658 = vunpack.c.l.b16 %v1438
        %v4659 = vunpack.c.h.b16 %v1438
        %v4660 = vunpack.c.l.b16 %v1439
        %v4661 = vunpack.c.h.b16 %v1439
        %v4662 = vunpack.c.l.b16 %v1440
        %v4663 = vunpack.c.h.b16 %v1440
        %v4664 = vunpack.c.l.b16 %v1441
        %v4665 = vunpack.c.h.b16 %v1441
        %v4666 = vunpack.c.l.b16 %v1442
        %v4667 = vunpack.c.h.b16 %v1442
        %v4668 = vunpack.c.l.b16 %v1443
        %v4669 = vunpack.c.h.b16 %v1443
        %v4670 = vunpack.c.l.b16 %v1444
        %v4671 = vunpack.c.h.b16 %v1444
        %v4672 = vunpack.c.l.b16 %v1445
        %v4673 = vunpack.c.h.b16 %v1445
        %v4674 = vunpack.c.l.b16 %v1446
        %v4675 = vunpack.c.h.b16 %v1446
        %v4676 = vunpack.c.l.b16 %v1447
        %v4677 = vunpack.c.h.b16 %v1447
        %v4678 = vunpack.c.l.b16 %v1448
        %v4679 = vunpack.c.h.b16 %v1448
        %v4680 = vunpack.c.l.b16 %v1449
        %v4681 = vunpack.c.h.b16 %v1449
        %v4682 = vpack.c.b16 %v2638, %v2634
        %v4683 = vpack.c.b16 %v2639, %v2635
        %v4684 = vpack.c.b16 %v2640, %v2636
        %v4685 = vpack.c.b16 %v2641, %v2637
        %v4686 = vpack.c.b16 %v2646, %v2642
        %v4687 = vpack.c.b16 %v2647, %v2643
        %v4688 = vpack.c.b16 %v2648, %v2644
        %v4689 = vpack.c.b16 %v2649, %v2645
        %v4690 = vpack.c.b16 %v2654, %v2650
        %v4691 = vpack.c.b16 %v2655, %v2651
        %v4692 = vpack.c.b16 %v2656, %v2652
        %v4693 = vpack.c.b16 %v2657, %v2653
        %v4694 = vpack.c.b16 %v2662, %v2658
        %v4695 = vpack.c.b16 %v2663, %v2659
        %v4696 = vpack.c.b16 %v2664, %v2660
        %v4697 = vpack.c.b16 %v2665, %v2661
        %v4698 = vpack.c.b16 %v2670, %v2666
        %v4699 = vpack.c.b16 %v2671, %v2667
        %v4700 = vpack.c.b16 %v2672, %v2668
        %v4701 = vpack.c.b16 %v2673, %v2669
        %v4702 = vpack.c.b16 %v2678, %v2674
        %v4703 = vpack.c.b16 %v2679, %v2675
        %v4704 = vpack.c.b16 %v2680, %v2676
        %v4705 = vpack.c.b16 %v2681, %v2677
        %v4706 = vpack.c.b16 %v2686, %v2682
        %v4707 = vpack.c.b16 %v2687, %v2683
        %v4708 = vpack.c.b16 %v2688, %v2684
        %v4709 = vpack.c.b16 %v2689, %v2685
        %v4710 = vpack.c.b16 %v2694, %v2690
        %v4711 = vpack.c.b16 %v2695, %v2691
        %v4712 = vpack.c.b16 %v2696, %v2692
        %v4713 = vpack.c.b16 %v2697, %v2693
        %v4714 = vpack.c.b16 %v2702, %v2698
        %v4715 = vpack.c.b16 %v2703, %v2699
        %v4716 = vpack.c.b16 %v2704, %v2700
        %v4717 = vpack.c.b16 %v2705, %v2701
        %v4718 = vpack.c.b16 %v2710, %v2706
        %v4719 = vpack.c.b16 %v2711, %v2707
        %v4720 = vpack.c.b16 %v2712, %v2708
        %v4721 = vpack.c.b16 %v2713, %v2709
        %v4722 = vpack.c.b16 %v2718, %v2714
        %v4723 = vpack.c.b16 %v2719, %v2715
        %v4724 = vpack.c.b16 %v2720, %v2716
        %v4725 = vpack.c.b16 %v2721, %v2717
        %v4726 = vpack.c.b16 %v2726, %v2722
        %v4727 = vpack.c.b16 %v2727, %v2723
        %v4728 = vpack.c.b16 %v2728, %v2724
        %v4729 = vpack.c.b16 %v2729, %v2725
        %v4730 = vpack.c.b16 %v2734, %v2730
        %v4731 = vpack.c.b16 %v2735, %v2731
        %v4732 = vpack.c.b16 %v2736, %v2732
        %v4733 = vpack.c.b16 %v2737, %v2733
        %v4734 = vpack.c.b16 %v2742, %v2738
        %v4735 = vpack.c.b16 %v2743, %v2739
        %v4736 = vpack.c.b16 %v2744, %v2740
        %v4737 = vpack.c.b16 %v2745, %v2741
        %v4738 = vpack.c.b16 %v2750, %v2746
        %v4739 = vpack.c.b16 %v2751, %v2747
        %v4740 = vpack.c.b16 %v2752, %v2748
        %v4741 = vpack.c.b16 %v2753, %v2749
        %v4742 = vpack.c.b16 %v2758, %v2754
        %v4743 = vpack.c.b16 %v2759, %v2755
        %v4744 = vpack.c.b16 %v2760, %v2756
        %v4745 = vpack.c.b16 %v2761, %v2757
        %v4746 = vpack.c.b16 %v2766, %v2762
        %v4747 = vpack.c.b16 %v2767, %v2763
        %v4748 = vpack.c.b16 %v2768, %v2764
        %v4749 = vpack.c.b16 %v2769, %v2765
        %v4750 = vpack.c.b16 %v2774, %v2770
        %v4751 = vpack.c.b16 %v2775, %v2771
        %v4752 = vpack.c.b16 %v2776, %v2772
        %v4753 = vpack.c.b16 %v2777, %v2773
        %v4754 = vpack.c.b16 %v2782, %v2778
        %v4755 = vpack.c.b16 %v2783, %v2779
        %v4756 = vpack.c.b16 %v2784, %v2780
        %v4757 = vpack.c.b16 %v2785, %v2781
        %v4758 = vpack.c.b16 %v2790, %v2786
        %v4759 = vpack.c.b16 %v2791, %v2787
        %v4760 = vpack.c.b16 %v2792, %v2788
        %v4761 = vpack.c.b16 %v2793, %v2789
        %v4762 = vpack.c.b16 %v2798, %v2794
        %v4763 = vpack.c.b16 %v2799, %v2795
        %v4764 = vpack.c.b16 %v2800, %v2796
        %v4765 = vpack.c.b16 %v2801, %v2797
        %v4766 = vpack.c.b16 %v2806, %v2802
        %v4767 = vpack.c.b16 %v2807, %v2803
        %v4768 = vpack.c.b16 %v2808, %v2804
        %v4769 = vpack.c.b16 %v2809, %v2805
        %v4770 = vpack.c.b16 %v2814, %v2810
        %v4771 = vpack.c.b16 %v2815, %v2811
        %v4772 = vpack.c.b16 %v2816, %v2812
        %v4773 = vpack.c.b16 %v2817, %v2813
        %v4774 = vpack.c.b16 %v2822, %v2818
        %v4775 = vpack.c.b16 %v2823, %v2819
        %v4776 = vpack.c.b16 %v2824, %v2820
        %v4777 = vpack.c.b16 %v2825, %v2821
        %v4778 = vpack.c.b16 %v2830, %v2826
        %v4779 = vpack.c.b16 %v2831, %v2827
        %v4780 = vpack.c.b16 %v2832, %v2828
        %v4781 = vpack.c.b16 %v2833, %v2829
        %v4782 = vpack.c.b16 %v2838, %v2834
        %v4783 = vpack.c.b16 %v2839, %v2835
        %v4784 = vpack.c.b16 %v2840, %v2836
        %v4785 = vpack.c.b16 %v2841, %v2837
        %v4786 = vpack.c.b16 %v2846, %v2842
        %v4787 = vpack.c.b16 %v2847, %v2843
        %v4788 = vpack.c.b16 %v2848, %v2844
        %v4789 = vpack.c.b16 %v2849, %v2845
        %v4790 = vpack.c.b16 %v2854, %v2850
        %v4791 = vpack.c.b16 %v2855, %v2851
        %v4792 = vpack.c.b16 %v2856, %v2852
        %v4793 = vpack.c.b16 %v2857, %v2853
        %v4794 = vpack.c.b16 %v2862, %v2858
        %v4795 = vpack.c.b16 %v2863, %v2859
        %v4796 = vpack.c.b16 %v2864, %v2860
        %v4797 = vpack.c.b16 %v2865, %v2861
        %v4798 = vpack.c.b16 %v2870, %v2866
        %v4799 = vpack.c.b16 %v2871, %v2867
        %v4800 = vpack.c.b16 %v2872, %v2868
        %v4801 = vpack.c.b16 %v2873, %v2869
        %v4802 = vpack.c.b16 %v2878, %v2874
        %v4803 = vpack.c.b16 %v2879, %v2875
        %v4804 = vpack.c.b16 %v2880, %v2876
        %v4805 = vpack.c.b16 %v2881, %v2877
        %v4806 = vpack.c.b16 %v2886, %v2882
        %v4807 = vpack.c.b16 %v2887, %v2883
        %v4808 = vpack.c.b16 %v2888, %v2884
        %v4809 = vpack.c.b16 %v2889, %v2885
        %v4810 = vpack.c.b16 %v2894, %v2890
        %v4811 = vpack.c.b16 %v2895, %v2891
        %v4812 = vpack.c.b16 %v2896, %v2892
        %v4813 = vpack.c.b16 %v2897, %v2893
        %v4814 = vpack.c.b16 %v2902, %v2898
        %v4815 = vpack.c.b16 %v2903, %v2899
        %v4816 = vpack.c.b16 %v2904, %v2900
        %v4817 = vpack.c.b16 %v2905, %v2901
        %v4818 = vpack.c.b16 %v2910, %v2906
        %v4819 = vpack.c.b16 %v2911, %v2907
        %v4820 = vpack.c.b16 %v2912, %v2908
        %v4821 = vpack.c.b16 %v2913, %v2909
        %v4822 = vpack.c.b16 %v2918, %v2914
        %v4823 = vpack.c.b16 %v2919, %v2915
        %v4824 = vpack.c.b16 %v2920, %v2916
        %v4825 = vpack.c.b16 %v2921, %v2917
        %v4826 = vpack.c.b16 %v2926, %v2922
        %v4827 = vpack.c.b16 %v2927, %v2923
        %v4828 = vpack.c.b16 %v2928, %v2924
        %v4829 = vpack.c.b16 %v2929, %v2925
        %v4830 = vpack.c.b16 %v2934, %v2930
        %v4831 = vpack.c.b16 %v2935, %v2931
        %v4832 = vpack.c.b16 %v2936, %v2932
        %v4833 = vpack.c.b16 %v2937, %v2933
        %v4834 = vpack.c.b16 %v2942, %v2938
        %v4835 = vpack.c.b16 %v2943, %v2939
        %v4836 = vpack.c.b16 %v2944, %v2940
        %v4837 = vpack.c.b16 %v2945, %v2941
        %v4838 = vpack.c.b16 %v2950, %v2946
        %v4839 = vpack.c.b16 %v2951, %v2947
        %v4840 = vpack.c.b16 %v2952, %v2948
        %v4841 = vpack.c.b16 %v2953, %v2949
        %v4842 = vpack.c.b16 %v2958, %v2954
        %v4843 = vpack.c.b16 %v2959, %v2955
        %v4844 = vpack.c.b16 %v2960, %v2956
        %v4845 = vpack.c.b16 %v2961, %v2957
        %v4846 = vpack.c.b16 %v2966, %v2962
        %v4847 = vpack.c.b16 %v2967, %v2963
        %v4848 = vpack.c.b16 %v2968, %v2964
        %v4849 = vpack.c.b16 %v2969, %v2965
        %v4850 = vpack.c.b16 %v2974, %v2970
        %v4851 = vpack.c.b16 %v2975, %v2971
        %v4852 = vpack.c.b16 %v2976, %v2972
        %v4853 = vpack.c.b16 %v2977, %v2973
        %v4854 = vpack.c.b16 %v2982, %v2978
        %v4855 = vpack.c.b16 %v2983, %v2979
        %v4856 = vpack.c.b16 %v2984, %v2980
        %v4857 = vpack.c.b16 %v2985, %v2981
        %v4858 = vpack.c.b16 %v2990, %v2986
        %v4859 = vpack.c.b16 %v2991, %v2987
        %v4860 = vpack.c.b16 %v2992, %v2988
        %v4861 = vpack.c.b16 %v2993, %v2989
        %v4862 = vpack.c.b16 %v2998, %v2994
        %v4863 = vpack.c.b16 %v2999, %v2995
        %v4864 = vpack.c.b16 %v3000, %v2996
        %v4865 = vpack.c.b16 %v3001, %v2997
        %v4866 = vpack.c.b16 %v3006, %v3002
        %v4867 = vpack.c.b16 %v3007, %v3003
        %v4868 = vpack.c.b16 %v3008, %v3004
        %v4869 = vpack.c.b16 %v3009, %v3005
        %v4870 = vpack.c.b16 %v3014, %v3010
        %v4871 = vpack.c.b16 %v3015, %v3011
        %v4872 = vpack.c.b16 %v3016, %v3012
        %v4873 = vpack.c.b16 %v3017, %v3013
        %v4874 = vpack.c.b16 %v3022, %v3018
        %v4875 = vpack.c.b16 %v3023, %v3019
        %v4876 = vpack.c.b16 %v3024, %v3020
        %v4877 = vpack.c.b16 %v3025, %v3021
        %v4878 = vpack.c.b16 %v3030, %v3026
        %v4879 = vpack.c.b16 %v3031, %v3027
        %v4880 = vpack.c.b16 %v3032, %v3028
        %v4881 = vpack.c.b16 %v3033, %v3029
        %v4882 = vpack.c.b16 %v3038, %v3034
        %v4883 = vpack.c.b16 %v3039, %v3035
        %v4884 = vpack.c.b16 %v3040, %v3036
        %v4885 = vpack.c.b16 %v3041, %v3037
        %v4886 = vpack.c.b16 %v3046, %v3042
        %v4887 = vpack.c.b16 %v3047, %v3043
        %v4888 = vpack.c.b16 %v3048, %v3044
        %v4889 = vpack.c.b16 %v3049, %v3045
        %v4890 = vpack.c.b16 %v3054, %v3050
        %v4891 = vpack.c.b16 %v3055, %v3051
        %v4892 = vpack.c.b16 %v3056, %v3052
        %v4893 = vpack.c.b16 %v3057, %v3053
        %v4894 = vpack.c.b16 %v3062, %v3058
        %v4895 = vpack.c.b16 %v3063, %v3059
        %v4896 = vpack.c.b16 %v3064, %v3060
        %v4897 = vpack.c.b16 %v3065, %v3061
        %v4898 = vpack.c.b16 %v3070, %v3066
        %v4899 = vpack.c.b16 %v3071, %v3067
        %v4900 = vpack.c.b16 %v3072, %v3068
        %v4901 = vpack.c.b16 %v3073, %v3069
        %v4902 = vpack.c.b16 %v3078, %v3074
        %v4903 = vpack.c.b16 %v3079, %v3075
        %v4904 = vpack.c.b16 %v3080, %v3076
        %v4905 = vpack.c.b16 %v3081, %v3077
        %v4906 = vpack.c.b16 %v3086, %v3082
        %v4907 = vpack.c.b16 %v3087, %v3083
        %v4908 = vpack.c.b16 %v3088, %v3084
        %v4909 = vpack.c.b16 %v3089, %v3085
        %v4910 = vpack.c.b16 %v3094, %v3090
        %v4911 = vpack.c.b16 %v3095, %v3091
        %v4912 = vpack.c.b16 %v3096, %v3092
        %v4913 = vpack.c.b16 %v3097, %v3093
        %v4914 = vpack.c.b16 %v3102, %v3098
        %v4915 = vpack.c.b16 %v3103, %v3099
        %v4916 = vpack.c.b16 %v3104, %v3100
        %v4917 = vpack.c.b16 %v3105, %v3101
        %v4918 = vpack.c.b16 %v3110, %v3106
        %v4919 = vpack.c.b16 %v3111, %v3107
        %v4920 = vpack.c.b16 %v3112, %v3108
        %v4921 = vpack.c.b16 %v3113, %v3109
        %v4922 = vpack.c.b16 %v3118, %v3114
        %v4923 = vpack.c.b16 %v3119, %v3115
        %v4924 = vpack.c.b16 %v3120, %v3116
        %v4925 = vpack.c.b16 %v3121, %v3117
        %v4926 = vpack.c.b16 %v3126, %v3122
        %v4927 = vpack.c.b16 %v3127, %v3123
        %v4928 = vpack.c.b16 %v3128, %v3124
        %v4929 = vpack.c.b16 %v3129, %v3125
        %v4930 = vpack.c.b16 %v3134, %v3130
        %v4931 = vpack.c.b16 %v3135, %v3131
        %v4932 = vpack.c.b16 %v3136, %v3132
        %v4933 = vpack.c.b16 %v3137, %v3133
        %v4934 = vpack.c.b16 %v3142, %v3138
        %v4935 = vpack.c.b16 %v3143, %v3139
        %v4936 = vpack.c.b16 %v3144, %v3140
        %v4937 = vpack.c.b16 %v3145, %v3141
        %v4938 = vpack.c.b16 %v3150, %v3146
        %v4939 = vpack.c.b16 %v3151, %v3147
        %v4940 = vpack.c.b16 %v3152, %v3148
        %v4941 = vpack.c.b16 %v3153, %v3149
        %v4942 = vpack.c.b16 %v3158, %v3154
        %v4943 = vpack.c.b16 %v3159, %v3155
        %v4944 = vpack.c.b16 %v3160, %v3156
        %v4945 = vpack.c.b16 %v3161, %v3157
        %v4946 = vpack.c.b16 %v3166, %v3162
        %v4947 = vpack.c.b16 %v3167, %v3163
        %v4948 = vpack.c.b16 %v3168, %v3164
        %v4949 = vpack.c.b16 %v3169, %v3165
        %v4950 = vpack.c.b16 %v3174, %v3170
        %v4951 = vpack.c.b16 %v3175, %v3171
        %v4952 = vpack.c.b16 %v3176, %v3172
        %v4953 = vpack.c.b16 %v3177, %v3173
        %v4954 = vpack.c.b16 %v3182, %v3178
        %v4955 = vpack.c.b16 %v3183, %v3179
        %v4956 = vpack.c.b16 %v3184, %v3180
        %v4957 = vpack.c.b16 %v3185, %v3181
        %v4958 = vpack.c.b16 %v3190, %v3186
        %v4959 = vpack.c.b16 %v3191, %v3187
        %v4960 = vpack.c.b16 %v3192, %v3188
        %v4961 = vpack.c.b16 %v3193, %v3189
        %v4962 = vpack.c.b16 %v3198, %v3194
        %v4963 = vpack.c.b16 %v3199, %v3195
        %v4964 = vpack.c.b16 %v3200, %v3196
        %v4965 = vpack.c.b16 %v3201, %v3197
        %v4966 = vpack.c.b16 %v3206, %v3202
        %v4967 = vpack.c.b16 %v3207, %v3203
        %v4968 = vpack.c.b16 %v3208, %v3204
        %v4969 = vpack.c.b16 %v3209, %v3205
        %v4970 = vpack.c.b16 %v3214, %v3210
        %v4971 = vpack.c.b16 %v3215, %v3211
        %v4972 = vpack.c.b16 %v3216, %v3212
        %v4973 = vpack.c.b16 %v3217, %v3213
        %v4974 = vpack.c.b16 %v3222, %v3218
        %v4975 = vpack.c.b16 %v3223, %v3219
        %v4976 = vpack.c.b16 %v3224, %v3220
        %v4977 = vpack.c.b16 %v3225, %v3221
        %v4978 = vpack.c.b16 %v3230, %v3226
        %v4979 = vpack.c.b16 %v3231, %v3227
        %v4980 = vpack.c.b16 %v3232, %v3228
        %v4981 = vpack.c.b16 %v3233, %v3229
        %v4982 = vpack.c.b16 %v3238, %v3234
        %v4983 = vpack.c.b16 %v3239, %v3235
        %v4984 = vpack.c.b16 %v3240, %v3236
        %v4985 = vpack.c.b16 %v3241, %v3237
        %v4986 = vpack.c.b16 %v3246, %v3242
        %v4987 = vpack.c.b16 %v3247, %v3243
        %v4988 = vpack.c.b16 %v3248, %v3244
        %v4989 = vpack.c.b16 %v3249, %v3245
        %v4990 = vpack.c.b16 %v3254, %v3250
        %v4991 = vpack.c.b16 %v3255, %v3251
        %v4992 = vpack.c.b16 %v3256, %v3252
        %v4993 = vpack.c.b16 %v3257, %v3253
        %v4994 = vpack.c.b16 %v3262, %v3258
        %v4995 = vpack.c.b16 %v3263, %v3259
        %v4996 = vpack.c.b16 %v3264, %v3260
        %v4997 = vpack.c.b16 %v3265, %v3261
        %v4998 = vpack.c.b16 %v3270, %v3266
        %v4999 = vpack.c.b16 %v3271, %v3267
        %v5000 = vpack.c.b16 %v3272, %v3268
        %v5001 = vpack.c.b16 %v3273, %v3269
        %v5002 = vpack.c.b16 %v3278, %v3274
        %v5003 = vpack.c.b16 %v3279, %v3275
        %v5004 = vpack.c.b16 %v3280, %v3276
        %v5005 = vpack.c.b16 %v3281, %v3277
        %v5006 = vpack.c.b16 %v3286, %v3282
        %v5007 = vpack.c.b16 %v3287, %v3283
        %v5008 = vpack.c.b16 %v3288, %v3284
        %v5009 = vpack.c.b16 %v3289, %v3285
        %v5010 = vpack.c.b16 %v3294, %v3290
        %v5011 = vpack.c.b16 %v3295, %v3291
        %v5012 = vpack.c.b16 %v3296, %v3292
        %v5013 = vpack.c.b16 %v3297, %v3293
        %v5014 = vpack.c.b16 %v3302, %v3298
        %v5015 = vpack.c.b16 %v3303, %v3299
        %v5016 = vpack.c.b16 %v3304, %v3300
        %v5017 = vpack.c.b16 %v3305, %v3301
        %v5018 = vpack.c.b16 %v3310, %v3306
        %v5019 = vpack.c.b16 %v3311, %v3307
        %v5020 = vpack.c.b16 %v3312, %v3308
        %v5021 = vpack.c.b16 %v3313, %v3309
        %v5022 = vpack.c.b16 %v3318, %v3314
        %v5023 = vpack.c.b16 %v3319, %v3315
        %v5024 = vpack.c.b16 %v3320, %v3316
        %v5025 = vpack.c.b16 %v3321, %v3317
        %v5026 = vpack.c.b16 %v3326, %v3322
        %v5027 = vpack.c.b16 %v3327, %v3323
        %v5028 = vpack.c.b16 %v3328, %v3324
        %v5029 = vpack.c.b16 %v3329, %v3325
        %v5030 = vpack.c.b16 %v3334, %v3330
        %v5031 = vpack.c.b16 %v3335, %v3331
        %v5032 = vpack.c.b16 %v3336, %v3332
        %v5033 = vpack.c.b16 %v3337, %v3333
        %v5034 = vpack.c.b16 %v3342, %v3338
        %v5035 = vpack.c.b16 %v3343, %v3339
        %v5036 = vpack.c.b16 %v3344, %v3340
        %v5037 = vpack.c.b16 %v3345, %v3341
        %v5038 = vpack.c.b16 %v3350, %v3346
        %v5039 = vpack.c.b16 %v3351, %v3347
        %v5040 = vpack.c.b16 %v3352, %v3348
        %v5041 = vpack.c.b16 %v3353, %v3349
        %v5042 = vpack.c.b16 %v3358, %v3354
        %v5043 = vpack.c.b16 %v3359, %v3355
        %v5044 = vpack.c.b16 %v3360, %v3356
        %v5045 = vpack.c.b16 %v3361, %v3357
        %v5046 = vpack.c.b16 %v3366, %v3362
        %v5047 = vpack.c.b16 %v3367, %v3363
        %v5048 = vpack.c.b16 %v3368, %v3364
        %v5049 = vpack.c.b16 %v3369, %v3365
        %v5050 = vpack.c.b16 %v3374, %v3370
        %v5051 = vpack.c.b16 %v3375, %v3371
        %v5052 = vpack.c.b16 %v3376, %v3372
        %v5053 = vpack.c.b16 %v3377, %v3373
        %v5054 = vpack.c.b16 %v3382, %v3378
        %v5055 = vpack.c.b16 %v3383, %v3379
        %v5056 = vpack.c.b16 %v3384, %v3380
        %v5057 = vpack.c.b16 %v3385, %v3381
        %v5058 = vpack.c.b16 %v3390, %v3386
        %v5059 = vpack.c.b16 %v3391, %v3387
        %v5060 = vpack.c.b16 %v3392, %v3388
        %v5061 = vpack.c.b16 %v3393, %v3389
        %v5062 = vpack.c.b16 %v3398, %v3394
        %v5063 = vpack.c.b16 %v3399, %v3395
        %v5064 = vpack.c.b16 %v3400, %v3396
        %v5065 = vpack.c.b16 %v3401, %v3397
        %v5066 = vpack.c.b16 %v3406, %v3402
        %v5067 = vpack.c.b16 %v3407, %v3403
        %v5068 = vpack.c.b16 %v3408, %v3404
        %v5069 = vpack.c.b16 %v3409, %v3405
        %v5070 = vpack.c.b16 %v3414, %v3410
        %v5071 = vpack.c.b16 %v3415, %v3411
        %v5072 = vpack.c.b16 %v3416, %v3412
        %v5073 = vpack.c.b16 %v3417, %v3413
        %v5074 = vpack.c.b16 %v3422, %v3418
        %v5075 = vpack.c.b16 %v3423, %v3419
        %v5076 = vpack.c.b16 %v3424, %v3420
        %v5077 = vpack.c.b16 %v3425, %v3421
        %v5078 = vpack.c.b16 %v3430, %v3426
        %v5079 = vpack.c.b16 %v3431, %v3427
        %v5080 = vpack.c.b16 %v3432, %v3428
        %v5081 = vpack.c.b16 %v3433, %v3429
        %v5082 = vpack.c.b16 %v3438, %v3434
        %v5083 = vpack.c.b16 %v3439, %v3435
        %v5084 = vpack.c.b16 %v3440, %v3436
        %v5085 = vpack.c.b16 %v3441, %v3437
        %v5086 = vpack.c.b16 %v3446, %v3442
        %v5087 = vpack.c.b16 %v3447, %v3443
        %v5088 = vpack.c.b16 %v3448, %v3444
        %v5089 = vpack.c.b16 %v3449, %v3445
        %v5090 = vpack.c.b16 %v3454, %v3450
        %v5091 = vpack.c.b16 %v3455, %v3451
        %v5092 = vpack.c.b16 %v3456, %v3452
        %v5093 = vpack.c.b16 %v3457, %v3453
        %v5094 = vpack.c.b16 %v3462, %v3458
        %v5095 = vpack.c.b16 %v3463, %v3459
        %v5096 = vpack.c.b16 %v3464, %v3460
        %v5097 = vpack.c.b16 %v3465, %v3461
        %v5098 = vpack.c.b16 %v3470, %v3466
        %v5099 = vpack.c.b16 %v3471, %v3467
        %v5100 = vpack.c.b16 %v3472, %v3468
        %v5101 = vpack.c.b16 %v3473, %v3469
        %v5102 = vpack.c.b16 %v3478, %v3474
        %v5103 = vpack.c.b16 %v3479, %v3475
        %v5104 = vpack.c.b16 %v3480, %v3476
        %v5105 = vpack.c.b16 %v3481, %v3477
        %v5106 = vpack.c.b16 %v3486, %v3482
        %v5107 = vpack.c.b16 %v3487, %v3483
        %v5108 = vpack.c.b16 %v3488, %v3484
        %v5109 = vpack.c.b16 %v3489, %v3485
        %v5110 = vpack.c.b16 %v3494, %v3490
        %v5111 = vpack.c.b16 %v3495, %v3491
        %v5112 = vpack.c.b16 %v3496, %v3492
        %v5113 = vpack.c.b16 %v3497, %v3493
        %v5114 = vpack.c.b16 %v3502, %v3498
        %v5115 = vpack.c.b16 %v3503, %v3499
        %v5116 = vpack.c.b16 %v3504, %v3500
        %v5117 = vpack.c.b16 %v3505, %v3501
        %v5118 = vpack.c.b16 %v3510, %v3506
        %v5119 = vpack.c.b16 %v3511, %v3507
        %v5120 = vpack.c.b16 %v3512, %v3508
        %v5121 = vpack.c.b16 %v3513, %v3509
        %v5122 = vpack.c.b16 %v3518, %v3514
        %v5123 = vpack.c.b16 %v3519, %v3515
        %v5124 = vpack.c.b16 %v3520, %v3516
        %v5125 = vpack.c.b16 %v3521, %v3517
        %v5126 = vpack.c.b16 %v3526, %v3522
        %v5127 = vpack.c.b16 %v3527, %v3523
        %v5128 = vpack.c.b16 %v3528, %v3524
        %v5129 = vpack.c.b16 %v3529, %v3525
        %v5130 = vpack.c.b16 %v3534, %v3530
        %v5131 = vpack.c.b16 %v3535, %v3531
        %v5132 = vpack.c.b16 %v3536, %v3532
        %v5133 = vpack.c.b16 %v3537, %v3533
        %v5134 = vpack.c.b16 %v3542, %v3538
        %v5135 = vpack.c.b16 %v3543, %v3539
        %v5136 = vpack.c.b16 %v3544, %v3540
        %v5137 = vpack.c.b16 %v3545, %v3541
        %v5138 = vpack.c.b16 %v3550, %v3546
        %v5139 = vpack.c.b16 %v3551, %v3547
        %v5140 = vpack.c.b16 %v3552, %v3548
        %v5141 = vpack.c.b16 %v3553, %v3549
        %v5142 = vpack.c.b16 %v3558, %v3554
        %v5143 = vpack.c.b16 %v3559, %v3555
        %v5144 = vpack.c.b16 %v3560, %v3556
        %v5145 = vpack.c.b16 %v3561, %v3557
        %v5146 = vpack.c.b16 %v3566, %v3562
        %v5147 = vpack.c.b16 %v3567, %v3563
        %v5148 = vpack.c.b16 %v3568, %v3564
        %v5149 = vpack.c.b16 %v3569, %v3565
        %v5150 = vpack.c.b16 %v3574, %v3570
        %v5151 = vpack.c.b16 %v3575, %v3571
        %v5152 = vpack.c.b16 %v3576, %v3572
        %v5153 = vpack.c.b16 %v3577, %v3573
        %v5154 = vpack.c.b16 %v3582, %v3578
        %v5155 = vpack.c.b16 %v3583, %v3579
        %v5156 = vpack.c.b16 %v3584, %v3580
        %v5157 = vpack.c.b16 %v3585, %v3581
        %v5158 = vpack.c.b16 %v3590, %v3586
        %v5159 = vpack.c.b16 %v3591, %v3587
        %v5160 = vpack.c.b16 %v3592, %v3588
        %v5161 = vpack.c.b16 %v3593, %v3589
        %v5162 = vpack.c.b16 %v3598, %v3594
        %v5163 = vpack.c.b16 %v3599, %v3595
        %v5164 = vpack.c.b16 %v3600, %v3596
        %v5165 = vpack.c.b16 %v3601, %v3597
        %v5166 = vpack.c.b16 %v3606, %v3602
        %v5167 = vpack.c.b16 %v3607, %v3603
        %v5168 = vpack.c.b16 %v3608, %v3604
        %v5169 = vpack.c.b16 %v3609, %v3605
        %v5170 = vpack.c.b16 %v3614, %v3610
        %v5171 = vpack.c.b16 %v3615, %v3611
        %v5172 = vpack.c.b16 %v3616, %v3612
        %v5173 = vpack.c.b16 %v3617, %v3613
        %v5174 = vpack.c.b16 %v3622, %v3618
        %v5175 = vpack.c.b16 %v3623, %v3619
        %v5176 = vpack.c.b16 %v3624, %v3620
        %v5177 = vpack.c.b16 %v3625, %v3621
        %v5178 = vpack.c.b16 %v3630, %v3626
        %v5179 = vpack.c.b16 %v3631, %v3627
        %v5180 = vpack.c.b16 %v3632, %v3628
        %v5181 = vpack.c.b16 %v3633, %v3629
        %v5182 = vpack.c.b16 %v3638, %v3634
        %v5183 = vpack.c.b16 %v3639, %v3635
        %v5184 = vpack.c.b16 %v3640, %v3636
        %v5185 = vpack.c.b16 %v3641, %v3637
        %v5186 = vpack.c.b16 %v3646, %v3642
        %v5187 = vpack.c.b16 %v3647, %v3643
        %v5188 = vpack.c.b16 %v3648, %v3644
        %v5189 = vpack.c.b16 %v3649, %v3645
        %v5190 = vpack.c.b16 %v3654, %v3650
        %v5191 = vpack.c.b16 %v3655, %v3651
        %v5192 = vpack.c.b16 %v3656, %v3652
        %v5193 = vpack.c.b16 %v3657, %v3653
        %v5194 = vpack.c.b16 %v3662, %v3658
        %v5195 = vpack.c.b16 %v3663, %v3659
        %v5196 = vpack.c.b16 %v3664, %v3660
        %v5197 = vpack.c.b16 %v3665, %v3661
        %v5198 = vpack.c.b16 %v3670, %v3666
        %v5199 = vpack.c.b16 %v3671, %v3667
        %v5200 = vpack.c.b16 %v3672, %v3668
        %v5201 = vpack.c.b16 %v3673, %v3669
        %v5202 = vpack.c.b16 %v3678, %v3674
        %v5203 = vpack.c.b16 %v3679, %v3675
        %v5204 = vpack.c.b16 %v3680, %v3676
        %v5205 = vpack.c.b16 %v3681, %v3677
        %v5206 = vpack.c.b16 %v3686, %v3682
        %v5207 = vpack.c.b16 %v3687, %v3683
        %v5208 = vpack.c.b16 %v3688, %v3684
        %v5209 = vpack.c.b16 %v3689, %v3685
        %v5210 = vpack.c.b16 %v3694, %v3690
        %v5211 = vpack.c.b16 %v3695, %v3691
        %v5212 = vpack.c.b16 %v3696, %v3692
        %v5213 = vpack.c.b16 %v3697, %v3693
        %v5214 = vpack.c.b16 %v3702, %v3698
        %v5215 = vpack.c.b16 %v3703, %v3699
        %v5216 = vpack.c.b16 %v3704, %v3700
        %v5217 = vpack.c.b16 %v3705, %v3701
        %v5218 = vpack.c.b16 %v3710, %v3706
        %v5219 = vpack.c.b16 %v3711, %v3707
        %v5220 = vpack.c.b16 %v3712, %v3708
        %v5221 = vpack.c.b16 %v3713, %v3709
        %v5222 = vpack.c.b16 %v3718, %v3714
        %v5223 = vpack.c.b16 %v3719, %v3715
        %v5224 = vpack.c.b16 %v3720, %v3716
        %v5225 = vpack.c.b16 %v3721, %v3717
        %v5226 = vpack.c.b16 %v3726, %v3722
        %v5227 = vpack.c.b16 %v3727, %v3723
        %v5228 = vpack.c.b16 %v3728, %v3724
        %v5229 = vpack.c.b16 %v3729, %v3725
        %v5230 = vpack.c.b16 %v3734, %v3730
        %v5231 = vpack.c.b16 %v3735, %v3731
        %v5232 = vpack.c.b16 %v3736, %v3732
        %v5233 = vpack.c.b16 %v3737, %v3733
        %v5234 = vpack.c.b16 %v3742, %v3738
        %v5235 = vpack.c.b16 %v3743, %v3739
        %v5236 = vpack.c.b16 %v3744, %v3740
        %v5237 = vpack.c.b16 %v3745, %v3741
        %v5238 = vpack.c.b16 %v3750, %v3746
        %v5239 = vpack.c.b16 %v3751, %v3747
        %v5240 = vpack.c.b16 %v3752, %v3748
        %v5241 = vpack.c.b16 %v3753, %v3749
        %v5242 = vpack.c.b16 %v3758, %v3754
        %v5243 = vpack.c.b16 %v3759, %v3755
        %v5244 = vpack.c.b16 %v3760, %v3756
        %v5245 = vpack.c.b16 %v3761, %v3757
        %v5246 = vpack.c.b16 %v3766, %v3762
        %v5247 = vpack.c.b16 %v3767, %v3763
        %v5248 = vpack.c.b16 %v3768, %v3764
        %v5249 = vpack.c.b16 %v3769, %v3765
        %v5250 = vpack.c.b16 %v3774, %v3770
        %v5251 = vpack.c.b16 %v3775, %v3771
        %v5252 = vpack.c.b16 %v3776, %v3772
        %v5253 = vpack.c.b16 %v3777, %v3773
        %v5254 = vpack.c.b16 %v3782, %v3778
        %v5255 = vpack.c.b16 %v3783, %v3779
        %v5256 = vpack.c.b16 %v3784, %v3780
        %v5257 = vpack.c.b16 %v3785, %v3781
        %v5258 = vpack.c.b16 %v3790, %v3786
        %v5259 = vpack.c.b16 %v3791, %v3787
        %v5260 = vpack.c.b16 %v3792, %v3788
        %v5261 = vpack.c.b16 %v3793, %v3789
        %v5262 = vpack.c.b16 %v3798, %v3794
        %v5263 = vpack.c.b16 %v3799, %v3795
        %v5264 = vpack.c.b16 %v3800, %v3796
        %v5265 = vpack.c.b16 %v3801, %v3797
        %v5266 = vpack.c.b16 %v3806, %v3802
        %v5267 = vpack.c.b16 %v3807, %v3803
        %v5268 = vpack.c.b16 %v3808, %v3804
        %v5269 = vpack.c.b16 %v3809, %v3805
        %v5270 = vpack.c.b16 %v3814, %v3810
        %v5271 = vpack.c.b16 %v3815, %v3811
        %v5272 = vpack.c.b16 %v3816, %v3812
        %v5273 = vpack.c.b16 %v3817, %v3813
        %v5274 = vpack.c.b16 %v3822, %v3818
        %v5275 = vpack.c.b16 %v3823, %v3819
        %v5276 = vpack.c.b16 %v3824, %v3820
        %v5277 = vpack.c.b16 %v3825, %v3821
        %v5278 = vpack.c.b16 %v3830, %v3826
        %v5279 = vpack.c.b16 %v3831, %v3827
        %v5280 = vpack.c.b16 %v3832, %v3828
        %v5281 = vpack.c.b16 %v3833, %v3829
        %v5282 = vpack.c.b16 %v3838, %v3834
        %v5283 = vpack.c.b16 %v3839, %v3835
        %v5284 = vpack.c.b16 %v3840, %v3836
        %v5285 = vpack.c.b16 %v3841, %v3837
        %v5286 = vpack.c.b16 %v3846, %v3842
        %v5287 = vpack.c.b16 %v3847, %v3843
        %v5288 = vpack.c.b16 %v3848, %v3844
        %v5289 = vpack.c.b16 %v3849, %v3845
        %v5290 = vpack.c.b16 %v3854, %v3850
        %v5291 = vpack.c.b16 %v3855, %v3851
        %v5292 = vpack.c.b16 %v3856, %v3852
        %v5293 = vpack.c.b16 %v3857, %v3853
        %v5294 = vpack.c.b16 %v3862, %v3858
        %v5295 = vpack.c.b16 %v3863, %v3859
        %v5296 = vpack.c.b16 %v3864, %v3860
        %v5297 = vpack.c.b16 %v3865, %v3861
        %v5298 = vpack.c.b16 %v3870, %v3866
        %v5299 = vpack.c.b16 %v3871, %v3867
        %v5300 = vpack.c.b16 %v3872, %v3868
        %v5301 = vpack.c.b16 %v3873, %v3869
        %v5302 = vpack.c.b16 %v3878, %v3874
        %v5303 = vpack.c.b16 %v3879, %v3875
        %v5304 = vpack.c.b16 %v3880, %v3876
        %v5305 = vpack.c.b16 %v3881, %v3877
        %v5306 = vpack.c.b16 %v3886, %v3882
        %v5307 = vpack.c.b16 %v3887, %v3883
        %v5308 = vpack.c.b16 %v3888, %v3884
        %v5309 = vpack.c.b16 %v3889, %v3885
        %v5310 = vpack.c.b16 %v3894, %v3890
        %v5311 = vpack.c.b16 %v3895, %v3891
        %v5312 = vpack.c.b16 %v3896, %v3892
        %v5313 = vpack.c.b16 %v3897, %v3893
        %v5314 = vpack.c.b16 %v3902, %v3898
        %v5315 = vpack.c.b16 %v3903, %v3899
        %v5316 = vpack.c.b16 %v3904, %v3900
        %v5317 = vpack.c.b16 %v3905, %v3901
        %v5318 = vpack.c.b16 %v3910, %v3906
        %v5319 = vpack.c.b16 %v3911, %v3907
        %v5320 = vpack.c.b16 %v3912, %v3908
        %v5321 = vpack.c.b16 %v3913, %v3909
        %v5322 = vpack.c.b16 %v3918, %v3914
        %v5323 = vpack.c.b16 %v3919, %v3915
        %v5324 = vpack.c.b16 %v3920, %v3916
        %v5325 = vpack.c.b16 %v3921, %v3917
        %v5326 = vpack.c.b16 %v3926, %v3922
        %v5327 = vpack.c.b16 %v3927, %v3923
        %v5328 = vpack.c.b16 %v3928, %v3924
        %v5329 = vpack.c.b16 %v3929, %v3925
        %v5330 = vpack.c.b16 %v3934, %v3930
        %v5331 = vpack.c.b16 %v3935, %v3931
        %v5332 = vpack.c.b16 %v3936, %v3932
        %v5333 = vpack.c.b16 %v3937, %v3933
        %v5334 = vpack.c.b16 %v3942, %v3938
        %v5335 = vpack.c.b16 %v3943, %v3939
        %v5336 = vpack.c.b16 %v3944, %v3940
        %v5337 = vpack.c.b16 %v3945, %v3941
        %v5338 = vpack.c.b16 %v3950, %v3946
        %v5339 = vpack.c.b16 %v3951, %v3947
        %v5340 = vpack.c.b16 %v3952, %v3948
        %v5341 = vpack.c.b16 %v3953, %v3949
        %v5342 = vpack.c.b16 %v3958, %v3954
        %v5343 = vpack.c.b16 %v3959, %v3955
        %v5344 = vpack.c.b16 %v3960, %v3956
        %v5345 = vpack.c.b16 %v3961, %v3957
        %v5346 = vpack.c.b16 %v3966, %v3962
        %v5347 = vpack.c.b16 %v3967, %v3963
        %v5348 = vpack.c.b16 %v3968, %v3964
        %v5349 = vpack.c.b16 %v3969, %v3965
        %v5350 = vpack.c.b16 %v3974, %v3970
        %v5351 = vpack.c.b16 %v3975, %v3971
        %v5352 = vpack.c.b16 %v3976, %v3972
        %v5353 = vpack.c.b16 %v3977, %v3973
        %v5354 = vpack.c.b16 %v3982, %v3978
        %v5355 = vpack.c.b16 %v3983, %v3979
        %v5356 = vpack.c.b16 %v3984, %v3980
        %v5357 = vpack.c.b16 %v3985, %v3981
        %v5358 = vpack.c.b16 %v3990, %v3986
        %v5359 = vpack.c.b16 %v3991, %v3987
        %v5360 = vpack.c.b16 %v3992, %v3988
        %v5361 = vpack.c.b16 %v3993, %v3989
        %v5362 = vpack.c.b16 %v3998, %v3994
        %v5363 = vpack.c.b16 %v3999, %v3995
        %v5364 = vpack.c.b16 %v4000, %v3996
        %v5365 = vpack.c.b16 %v4001, %v3997
        %v5366 = vpack.c.b16 %v4006, %v4002
        %v5367 = vpack.c.b16 %v4007, %v4003
        %v5368 = vpack.c.b16 %v4008, %v4004
        %v5369 = vpack.c.b16 %v4009, %v4005
        %v5370 = vpack.c.b16 %v4014, %v4010
        %v5371 = vpack.c.b16 %v4015, %v4011
        %v5372 = vpack.c.b16 %v4016, %v4012
        %v5373 = vpack.c.b16 %v4017, %v4013
        %v5374 = vpack.c.b16 %v4022, %v4018
        %v5375 = vpack.c.b16 %v4023, %v4019
        %v5376 = vpack.c.b16 %v4024, %v4020
        %v5377 = vpack.c.b16 %v4025, %v4021
        %v5378 = vpack.c.b16 %v4030, %v4026
        %v5379 = vpack.c.b16 %v4031, %v4027
        %v5380 = vpack.c.b16 %v4032, %v4028
        %v5381 = vpack.c.b16 %v4033, %v4029
        %v5382 = vpack.c.b16 %v4038, %v4034
        %v5383 = vpack.c.b16 %v4039, %v4035
        %v5384 = vpack.c.b16 %v4040, %v4036
        %v5385 = vpack.c.b16 %v4041, %v4037
        %v5386 = vpack.c.b16 %v4046, %v4042
        %v5387 = vpack.c.b16 %v4047, %v4043
        %v5388 = vpack.c.b16 %v4048, %v4044
        %v5389 = vpack.c.b16 %v4049, %v4045
        %v5390 = vpack.c.b16 %v4054, %v4050
        %v5391 = vpack.c.b16 %v4055, %v4051
        %v5392 = vpack.c.b16 %v4056, %v4052
        %v5393 = vpack.c.b16 %v4057, %v4053
        %v5394 = vpack.c.b16 %v4062, %v4058
        %v5395 = vpack.c.b16 %v4063, %v4059
        %v5396 = vpack.c.b16 %v4064, %v4060
        %v5397 = vpack.c.b16 %v4065, %v4061
        %v5398 = vpack.c.b16 %v4070, %v4066
        %v5399 = vpack.c.b16 %v4071, %v4067
        %v5400 = vpack.c.b16 %v4072, %v4068
        %v5401 = vpack.c.b16 %v4073, %v4069
        %v5402 = vpack.c.b16 %v4078, %v4074
        %v5403 = vpack.c.b16 %v4079, %v4075
        %v5404 = vpack.c.b16 %v4080, %v4076
        %v5405 = vpack.c.b16 %v4081, %v4077
        %v5406 = vpack.c.b16 %v4086, %v4082
        %v5407 = vpack.c.b16 %v4087, %v4083
        %v5408 = vpack.c.b16 %v4088, %v4084
        %v5409 = vpack.c.b16 %v4089, %v4085
        %v5410 = vpack.c.b16 %v4094, %v4090
        %v5411 = vpack.c.b16 %v4095, %v4091
        %v5412 = vpack.c.b16 %v4096, %v4092
        %v5413 = vpack.c.b16 %v4097, %v4093
        %v5414 = vpack.c.b16 %v4102, %v4098
        %v5415 = vpack.c.b16 %v4103, %v4099
        %v5416 = vpack.c.b16 %v4104, %v4100
        %v5417 = vpack.c.b16 %v4105, %v4101
        %v5418 = vpack.c.b16 %v4110, %v4106
        %v5419 = vpack.c.b16 %v4111, %v4107
        %v5420 = vpack.c.b16 %v4112, %v4108
        %v5421 = vpack.c.b16 %v4113, %v4109
        %v5422 = vpack.c.b16 %v4118, %v4114
        %v5423 = vpack.c.b16 %v4119, %v4115
        %v5424 = vpack.c.b16 %v4120, %v4116
        %v5425 = vpack.c.b16 %v4121, %v4117
        %v5426 = vpack.c.b16 %v4126, %v4122
        %v5427 = vpack.c.b16 %v4127, %v4123
        %v5428 = vpack.c.b16 %v4128, %v4124
        %v5429 = vpack.c.b16 %v4129, %v4125
        %v5430 = vpack.c.b16 %v4134, %v4130
        %v5431 = vpack.c.b16 %v4135, %v4131
        %v5432 = vpack.c.b16 %v4136, %v4132
        %v5433 = vpack.c.b16 %v4137, %v4133
        %v5434 = vpack.c.b16 %v4142, %v4138
        %v5435 = vpack.c.b16 %v4143, %v4139
        %v5436 = vpack.c.b16 %v4144, %v4140
        %v5437 = vpack.c.b16 %v4145, %v4141
        %v5438 = vpack.c.b16 %v4150, %v4146
        %v5439 = vpack.c.b16 %v4151, %v4147
        %v5440 = vpack.c.b16 %v4152, %v4148
        %v5441 = vpack.c.b16 %v4153, %v4149
        %v5442 = vpack.c.b16 %v4158, %v4154
        %v5443 = vpack.c.b16 %v4159, %v4155
        %v5444 = vpack.c.b16 %v4160, %v4156
        %v5445 = vpack.c.b16 %v4161, %v4157
        %v5446 = vpack.c.b16 %v4166, %v4162
        %v5447 = vpack.c.b16 %v4167, %v4163
        %v5448 = vpack.c.b16 %v4168, %v4164
        %v5449 = vpack.c.b16 %v4169, %v4165
        %v5450 = vpack.c.b16 %v4174, %v4170
        %v5451 = vpack.c.b16 %v4175, %v4171
        %v5452 = vpack.c.b16 %v4176, %v4172
        %v5453 = vpack.c.b16 %v4177, %v4173
        %v5454 = vpack.c.b16 %v4182, %v4178
        %v5455 = vpack.c.b16 %v4183, %v4179
        %v5456 = vpack.c.b16 %v4184, %v4180
        %v5457 = vpack.c.b16 %v4185, %v4181
        %v5458 = vpack.c.b16 %v4190, %v4186
        %v5459 = vpack.c.b16 %v4191, %v4187
        %v5460 = vpack.c.b16 %v4192, %v4188
        %v5461 = vpack.c.b16 %v4193, %v4189
        %v5462 = vpack.c.b16 %v4198, %v4194
        %v5463 = vpack.c.b16 %v4199, %v4195
        %v5464 = vpack.c.b16 %v4200, %v4196
        %v5465 = vpack.c.b16 %v4201, %v4197
        %v5466 = vpack.c.b16 %v4206, %v4202
        %v5467 = vpack.c.b16 %v4207, %v4203
        %v5468 = vpack.c.b16 %v4208, %v4204
        %v5469 = vpack.c.b16 %v4209, %v4205
        %v5470 = vpack.c.b16 %v4214, %v4210
        %v5471 = vpack.c.b16 %v4215, %v4211
        %v5472 = vpack.c.b16 %v4216, %v4212
        %v5473 = vpack.c.b16 %v4217, %v4213
        %v5474 = vpack.c.b16 %v4222, %v4218
        %v5475 = vpack.c.b16 %v4223, %v4219
        %v5476 = vpack.c.b16 %v4224, %v4220
        %v5477 = vpack.c.b16 %v4225, %v4221
        %v5478 = vpack.c.b16 %v4230, %v4226
        %v5479 = vpack.c.b16 %v4231, %v4227
        %v5480 = vpack.c.b16 %v4232, %v4228
        %v5481 = vpack.c.b16 %v4233, %v4229
        %v5482 = vpack.c.b16 %v4238, %v4234
        %v5483 = vpack.c.b16 %v4239, %v4235
        %v5484 = vpack.c.b16 %v4240, %v4236
        %v5485 = vpack.c.b16 %v4241, %v4237
        %v5486 = vpack.c.b16 %v4246, %v4242
        %v5487 = vpack.c.b16 %v4247, %v4243
        %v5488 = vpack.c.b16 %v4248, %v4244
        %v5489 = vpack.c.b16 %v4249, %v4245
        %v5490 = vpack.c.b16 %v4254, %v4250
        %v5491 = vpack.c.b16 %v4255, %v4251
        %v5492 = vpack.c.b16 %v4256, %v4252
        %v5493 = vpack.c.b16 %v4257, %v4253
        %v5494 = vpack.c.b16 %v4262, %v4258
        %v5495 = vpack.c.b16 %v4263, %v4259
        %v5496 = vpack.c.b16 %v4264, %v4260
        %v5497 = vpack.c.b16 %v4265, %v4261
        %v5498 = vpack.c.b16 %v4270, %v4266
        %v5499 = vpack.c.b16 %v4271, %v4267
        %v5500 = vpack.c.b16 %v4272, %v4268
        %v5501 = vpack.c.b16 %v4273, %v4269
        %v5502 = vpack.c.b16 %v4278, %v4274
        %v5503 = vpack.c.b16 %v4279, %v4275
        %v5504 = vpack.c.b16 %v4280, %v4276
        %v5505 = vpack.c.b16 %v4281, %v4277
        %v5506 = vpack.c.b16 %v4286, %v4282
        %v5507 = vpack.c.b16 %v4287, %v4283
        %v5508 = vpack.c.b16 %v4288, %v4284
        %v5509 = vpack.c.b16 %v4289, %v4285
        %v5510 = vpack.c.b16 %v4294, %v4290
        %v5511 = vpack.c.b16 %v4295, %v4291
        %v5512 = vpack.c.b16 %v4296, %v4292
        %v5513 = vpack.c.b16 %v4297, %v4293
        %v5514 = vpack.c.b16 %v4302, %v4298
        %v5515 = vpack.c.b16 %v4303, %v4299
        %v5516 = vpack.c.b16 %v4304, %v4300
        %v5517 = vpack.c.b16 %v4305, %v4301
        %v5518 = vpack.c.b16 %v4310, %v4306
        %v5519 = vpack.c.b16 %v4311, %v4307
        %v5520 = vpack.c.b16 %v4312, %v4308
        %v5521 = vpack.c.b16 %v4313, %v4309
        %v5522 = vpack.c.b16 %v4318, %v4314
        %v5523 = vpack.c.b16 %v4319, %v4315
        %v5524 = vpack.c.b16 %v4320, %v4316
        %v5525 = vpack.c.b16 %v4321, %v4317
        %v5526 = vpack.c.b16 %v4326, %v4322
        %v5527 = vpack.c.b16 %v4327, %v4323
        %v5528 = vpack.c.b16 %v4328, %v4324
        %v5529 = vpack.c.b16 %v4329, %v4325
        %v5530 = vpack.c.b16 %v4334, %v4330
        %v5531 = vpack.c.b16 %v4335, %v4331
        %v5532 = vpack.c.b16 %v4336, %v4332
        %v5533 = vpack.c.b16 %v4337, %v4333
        %v5534 = vpack.c.b16 %v4342, %v4338
        %v5535 = vpack.c.b16 %v4343, %v4339
        %v5536 = vpack.c.b16 %v4344, %v4340
        %v5537 = vpack.c.b16 %v4345, %v4341
        %v5538 = vpack.c.b16 %v4350, %v4346
        %v5539 = vpack.c.b16 %v4351, %v4347
        %v5540 = vpack.c.b16 %v4352, %v4348
        %v5541 = vpack.c.b16 %v4353, %v4349
        %v5542 = vpack.c.b16 %v4358, %v4354
        %v5543 = vpack.c.b16 %v4359, %v4355
        %v5544 = vpack.c.b16 %v4360, %v4356
        %v5545 = vpack.c.b16 %v4361, %v4357
        %v5546 = vpack.c.b16 %v4366, %v4362
        %v5547 = vpack.c.b16 %v4367, %v4363
        %v5548 = vpack.c.b16 %v4368, %v4364
        %v5549 = vpack.c.b16 %v4369, %v4365
        %v5550 = vpack.c.b16 %v4374, %v4370
        %v5551 = vpack.c.b16 %v4375, %v4371
        %v5552 = vpack.c.b16 %v4376, %v4372
        %v5553 = vpack.c.b16 %v4377, %v4373
        %v5554 = vpack.c.b16 %v4382, %v4378
        %v5555 = vpack.c.b16 %v4383, %v4379
        %v5556 = vpack.c.b16 %v4384, %v4380
        %v5557 = vpack.c.b16 %v4385, %v4381
        %v5558 = vpack.c.b16 %v4390, %v4386
        %v5559 = vpack.c.b16 %v4391, %v4387
        %v5560 = vpack.c.b16 %v4392, %v4388
        %v5561 = vpack.c.b16 %v4393, %v4389
        %v5562 = vpack.c.b16 %v4398, %v4394
        %v5563 = vpack.c.b16 %v4399, %v4395
        %v5564 = vpack.c.b16 %v4400, %v4396
        %v5565 = vpack.c.b16 %v4401, %v4397
        %v5566 = vpack.c.b16 %v4406, %v4402
        %v5567 = vpack.c.b16 %v4407, %v4403
        %v5568 = vpack.c.b16 %v4408, %v4404
        %v5569 = vpack.c.b16 %v4409, %v4405
        %v5570 = vpack.c.b16 %v4414, %v4410
        %v5571 = vpack.c.b16 %v4415, %v4411
        %v5572 = vpack.c.b16 %v4416, %v4412
        %v5573 = vpack.c.b16 %v4417, %v4413
        %v5574 = vpack.c.b16 %v4422, %v4418
        %v5575 = vpack.c.b16 %v4423, %v4419
        %v5576 = vpack.c.b16 %v4424, %v4420
        %v5577 = vpack.c.b16 %v4425, %v4421
        %v5578 = vpack.c.b16 %v4430, %v4426
        %v5579 = vpack.c.b16 %v4431, %v4427
        %v5580 = vpack.c.b16 %v4432, %v4428
        %v5581 = vpack.c.b16 %v4433, %v4429
        %v5582 = vpack.c.b16 %v4438, %v4434
        %v5583 = vpack.c.b16 %v4439, %v4435
        %v5584 = vpack.c.b16 %v4440, %v4436
        %v5585 = vpack.c.b16 %v4441, %v4437
        %v5586 = vpack.c.b16 %v4446, %v4442
        %v5587 = vpack.c.b16 %v4447, %v4443
        %v5588 = vpack.c.b16 %v4448, %v4444
        %v5589 = vpack.c.b16 %v4449, %v4445
        %v5590 = vpack.c.b16 %v4454, %v4450
        %v5591 = vpack.c.b16 %v4455, %v4451
        %v5592 = vpack.c.b16 %v4456, %v4452
        %v5593 = vpack.c.b16 %v4457, %v4453
        %v5594 = vpack.c.b16 %v4462, %v4458
        %v5595 = vpack.c.b16 %v4463, %v4459
        %v5596 = vpack.c.b16 %v4464, %v4460
        %v5597 = vpack.c.b16 %v4465, %v4461
        %v5598 = vpack.c.b16 %v4470, %v4466
        %v5599 = vpack.c.b16 %v4471, %v4467
        %v5600 = vpack.c.b16 %v4472, %v4468
        %v5601 = vpack.c.b16 %v4473, %v4469
        %v5602 = vpack.c.b16 %v4478, %v4474
        %v5603 = vpack.c.b16 %v4479, %v4475
        %v5604 = vpack.c.b16 %v4480, %v4476
        %v5605 = vpack.c.b16 %v4481, %v4477
        %v5606 = vpack.c.b16 %v4486, %v4482
        %v5607 = vpack.c.b16 %v4487, %v4483
        %v5608 = vpack.c.b16 %v4488, %v4484
        %v5609 = vpack.c.b16 %v4489, %v4485
        %v5610 = vpack.c.b16 %v4494, %v4490
        %v5611 = vpack.c.b16 %v4495, %v4491
        %v5612 = vpack.c.b16 %v4496, %v4492
        %v5613 = vpack.c.b16 %v4497, %v4493
        %v5614 = vpack.c.b16 %v4502, %v4498
        %v5615 = vpack.c.b16 %v4503, %v4499
        %v5616 = vpack.c.b16 %v4504, %v4500
        %v5617 = vpack.c.b16 %v4505, %v4501
        %v5618 = vpack.c.b16 %v4510, %v4506
        %v5619 = vpack.c.b16 %v4511, %v4507
        %v5620 = vpack.c.b16 %v4512, %v4508
        %v5621 = vpack.c.b16 %v4513, %v4509
        %v5622 = vpack.c.b16 %v4518, %v4514
        %v5623 = vpack.c.b16 %v4519, %v4515
        %v5624 = vpack.c.b16 %v4520, %v4516
        %v5625 = vpack.c.b16 %v4521, %v4517
        %v5626 = vpack.c.b16 %v4526, %v4522
        %v5627 = vpack.c.b16 %v4527, %v4523
        %v5628 = vpack.c.b16 %v4528, %v4524
        %v5629 = vpack.c.b16 %v4529, %v4525
        %v5630 = vpack.c.b16 %v4534, %v4530
        %v5631 = vpack.c.b16 %v4535, %v4531
        %v5632 = vpack.c.b16 %v4536, %v4532
        %v5633 = vpack.c.b16 %v4537, %v4533
        %v5634 = vpack.c.b16 %v4542, %v4538
        %v5635 = vpack.c.b16 %v4543, %v4539
        %v5636 = vpack.c.b16 %v4544, %v4540
        %v5637 = vpack.c.b16 %v4545, %v4541
        %v5638 = vpack.c.b16 %v4550, %v4546
        %v5639 = vpack.c.b16 %v4551, %v4547
        %v5640 = vpack.c.b16 %v4552, %v4548
        %v5641 = vpack.c.b16 %v4553, %v4549
        %v5642 = vpack.c.b16 %v4558, %v4554
        %v5643 = vpack.c.b16 %v4559, %v4555
        %v5644 = vpack.c.b16 %v4560, %v4556
        %v5645 = vpack.c.b16 %v4561, %v4557
        %v5646 = vpack.c.b16 %v4566, %v4562
        %v5647 = vpack.c.b16 %v4567, %v4563
        %v5648 = vpack.c.b16 %v4568, %v4564
        %v5649 = vpack.c.b16 %v4569, %v4565
        %v5650 = vpack.c.b16 %v4574, %v4570
        %v5651 = vpack.c.b16 %v4575, %v4571
        %v5652 = vpack.c.b16 %v4576, %v4572
        %v5653 = vpack.c.b16 %v4577, %v4573
        %v5654 = vpack.c.b16 %v4582, %v4578
        %v5655 = vpack.c.b16 %v4583, %v4579
        %v5656 = vpack.c.b16 %v4584, %v4580
        %v5657 = vpack.c.b16 %v4585, %v4581
        %v5658 = vpack.c.b16 %v4590, %v4586
        %v5659 = vpack.c.b16 %v4591, %v4587
        %v5660 = vpack.c.b16 %v4592, %v4588
        %v5661 = vpack.c.b16 %v4593, %v4589
        %v5662 = vpack.c.b16 %v4598, %v4594
        %v5663 = vpack.c.b16 %v4599, %v4595
        %v5664 = vpack.c.b16 %v4600, %v4596
        %v5665 = vpack.c.b16 %v4601, %v4597
        %v5666 = vpack.c.b16 %v4606, %v4602
        %v5667 = vpack.c.b16 %v4607, %v4603
        %v5668 = vpack.c.b16 %v4608, %v4604
        %v5669 = vpack.c.b16 %v4609, %v4605
        %v5670 = vpack.c.b16 %v4614, %v4610
        %v5671 = vpack.c.b16 %v4615, %v4611
        %v5672 = vpack.c.b16 %v4616, %v4612
        %v5673 = vpack.c.b16 %v4617, %v4613
        %v5674 = vpack.c.b16 %v4622, %v4618
        %v5675 = vpack.c.b16 %v4623, %v4619
        %v5676 = vpack.c.b16 %v4624, %v4620
        %v5677 = vpack.c.b16 %v4625, %v4621
        %v5678 = vpack.c.b16 %v4630, %v4626
        %v5679 = vpack.c.b16 %v4631, %v4627
        %v5680 = vpack.c.b16 %v4632, %v4628
        %v5681 = vpack.c.b16 %v4633, %v4629
        %v5682 = vpack.c.b16 %v4638, %v4634
        %v5683 = vpack.c.b16 %v4639, %v4635
        %v5684 = vpack.c.b16 %v4640, %v4636
        %v5685 = vpack.c.b16 %v4641, %v4637
        %v5686 = vpack.c.b16 %v4646, %v4642
        %v5687 = vpack.c.b16 %v4647, %v4643
        %v5688 = vpack.c.b16 %v4648, %v4644
        %v5689 = vpack.c.b16 %v4649, %v4645
        %v5690 = vpack.c.b16 %v4654, %v4650
        %v5691 = vpack.c.b16 %v4655, %v4651
        %v5692 = vpack.c.b16 %v4656, %v4652
        %v5693 = vpack.c.b16 %v4657, %v4653
        %v5694 = vpack.c.b16 %v4662, %v4658
        %v5695 = vpack.c.b16 %v4663, %v4659
        %v5696 = vpack.c.b16 %v4664, %v4660
        %v5697 = vpack.c.b16 %v4665, %v4661
        %v5698 = vpack.c.b16 %v4670, %v4666
        %v5699 = vpack.c.b16 %v4671, %v4667
        %v5700 = vpack.c.b16 %v4672, %v4668
        %v5701 = vpack.c.b16 %v4673, %v4669
        %v5702 = vpack.c.b16 %v4678, %v4674
        %v5703 = vpack.c.b16 %v4679, %v4675
        %v5704 = vpack.c.b16 %v4680, %v4676
        %v5705 = vpack.c.b16 %v4681, %v4677
        %6730 = vmatprep.subr.bf16.mxu0 %v4683
        %6731 = vmatpush1.bf16.msra.mxu0 %v4682
        %6732 = vmatprep.subr.bf16.mxu0 %v4687
        %6733 = vmatpush1.bf16.msra.mxu0 %v4686
        %6734 = vmatprep.subr.bf16.mxu0 %v4691
        %6735 = vmatpush1.bf16.msra.mxu0 %v4690
        %6736 = vmatprep.subr.bf16.mxu0 %v4695
        %6737 = vmatpush1.bf16.msra.mxu0 %v4694
        %6738 = vmatprep.subr.bf16.mxu0 %v4699
        %6739 = vmatpush1.bf16.msra.mxu0 %v4698
        %6740 = vmatprep.subr.bf16.mxu0 %v4703
        %6741 = vmatpush1.bf16.msra.mxu0 %v4702
        %6742 = vmatprep.subr.bf16.mxu0 %v4707
        %6743 = vmatpush1.bf16.msra.mxu0 %v4706
        %6744 = vmatprep.subr.bf16.mxu0 %v4711
        %6745 = vmatpush1.bf16.msra.mxu0 %v4710
        %6746 = vmatprep.subr.bf16.mxu0 %v4715
        %6747 = vmatpush1.bf16.msra.mxu0 %v4714
        %6748 = vmatprep.subr.bf16.mxu0 %v4719
        %6749 = vmatpush1.bf16.msra.mxu0 %v4718
        %6750 = vmatprep.subr.bf16.mxu0 %v4723
        %6751 = vmatpush1.bf16.msra.mxu0 %v4722
        %6752 = vmatprep.subr.bf16.mxu0 %v4727
        %6753 = vmatpush1.bf16.msra.mxu0 %v4726
        %6754 = vmatprep.subr.bf16.mxu0 %v4731
        %6755 = vmatpush1.bf16.msra.mxu0 %v4730
        %6756 = vmatprep.subr.bf16.mxu0 %v4735
        %6757 = vmatpush1.bf16.msra.mxu0 %v4734
        %6758 = vmatprep.subr.bf16.mxu0 %v4739
        %6759 = vmatpush1.bf16.msra.mxu0 %v4738
        %6760 = vmatprep.subr.bf16.mxu0 %v4743
        %6761 = vmatpush1.bf16.msra.mxu0 %v4742
        %6762 = vmatprep.mubr.bf16.mxu0 %v1547
        %6763 = vmatmul.mubr.bf16.gmra.mrb[0].mxu0 %v1546
        %v6764 = vpop.f32.mrb[0].mxu0
        %v6765 = vadd.f32 0.0, %v6764
        %v6766 = vpop.f32.mrb[0].mxu0
        %v6767 = vadd.f32 0.0, %v6766
        %v6768 = vpop.f32.mrb[0].mxu0
        %v6769 = vadd.f32 0.0, %v6768
        %v6770 = vpop.f32.mrb[0].mxu0
        %v6771 = vadd.f32 0.0, %v6770
        %6772 = vdwg.mxu0
        %6773 = vmatprep.subr.bf16.mxu0 %v4747
        %6774 = vmatpush1.bf16.msra.mxu0 %v4746
        %6775 = vmatprep.subr.bf16.mxu0 %v4751
        %6776 = vmatpush1.bf16.msra.mxu0 %v4750
        %6777 = vmatprep.subr.bf16.mxu0 %v4755
        %6778 = vmatpush1.bf16.msra.mxu0 %v4754
        %6779 = vmatprep.subr.bf16.mxu0 %v4759
        %6780 = vmatpush1.bf16.msra.mxu0 %v4758
        %6781 = vmatprep.subr.bf16.mxu0 %v4763
        %6782 = vmatpush1.bf16.msra.mxu0 %v4762
        %6783 = vmatprep.subr.bf16.mxu0 %v4767
        %6784 = vmatpush1.bf16.msra.mxu0 %v4766
        %6785 = vmatprep.subr.bf16.mxu0 %v4771
        %6786 = vmatpush1.bf16.msra.mxu0 %v4770
        %6787 = vmatprep.subr.bf16.mxu0 %v4775
        %6788 = vmatpush1.bf16.msra.mxu0 %v4774
        %6789 = vmatprep.subr.bf16.mxu0 %v4779
        %6790 = vmatpush1.bf16.msra.mxu0 %v4778
        %6791 = vmatprep.subr.bf16.mxu0 %v4783
        %6792 = vmatpush1.bf16.msra.mxu0 %v4782
        %6793 = vmatprep.subr.bf16.mxu0 %v4787
        %6794 = vmatpush1.bf16.msra.mxu0 %v4786
        %6795 = vmatprep.subr.bf16.mxu0 %v4791
        %6796 = vmatpush1.bf16.msra.mxu0 %v4790
        %6797 = vmatprep.subr.bf16.mxu0 %v4795
        %6798 = vmatpush1.bf16.msra.mxu0 %v4794
        %6799 = vmatprep.subr.bf16.mxu0 %v4799
        %6800 = vmatpush1.bf16.msra.mxu0 %v4798
        %6801 = vmatprep.subr.bf16.mxu0 %v4803
        %6802 = vmatpush1.bf16.msra.mxu0 %v4802
        %6803 = vmatprep.subr.bf16.mxu0 %v4807
        %6804 = vmatpush1.bf16.msra.mxu0 %v4806
        %6805 = vmatprep.mubr.bf16.mxu0 %v1549
        %6806 = vmatmul.mubr.bf16.gmra.mrb[0].mxu0 %v1548
        %v6807 = vpop.f32.mrb[0].mxu0
        %v6808 = vadd.f32 %v6765, %v6807
        %v6809 = vpop.f32.mrb[0].mxu0
        %v6810 = vadd.f32 %v6767, %v6809
        %v6811 = vpop.f32.mrb[0].mxu0
        %v6812 = vadd.f32 %v6769, %v6811
        %v6813 = vpop.f32.mrb[0].mxu0
        %v6814 = vadd.f32 %v6771, %v6813
        %6815 = vdwg.mxu0
        %6816 = vmatprep.subr.bf16.mxu0 %v4811
        %6817 = vmatpush1.bf16.msra.mxu0 %v4810
        %6818 = vmatprep.subr.bf16.mxu0 %v4815
        %6819 = vmatpush1.bf16.msra.mxu0 %v4814
        %6820 = vmatprep.subr.bf16.mxu0 %v4819
        %6821 = vmatpush1.bf16.msra.mxu0 %v4818
        %6822 = vmatprep.subr.bf16.mxu0 %v4823
        %6823 = vmatpush1.bf16.msra.mxu0 %v4822
        %6824 = vmatprep.subr.bf16.mxu0 %v4827
        %6825 = vmatpush1.bf16.msra.mxu0 %v4826
        %6826 = vmatprep.subr.bf16.mxu0 %v4831
        %6827 = vmatpush1.bf16.msra.mxu0 %v4830
        %6828 = vmatprep.subr.bf16.mxu0 %v4835
        %6829 = vmatpush1.bf16.msra.mxu0 %v4834
        %6830 = vmatprep.subr.bf16.mxu0 %v4839
        %6831 = vmatpush1.bf16.msra.mxu0 %v4838
        %6832 = vmatprep.subr.bf16.mxu0 %v4843
        %6833 = vmatpush1.bf16.msra.mxu0 %v4842
        %6834 = vmatprep.subr.bf16.mxu0 %v4847
        %6835 = vmatpush1.bf16.msra.mxu0 %v4846
        %6836 = vmatprep.subr.bf16.mxu0 %v4851
        %6837 = vmatpush1.bf16.msra.mxu0 %v4850
        %6838 = vmatprep.subr.bf16.mxu0 %v4855
        %6839 = vmatpush1.bf16.msra.mxu0 %v4854
        %6840 = vmatprep.subr.bf16.mxu0 %v4859
        %6841 = vmatpush1.bf16.msra.mxu0 %v4858
        %6842 = vmatprep.subr.bf16.mxu0 %v4863
        %6843 = vmatpush1.bf16.msra.mxu0 %v4862
        %6844 = vmatprep.subr.bf16.mxu0 %v4867
        %6845 = vmatpush1.bf16.msra.mxu0 %v4866
        %6846 = vmatprep.subr.bf16.mxu0 %v4871
        %6847 = vmatpush1.bf16.msra.mxu0 %v4870
        %6848 = vmatprep.mubr.bf16.mxu0 %v1551
        %6849 = vmatmul.mubr.bf16.gmra.mrb[0].mxu0 %v1550
        %v6850 = vpop.f32.mrb[0].mxu0
        %v6851 = vadd.f32 %v6808, %v6850
        %v6852 = vpop.f32.mrb[0].mxu0
        %v6853 = vadd.f32 %v6810, %v6852
        %v6854 = vpop.f32.mrb[0].mxu0
        %v6855 = vadd.f32 %v6812, %v6854
        %v6856 = vpop.f32.mrb[0].mxu0
        %v6857 = vadd.f32 %v6814, %v6856
        %6858 = vdwg.mxu0
        %6859 = vmatprep.subr.bf16.mxu0 %v4875
        %6860 = vmatpush1.bf16.msra.mxu0 %v4874
        %6861 = vmatprep.subr.bf16.mxu0 %v4879
        %6862 = vmatpush1.bf16.msra.mxu0 %v4878
        %6863 = vmatprep.subr.bf16.mxu0 %v4883
        %6864 = vmatpush1.bf16.msra.mxu0 %v4882
        %6865 = vmatprep.subr.bf16.mxu0 %v4887
        %6866 = vmatpush1.bf16.msra.mxu0 %v4886
        %6867 = vmatprep.subr.bf16.mxu0 %v4891
        %6868 = vmatpush1.bf16.msra.mxu0 %v4890
        %6869 = vmatprep.subr.bf16.mxu0 %v4895
        %6870 = vmatpush1.bf16.msra.mxu0 %v4894
        %6871 = vmatprep.subr.bf16.mxu0 %v4899
        %6872 = vmatpush1.bf16.msra.mxu0 %v4898
        %6873 = vmatprep.subr.bf16.mxu0 %v4903
        %6874 = vmatpush1.bf16.msra.mxu0 %v4902
        %6875 = vmatprep.subr.bf16.mxu0 %v4907
        %6876 = vmatpush1.bf16.msra.mxu0 %v4906
        %6877 = vmatprep.subr.bf16.mxu0 %v4911
        %6878 = vmatpush1.bf16.msra.mxu0 %v4910
        %6879 = vmatprep.subr.bf16.mxu0 %v4915
        %6880 = vmatpush1.bf16.msra.mxu0 %v4914
        %6881 = vmatprep.subr.bf16.mxu0 %v4919
        %6882 = vmatpush1.bf16.msra.mxu0 %v4918
        %6883 = vmatprep.subr.bf16.mxu0 %v4923
        %6884 = vmatpush1.bf16.msra.mxu0 %v4922
        %6885 = vmatprep.subr.bf16.mxu0 %v4927
        %6886 = vmatpush1.bf16.msra.mxu0 %v4926
        %6887 = vmatprep.subr.bf16.mxu0 %v4931
        %6888 = vmatpush1.bf16.msra.mxu0 %v4930
        %6889 = vmatprep.subr.bf16.mxu0 %v4935
        %6890 = vmatpush1.bf16.msra.mxu0 %v4934
        %6891 = vmatprep.mubr.bf16.mxu0 %v1553
        %6892 = vmatmul.mubr.bf16.gmra.mrb[0].mxu0 %v1552
        %v6893 = vpop.f32.mrb[0].mxu0
        %v6894 = vadd.f32 %v6851, %v6893
        %v6895 = vpop.f32.mrb[0].mxu0
        %v6896 = vadd.f32 %v6853, %v6895
        %v6897 = vpop.f32.mrb[0].mxu0
        %v6898 = vadd.f32 %v6855, %v6897
        %v6899 = vpop.f32.mrb[0].mxu0
        %v6900 = vadd.f32 %v6857, %v6899
        %6901 = vdwg.mxu0
        %6902 = vmatprep.subr.bf16.mxu0 %v4939
        %6903 = vmatpush1.bf16.msra.mxu0 %v4938
        %6904 = vmatprep.subr.bf16.mxu0 %v4943
        %6905 = vmatpush1.bf16.msra.mxu0 %v4942
        %6906 = vmatprep.subr.bf16.mxu0 %v4947
        %6907 = vmatpush1.bf16.msra.mxu0 %v4946
        %6908 = vmatprep.subr.bf16.mxu0 %v4951
        %6909 = vmatpush1.bf16.msra.mxu0 %v4950
        %6910 = vmatprep.subr.bf16.mxu0 %v4955
        %6911 = vmatpush1.bf16.msra.mxu0 %v4954
        %6912 = vmatprep.subr.bf16.mxu0 %v4959
        %6913 = vmatpush1.bf16.msra.mxu0 %v4958
        %6914 = vmatprep.subr.bf16.mxu0 %v4963
        %6915 = vmatpush1.bf16.msra.mxu0 %v4962
        %6916 = vmatprep.subr.bf16.mxu0 %v4967
        %6917 = vmatpush1.bf16.msra.mxu0 %v4966
        %6918 = vmatprep.subr.bf16.mxu0 %v4971
        %6919 = vmatpush1.bf16.msra.mxu0 %v4970
        %6920 = vmatprep.subr.bf16.mxu0 %v4975
        %6921 = vmatpush1.bf16.msra.mxu0 %v4974
        %6922 = vmatprep.subr.bf16.mxu0 %v4979
        %6923 = vmatpush1.bf16.msra.mxu0 %v4978
        %6924 = vmatprep.subr.bf16.mxu0 %v4983
        %6925 = vmatpush1.bf16.msra.mxu0 %v4982
        %6926 = vmatprep.subr.bf16.mxu0 %v4987
        %6927 = vmatpush1.bf16.msra.mxu0 %v4986
        %6928 = vmatprep.subr.bf16.mxu0 %v4991
        %6929 = vmatpush1.bf16.msra.mxu0 %v4990
        %6930 = vmatprep.subr.bf16.mxu0 %v4995
        %6931 = vmatpush1.bf16.msra.mxu0 %v4994
        %6932 = vmatprep.subr.bf16.mxu0 %v4999
        %6933 = vmatpush1.bf16.msra.mxu0 %v4998
        %6934 = vmatprep.mubr.bf16.mxu0 %v1555
        %6935 = vmatmul.mubr.bf16.gmra.mrb[0].mxu0 %v1554
        %v6936 = vpop.f32.mrb[0].mxu0
        %v6937 = vadd.f32 %v6894, %v6936
        %v6938 = vpop.f32.mrb[0].mxu0
        %v6939 = vadd.f32 %v6896, %v6938
        %v6940 = vpop.f32.mrb[0].mxu0
        %v6941 = vadd.f32 %v6898, %v6940
        %v6942 = vpop.f32.mrb[0].mxu0
        %v6943 = vadd.f32 %v6900, %v6942
        %6944 = vdwg.mxu0
        %6945 = vmatprep.subr.bf16.mxu0 %v5003
        %6946 = vmatpush1.bf16.msra.mxu0 %v5002
        %6947 = vmatprep.subr.bf16.mxu0 %v5007
        %6948 = vmatpush1.bf16.msra.mxu0 %v5006
        %6949 = vmatprep.subr.bf16.mxu0 %v5011
        %6950 = vmatpush1.bf16.msra.mxu0 %v5010
        %6951 = vmatprep.subr.bf16.mxu0 %v5015
        %6952 = vmatpush1.bf16.msra.mxu0 %v5014
        %6953 = vmatprep.subr.bf16.mxu0 %v5019
        %6954 = vmatpush1.bf16.msra.mxu0 %v5018
        %6955 = vmatprep.subr.bf16.mxu0 %v5023
        %6956 = vmatpush1.bf16.msra.mxu0 %v5022
        %6957 = vmatprep.subr.bf16.mxu0 %v5027
        %6958 = vmatpush1.bf16.msra.mxu0 %v5026
        %6959 = vmatprep.subr.bf16.mxu0 %v5031
        %6960 = vmatpush1.bf16.msra.mxu0 %v5030
        %6961 = vmatprep.subr.bf16.mxu0 %v5035
        %6962 = vmatpush1.bf16.msra.mxu0 %v5034
        %6963 = vmatprep.subr.bf16.mxu0 %v5039
        %6964 = vmatpush1.bf16.msra.mxu0 %v5038
        %6965 = vmatprep.subr.bf16.mxu0 %v5043
        %6966 = vmatpush1.bf16.msra.mxu0 %v5042
        %6967 = vmatprep.subr.bf16.mxu0 %v5047
        %6968 = vmatpush1.bf16.msra.mxu0 %v5046
        %6969 = vmatprep.subr.bf16.mxu0 %v5051
        %6970 = vmatpush1.bf16.msra.mxu0 %v5050
        %6971 = vmatprep.subr.bf16.mxu0 %v5055
        %6972 = vmatpush1.bf16.msra.mxu0 %v5054
        %6973 = vmatprep.subr.bf16.mxu0 %v5059
        %6974 = vmatpush1.bf16.msra.mxu0 %v5058
        %6975 = vmatprep.subr.bf16.mxu0 %v5063
        %6976 = vmatpush1.bf16.msra.mxu0 %v5062
        %6977 = vmatprep.mubr.bf16.mxu0 %v1557
        %6978 = vmatmul.mubr.bf16.gmra.mrb[0].mxu0 %v1556
        %v6979 = vpop.f32.mrb[0].mxu0
        %v6980 = vadd.f32 %v6937, %v6979
        %v6981 = vpop.f32.mrb[0].mxu0
        %v6982 = vadd.f32 %v6939, %v6981
        %v6983 = vpop.f32.mrb[0].mxu0
        %v6984 = vadd.f32 %v6941, %v6983
        %v6985 = vpop.f32.mrb[0].mxu0
        %v6986 = vadd.f32 %v6943, %v6985
        %6987 = vdwg.mxu0
        %6988 = vmatprep.subr.bf16.mxu0 %v5067
        %6989 = vmatpush1.bf16.msra.mxu0 %v5066
        %6990 = vmatprep.subr.bf16.mxu0 %v5071
        %6991 = vmatpush1.bf16.msra.mxu0 %v5070
        %6992 = vmatprep.subr.bf16.mxu0 %v5075
        %6993 = vmatpush1.bf16.msra.mxu0 %v5074
        %6994 = vmatprep.subr.bf16.mxu0 %v5079
        %6995 = vmatpush1.bf16.msra.mxu0 %v5078
        %6996 = vmatprep.subr.bf16.mxu0 %v5083
        %6997 = vmatpush1.bf16.msra.mxu0 %v5082
        %6998 = vmatprep.subr.bf16.mxu0 %v5087
        %6999 = vmatpush1.bf16.msra.mxu0 %v5086
        %7000 = vmatprep.subr.bf16.mxu0 %v5091
        %7001 = vmatpush1.bf16.msra.mxu0 %v5090
        %7002 = vmatprep.subr.bf16.mxu0 %v5095
        %7003 = vmatpush1.bf16.msra.mxu0 %v5094
        %7004 = vmatprep.subr.bf16.mxu0 %v5099
        %7005 = vmatpush1.bf16.msra.mxu0 %v5098
        %7006 = vmatprep.subr.bf16.mxu0 %v5103
        %7007 = vmatpush1.bf16.msra.mxu0 %v5102
        %7008 = vmatprep.subr.bf16.mxu0 %v5107
        %7009 = vmatpush1.bf16.msra.mxu0 %v5106
        %7010 = vmatprep.subr.bf16.mxu0 %v5111
        %7011 = vmatpush1.bf16.msra.mxu0 %v5110
        %7012 = vmatprep.subr.bf16.mxu0 %v5115
        %7013 = vmatpush1.bf16.msra.mxu0 %v5114
        %7014 = vmatprep.subr.bf16.mxu0 %v5119
        %7015 = vmatpush1.bf16.msra.mxu0 %v5118
        %7016 = vmatprep.subr.bf16.mxu0 %v5123
        %7017 = vmatpush1.bf16.msra.mxu0 %v5122
        %7018 = vmatprep.subr.bf16.mxu0 %v5127
        %7019 = vmatpush1.bf16.msra.mxu0 %v5126
        %7020 = vmatprep.mubr.bf16.mxu0 %v1559
        %7021 = vmatmul.mubr.bf16.gmra.mrb[0].mxu0 %v1558
        %v7022 = vpop.f32.mrb[0].mxu0
        %v7023 = vadd.f32 %v6980, %v7022
        %v7024 = vpop.f32.mrb[0].mxu0
        %v7025 = vadd.f32 %v6982, %v7024
        %v7026 = vpop.f32.mrb[0].mxu0
        %v7027 = vadd.f32 %v6984, %v7026
        %v7028 = vpop.f32.mrb[0].mxu0
        %v7029 = vadd.f32 %v6986, %v7028
        %7030 = vdwg.mxu0
        %7031 = vmatprep.subr.bf16.mxu0 %v5131
        %7032 = vmatpush1.bf16.msra.mxu0 %v5130
        %7033 = vmatprep.subr.bf16.mxu0 %v5135
        %7034 = vmatpush1.bf16.msra.mxu0 %v5134
        %7035 = vmatprep.subr.bf16.mxu0 %v5139
        %7036 = vmatpush1.bf16.msra.mxu0 %v5138
        %7037 = vmatprep.subr.bf16.mxu0 %v5143
        %7038 = vmatpush1.bf16.msra.mxu0 %v5142
        %7039 = vmatprep.subr.bf16.mxu0 %v5147
        %7040 = vmatpush1.bf16.msra.mxu0 %v5146
        %7041 = vmatprep.subr.bf16.mxu0 %v5151
        %7042 = vmatpush1.bf16.msra.mxu0 %v5150
        %7043 = vmatprep.subr.bf16.mxu0 %v5155
        %7044 = vmatpush1.bf16.msra.mxu0 %v5154
        %7045 = vmatprep.subr.bf16.mxu0 %v5159
        %7046 = vmatpush1.bf16.msra.mxu0 %v5158
        %7047 = vmatprep.subr.bf16.mxu0 %v5163
        %7048 = vmatpush1.bf16.msra.mxu0 %v5162
        %7049 = vmatprep.subr.bf16.mxu0 %v5167
        %7050 = vmatpush1.bf16.msra.mxu0 %v5166
        %7051 = vmatprep.subr.bf16.mxu0 %v5171
        %7052 = vmatpush1.bf16.msra.mxu0 %v5170
        %7053 = vmatprep.subr.bf16.mxu0 %v5175
        %7054 = vmatpush1.bf16.msra.mxu0 %v5174
        %7055 = vmatprep.subr.bf16.mxu0 %v5179
        %7056 = vmatpush1.bf16.msra.mxu0 %v5178
        %7057 = vmatprep.subr.bf16.mxu0 %v5183
        %7058 = vmatpush1.bf16.msra.mxu0 %v5182
        %7059 = vmatprep.subr.bf16.mxu0 %v5187
        %7060 = vmatpush1.bf16.msra.mxu0 %v5186
        %7061 = vmatprep.subr.bf16.mxu0 %v5191
        %7062 = vmatpush1.bf16.msra.mxu0 %v5190
        %7063 = vmatprep.mubr.bf16.mxu0 %v1561
        %7064 = vmatmul.mubr.bf16.gmra.mrb[0].mxu0 %v1560
        %v7065 = vpop.f32.mrb[0].mxu0
        %v7066 = vadd.f32 %v7023, %v7065
        %v7067 = vpop.f32.mrb[0].mxu0
        %v7068 = vadd.f32 %v7025, %v7067
        %v7069 = vpop.f32.mrb[0].mxu0
        %v7070 = vadd.f32 %v7027, %v7069
        %v7071 = vpop.f32.mrb[0].mxu0
        %v7072 = vadd.f32 %v7029, %v7071
        %7073 = vdwg.mxu0
        %7074 = vmatprep.subr.bf16.mxu0 %v5195
        %7075 = vmatpush1.bf16.msra.mxu0 %v5194
        %7076 = vmatprep.subr.bf16.mxu0 %v5199
        %7077 = vmatpush1.bf16.msra.mxu0 %v5198
        %7078 = vmatprep.subr.bf16.mxu0 %v5203
        %7079 = vmatpush1.bf16.msra.mxu0 %v5202
        %7080 = vmatprep.subr.bf16.mxu0 %v5207
        %7081 = vmatpush1.bf16.msra.mxu0 %v5206
        %7082 = vmatprep.subr.bf16.mxu0 %v5211
        %7083 = vmatpush1.bf16.msra.mxu0 %v5210
        %7084 = vmatprep.subr.bf16.mxu0 %v5215
        %7085 = vmatpush1.bf16.msra.mxu0 %v5214
        %7086 = vmatprep.subr.bf16.mxu0 %v5219
        %7087 = vmatpush1.bf16.msra.mxu0 %v5218
        %7088 = vmatprep.subr.bf16.mxu0 %v5223
        %7089 = vmatpush1.bf16.msra.mxu0 %v5222
        %7090 = vmatprep.subr.bf16.mxu0 %v5227
        %7091 = vmatpush1.bf16.msra.mxu0 %v5226
        %7092 = vmatprep.subr.bf16.mxu0 %v5231
        %7093 = vmatpush1.bf16.msra.mxu0 %v5230
        %7094 = vmatprep.subr.bf16.mxu0 %v5235
        %7095 = vmatpush1.bf16.msra.mxu0 %v5234
        %7096 = vmatprep.subr.bf16.mxu0 %v5239
        %7097 = vmatpush1.bf16.msra.mxu0 %v5238
        %7098 = vmatprep.subr.bf16.mxu0 %v5243
        %7099 = vmatpush1.bf16.msra.mxu0 %v5242
        %7100 = vmatprep.subr.bf16.mxu0 %v5247
        %7101 = vmatpush1.bf16.msra.mxu0 %v5246
        %7102 = vmatprep.subr.bf16.mxu0 %v5251
        %7103 = vmatpush1.bf16.msra.mxu0 %v5250
        %7104 = vmatprep.subr.bf16.mxu0 %v5255
        %7105 = vmatpush1.bf16.msra.mxu0 %v5254
        %7106 = vmatprep.mubr.bf16.mxu0 %v1563
        %7107 = vmatmul.mubr.bf16.gmra.mrb[0].mxu0 %v1562
        %v7108 = vpop.f32.mrb[0].mxu0
        %v7109 = vadd.f32 %v7066, %v7108
        %v7110 = vpop.f32.mrb[0].mxu0
        %v7111 = vadd.f32 %v7068, %v7110
        %v7112 = vpop.f32.mrb[0].mxu0
        %v7113 = vadd.f32 %v7070, %v7112
        %v7114 = vpop.f32.mrb[0].mxu0
        %v7115 = vadd.f32 %v7072, %v7114
        %7116 = vdwg.mxu0
        %7117 = vmatprep.subr.bf16.mxu0 %v5259
        %7118 = vmatpush1.bf16.msra.mxu0 %v5258
        %7119 = vmatprep.subr.bf16.mxu0 %v5263
        %7120 = vmatpush1.bf16.msra.mxu0 %v5262
        %7121 = vmatprep.subr.bf16.mxu0 %v5267
        %7122 = vmatpush1.bf16.msra.mxu0 %v5266
        %7123 = vmatprep.subr.bf16.mxu0 %v5271
        %7124 = vmatpush1.bf16.msra.mxu0 %v5270
        %7125 = vmatprep.subr.bf16.mxu0 %v5275
        %7126 = vmatpush1.bf16.msra.mxu0 %v5274
        %7127 = vmatprep.subr.bf16.mxu0 %v5279
        %7128 = vmatpush1.bf16.msra.mxu0 %v5278
        %7129 = vmatprep.subr.bf16.mxu0 %v5283
        %7130 = vmatpush1.bf16.msra.mxu0 %v5282
        %7131 = vmatprep.subr.bf16.mxu0 %v5287
        %7132 = vmatpush1.bf16.msra.mxu0 %v5286
        %7133 = vmatprep.subr.bf16.mxu0 %v5291
        %7134 = vmatpush1.bf16.msra.mxu0 %v5290
        %7135 = vmatprep.subr.bf16.mxu0 %v5295
        %7136 = vmatpush1.bf16.msra.mxu0 %v5294
        %7137 = vmatprep.subr.bf16.mxu0 %v5299
        %7138 = vmatpush1.bf16.msra.mxu0 %v5298
        %7139 = vmatprep.subr.bf16.mxu0 %v5303
        %7140 = vmatpush1.bf16.msra.mxu0 %v5302
        %7141 = vmatprep.subr.bf16.mxu0 %v5307
        %7142 = vmatpush1.bf16.msra.mxu0 %v5306
        %7143 = vmatprep.subr.bf16.mxu0 %v5311
        %7144 = vmatpush1.bf16.msra.mxu0 %v5310
        %7145 = vmatprep.subr.bf16.mxu0 %v5315
        %7146 = vmatpush1.bf16.msra.mxu0 %v5314
        %7147 = vmatprep.subr.bf16.mxu0 %v5319
        %7148 = vmatpush1.bf16.msra.mxu0 %v5318
        %7149 = vmatprep.mubr.bf16.mxu0 %v1565
        %7150 = vmatmul.mubr.bf16.gmra.mrb[0].mxu0 %v1564
        %v7151 = vpop.f32.mrb[0].mxu0
        %v7152 = vadd.f32 %v7109, %v7151
        %v7153 = vpop.f32.mrb[0].mxu0
        %v7154 = vadd.f32 %v7111, %v7153
        %v7155 = vpop.f32.mrb[0].mxu0
        %v7156 = vadd.f32 %v7113, %v7155
        %v7157 = vpop.f32.mrb[0].mxu0
        %v7158 = vadd.f32 %v7115, %v7157
        %7159 = vdwg.mxu0
        %7160 = vmatprep.subr.bf16.mxu0 %v5323
        %7161 = vmatpush1.bf16.msra.mxu0 %v5322
        %7162 = vmatprep.subr.bf16.mxu0 %v5327
        %7163 = vmatpush1.bf16.msra.mxu0 %v5326
        %7164 = vmatprep.subr.bf16.mxu0 %v5331
        %7165 = vmatpush1.bf16.msra.mxu0 %v5330
        %7166 = vmatprep.subr.bf16.mxu0 %v5335
        %7167 = vmatpush1.bf16.msra.mxu0 %v5334
        %7168 = vmatprep.subr.bf16.mxu0 %v5339
        %7169 = vmatpush1.bf16.msra.mxu0 %v5338
        %7170 = vmatprep.subr.bf16.mxu0 %v5343
        %7171 = vmatpush1.bf16.msra.mxu0 %v5342
        %7172 = vmatprep.subr.bf16.mxu0 %v5347
        %7173 = vmatpush1.bf16.msra.mxu0 %v5346
        %7174 = vmatprep.subr.bf16.mxu0 %v5351
        %7175 = vmatpush1.bf16.msra.mxu0 %v5350
        %7176 = vmatprep.subr.bf16.mxu0 %v5355
        %7177 = vmatpush1.bf16.msra.mxu0 %v5354
        %7178 = vmatprep.subr.bf16.mxu0 %v5359
        %7179 = vmatpush1.bf16.msra.mxu0 %v5358
        %7180 = vmatprep.subr.bf16.mxu0 %v5363
        %7181 = vmatpush1.bf16.msra.mxu0 %v5362
        %7182 = vmatprep.subr.bf16.mxu0 %v5367
        %7183 = vmatpush1.bf16.msra.mxu0 %v5366
        %7184 = vmatprep.subr.bf16.mxu0 %v5371
        %7185 = vmatpush1.bf16.msra.mxu0 %v5370
        %7186 = vmatprep.subr.bf16.mxu0 %v5375
        %7187 = vmatpush1.bf16.msra.mxu0 %v5374
        %7188 = vmatprep.subr.bf16.mxu0 %v5379
        %7189 = vmatpush1.bf16.msra.mxu0 %v5378
        %7190 = vmatprep.subr.bf16.mxu0 %v5383
        %7191 = vmatpush1.bf16.msra.mxu0 %v5382
        %7192 = vmatprep.mubr.bf16.mxu0 %v1567
        %7193 = vmatmul.mubr.bf16.gmra.mrb[0].mxu0 %v1566
        %v7194 = vpop.f32.mrb[0].mxu0
        %v7195 = vadd.f32 %v7152, %v7194
        %v7196 = vpop.f32.mrb[0].mxu0
        %v7197 = vadd.f32 %v7154, %v7196
        %v7198 = vpop.f32.mrb[0].mxu0
        %v7199 = vadd.f32 %v7156, %v7198
        %v7200 = vpop.f32.mrb[0].mxu0
        %v7201 = vadd.f32 %v7158, %v7200
        %7202 = vdwg.mxu0
        %7203 = vmatprep.subr.bf16.mxu0 %v5387
        %7204 = vmatpush1.bf16.msra.mxu0 %v5386
        %7205 = vmatprep.subr.bf16.mxu0 %v5391
        %7206 = vmatpush1.bf16.msra.mxu0 %v5390
        %7207 = vmatprep.subr.bf16.mxu0 %v5395
        %7208 = vmatpush1.bf16.msra.mxu0 %v5394
        %7209 = vmatprep.subr.bf16.mxu0 %v5399
        %7210 = vmatpush1.bf16.msra.mxu0 %v5398
        %7211 = vmatprep.subr.bf16.mxu0 %v5403
        %7212 = vmatpush1.bf16.msra.mxu0 %v5402
        %7213 = vmatprep.subr.bf16.mxu0 %v5407
        %7214 = vmatpush1.bf16.msra.mxu0 %v5406
        %7215 = vmatprep.subr.bf16.mxu0 %v5411
        %7216 = vmatpush1.bf16.msra.mxu0 %v5410
        %7217 = vmatprep.subr.bf16.mxu0 %v5415
        %7218 = vmatpush1.bf16.msra.mxu0 %v5414
        %7219 = vmatprep.subr.bf16.mxu0 %v5419
        %7220 = vmatpush1.bf16.msra.mxu0 %v5418
        %7221 = vmatprep.subr.bf16.mxu0 %v5423
        %7222 = vmatpush1.bf16.msra.mxu0 %v5422
        %7223 = vmatprep.subr.bf16.mxu0 %v5427
        %7224 = vmatpush1.bf16.msra.mxu0 %v5426
        %7225 = vmatprep.subr.bf16.mxu0 %v5431
        %7226 = vmatpush1.bf16.msra.mxu0 %v5430
        %7227 = vmatprep.subr.bf16.mxu0 %v5435
        %7228 = vmatpush1.bf16.msra.mxu0 %v5434
        %7229 = vmatprep.subr.bf16.mxu0 %v5439
        %7230 = vmatpush1.bf16.msra.mxu0 %v5438
        %7231 = vmatprep.subr.bf16.mxu0 %v5443
        %7232 = vmatpush1.bf16.msra.mxu0 %v5442
        %7233 = vmatprep.subr.bf16.mxu0 %v5447
        %7234 = vmatpush1.bf16.msra.mxu0 %v5446
        %7235 = vmatprep.mubr.bf16.mxu0 %v1569
        %7236 = vmatmul.mubr.bf16.gmra.mrb[0].mxu0 %v1568
        %v7237 = vpop.f32.mrb[0].mxu0
        %v7238 = vadd.f32 %v7195, %v7237
        %v7239 = vpop.f32.mrb[0].mxu0
        %v7240 = vadd.f32 %v7197, %v7239
        %v7241 = vpop.f32.mrb[0].mxu0
        %v7242 = vadd.f32 %v7199, %v7241
        %v7243 = vpop.f32.mrb[0].mxu0
        %v7244 = vadd.f32 %v7201, %v7243
        %7245 = vdwg.mxu0
        %7246 = vmatprep.subr.bf16.mxu0 %v5451
        %7247 = vmatpush1.bf16.msra.mxu0 %v5450
        %7248 = vmatprep.subr.bf16.mxu0 %v5455
        %7249 = vmatpush1.bf16.msra.mxu0 %v5454
        %7250 = vmatprep.subr.bf16.mxu0 %v5459
        %7251 = vmatpush1.bf16.msra.mxu0 %v5458
        %7252 = vmatprep.subr.bf16.mxu0 %v5463
        %7253 = vmatpush1.bf16.msra.mxu0 %v5462
        %7254 = vmatprep.subr.bf16.mxu0 %v5467
        %7255 = vmatpush1.bf16.msra.mxu0 %v5466
        %7256 = vmatprep.subr.bf16.mxu0 %v5471
        %7257 = vmatpush1.bf16.msra.mxu0 %v5470
        %7258 = vmatprep.subr.bf16.mxu0 %v5475
        %7259 = vmatpush1.bf16.msra.mxu0 %v5474
        %7260 = vmatprep.subr.bf16.mxu0 %v5479
        %7261 = vmatpush1.bf16.msra.mxu0 %v5478
        %7262 = vmatprep.subr.bf16.mxu0 %v5483
        %7263 = vmatpush1.bf16.msra.mxu0 %v5482
        %7264 = vmatprep.subr.bf16.mxu0 %v5487
        %7265 = vmatpush1.bf16.msra.mxu0 %v5486
        %7266 = vmatprep.subr.bf16.mxu0 %v5491
        %7267 = vmatpush1.bf16.msra.mxu0 %v5490
        %7268 = vmatprep.subr.bf16.mxu0 %v5495
        %7269 = vmatpush1.bf16.msra.mxu0 %v5494
        %7270 = vmatprep.subr.bf16.mxu0 %v5499
        %7271 = vmatpush1.bf16.msra.mxu0 %v5498
        %7272 = vmatprep.subr.bf16.mxu0 %v5503
        %7273 = vmatpush1.bf16.msra.mxu0 %v5502
        %7274 = vmatprep.subr.bf16.mxu0 %v5507
        %7275 = vmatpush1.bf16.msra.mxu0 %v5506
        %7276 = vmatprep.subr.bf16.mxu0 %v5511
        %7277 = vmatpush1.bf16.msra.mxu0 %v5510
        %7278 = vmatprep.mubr.bf16.mxu0 %v1571
        %7279 = vmatmul.mubr.bf16.gmra.mrb[0].mxu0 %v1570
        %v7280 = vpop.f32.mrb[0].mxu0
        %v7281 = vadd.f32 %v7238, %v7280
        %v7282 = vpop.f32.mrb[0].mxu0
        %v7283 = vadd.f32 %v7240, %v7282
        %v7284 = vpop.f32.mrb[0].mxu0
        %v7285 = vadd.f32 %v7242, %v7284
        %v7286 = vpop.f32.mrb[0].mxu0
        %v7287 = vadd.f32 %v7244, %v7286
        %7288 = vdwg.mxu0
        %7289 = vmatprep.subr.bf16.mxu0 %v5515
        %7290 = vmatpush1.bf16.msra.mxu0 %v5514
        %7291 = vmatprep.subr.bf16.mxu0 %v5519
        %7292 = vmatpush1.bf16.msra.mxu0 %v5518
        %7293 = vmatprep.subr.bf16.mxu0 %v5523
        %7294 = vmatpush1.bf16.msra.mxu0 %v5522
        %7295 = vmatprep.subr.bf16.mxu0 %v5527
        %7296 = vmatpush1.bf16.msra.mxu0 %v5526
        %7297 = vmatprep.subr.bf16.mxu0 %v5531
        %7298 = vmatpush1.bf16.msra.mxu0 %v5530
        %7299 = vmatprep.subr.bf16.mxu0 %v5535
        %7300 = vmatpush1.bf16.msra.mxu0 %v5534
        %7301 = vmatprep.subr.bf16.mxu0 %v5539
        %7302 = vmatpush1.bf16.msra.mxu0 %v5538
        %7303 = vmatprep.subr.bf16.mxu0 %v5543
        %7304 = vmatpush1.bf16.msra.mxu0 %v5542
        %7305 = vmatprep.subr.bf16.mxu0 %v5547
        %7306 = vmatpush1.bf16.msra.mxu0 %v5546
        %7307 = vmatprep.subr.bf16.mxu0 %v5551
        %7308 = vmatpush1.bf16.msra.mxu0 %v5550
        %7309 = vmatprep.subr.bf16.mxu0 %v5555
        %7310 = vmatpush1.bf16.msra.mxu0 %v5554
        %7311 = vmatprep.subr.bf16.mxu0 %v5559
        %7312 = vmatpush1.bf16.msra.mxu0 %v5558
        %7313 = vmatprep.subr.bf16.mxu0 %v5563
        %7314 = vmatpush1.bf16.msra.mxu0 %v5562
        %7315 = vmatprep.subr.bf16.mxu0 %v5567
        %7316 = vmatpush1.bf16.msra.mxu0 %v5566
        %7317 = vmatprep.subr.bf16.mxu0 %v5571
        %7318 = vmatpush1.bf16.msra.mxu0 %v5570
        %7319 = vmatprep.subr.bf16.mxu0 %v5575
        %7320 = vmatpush1.bf16.msra.mxu0 %v5574
        %7321 = vmatprep.mubr.bf16.mxu0 %v1573
        %7322 = vmatmul.mubr.bf16.gmra.mrb[0].mxu0 %v1572
        %v7323 = vpop.f32.mrb[0].mxu0
        %v7324 = vadd.f32 %v7281, %v7323
        %v7325 = vpop.f32.mrb[0].mxu0
        %v7326 = vadd.f32 %v7283, %v7325
        %v7327 = vpop.f32.mrb[0].mxu0
        %v7328 = vadd.f32 %v7285, %v7327
        %v7329 = vpop.f32.mrb[0].mxu0
        %v7330 = vadd.f32 %v7287, %v7329
        %7331 = vdwg.mxu0
        %7332 = vmatprep.subr.bf16.mxu0 %v5579
        %7333 = vmatpush1.bf16.msra.mxu0 %v5578
        %7334 = vmatprep.subr.bf16.mxu0 %v5583
        %7335 = vmatpush1.bf16.msra.mxu0 %v5582
        %7336 = vmatprep.subr.bf16.mxu0 %v5587
        %7337 = vmatpush1.bf16.msra.mxu0 %v5586
        %7338 = vmatprep.subr.bf16.mxu0 %v5591
        %7339 = vmatpush1.bf16.msra.mxu0 %v5590
        %7340 = vmatprep.subr.bf16.mxu0 %v5595
        %7341 = vmatpush1.bf16.msra.mxu0 %v5594
        %7342 = vmatprep.subr.bf16.mxu0 %v5599
        %7343 = vmatpush1.bf16.msra.mxu0 %v5598
        %7344 = vmatprep.subr.bf16.mxu0 %v5603
        %7345 = vmatpush1.bf16.msra.mxu0 %v5602
        %7346 = vmatprep.subr.bf16.mxu0 %v5607
        %7347 = vmatpush1.bf16.msra.mxu0 %v5606
        %7348 = vmatprep.subr.bf16.mxu0 %v5611
        %7349 = vmatpush1.bf16.msra.mxu0 %v5610
        %7350 = vmatprep.subr.bf16.mxu0 %v5615
        %7351 = vmatpush1.bf16.msra.mxu0 %v5614
        %7352 = vmatprep.subr.bf16.mxu0 %v5619
        %7353 = vmatpush1.bf16.msra.mxu0 %v5618
        %7354 = vmatprep.subr.bf16.mxu0 %v5623
        %7355 = vmatpush1.bf16.msra.mxu0 %v5622
        %7356 = vmatprep.subr.bf16.mxu0 %v5627
        %7357 = vmatpush1.bf16.msra.mxu0 %v5626
        %7358 = vmatprep.subr.bf16.mxu0 %v5631
        %7359 = vmatpush1.bf16.msra.mxu0 %v5630
        %7360 = vmatprep.subr.bf16.mxu0 %v5635
        %7361 = vmatpush1.bf16.msra.mxu0 %v5634
        %7362 = vmatprep.subr.bf16.mxu0 %v5639
        %7363 = vmatpush1.bf16.msra.mxu0 %v5638
        %7364 = vmatprep.mubr.bf16.mxu0 %v1575
        %7365 = vmatmul.mubr.bf16.gmra.mrb[0].mxu0 %v1574
        %v7366 = vpop.f32.mrb[0].mxu0
        %v7367 = vadd.f32 %v7324, %v7366
        %v7368 = vpop.f32.mrb[0].mxu0
        %v7369 = vadd.f32 %v7326, %v7368
        %v7370 = vpop.f32.mrb[0].mxu0
        %v7371 = vadd.f32 %v7328, %v7370
        %v7372 = vpop.f32.mrb[0].mxu0
        %v7373 = vadd.f32 %v7330, %v7372
        %7374 = vdwg.mxu0
        %7375 = vmatprep.subr.bf16.mxu0 %v5643
        %7376 = vmatpush1.bf16.msra.mxu0 %v5642
        %7377 = vmatprep.subr.bf16.mxu0 %v5647
        %7378 = vmatpush1.bf16.msra.mxu0 %v5646
        %7379 = vmatprep.subr.bf16.mxu0 %v5651
        %7380 = vmatpush1.bf16.msra.mxu0 %v5650
        %7381 = vmatprep.subr.bf16.mxu0 %v5655
        %7382 = vmatpush1.bf16.msra.mxu0 %v5654
        %7383 = vmatprep.subr.bf16.mxu0 %v5659
        %7384 = vmatpush1.bf16.msra.mxu0 %v5658
        %7385 = vmatprep.subr.bf16.mxu0 %v5663
        %7386 = vmatpush1.bf16.msra.mxu0 %v5662
        %7387 = vmatprep.subr.bf16.mxu0 %v5667
        %7388 = vmatpush1.bf16.msra.mxu0 %v5666
        %7389 = vmatprep.subr.bf16.mxu0 %v5671
        %7390 = vmatpush1.bf16.msra.mxu0 %v5670
        %7391 = vmatprep.subr.bf16.mxu0 %v5675
        %7392 = vmatpush1.bf16.msra.mxu0 %v5674
        %7393 = vmatprep.subr.bf16.mxu0 %v5679
        %7394 = vmatpush1.bf16.msra.mxu0 %v5678
        %7395 = vmatprep.subr.bf16.mxu0 %v5683
        %7396 = vmatpush1.bf16.msra.mxu0 %v5682
        %7397 = vmatprep.subr.bf16.mxu0 %v5687
        %7398 = vmatpush1.bf16.msra.mxu0 %v5686
        %7399 = vmatprep.subr.bf16.mxu0 %v5691
        %7400 = vmatpush1.bf16.msra.mxu0 %v5690
        %7401 = vmatprep.subr.bf16.mxu0 %v5695
        %7402 = vmatpush1.bf16.msra.mxu0 %v5694
        %7403 = vmatprep.subr.bf16.mxu0 %v5699
        %7404 = vmatpush1.bf16.msra.mxu0 %v5698
        %7405 = vmatprep.subr.bf16.mxu0 %v5703
        %7406 = vmatpush1.bf16.msra.mxu0 %v5702
        %7407 = vmatprep.mubr.bf16.mxu0 %v1577
        %7408 = vmatmul.mubr.bf16.gmra.mrb[0].mxu0 %v1576
        %v7409 = vpop.f32.mrb[0].mxu0
        %v7410 = vadd.f32 %v7367, %v7409
        %v7411 = vpop.f32.mrb[0].mxu0
        %v7412 = vadd.f32 %v7369, %v7411
        %v7413 = vpop.f32.mrb[0].mxu0
        %v7414 = vadd.f32 %v7371, %v7413
        %v7415 = vpop.f32.mrb[0].mxu0
        %v7416 = vadd.f32 %v7373, %v7415
        %7417 = vdwg.mxu0
        %7418 = vmatprep.subr.bf16.mxu0 %v4685
        %7419 = vmatpush1.bf16.msra.mxu0 %v4684
        %7420 = vmatprep.subr.bf16.mxu0 %v4689
        %7421 = vmatpush1.bf16.msra.mxu0 %v4688
        %7422 = vmatprep.subr.bf16.mxu0 %v4693
        %7423 = vmatpush1.bf16.msra.mxu0 %v4692
        %7424 = vmatprep.subr.bf16.mxu0 %v4697
        %7425 = vmatpush1.bf16.msra.mxu0 %v4696
        %7426 = vmatprep.subr.bf16.mxu0 %v4701
        %7427 = vmatpush1.bf16.msra.mxu0 %v4700
        %7428 = vmatprep.subr.bf16.mxu0 %v4705
        %7429 = vmatpush1.bf16.msra.mxu0 %v4704
        %7430 = vmatprep.subr.bf16.mxu0 %v4709
        %7431 = vmatpush1.bf16.msra.mxu0 %v4708
        %7432 = vmatprep.subr.bf16.mxu0 %v4713
        %7433 = vmatpush1.bf16.msra.mxu0 %v4712
        %7434 = vmatprep.subr.bf16.mxu0 %v4717
        %7435 = vmatpush1.bf16.msra.mxu0 %v4716
        %7436 = vmatprep.subr.bf16.mxu0 %v4721
        %7437 = vmatpush1.bf16.msra.mxu0 %v4720
        %7438 = vmatprep.subr.bf16.mxu0 %v4725
        %7439 = vmatpush1.bf16.msra.mxu0 %v4724
        %7440 = vmatprep.subr.bf16.mxu0 %v4729
        %7441 = vmatpush1.bf16.msra.mxu0 %v4728
        %7442 = vmatprep.subr.bf16.mxu0 %v4733
        %7443 = vmatpush1.bf16.msra.mxu0 %v4732
        %7444 = vmatprep.subr.bf16.mxu0 %v4737
        %7445 = vmatpush1.bf16.msra.mxu0 %v4736
        %7446 = vmatprep.subr.bf16.mxu0 %v4741
        %7447 = vmatpush1.bf16.msra.mxu0 %v4740
        %7448 = vmatprep.subr.bf16.mxu0 %v4745
        %7449 = vmatpush1.bf16.msra.mxu0 %v4744
        %7450 = vmatprep.mubr.bf16.mxu0 %v1547
        %7451 = vmatmul.mubr.bf16.gmra.mrb[0].mxu0 %v1546
        %v7452 = vpop.f32.mrb[0].mxu0
        %v7453 = vadd.f32 0.0, %v7452
        %v7454 = vpop.f32.mrb[0].mxu0
        %v7455 = vadd.f32 0.0, %v7454
        %v7456 = vpop.f32.mrb[0].mxu0
        %v7457 = vadd.f32 0.0, %v7456
        %v7458 = vpop.f32.mrb[0].mxu0
        %v7459 = vadd.f32 0.0, %v7458
        %7460 = vdwg.mxu0
        %7461 = vmatprep.subr.bf16.mxu0 %v4749
        %7462 = vmatpush1.bf16.msra.mxu0 %v4748
        %7463 = vmatprep.subr.bf16.mxu0 %v4753
        %7464 = vmatpush1.bf16.msra.mxu0 %v4752
        %7465 = vmatprep.subr.bf16.mxu0 %v4757
        %7466 = vmatpush1.bf16.msra.mxu0 %v4756
        %7467 = vmatprep.subr.bf16.mxu0 %v4761
        %7468 = vmatpush1.bf16.msra.mxu0 %v4760
        %7469 = vmatprep.subr.bf16.mxu0 %v4765
        %7470 = vmatpush1.bf16.msra.mxu0 %v4764
        %7471 = vmatprep.subr.bf16.mxu0 %v4769
        %7472 = vmatpush1.bf16.msra.mxu0 %v4768
        %7473 = vmatprep.subr.bf16.mxu0 %v4773
        %7474 = vmatpush1.bf16.msra.mxu0 %v4772
        %7475 = vmatprep.subr.bf16.mxu0 %v4777
        %7476 = vmatpush1.bf16.msra.mxu0 %v4776
        %7477 = vmatprep.subr.bf16.mxu0 %v4781
        %7478 = vmatpush1.bf16.msra.mxu0 %v4780
        %7479 = vmatprep.subr.bf16.mxu0 %v4785
        %7480 = vmatpush1.bf16.msra.mxu0 %v4784
        %7481 = vmatprep.subr.bf16.mxu0 %v4789
        %7482 = vmatpush1.bf16.msra.mxu0 %v4788
        %7483 = vmatprep.subr.bf16.mxu0 %v4793
        %7484 = vmatpush1.bf16.msra.mxu0 %v4792
        %7485 = vmatprep.subr.bf16.mxu0 %v4797
        %7486 = vmatpush1.bf16.msra.mxu0 %v4796
        %7487 = vmatprep.subr.bf16.mxu0 %v4801
        %7488 = vmatpush1.bf16.msra.mxu0 %v4800
        %7489 = vmatprep.subr.bf16.mxu0 %v4805
        %7490 = vmatpush1.bf16.msra.mxu0 %v4804
        %7491 = vmatprep.subr.bf16.mxu0 %v4809
        %7492 = vmatpush1.bf16.msra.mxu0 %v4808
        %7493 = vmatprep.mubr.bf16.mxu0 %v1549
        %7494 = vmatmul.mubr.bf16.gmra.mrb[0].mxu0 %v1548
        %v7495 = vpop.f32.mrb[0].mxu0
        %v7496 = vadd.f32 %v7453, %v7495
        %v7497 = vpop.f32.mrb[0].mxu0
        %v7498 = vadd.f32 %v7455, %v7497
        %v7499 = vpop.f32.mrb[0].mxu0
        %v7500 = vadd.f32 %v7457, %v7499
        %v7501 = vpop.f32.mrb[0].mxu0
        %v7502 = vadd.f32 %v7459, %v7501
        %7503 = vdwg.mxu0
        %7504 = vmatprep.subr.bf16.mxu0 %v4813
        %7505 = vmatpush1.bf16.msra.mxu0 %v4812
        %7506 = vmatprep.subr.bf16.mxu0 %v4817
        %7507 = vmatpush1.bf16.msra.mxu0 %v4816
        %7508 = vmatprep.subr.bf16.mxu0 %v4821
        %7509 = vmatpush1.bf16.msra.mxu0 %v4820
        %7510 = vmatprep.subr.bf16.mxu0 %v4825
        %7511 = vmatpush1.bf16.msra.mxu0 %v4824
        %7512 = vmatprep.subr.bf16.mxu0 %v4829
        %7513 = vmatpush1.bf16.msra.mxu0 %v4828
        %7514 = vmatprep.subr.bf16.mxu0 %v4833
        %7515 = vmatpush1.bf16.msra.mxu0 %v4832
        %7516 = vmatprep.subr.bf16.mxu0 %v4837
        %7517 = vmatpush1.bf16.msra.mxu0 %v4836
        %7518 = vmatprep.subr.bf16.mxu0 %v4841
        %7519 = vmatpush1.bf16.msra.mxu0 %v4840
        %7520 = vmatprep.subr.bf16.mxu0 %v4845
        %7521 = vmatpush1.bf16.msra.mxu0 %v4844
        %7522 = vmatprep.subr.bf16.mxu0 %v4849
        %7523 = vmatpush1.bf16.msra.mxu0 %v4848
        %7524 = vmatprep.subr.bf16.mxu0 %v4853
        %7525 = vmatpush1.bf16.msra.mxu0 %v4852
        %7526 = vmatprep.subr.bf16.mxu0 %v4857
        %7527 = vmatpush1.bf16.msra.mxu0 %v4856
        %7528 = vmatprep.subr.bf16.mxu0 %v4861
        %7529 = vmatpush1.bf16.msra.mxu0 %v4860
        %7530 = vmatprep.subr.bf16.mxu0 %v4865
        %7531 = vmatpush1.bf16.msra.mxu0 %v4864
        %7532 = vmatprep.subr.bf16.mxu0 %v4869
        %7533 = vmatpush1.bf16.msra.mxu0 %v4868
        %7534 = vmatprep.subr.bf16.mxu0 %v4873
        %7535 = vmatpush1.bf16.msra.mxu0 %v4872
        %7536 = vmatprep.mubr.bf16.mxu0 %v1551
        %7537 = vmatmul.mubr.bf16.gmra.mrb[0].mxu0 %v1550
        %v7538 = vpop.f32.mrb[0].mxu0
        %v7539 = vadd.f32 %v7496, %v7538
        %v7540 = vpop.f32.mrb[0].mxu0
        %v7541 = vadd.f32 %v7498, %v7540
        %v7542 = vpop.f32.mrb[0].mxu0
        %v7543 = vadd.f32 %v7500, %v7542
        %v7544 = vpop.f32.mrb[0].mxu0
        %v7545 = vadd.f32 %v7502, %v7544
        %7546 = vdwg.mxu0
        %7547 = vmatprep.subr.bf16.mxu0 %v4877
        %7548 = vmatpush1.bf16.msra.mxu0 %v4876
        %7549 = vmatprep.subr.bf16.mxu0 %v4881
        %7550 = vmatpush1.bf16.msra.mxu0 %v4880
        %7551 = vmatprep.subr.bf16.mxu0 %v4885
        %7552 = vmatpush1.bf16.msra.mxu0 %v4884
        %7553 = vmatprep.subr.bf16.mxu0 %v4889
        %7554 = vmatpush1.bf16.msra.mxu0 %v4888
        %7555 = vmatprep.subr.bf16.mxu0 %v4893
        %7556 = vmatpush1.bf16.msra.mxu0 %v4892
        %7557 = vmatprep.subr.bf16.mxu0 %v4897
        %7558 = vmatpush1.bf16.msra.mxu0 %v4896
        %7559 = vmatprep.subr.bf16.mxu0 %v4901
        %7560 = vmatpush1.bf16.msra.mxu0 %v4900
        %7561 = vmatprep.subr.bf16.mxu0 %v4905
        %7562 = vmatpush1.bf16.msra.mxu0 %v4904
        %7563 = vmatprep.subr.bf16.mxu0 %v4909
        %7564 = vmatpush1.bf16.msra.mxu0 %v4908
        %7565 = vmatprep.subr.bf16.mxu0 %v4913
        %7566 = vmatpush1.bf16.msra.mxu0 %v4912
        %7567 = vmatprep.subr.bf16.mxu0 %v4917
        %7568 = vmatpush1.bf16.msra.mxu0 %v4916
        %7569 = vmatprep.subr.bf16.mxu0 %v4921
        %7570 = vmatpush1.bf16.msra.mxu0 %v4920
        %7571 = vmatprep.subr.bf16.mxu0 %v4925
        %7572 = vmatpush1.bf16.msra.mxu0 %v4924
        %7573 = vmatprep.subr.bf16.mxu0 %v4929
        %7574 = vmatpush1.bf16.msra.mxu0 %v4928
        %7575 = vmatprep.subr.bf16.mxu0 %v4933
        %7576 = vmatpush1.bf16.msra.mxu0 %v4932
        %7577 = vmatprep.subr.bf16.mxu0 %v4937
        %7578 = vmatpush1.bf16.msra.mxu0 %v4936
        %7579 = vmatprep.mubr.bf16.mxu0 %v1553
        %7580 = vmatmul.mubr.bf16.gmra.mrb[0].mxu0 %v1552
        %v7581 = vpop.f32.mrb[0].mxu0
        %v7582 = vadd.f32 %v7539, %v7581
        %v7583 = vpop.f32.mrb[0].mxu0
        %v7584 = vadd.f32 %v7541, %v7583
        %v7585 = vpop.f32.mrb[0].mxu0
        %v7586 = vadd.f32 %v7543, %v7585
        %v7587 = vpop.f32.mrb[0].mxu0
        %v7588 = vadd.f32 %v7545, %v7587
        %7589 = vdwg.mxu0
        %7590 = vmatprep.subr.bf16.mxu0 %v4941
        %7591 = vmatpush1.bf16.msra.mxu0 %v4940
        %7592 = vmatprep.subr.bf16.mxu0 %v4945
        %7593 = vmatpush1.bf16.msra.mxu0 %v4944
        %7594 = vmatprep.subr.bf16.mxu0 %v4949
        %7595 = vmatpush1.bf16.msra.mxu0 %v4948
        %7596 = vmatprep.subr.bf16.mxu0 %v4953
        %7597 = vmatpush1.bf16.msra.mxu0 %v4952
        %7598 = vmatprep.subr.bf16.mxu0 %v4957
        %7599 = vmatpush1.bf16.msra.mxu0 %v4956
        %7600 = vmatprep.subr.bf16.mxu0 %v4961
        %7601 = vmatpush1.bf16.msra.mxu0 %v4960
        %7602 = vmatprep.subr.bf16.mxu0 %v4965
        %7603 = vmatpush1.bf16.msra.mxu0 %v4964
        %7604 = vmatprep.subr.bf16.mxu0 %v4969
        %7605 = vmatpush1.bf16.msra.mxu0 %v4968
        %7606 = vmatprep.subr.bf16.mxu0 %v4973
        %7607 = vmatpush1.bf16.msra.mxu0 %v4972
        %7608 = vmatprep.subr.bf16.mxu0 %v4977
        %7609 = vmatpush1.bf16.msra.mxu0 %v4976
        %7610 = vmatprep.subr.bf16.mxu0 %v4981
        %7611 = vmatpush1.bf16.msra.mxu0 %v4980
        %7612 = vmatprep.subr.bf16.mxu0 %v4985
        %7613 = vmatpush1.bf16.msra.mxu0 %v4984
        %7614 = vmatprep.subr.bf16.mxu0 %v4989
        %7615 = vmatpush1.bf16.msra.mxu0 %v4988
        %7616 = vmatprep.subr.bf16.mxu0 %v4993
        %7617 = vmatpush1.bf16.msra.mxu0 %v4992
        %7618 = vmatprep.subr.bf16.mxu0 %v4997
        %7619 = vmatpush1.bf16.msra.mxu0 %v4996
        %7620 = vmatprep.subr.bf16.mxu0 %v5001
        %7621 = vmatpush1.bf16.msra.mxu0 %v5000
        %7622 = vmatprep.mubr.bf16.mxu0 %v1555
        %7623 = vmatmul.mubr.bf16.gmra.mrb[0].mxu0 %v1554
        %v7624 = vpop.f32.mrb[0].mxu0
        %v7625 = vadd.f32 %v7582, %v7624
        %v7626 = vpop.f32.mrb[0].mxu0
        %v7627 = vadd.f32 %v7584, %v7626
        %v7628 = vpop.f32.mrb[0].mxu0
        %v7629 = vadd.f32 %v7586, %v7628
        %v7630 = vpop.f32.mrb[0].mxu0
        %v7631 = vadd.f32 %v7588, %v7630
        %7632 = vdwg.mxu0
        %7633 = vmatprep.subr.bf16.mxu0 %v5005
        %7634 = vmatpush1.bf16.msra.mxu0 %v5004
        %7635 = vmatprep.subr.bf16.mxu0 %v5009
        %7636 = vmatpush1.bf16.msra.mxu0 %v5008
        %7637 = vmatprep.subr.bf16.mxu0 %v5013
        %7638 = vmatpush1.bf16.msra.mxu0 %v5012
        %7639 = vmatprep.subr.bf16.mxu0 %v5017
        %7640 = vmatpush1.bf16.msra.mxu0 %v5016
        %7641 = vmatprep.subr.bf16.mxu0 %v5021
        %7642 = vmatpush1.bf16.msra.mxu0 %v5020
        %7643 = vmatprep.subr.bf16.mxu0 %v5025
        %7644 = vmatpush1.bf16.msra.mxu0 %v5024
        %7645 = vmatprep.subr.bf16.mxu0 %v5029
        %7646 = vmatpush1.bf16.msra.mxu0 %v5028
        %7647 = vmatprep.subr.bf16.mxu0 %v5033
        %7648 = vmatpush1.bf16.msra.mxu0 %v5032
        %7649 = vmatprep.subr.bf16.mxu0 %v5037
        %7650 = vmatpush1.bf16.msra.mxu0 %v5036
        %7651 = vmatprep.subr.bf16.mxu0 %v5041
        %7652 = vmatpush1.bf16.msra.mxu0 %v5040
        %7653 = vmatprep.subr.bf16.mxu0 %v5045
        %7654 = vmatpush1.bf16.msra.mxu0 %v5044
        %7655 = vmatprep.subr.bf16.mxu0 %v5049
        %7656 = vmatpush1.bf16.msra.mxu0 %v5048
        %7657 = vmatprep.subr.bf16.mxu0 %v5053
        %7658 = vmatpush1.bf16.msra.mxu0 %v5052
        %7659 = vmatprep.subr.bf16.mxu0 %v5057
        %7660 = vmatpush1.bf16.msra.mxu0 %v5056
        %7661 = vmatprep.subr.bf16.mxu0 %v5061
        %7662 = vmatpush1.bf16.msra.mxu0 %v5060
        %7663 = vmatprep.subr.bf16.mxu0 %v5065
        %7664 = vmatpush1.bf16.msra.mxu0 %v5064
        %7665 = vmatprep.mubr.bf16.mxu0 %v1557
        %7666 = vmatmul.mubr.bf16.gmra.mrb[0].mxu0 %v1556
        %v7667 = vpop.f32.mrb[0].mxu0
        %v7668 = vadd.f32 %v7625, %v7667
        %v7669 = vpop.f32.mrb[0].mxu0
        %v7670 = vadd.f32 %v7627, %v7669
        %v7671 = vpop.f32.mrb[0].mxu0
        %v7672 = vadd.f32 %v7629, %v7671
        %v7673 = vpop.f32.mrb[0].mxu0
        %v7674 = vadd.f32 %v7631, %v7673
        %7675 = vdwg.mxu0
        %7676 = vmatprep.subr.bf16.mxu0 %v5069
        %7677 = vmatpush1.bf16.msra.mxu0 %v5068
        %7678 = vmatprep.subr.bf16.mxu0 %v5073
        %7679 = vmatpush1.bf16.msra.mxu0 %v5072
        %7680 = vmatprep.subr.bf16.mxu0 %v5077
        %7681 = vmatpush1.bf16.msra.mxu0 %v5076
        %7682 = vmatprep.subr.bf16.mxu0 %v5081
        %7683 = vmatpush1.bf16.msra.mxu0 %v5080
        %7684 = vmatprep.subr.bf16.mxu0 %v5085
        %7685 = vmatpush1.bf16.msra.mxu0 %v5084
        %7686 = vmatprep.subr.bf16.mxu0 %v5089
        %7687 = vmatpush1.bf16.msra.mxu0 %v5088
        %7688 = vmatprep.subr.bf16.mxu0 %v5093
        %7689 = vmatpush1.bf16.msra.mxu0 %v5092
        %7690 = vmatprep.subr.bf16.mxu0 %v5097
        %7691 = vmatpush1.bf16.msra.mxu0 %v5096
        %7692 = vmatprep.subr.bf16.mxu0 %v5101
        %7693 = vmatpush1.bf16.msra.mxu0 %v5100
        %7694 = vmatprep.subr.bf16.mxu0 %v5105
        %7695 = vmatpush1.bf16.msra.mxu0 %v5104
        %7696 = vmatprep.subr.bf16.mxu0 %v5109
        %7697 = vmatpush1.bf16.msra.mxu0 %v5108
        %7698 = vmatprep.subr.bf16.mxu0 %v5113
        %7699 = vmatpush1.bf16.msra.mxu0 %v5112
        %7700 = vmatprep.subr.bf16.mxu0 %v5117
        %7701 = vmatpush1.bf16.msra.mxu0 %v5116
        %7702 = vmatprep.subr.bf16.mxu0 %v5121
        %7703 = vmatpush1.bf16.msra.mxu0 %v5120
        %7704 = vmatprep.subr.bf16.mxu0 %v5125
        %7705 = vmatpush1.bf16.msra.mxu0 %v5124
        %7706 = vmatprep.subr.bf16.mxu0 %v5129
        %7707 = vmatpush1.bf16.msra.mxu0 %v5128
        %7708 = vmatprep.mubr.bf16.mxu0 %v1559
        %7709 = vmatmul.mubr.bf16.gmra.mrb[0].mxu0 %v1558
        %v7710 = vpop.f32.mrb[0].mxu0
        %v7711 = vadd.f32 %v7668, %v7710
        %v7712 = vpop.f32.mrb[0].mxu0
        %v7713 = vadd.f32 %v7670, %v7712
        %v7714 = vpop.f32.mrb[0].mxu0
        %v7715 = vadd.f32 %v7672, %v7714
        %v7716 = vpop.f32.mrb[0].mxu0
        %v7717 = vadd.f32 %v7674, %v7716
        %7718 = vdwg.mxu0
        %7719 = vmatprep.subr.bf16.mxu0 %v5133
        %7720 = vmatpush1.bf16.msra.mxu0 %v5132
        %7721 = vmatprep.subr.bf16.mxu0 %v5137
        %7722 = vmatpush1.bf16.msra.mxu0 %v5136
        %7723 = vmatprep.subr.bf16.mxu0 %v5141
        %7724 = vmatpush1.bf16.msra.mxu0 %v5140
        %7725 = vmatprep.subr.bf16.mxu0 %v5145
        %7726 = vmatpush1.bf16.msra.mxu0 %v5144
        %7727 = vmatprep.subr.bf16.mxu0 %v5149
        %7728 = vmatpush1.bf16.msra.mxu0 %v5148
        %7729 = vmatprep.subr.bf16.mxu0 %v5153
        %7730 = vmatpush1.bf16.msra.mxu0 %v5152
        %7731 = vmatprep.subr.bf16.mxu0 %v5157
        %7732 = vmatpush1.bf16.msra.mxu0 %v5156
        %7733 = vmatprep.subr.bf16.mxu0 %v5161
        %7734 = vmatpush1.bf16.msra.mxu0 %v5160
        %7735 = vmatprep.subr.bf16.mxu0 %v5165
        %7736 = vmatpush1.bf16.msra.mxu0 %v5164
        %7737 = vmatprep.subr.bf16.mxu0 %v5169
        %7738 = vmatpush1.bf16.msra.mxu0 %v5168
        %7739 = vmatprep.subr.bf16.mxu0 %v5173
        %7740 = vmatpush1.bf16.msra.mxu0 %v5172
        %7741 = vmatprep.subr.bf16.mxu0 %v5177
        %7742 = vmatpush1.bf16.msra.mxu0 %v5176
        %7743 = vmatprep.subr.bf16.mxu0 %v5181
        %7744 = vmatpush1.bf16.msra.mxu0 %v5180
        %7745 = vmatprep.subr.bf16.mxu0 %v5185
        %7746 = vmatpush1.bf16.msra.mxu0 %v5184
        %7747 = vmatprep.subr.bf16.mxu0 %v5189
        %7748 = vmatpush1.bf16.msra.mxu0 %v5188
        %7749 = vmatprep.subr.bf16.mxu0 %v5193
        %7750 = vmatpush1.bf16.msra.mxu0 %v5192
        %7751 = vmatprep.mubr.bf16.mxu0 %v1561
        %7752 = vmatmul.mubr.bf16.gmra.mrb[0].mxu0 %v1560
        %v7753 = vpop.f32.mrb[0].mxu0
        %v7754 = vadd.f32 %v7711, %v7753
        %v7755 = vpop.f32.mrb[0].mxu0
        %v7756 = vadd.f32 %v7713, %v7755
        %v7757 = vpop.f32.mrb[0].mxu0
        %v7758 = vadd.f32 %v7715, %v7757
        %v7759 = vpop.f32.mrb[0].mxu0
        %v7760 = vadd.f32 %v7717, %v7759
        %7761 = vdwg.mxu0
        %7762 = vmatprep.subr.bf16.mxu0 %v5197
        %7763 = vmatpush1.bf16.msra.mxu0 %v5196
        %7764 = vmatprep.subr.bf16.mxu0 %v5201
        %7765 = vmatpush1.bf16.msra.mxu0 %v5200
        %7766 = vmatprep.subr.bf16.mxu0 %v5205
        %7767 = vmatpush1.bf16.msra.mxu0 %v5204
        %7768 = vmatprep.subr.bf16.mxu0 %v5209
        %7769 = vmatpush1.bf16.msra.mxu0 %v5208
        %7770 = vmatprep.subr.bf16.mxu0 %v5213
        %7771 = vmatpush1.bf16.msra.mxu0 %v5212
        %7772 = vmatprep.subr.bf16.mxu0 %v5217
        %7773 = vmatpush1.bf16.msra.mxu0 %v5216
        %7774 = vmatprep.subr.bf16.mxu0 %v5221
        %7775 = vmatpush1.bf16.msra.mxu0 %v5220
        %7776 = vmatprep.subr.bf16.mxu0 %v5225
        %7777 = vmatpush1.bf16.msra.mxu0 %v5224
        %7778 = vmatprep.subr.bf16.mxu0 %v5229
        %7779 = vmatpush1.bf16.msra.mxu0 %v5228
        %7780 = vmatprep.subr.bf16.mxu0 %v5233
        %7781 = vmatpush1.bf16.msra.mxu0 %v5232
        %7782 = vmatprep.subr.bf16.mxu0 %v5237
        %7783 = vmatpush1.bf16.msra.mxu0 %v5236
        %7784 = vmatprep.subr.bf16.mxu0 %v5241
        %7785 = vmatpush1.bf16.msra.mxu0 %v5240
        %7786 = vmatprep.subr.bf16.mxu0 %v5245
        %7787 = vmatpush1.bf16.msra.mxu0 %v5244
        %7788 = vmatprep.subr.bf16.mxu0 %v5249
        %7789 = vmatpush1.bf16.msra.mxu0 %v5248
        %7790 = vmatprep.subr.bf16.mxu0 %v5253
        %7791 = vmatpush1.bf16.msra.mxu0 %v5252
        %7792 = vmatprep.subr.bf16.mxu0 %v5257
        %7793 = vmatpush1.bf16.msra.mxu0 %v5256
        %7794 = vmatprep.mubr.bf16.mxu0 %v1563
        %7795 = vmatmul.mubr.bf16.gmra.mrb[0].mxu0 %v1562
        %v7796 = vpop.f32.mrb[0].mxu0
        %v7797 = vadd.f32 %v7754, %v7796
        %v7798 = vpop.f32.mrb[0].mxu0
        %v7799 = vadd.f32 %v7756, %v7798
        %v7800 = vpop.f32.mrb[0].mxu0
        %v7801 = vadd.f32 %v7758, %v7800
        %v7802 = vpop.f32.mrb[0].mxu0
        %v7803 = vadd.f32 %v7760, %v7802
        %7804 = vdwg.mxu0
        %7805 = vmatprep.subr.bf16.mxu0 %v5261
        %7806 = vmatpush1.bf16.msra.mxu0 %v5260
        %7807 = vmatprep.subr.bf16.mxu0 %v5265
        %7808 = vmatpush1.bf16.msra.mxu0 %v5264
        %7809 = vmatprep.subr.bf16.mxu0 %v5269
        %7810 = vmatpush1.bf16.msra.mxu0 %v5268
        %7811 = vmatprep.subr.bf16.mxu0 %v5273
        %7812 = vmatpush1.bf16.msra.mxu0 %v5272
        %7813 = vmatprep.subr.bf16.mxu0 %v5277
        %7814 = vmatpush1.bf16.msra.mxu0 %v5276
        %7815 = vmatprep.subr.bf16.mxu0 %v5281
        %7816 = vmatpush1.bf16.msra.mxu0 %v5280
        %7817 = vmatprep.subr.bf16.mxu0 %v5285
        %7818 = vmatpush1.bf16.msra.mxu0 %v5284
        %7819 = vmatprep.subr.bf16.mxu0 %v5289
        %7820 = vmatpush1.bf16.msra.mxu0 %v5288
        %7821 = vmatprep.subr.bf16.mxu0 %v5293
        %7822 = vmatpush1.bf16.msra.mxu0 %v5292
        %7823 = vmatprep.subr.bf16.mxu0 %v5297
        %7824 = vmatpush1.bf16.msra.mxu0 %v5296
        %7825 = vmatprep.subr.bf16.mxu0 %v5301
        %7826 = vmatpush1.bf16.msra.mxu0 %v5300
        %7827 = vmatprep.subr.bf16.mxu0 %v5305
        %7828 = vmatpush1.bf16.msra.mxu0 %v5304
        %7829 = vmatprep.subr.bf16.mxu0 %v5309
        %7830 = vmatpush1.bf16.msra.mxu0 %v5308
        %7831 = vmatprep.subr.bf16.mxu0 %v5313
        %7832 = vmatpush1.bf16.msra.mxu0 %v5312
        %7833 = vmatprep.subr.bf16.mxu0 %v5317
        %7834 = vmatpush1.bf16.msra.mxu0 %v5316
        %7835 = vmatprep.subr.bf16.mxu0 %v5321
        %7836 = vmatpush1.bf16.msra.mxu0 %v5320
        %7837 = vmatprep.mubr.bf16.mxu0 %v1565
        %7838 = vmatmul.mubr.bf16.gmra.mrb[0].mxu0 %v1564
        %v7839 = vpop.f32.mrb[0].mxu0
        %v7840 = vadd.f32 %v7797, %v7839
        %v7841 = vpop.f32.mrb[0].mxu0
        %v7842 = vadd.f32 %v7799, %v7841
        %v7843 = vpop.f32.mrb[0].mxu0
        %v7844 = vadd.f32 %v7801, %v7843
        %v7845 = vpop.f32.mrb[0].mxu0
        %v7846 = vadd.f32 %v7803, %v7845
        %7847 = vdwg.mxu0
        %7848 = vmatprep.subr.bf16.mxu0 %v5325
        %7849 = vmatpush1.bf16.msra.mxu0 %v5324
        %7850 = vmatprep.subr.bf16.mxu0 %v5329
        %7851 = vmatpush1.bf16.msra.mxu0 %v5328
        %7852 = vmatprep.subr.bf16.mxu0 %v5333
        %7853 = vmatpush1.bf16.msra.mxu0 %v5332
        %7854 = vmatprep.subr.bf16.mxu0 %v5337
        %7855 = vmatpush1.bf16.msra.mxu0 %v5336
        %7856 = vmatprep.subr.bf16.mxu0 %v5341
        %7857 = vmatpush1.bf16.msra.mxu0 %v5340
        %7858 = vmatprep.subr.bf16.mxu0 %v5345
        %7859 = vmatpush1.bf16.msra.mxu0 %v5344
        %7860 = vmatprep.subr.bf16.mxu0 %v5349
        %7861 = vmatpush1.bf16.msra.mxu0 %v5348
        %7862 = vmatprep.subr.bf16.mxu0 %v5353
        %7863 = vmatpush1.bf16.msra.mxu0 %v5352
        %7864 = vmatprep.subr.bf16.mxu0 %v5357
        %7865 = vmatpush1.bf16.msra.mxu0 %v5356
        %7866 = vmatprep.subr.bf16.mxu0 %v5361
        %7867 = vmatpush1.bf16.msra.mxu0 %v5360
        %7868 = vmatprep.subr.bf16.mxu0 %v5365
        %7869 = vmatpush1.bf16.msra.mxu0 %v5364
        %7870 = vmatprep.subr.bf16.mxu0 %v5369
        %7871 = vmatpush1.bf16.msra.mxu0 %v5368
        %7872 = vmatprep.subr.bf16.mxu0 %v5373
        %7873 = vmatpush1.bf16.msra.mxu0 %v5372
        %7874 = vmatprep.subr.bf16.mxu0 %v5377
        %7875 = vmatpush1.bf16.msra.mxu0 %v5376
        %7876 = vmatprep.subr.bf16.mxu0 %v5381
        %7877 = vmatpush1.bf16.msra.mxu0 %v5380
        %7878 = vmatprep.subr.bf16.mxu0 %v5385
        %7879 = vmatpush1.bf16.msra.mxu0 %v5384
        %7880 = vmatprep.mubr.bf16.mxu0 %v1567
        %7881 = vmatmul.mubr.bf16.gmra.mrb[0].mxu0 %v1566
        %v7882 = vpop.f32.mrb[0].mxu0
        %v7883 = vadd.f32 %v7840, %v7882
        %v7884 = vpop.f32.mrb[0].mxu0
        %v7885 = vadd.f32 %v7842, %v7884
        %v7886 = vpop.f32.mrb[0].mxu0
        %v7887 = vadd.f32 %v7844, %v7886
        %v7888 = vpop.f32.mrb[0].mxu0
        %v7889 = vadd.f32 %v7846, %v7888
        %7890 = vdwg.mxu0
        %7891 = vmatprep.subr.bf16.mxu0 %v5389
        %7892 = vmatpush1.bf16.msra.mxu0 %v5388
        %7893 = vmatprep.subr.bf16.mxu0 %v5393
        %7894 = vmatpush1.bf16.msra.mxu0 %v5392
        %7895 = vmatprep.subr.bf16.mxu0 %v5397
        %7896 = vmatpush1.bf16.msra.mxu0 %v5396
        %7897 = vmatprep.subr.bf16.mxu0 %v5401
        %7898 = vmatpush1.bf16.msra.mxu0 %v5400
        %7899 = vmatprep.subr.bf16.mxu0 %v5405
        %7900 = vmatpush1.bf16.msra.mxu0 %v5404
        %7901 = vmatprep.subr.bf16.mxu0 %v5409
        %7902 = vmatpush1.bf16.msra.mxu0 %v5408
        %7903 = vmatprep.subr.bf16.mxu0 %v5413
        %7904 = vmatpush1.bf16.msra.mxu0 %v5412
        %7905 = vmatprep.subr.bf16.mxu0 %v5417
        %7906 = vmatpush1.bf16.msra.mxu0 %v5416
        %7907 = vmatprep.subr.bf16.mxu0 %v5421
        %7908 = vmatpush1.bf16.msra.mxu0 %v5420
        %7909 = vmatprep.subr.bf16.mxu0 %v5425
        %7910 = vmatpush1.bf16.msra.mxu0 %v5424
        %7911 = vmatprep.subr.bf16.mxu0 %v5429
        %7912 = vmatpush1.bf16.msra.mxu0 %v5428
        %7913 = vmatprep.subr.bf16.mxu0 %v5433
        %7914 = vmatpush1.bf16.msra.mxu0 %v5432
        %7915 = vmatprep.subr.bf16.mxu0 %v5437
        %7916 = vmatpush1.bf16.msra.mxu0 %v5436
        %7917 = vmatprep.subr.bf16.mxu0 %v5441
        %7918 = vmatpush1.bf16.msra.mxu0 %v5440
        %7919 = vmatprep.subr.bf16.mxu0 %v5445
        %7920 = vmatpush1.bf16.msra.mxu0 %v5444
        %7921 = vmatprep.subr.bf16.mxu0 %v5449
        %7922 = vmatpush1.bf16.msra.mxu0 %v5448
        %7923 = vmatprep.mubr.bf16.mxu0 %v1569
        %7924 = vmatmul.mubr.bf16.gmra.mrb[0].mxu0 %v1568
        %v7925 = vpop.f32.mrb[0].mxu0
        %v7926 = vadd.f32 %v7883, %v7925
        %v7927 = vpop.f32.mrb[0].mxu0
        %v7928 = vadd.f32 %v7885, %v7927
        %v7929 = vpop.f32.mrb[0].mxu0
        %v7930 = vadd.f32 %v7887, %v7929
        %v7931 = vpop.f32.mrb[0].mxu0
        %v7932 = vadd.f32 %v7889, %v7931
        %7933 = vdwg.mxu0
        %7934 = vmatprep.subr.bf16.mxu0 %v5453
        %7935 = vmatpush1.bf16.msra.mxu0 %v5452
        %7936 = vmatprep.subr.bf16.mxu0 %v5457
        %7937 = vmatpush1.bf16.msra.mxu0 %v5456
        %7938 = vmatprep.subr.bf16.mxu0 %v5461
        %7939 = vmatpush1.bf16.msra.mxu0 %v5460
        %7940 = vmatprep.subr.bf16.mxu0 %v5465
        %7941 = vmatpush1.bf16.msra.mxu0 %v5464
        %7942 = vmatprep.subr.bf16.mxu0 %v5469
        %7943 = vmatpush1.bf16.msra.mxu0 %v5468
        %7944 = vmatprep.subr.bf16.mxu0 %v5473
        %7945 = vmatpush1.bf16.msra.mxu0 %v5472
        %7946 = vmatprep.subr.bf16.mxu0 %v5477
        %7947 = vmatpush1.bf16.msra.mxu0 %v5476
        %7948 = vmatprep.subr.bf16.mxu0 %v5481
        %7949 = vmatpush1.bf16.msra.mxu0 %v5480
        %7950 = vmatprep.subr.bf16.mxu0 %v5485
        %7951 = vmatpush1.bf16.msra.mxu0 %v5484
        %7952 = vmatprep.subr.bf16.mxu0 %v5489
        %7953 = vmatpush1.bf16.msra.mxu0 %v5488
        %7954 = vmatprep.subr.bf16.mxu0 %v5493
        %7955 = vmatpush1.bf16.msra.mxu0 %v5492
        %7956 = vmatprep.subr.bf16.mxu0 %v5497
        %7957 = vmatpush1.bf16.msra.mxu0 %v5496
        %7958 = vmatprep.subr.bf16.mxu0 %v5501
        %7959 = vmatpush1.bf16.msra.mxu0 %v5500
        %7960 = vmatprep.subr.bf16.mxu0 %v5505
        %7961 = vmatpush1.bf16.msra.mxu0 %v5504
        %7962 = vmatprep.subr.bf16.mxu0 %v5509
        %7963 = vmatpush1.bf16.msra.mxu0 %v5508
        %7964 = vmatprep.subr.bf16.mxu0 %v5513
        %7965 = vmatpush1.bf16.msra.mxu0 %v5512
        %7966 = vmatprep.mubr.bf16.mxu0 %v1571
        %7967 = vmatmul.mubr.bf16.gmra.mrb[0].mxu0 %v1570
        %v7968 = vpop.f32.mrb[0].mxu0
        %v7969 = vadd.f32 %v7926, %v7968
        %v7970 = vpop.f32.mrb[0].mxu0
        %v7971 = vadd.f32 %v7928, %v7970
        %v7972 = vpop.f32.mrb[0].mxu0
        %v7973 = vadd.f32 %v7930, %v7972
        %v7974 = vpop.f32.mrb[0].mxu0
        %v7975 = vadd.f32 %v7932, %v7974
        %7976 = vdwg.mxu0
        %7977 = vmatprep.subr.bf16.mxu0 %v5517
        %7978 = vmatpush1.bf16.msra.mxu0 %v5516
        %7979 = vmatprep.subr.bf16.mxu0 %v5521
        %7980 = vmatpush1.bf16.msra.mxu0 %v5520
        %7981 = vmatprep.subr.bf16.mxu0 %v5525
        %7982 = vmatpush1.bf16.msra.mxu0 %v5524
        %7983 = vmatprep.subr.bf16.mxu0 %v5529
        %7984 = vmatpush1.bf16.msra.mxu0 %v5528
        %7985 = vmatprep.subr.bf16.mxu0 %v5533
        %7986 = vmatpush1.bf16.msra.mxu0 %v5532
        %7987 = vmatprep.subr.bf16.mxu0 %v5537
        %7988 = vmatpush1.bf16.msra.mxu0 %v5536
        %7989 = vmatprep.subr.bf16.mxu0 %v5541
        %7990 = vmatpush1.bf16.msra.mxu0 %v5540
        %7991 = vmatprep.subr.bf16.mxu0 %v5545
        %7992 = vmatpush1.bf16.msra.mxu0 %v5544
        %7993 = vmatprep.subr.bf16.mxu0 %v5549
        %7994 = vmatpush1.bf16.msra.mxu0 %v5548
        %7995 = vmatprep.subr.bf16.mxu0 %v5553
        %7996 = vmatpush1.bf16.msra.mxu0 %v5552
        %7997 = vmatprep.subr.bf16.mxu0 %v5557
        %7998 = vmatpush1.bf16.msra.mxu0 %v5556
        %7999 = vmatprep.subr.bf16.mxu0 %v5561
        %8000 = vmatpush1.bf16.msra.mxu0 %v5560
        %8001 = vmatprep.subr.bf16.mxu0 %v5565
        %8002 = vmatpush1.bf16.msra.mxu0 %v5564
        %8003 = vmatprep.subr.bf16.mxu0 %v5569
        %8004 = vmatpush1.bf16.msra.mxu0 %v5568
        %8005 = vmatprep.subr.bf16.mxu0 %v5573
        %8006 = vmatpush1.bf16.msra.mxu0 %v5572
        %8007 = vmatprep.subr.bf16.mxu0 %v5577
        %8008 = vmatpush1.bf16.msra.mxu0 %v5576
        %8009 = vmatprep.mubr.bf16.mxu0 %v1573
        %8010 = vmatmul.mubr.bf16.gmra.mrb[0].mxu0 %v1572
        %v8011 = vpop.f32.mrb[0].mxu0
        %v8012 = vadd.f32 %v7969, %v8011
        %v8013 = vpop.f32.mrb[0].mxu0
        %v8014 = vadd.f32 %v7971, %v8013
        %v8015 = vpop.f32.mrb[0].mxu0
        %v8016 = vadd.f32 %v7973, %v8015
        %v8017 = vpop.f32.mrb[0].mxu0
        %v8018 = vadd.f32 %v7975, %v8017
        %8019 = vdwg.mxu0
        %8020 = vmatprep.subr.bf16.mxu0 %v5581
        %8021 = vmatpush1.bf16.msra.mxu0 %v5580
        %8022 = vmatprep.subr.bf16.mxu0 %v5585
        %8023 = vmatpush1.bf16.msra.mxu0 %v5584
        %8024 = vmatprep.subr.bf16.mxu0 %v5589
        %8025 = vmatpush1.bf16.msra.mxu0 %v5588
        %8026 = vmatprep.subr.bf16.mxu0 %v5593
        %8027 = vmatpush1.bf16.msra.mxu0 %v5592
        %8028 = vmatprep.subr.bf16.mxu0 %v5597
        %8029 = vmatpush1.bf16.msra.mxu0 %v5596
        %8030 = vmatprep.subr.bf16.mxu0 %v5601
        %8031 = vmatpush1.bf16.msra.mxu0 %v5600
        %8032 = vmatprep.subr.bf16.mxu0 %v5605
        %8033 = vmatpush1.bf16.msra.mxu0 %v5604
        %8034 = vmatprep.subr.bf16.mxu0 %v5609
        %8035 = vmatpush1.bf16.msra.mxu0 %v5608
        %8036 = vmatprep.subr.bf16.mxu0 %v5613
        %8037 = vmatpush1.bf16.msra.mxu0 %v5612
        %8038 = vmatprep.subr.bf16.mxu0 %v5617
        %8039 = vmatpush1.bf16.msra.mxu0 %v5616
        %8040 = vmatprep.subr.bf16.mxu0 %v5621
        %8041 = vmatpush1.bf16.msra.mxu0 %v5620
        %8042 = vmatprep.subr.bf16.mxu0 %v5625
        %8043 = vmatpush1.bf16.msra.mxu0 %v5624
        %8044 = vmatprep.subr.bf16.mxu0 %v5629
        %8045 = vmatpush1.bf16.msra.mxu0 %v5628
        %8046 = vmatprep.subr.bf16.mxu0 %v5633
        %8047 = vmatpush1.bf16.msra.mxu0 %v5632
        %8048 = vmatprep.subr.bf16.mxu0 %v5637
        %8049 = vmatpush1.bf16.msra.mxu0 %v5636
        %8050 = vmatprep.subr.bf16.mxu0 %v5641
        %8051 = vmatpush1.bf16.msra.mxu0 %v5640
        %8052 = vmatprep.mubr.bf16.mxu0 %v1575
        %8053 = vmatmul.mubr.bf16.gmra.mrb[0].mxu0 %v1574
        %v8054 = vpop.f32.mrb[0].mxu0
        %v8055 = vadd.f32 %v8012, %v8054
        %v8056 = vpop.f32.mrb[0].mxu0
        %v8057 = vadd.f32 %v8014, %v8056
        %v8058 = vpop.f32.mrb[0].mxu0
        %v8059 = vadd.f32 %v8016, %v8058
        %v8060 = vpop.f32.mrb[0].mxu0
        %v8061 = vadd.f32 %v8018, %v8060
        %8062 = vdwg.mxu0
        %8063 = vmatprep.subr.bf16.mxu0 %v5645
        %8064 = vmatpush1.bf16.msra.mxu0 %v5644
        %8065 = vmatprep.subr.bf16.mxu0 %v5649
        %8066 = vmatpush1.bf16.msra.mxu0 %v5648
        %8067 = vmatprep.subr.bf16.mxu0 %v5653
        %8068 = vmatpush1.bf16.msra.mxu0 %v5652
        %8069 = vmatprep.subr.bf16.mxu0 %v5657
        %8070 = vmatpush1.bf16.msra.mxu0 %v5656
        %8071 = vmatprep.subr.bf16.mxu0 %v5661
        %8072 = vmatpush1.bf16.msra.mxu0 %v5660
        %8073 = vmatprep.subr.bf16.mxu0 %v5665
        %8074 = vmatpush1.bf16.msra.mxu0 %v5664
        %8075 = vmatprep.subr.bf16.mxu0 %v5669
        %8076 = vmatpush1.bf16.msra.mxu0 %v5668
        %8077 = vmatprep.subr.bf16.mxu0 %v5673
        %8078 = vmatpush1.bf16.msra.mxu0 %v5672
        %8079 = vmatprep.subr.bf16.mxu0 %v5677
        %8080 = vmatpush1.bf16.msra.mxu0 %v5676
        %8081 = vmatprep.subr.bf16.mxu0 %v5681
        %8082 = vmatpush1.bf16.msra.mxu0 %v5680
        %8083 = vmatprep.subr.bf16.mxu0 %v5685
        %8084 = vmatpush1.bf16.msra.mxu0 %v5684
        %8085 = vmatprep.subr.bf16.mxu0 %v5689
        %8086 = vmatpush1.bf16.msra.mxu0 %v5688
        %8087 = vmatprep.subr.bf16.mxu0 %v5693
        %8088 = vmatpush1.bf16.msra.mxu0 %v5692
        %8089 = vmatprep.subr.bf16.mxu0 %v5697
        %8090 = vmatpush1.bf16.msra.mxu0 %v5696
        %8091 = vmatprep.subr.bf16.mxu0 %v5701
        %8092 = vmatpush1.bf16.msra.mxu0 %v5700
        %8093 = vmatprep.subr.bf16.mxu0 %v5705
        %8094 = vmatpush1.bf16.msra.mxu0 %v5704
        %8095 = vmatprep.mubr.bf16.mxu0 %v1577
        %8096 = vmatmul.mubr.bf16.gmra.mrb[0].mxu0 %v1576
        %v8097 = vpop.f32.mrb[0].mxu0
        %v8098 = vadd.f32 %v8055, %v8097
        %v8099 = vpop.f32.mrb[0].mxu0
        %v8100 = vadd.f32 %v8057, %v8099
        %v8101 = vpop.f32.mrb[0].mxu0
        %v8102 = vadd.f32 %v8059, %v8101
        %v8103 = vpop.f32.mrb[0].mxu0
        %v8104 = vadd.f32 %v8061, %v8103
        %8105 = vdwg.mxu0
        %v8106 = vadd.f32 %v386, %v7410
        %v8107 = vadd.f32 %v387, %v7412
        %v8108 = vadd.f32 %v388, %v8098
        %v8109 = vadd.f32 %v389, %v8100
        %v8110 = vadd.f32 %v390, %v7414
        %v8111 = vadd.f32 %v391, %v7416
        %v8112 = vadd.f32 %v392, %v8102
        %v8113 = vadd.f32 %v393, %v8104
        %8114 = vst [vmem:[#allocation2] sm:$0xff] %v8106
        %8115 = vst [vmem:[#allocation2 + $0x8] sm:$0xff] %v8107
        %8116 = vst [vmem:[#allocation2 + $0x10] sm:$0xff] %v8108
        %8117 = vst [vmem:[#allocation2 + $0x18] sm:$0xff] %v8109
        %8118 = vst [vmem:[#allocation2 + $0x20] sm:$0xff] %v8110
        %8119 = vst [vmem:[#allocation2 + $0x28] sm:$0xff] %v8111
        %8120 = vst [vmem:[#allocation2 + $0x30] sm:$0xff] %v8112
        %8121 = vst [vmem:[#allocation2 + $0x38] sm:$0xff] %v8113
        %p8122 = scmp.eq.s32.totalorder %s20, 2
        // Predicated region
        $region76: #{discriminator_forward.1} parent=66 // pred_check
          %p8123 = pneg %p8122
        $region77: #{discriminator_forward.1} parent=66 // pred_check_branch
          %8125 = sbr.rel (%p8123) target = $region79
        $region78: #{discriminator_forward.1} parent=66 // pred_region
          %v8126 = vld [vmem:[#allocation2] sm:$0xff]
          %v8127 = vld [vmem:[#allocation2 + $0x8] sm:$0xff]
          %v8128 = vld [vmem:[#allocation2 + $0x10] sm:$0xff]
          %v8129 = vld [vmem:[#allocation2 + $0x18] sm:$0xff]
          %v8130 = vld [vmem:[#allocation2 + $0x20] sm:$0xff]
          %v8131 = vld [vmem:[#allocation2 + $0x28] sm:$0xff]
          %v8132 = vld [vmem:[#allocation2 + $0x30] sm:$0xff]
          %v8133 = vld [vmem:[#allocation2 + $0x38] sm:$0xff]
          %v8134 = vld [vmem:[%s2] sm:$0xf]
          %v8136 = vlaneseq
          %v8137 = vshrl.u32 %v8136, 7
          %v8138 = vsub.s32 0, %v8137
          %v8139 = vrot.slane %v8134, %v8138
          %v8140 = vlaneseq
          %v8141 = vshrl.u32 %v8140, 7
          %v8142 = vsub.s32 1, %v8141
          %v8143 = vrot.slane %v8134, %v8142
          %v8144 = vlaneseq
          %v8145 = vshrl.u32 %v8144, 7
          %v8146 = vsub.s32 2, %v8145
          %v8147 = vrot.slane %v8134, %v8146
          %v8148 = vlaneseq
          %v8149 = vshrl.u32 %v8148, 7
          %v8150 = vsub.s32 3, %v8149
          %v8151 = vrot.slane %v8134, %v8150
          %v8156 = vadd.f32 %v8126, %v8139
          %v8157 = vadd.f32 %v8127, %v8143
          %v8158 = vadd.f32 %v8128, %v8147
          %v8159 = vadd.f32 %v8129, %v8151
          %v8160 = vadd.f32 %v8130, %v8139
          %v8161 = vadd.f32 %v8131, %v8143
          %v8162 = vadd.f32 %v8132, %v8147
          %v8163 = vadd.f32 %v8133, %v8151
          %vm8164 = vcmp.gt.f32.partialorder %v8156, 0.0
          %vm8165 = vcmp.gt.f32.partialorder %v8157, 0.0
          %vm8166 = vcmp.gt.f32.partialorder %v8158, 0.0
          %vm8167 = vcmp.gt.f32.partialorder %v8159, 0.0
          %vm8168 = vcmp.gt.f32.partialorder %v8160, 0.0
          %vm8169 = vcmp.gt.f32.partialorder %v8161, 0.0
          %vm8170 = vcmp.gt.f32.partialorder %v8162, 0.0
          %vm8171 = vcmp.gt.f32.partialorder %v8163, 0.0
          %v8172 = vmul.f32 %v8156, 0.2
          %v8173 = vmul.f32 %v8157, 0.2
          %v8174 = vmul.f32 %v8158, 0.2
          %v8175 = vmul.f32 %v8159, 0.2
          %v8176 = vmul.f32 %v8160, 0.2
          %v8177 = vmul.f32 %v8161, 0.2
          %v8178 = vmul.f32 %v8162, 0.2
          %v8179 = vmul.f32 %v8163, 0.2
          %v8180 = vsel %vm8164, %v8156, %v8172
          %v8181 = vsel %vm8165, %v8157, %v8173
          %v8182 = vsel %vm8166, %v8158, %v8174
          %v8183 = vsel %vm8167, %v8159, %v8175
          %v8184 = vsel %vm8168, %v8160, %v8176
          %v8185 = vsel %vm8169, %v8161, %v8177
          %v8186 = vsel %vm8170, %v8162, %v8178
          %v8187 = vsel %vm8171, %v8163, %v8179
          %v8188 = vpack.c.bf16 %v8184, %v8180
          %v8189 = vpack.c.bf16 %v8185, %v8181
          %v8190 = vpack.c.bf16 %v8186, %v8182
          %v8191 = vpack.c.bf16 %v8187, %v8183
          %v8192 = vld [vmem:[%s3] sm:$0xff]
          %v8193 = vld [vmem:[%s3 + $0x8] sm:$0xff]
          %v8194 = vld [vmem:[%s3 + $0x10] sm:$0xff]
          %v8195 = vld [vmem:[%s3 + $0x18] sm:$0xff]
          %v8196 = vld [vmem:[%s3 + $0x20] sm:$0xff]
          %v8197 = vld [vmem:[%s3 + $0x28] sm:$0xff]
          %v8198 = vld [vmem:[%s3 + $0x30] sm:$0xff]
          %v8199 = vld [vmem:[%s3 + $0x38] sm:$0xff]
          %v8200 = vld [vmem:[%s3 + $0x40] sm:$0xff]
          %v8201 = vld [vmem:[%s3 + $0x48] sm:$0xff]
          %v8202 = vld [vmem:[%s3 + $0x50] sm:$0xff]
          %v8203 = vld [vmem:[%s3 + $0x58] sm:$0xff]
          %v8204 = vld [vmem:[%s3 + $0x60] sm:$0xff]
          %v8205 = vld [vmem:[%s3 + $0x68] sm:$0xff]
          %v8206 = vld [vmem:[%s3 + $0x70] sm:$0xff]
          %v8207 = vld [vmem:[%s3 + $0x78] sm:$0xff]
          %v8208 = vld [vmem:[%s3 + $0x80] sm:$0xff]
          %v8209 = vld [vmem:[%s3 + $0x88] sm:$0xff]
          %v8210 = vld [vmem:[%s3 + $0x90] sm:$0xff]
          %v8211 = vld [vmem:[%s3 + $0x98] sm:$0xff]
          %v8212 = vld [vmem:[%s3 + $0xa0] sm:$0xff]
          %v8213 = vld [vmem:[%s3 + $0xa8] sm:$0xff]
          %v8214 = vld [vmem:[%s3 + $0xb0] sm:$0xff]
          %v8215 = vld [vmem:[%s3 + $0xb8] sm:$0xff]
          %v8216 = vld [vmem:[%s3 + $0xc0] sm:$0xff]
          %v8217 = vld [vmem:[%s3 + $0xc8] sm:$0xff]
          %v8218 = vld [vmem:[%s3 + $0xd0] sm:$0xff]
          %v8219 = vld [vmem:[%s3 + $0xd8] sm:$0xff]
          %v8220 = vld [vmem:[%s3 + $0xe0] sm:$0xff]
          %v8221 = vld [vmem:[%s3 + $0xe8] sm:$0xff]
          %v8222 = vld [vmem:[%s3 + $0xf0] sm:$0xff]
          %v8223 = vld [vmem:[%s3 + $0xf8] sm:$0xff]
          %v8224 = vld [vmem:[%s3 + $0x100] sm:$0xff]
          %v8225 = vld [vmem:[%s3 + $0x108] sm:$0xff]
          %v8226 = vld [vmem:[%s3 + $0x110] sm:$0xff]
          %v8227 = vld [vmem:[%s3 + $0x118] sm:$0xff]
          %v8228 = vld [vmem:[%s3 + $0x120] sm:$0xff]
          %v8229 = vld [vmem:[%s3 + $0x128] sm:$0xff]
          %v8230 = vld [vmem:[%s3 + $0x130] sm:$0xff]
          %v8231 = vld [vmem:[%s3 + $0x138] sm:$0xff]
          %v8232 = vld [vmem:[%s3 + $0x140] sm:$0xff]
          %v8233 = vld [vmem:[%s3 + $0x148] sm:$0xff]
          %v8234 = vld [vmem:[%s3 + $0x150] sm:$0xff]
          %v8235 = vld [vmem:[%s3 + $0x158] sm:$0xff]
          %v8236 = vld [vmem:[%s3 + $0x160] sm:$0xff]
          %v8237 = vld [vmem:[%s3 + $0x168] sm:$0xff]
          %v8238 = vld [vmem:[%s3 + $0x170] sm:$0xff]
          %v8239 = vld [vmem:[%s3 + $0x178] sm:$0xff]
          %v8240 = vld [vmem:[%s3 + $0x180] sm:$0xff]
          %v8241 = vld [vmem:[%s3 + $0x188] sm:$0xff]
          %v8242 = vld [vmem:[%s3 + $0x190] sm:$0xff]
          %v8243 = vld [vmem:[%s3 + $0x198] sm:$0xff]
          %v8244 = vld [vmem:[%s3 + $0x1a0] sm:$0xff]
          %v8245 = vld [vmem:[%s3 + $0x1a8] sm:$0xff]
          %v8246 = vld [vmem:[%s3 + $0x1b0] sm:$0xff]
          %v8247 = vld [vmem:[%s3 + $0x1b8] sm:$0xff]
          %v8248 = vld [vmem:[%s3 + $0x1c0] sm:$0xff]
          %v8249 = vld [vmem:[%s3 + $0x1c8] sm:$0xff]
          %v8250 = vld [vmem:[%s3 + $0x1d0] sm:$0xff]
          %v8251 = vld [vmem:[%s3 + $0x1d8] sm:$0xff]
          %v8252 = vld [vmem:[%s3 + $0x1e0] sm:$0xff]
          %v8253 = vld [vmem:[%s3 + $0x1e8] sm:$0xff]
          %v8254 = vld [vmem:[%s3 + $0x1f0] sm:$0xff]
          %v8255 = vld [vmem:[%s3 + $0x1f8] sm:$0xff]
          %v8256 = vld [vmem:[%s4] sm:$0x3]
          %v8258 = vlaneseq
          %v8259 = vshrl.u32 %v8258, 7
          %v8260 = vsub.s32 0, %v8259
          %v8261 = vrot.slane %v8256, %v8260
          %v8262 = vlaneseq
          %v8263 = vshrl.u32 %v8262, 7
          %v8264 = vsub.s32 1, %v8263
          %v8265 = vrot.slane %v8256, %v8264
          %v8332 = vunpack.c.l.b16 %v8192
          %v8333 = vunpack.c.h.b16 %v8192
          %v8334 = vunpack.c.l.b16 %v8193
          %v8335 = vunpack.c.h.b16 %v8193
          %v8336 = vunpack.c.l.b16 %v8194
          %v8337 = vunpack.c.h.b16 %v8194
          %v8338 = vunpack.c.l.b16 %v8195
          %v8339 = vunpack.c.h.b16 %v8195
          %v8340 = vunpack.c.l.b16 %v8196
          %v8341 = vunpack.c.h.b16 %v8196
          %v8342 = vunpack.c.l.b16 %v8197
          %v8343 = vunpack.c.h.b16 %v8197
          %v8344 = vunpack.c.l.b16 %v8198
          %v8345 = vunpack.c.h.b16 %v8198
          %v8346 = vunpack.c.l.b16 %v8199
          %v8347 = vunpack.c.h.b16 %v8199
          %v8348 = vunpack.c.l.b16 %v8200
          %v8349 = vunpack.c.h.b16 %v8200
          %v8350 = vunpack.c.l.b16 %v8201
          %v8351 = vunpack.c.h.b16 %v8201
          %v8352 = vunpack.c.l.b16 %v8202
          %v8353 = vunpack.c.h.b16 %v8202
          %v8354 = vunpack.c.l.b16 %v8203
          %v8355 = vunpack.c.h.b16 %v8203
          %v8356 = vunpack.c.l.b16 %v8204
          %v8357 = vunpack.c.h.b16 %v8204
          %v8358 = vunpack.c.l.b16 %v8205
          %v8359 = vunpack.c.h.b16 %v8205
          %v8360 = vunpack.c.l.b16 %v8206
          %v8361 = vunpack.c.h.b16 %v8206
          %v8362 = vunpack.c.l.b16 %v8207
          %v8363 = vunpack.c.h.b16 %v8207
          %v8364 = vunpack.c.l.b16 %v8208
          %v8365 = vunpack.c.h.b16 %v8208
          %v8366 = vunpack.c.l.b16 %v8209
          %v8367 = vunpack.c.h.b16 %v8209
          %v8368 = vunpack.c.l.b16 %v8210
          %v8369 = vunpack.c.h.b16 %v8210
          %v8370 = vunpack.c.l.b16 %v8211
          %v8371 = vunpack.c.h.b16 %v8211
          %v8372 = vunpack.c.l.b16 %v8212
          %v8373 = vunpack.c.h.b16 %v8212
          %v8374 = vunpack.c.l.b16 %v8213
          %v8375 = vunpack.c.h.b16 %v8213
          %v8376 = vunpack.c.l.b16 %v8214
          %v8377 = vunpack.c.h.b16 %v8214
          %v8378 = vunpack.c.l.b16 %v8215
          %v8379 = vunpack.c.h.b16 %v8215
          %v8380 = vunpack.c.l.b16 %v8216
          %v8381 = vunpack.c.h.b16 %v8216
          %v8382 = vunpack.c.l.b16 %v8217
          %v8383 = vunpack.c.h.b16 %v8217
          %v8384 = vunpack.c.l.b16 %v8218
          %v8385 = vunpack.c.h.b16 %v8218
          %v8386 = vunpack.c.l.b16 %v8219
          %v8387 = vunpack.c.h.b16 %v8219
          %v8388 = vunpack.c.l.b16 %v8220
          %v8389 = vunpack.c.h.b16 %v8220
          %v8390 = vunpack.c.l.b16 %v8221
          %v8391 = vunpack.c.h.b16 %v8221
          %v8392 = vunpack.c.l.b16 %v8222
          %v8393 = vunpack.c.h.b16 %v8222
          %v8394 = vunpack.c.l.b16 %v8223
          %v8395 = vunpack.c.h.b16 %v8223
          %v8396 = vunpack.c.l.b16 %v8224
          %v8397 = vunpack.c.h.b16 %v8224
          %v8398 = vunpack.c.l.b16 %v8225
          %v8399 = vunpack.c.h.b16 %v8225
          %v8400 = vunpack.c.l.b16 %v8226
          %v8401 = vunpack.c.h.b16 %v8226
          %v8402 = vunpack.c.l.b16 %v8227
          %v8403 = vunpack.c.h.b16 %v8227
          %v8404 = vunpack.c.l.b16 %v8228
          %v8405 = vunpack.c.h.b16 %v8228
          %v8406 = vunpack.c.l.b16 %v8229
          %v8407 = vunpack.c.h.b16 %v8229
          %v8408 = vunpack.c.l.b16 %v8230
          %v8409 = vunpack.c.h.b16 %v8230
          %v8410 = vunpack.c.l.b16 %v8231
          %v8411 = vunpack.c.h.b16 %v8231
          %v8412 = vunpack.c.l.b16 %v8232
          %v8413 = vunpack.c.h.b16 %v8232
          %v8414 = vunpack.c.l.b16 %v8233
          %v8415 = vunpack.c.h.b16 %v8233
          %v8416 = vunpack.c.l.b16 %v8234
          %v8417 = vunpack.c.h.b16 %v8234
          %v8418 = vunpack.c.l.b16 %v8235
          %v8419 = vunpack.c.h.b16 %v8235
          %v8420 = vunpack.c.l.b16 %v8236
          %v8421 = vunpack.c.h.b16 %v8236
          %v8422 = vunpack.c.l.b16 %v8237
          %v8423 = vunpack.c.h.b16 %v8237
          %v8424 = vunpack.c.l.b16 %v8238
          %v8425 = vunpack.c.h.b16 %v8238
          %v8426 = vunpack.c.l.b16 %v8239
          %v8427 = vunpack.c.h.b16 %v8239
          %v8428 = vunpack.c.l.b16 %v8240
          %v8429 = vunpack.c.h.b16 %v8240
          %v8430 = vunpack.c.l.b16 %v8241
          %v8431 = vunpack.c.h.b16 %v8241
          %v8432 = vunpack.c.l.b16 %v8242
          %v8433 = vunpack.c.h.b16 %v8242
          %v8434 = vunpack.c.l.b16 %v8243
          %v8435 = vunpack.c.h.b16 %v8243
          %v8436 = vunpack.c.l.b16 %v8244
          %v8437 = vunpack.c.h.b16 %v8244
          %v8438 = vunpack.c.l.b16 %v8245
          %v8439 = vunpack.c.h.b16 %v8245
          %v8440 = vunpack.c.l.b16 %v8246
          %v8441 = vunpack.c.h.b16 %v8246
          %v8442 = vunpack.c.l.b16 %v8247
          %v8443 = vunpack.c.h.b16 %v8247
          %v8444 = vunpack.c.l.b16 %v8248
          %v8445 = vunpack.c.h.b16 %v8248
          %v8446 = vunpack.c.l.b16 %v8249
          %v8447 = vunpack.c.h.b16 %v8249
          %v8448 = vunpack.c.l.b16 %v8250
          %v8449 = vunpack.c.h.b16 %v8250
          %v8450 = vunpack.c.l.b16 %v8251
          %v8451 = vunpack.c.h.b16 %v8251
          %v8452 = vunpack.c.l.b16 %v8252
          %v8453 = vunpack.c.h.b16 %v8252
          %v8454 = vunpack.c.l.b16 %v8253
          %v8455 = vunpack.c.h.b16 %v8253
          %v8456 = vunpack.c.l.b16 %v8254
          %v8457 = vunpack.c.h.b16 %v8254
          %v8458 = vunpack.c.l.b16 %v8255
          %v8459 = vunpack.c.h.b16 %v8255
          %v8460 = vpack.c.b16 %v8334, %v8332
          %v8461 = vpack.c.b16 %v8335, %v8333
          %v8462 = vpack.c.b16 %v8338, %v8336
          %v8463 = vpack.c.b16 %v8339, %v8337
          %v8464 = vpack.c.b16 %v8342, %v8340
          %v8465 = vpack.c.b16 %v8343, %v8341
          %v8466 = vpack.c.b16 %v8346, %v8344
          %v8467 = vpack.c.b16 %v8347, %v8345
          %v8468 = vpack.c.b16 %v8350, %v8348
          %v8469 = vpack.c.b16 %v8351, %v8349
          %v8470 = vpack.c.b16 %v8354, %v8352
          %v8471 = vpack.c.b16 %v8355, %v8353
          %v8472 = vpack.c.b16 %v8358, %v8356
          %v8473 = vpack.c.b16 %v8359, %v8357
          %v8474 = vpack.c.b16 %v8362, %v8360
          %v8475 = vpack.c.b16 %v8363, %v8361
          %v8476 = vpack.c.b16 %v8366, %v8364
          %v8477 = vpack.c.b16 %v8367, %v8365
          %v8478 = vpack.c.b16 %v8370, %v8368
          %v8479 = vpack.c.b16 %v8371, %v8369
          %v8480 = vpack.c.b16 %v8374, %v8372
          %v8481 = vpack.c.b16 %v8375, %v8373
          %v8482 = vpack.c.b16 %v8378, %v8376
          %v8483 = vpack.c.b16 %v8379, %v8377
          %v8484 = vpack.c.b16 %v8382, %v8380
          %v8485 = vpack.c.b16 %v8383, %v8381
          %v8486 = vpack.c.b16 %v8386, %v8384
          %v8487 = vpack.c.b16 %v8387, %v8385
          %v8488 = vpack.c.b16 %v8390, %v8388
          %v8489 = vpack.c.b16 %v8391, %v8389
          %v8490 = vpack.c.b16 %v8394, %v8392
          %v8491 = vpack.c.b16 %v8395, %v8393
          %v8492 = vpack.c.b16 %v8398, %v8396
          %v8493 = vpack.c.b16 %v8399, %v8397
          %v8494 = vpack.c.b16 %v8402, %v8400
          %v8495 = vpack.c.b16 %v8403, %v8401
          %v8496 = vpack.c.b16 %v8406, %v8404
          %v8497 = vpack.c.b16 %v8407, %v8405
          %v8498 = vpack.c.b16 %v8410, %v8408
          %v8499 = vpack.c.b16 %v8411, %v8409
          %v8500 = vpack.c.b16 %v8414, %v8412
          %v8501 = vpack.c.b16 %v8415, %v8413
          %v8502 = vpack.c.b16 %v8418, %v8416
          %v8503 = vpack.c.b16 %v8419, %v8417
          %v8504 = vpack.c.b16 %v8422, %v8420
          %v8505 = vpack.c.b16 %v8423, %v8421
          %v8506 = vpack.c.b16 %v8426, %v8424
          %v8507 = vpack.c.b16 %v8427, %v8425
          %v8508 = vpack.c.b16 %v8430, %v8428
          %v8509 = vpack.c.b16 %v8431, %v8429
          %v8510 = vpack.c.b16 %v8434, %v8432
          %v8511 = vpack.c.b16 %v8435, %v8433
          %v8512 = vpack.c.b16 %v8438, %v8436
          %v8513 = vpack.c.b16 %v8439, %v8437
          %v8514 = vpack.c.b16 %v8442, %v8440
          %v8515 = vpack.c.b16 %v8443, %v8441
          %v8516 = vpack.c.b16 %v8446, %v8444
          %v8517 = vpack.c.b16 %v8447, %v8445
          %v8518 = vpack.c.b16 %v8450, %v8448
          %v8519 = vpack.c.b16 %v8451, %v8449
          %v8520 = vpack.c.b16 %v8454, %v8452
          %v8521 = vpack.c.b16 %v8455, %v8453
          %v8522 = vpack.c.b16 %v8458, %v8456
          %v8523 = vpack.c.b16 %v8459, %v8457
          %8588 = vmatprep.subr.bf16.mxu0 %v8461
          %8589 = vmatpush1.bf16.msra.mxu0 %v8460
          %8590 = vmatprep.subr.bf16.mxu0 %v8463
          %8591 = vmatpush1.bf16.msra.mxu0 %v8462
          %8592 = vmatprep.subr.bf16.mxu0 %v8465
          %8593 = vmatpush1.bf16.msra.mxu0 %v8464
          %8594 = vmatprep.subr.bf16.mxu0 %v8467
          %8595 = vmatpush1.bf16.msra.mxu0 %v8466
          %8596 = vmatprep.subr.bf16.mxu0 %v8469
          %8597 = vmatpush1.bf16.msra.mxu0 %v8468
          %8598 = vmatprep.subr.bf16.mxu0 %v8471
          %8599 = vmatpush1.bf16.msra.mxu0 %v8470
          %8600 = vmatprep.subr.bf16.mxu0 %v8473
          %8601 = vmatpush1.bf16.msra.mxu0 %v8472
          %8602 = vmatprep.subr.bf16.mxu0 %v8475
          %8603 = vmatpush1.bf16.msra.mxu0 %v8474
          %8604 = vmatprep.subr.bf16.mxu0 %v8477
          %8605 = vmatpush1.bf16.msra.mxu0 %v8476
          %8606 = vmatprep.subr.bf16.mxu0 %v8479
          %8607 = vmatpush1.bf16.msra.mxu0 %v8478
          %8608 = vmatprep.subr.bf16.mxu0 %v8481
          %8609 = vmatpush1.bf16.msra.mxu0 %v8480
          %8610 = vmatprep.subr.bf16.mxu0 %v8483
          %8611 = vmatpush1.bf16.msra.mxu0 %v8482
          %8612 = vmatprep.subr.bf16.mxu0 %v8485
          %8613 = vmatpush1.bf16.msra.mxu0 %v8484
          %8614 = vmatprep.subr.bf16.mxu0 %v8487
          %8615 = vmatpush1.bf16.msra.mxu0 %v8486
          %8616 = vmatprep.subr.bf16.mxu0 %v8489
          %8617 = vmatpush1.bf16.msra.mxu0 %v8488
          %8618 = vmatprep.subr.bf16.mxu0 %v8491
          %8619 = vmatpush1.bf16.msra.mxu0 %v8490
          %8620 = vmatprep.mubr.bf16.mxu0 %v8189
          %8621 = vmatmul.mubr.bf16.gmra.mrb[0].mxu0 %v8188
          %v8622 = vpop.f32.mrb[0].mxu0
          %v8623 = vadd.f32 %v8261, %v8622
          %v8624 = vpop.f32.mrb[0].mxu0
          %v8625 = vadd.f32 %v8265, %v8624
          %v8626 = vpop.f32.mrb[0].mxu0
          %v8627 = vadd.f32 %v8261, %v8626
          %v8628 = vpop.f32.mrb[0].mxu0
          %v8629 = vadd.f32 %v8265, %v8628
          %8630 = vdwg.mxu0
          %8631 = vmatprep.subr.bf16.mxu0 %v8493
          %8632 = vmatpush1.bf16.msra.mxu0 %v8492
          %8633 = vmatprep.subr.bf16.mxu0 %v8495
          %8634 = vmatpush1.bf16.msra.mxu0 %v8494
          %8635 = vmatprep.subr.bf16.mxu0 %v8497
          %8636 = vmatpush1.bf16.msra.mxu0 %v8496
          %8637 = vmatprep.subr.bf16.mxu0 %v8499
          %8638 = vmatpush1.bf16.msra.mxu0 %v8498
          %8639 = vmatprep.subr.bf16.mxu0 %v8501
          %8640 = vmatpush1.bf16.msra.mxu0 %v8500
          %8641 = vmatprep.subr.bf16.mxu0 %v8503
          %8642 = vmatpush1.bf16.msra.mxu0 %v8502
          %8643 = vmatprep.subr.bf16.mxu0 %v8505
          %8644 = vmatpush1.bf16.msra.mxu0 %v8504
          %8645 = vmatprep.subr.bf16.mxu0 %v8507
          %8646 = vmatpush1.bf16.msra.mxu0 %v8506
          %8647 = vmatprep.subr.bf16.mxu0 %v8509
          %8648 = vmatpush1.bf16.msra.mxu0 %v8508
          %8649 = vmatprep.subr.bf16.mxu0 %v8511
          %8650 = vmatpush1.bf16.msra.mxu0 %v8510
          %8651 = vmatprep.subr.bf16.mxu0 %v8513
          %8652 = vmatpush1.bf16.msra.mxu0 %v8512
          %8653 = vmatprep.subr.bf16.mxu0 %v8515
          %8654 = vmatpush1.bf16.msra.mxu0 %v8514
          %8655 = vmatprep.subr.bf16.mxu0 %v8517
          %8656 = vmatpush1.bf16.msra.mxu0 %v8516
          %8657 = vmatprep.subr.bf16.mxu0 %v8519
          %8658 = vmatpush1.bf16.msra.mxu0 %v8518
          %8659 = vmatprep.subr.bf16.mxu0 %v8521
          %8660 = vmatpush1.bf16.msra.mxu0 %v8520
          %8661 = vmatprep.subr.bf16.mxu0 %v8523
          %8662 = vmatpush1.bf16.msra.mxu0 %v8522
          %8663 = vmatprep.mubr.bf16.mxu0 %v8191
          %8664 = vmatmul.mubr.bf16.gmra.mrb[0].mxu0 %v8190
          %v8665 = vpop.f32.mrb[0].mxu0
          %v8666 = vadd.f32 %v8623, %v8665
          %v8667 = vpop.f32.mrb[0].mxu0
          %v8668 = vadd.f32 %v8625, %v8667
          %v8669 = vpop.f32.mrb[0].mxu0
          %v8670 = vadd.f32 %v8627, %v8669
          %v8671 = vpop.f32.mrb[0].mxu0
          %v8672 = vadd.f32 %v8629, %v8671
          %8673 = vdwg.mxu0
          %vm8674 = vcmp.gt.f32.partialorder %v8666, 0.0
          %vm8675 = vcmp.gt.f32.partialorder %v8668, 0.0
          %vm8676 = vcmp.gt.f32.partialorder %v8670, 0.0
          %vm8677 = vcmp.gt.f32.partialorder %v8672, 0.0
          %v8678 = vmul.f32 %v8666, 0.2
          %v8679 = vmul.f32 %v8668, 0.2
          %v8680 = vmul.f32 %v8670, 0.2
          %v8681 = vmul.f32 %v8672, 0.2
          %v8682 = vsel %vm8674, %v8666, %v8678
          %v8683 = vsel %vm8675, %v8668, %v8679
          %v8684 = vsel %vm8676, %v8670, %v8680
          %v8685 = vsel %vm8677, %v8672, %v8681
          %v8686 = vld [vmem:[%s5] sm:$0x3]
          %v8688 = vlaneseq
          %v8689 = vshrl.u32 %v8688, 7
          %v8690 = vsub.s32 0, %v8689
          %v8691 = vrot.slane %v8686, %v8690
          %v8692 = vlaneseq
          %v8693 = vshrl.u32 %v8692, 7
          %v8694 = vsub.s32 1, %v8693
          %v8695 = vrot.slane %v8686, %v8694
          %v8698 = vmul.f32 %v8682, %v8691
          %v8699 = vmul.f32 %v8683, %v8695
          %v8700 = vmul.f32 %v8684, %v8691
          %v8701 = vmul.f32 %v8685, %v8695
          %v8702 = vadd.f32 %v8698, %v8699
          %8703 = vadd.xlane.f32.xlu0 %v8702
          %v8704 = vpop.xlane.xlu0 %8703
          %v8705 = vadd.f32 %v8700, %v8701
          %8706 = vadd.xlane.f32.xlu0 %v8705
          %v8707 = vpop.xlane.xlu0 %8706
          %v8708 = vld [vmem:[#allocation3] sm:$0x1]
          %v8710 = vlaneseq
          %v8711 = vshrl.u32 %v8710, 7
          %v8712 = vsub.s32 0, %v8711
          %v8713 = vrot.slane %v8708, %v8712
          %v8715 = vadd.f32 %v8704, %v8713
          %v8716 = vadd.f32 %v8707, %v8713
          %v8717 = vsub.f32 0.0, %v8715
          %v8718 = vsub.f32 0.0, %v8716
          %v8719 = vmul.f32 %v8717, 1.442695
          %v8720 = vpow.pop %v8719
          %v8721 = vmul.f32 %v8718, 1.442695
          %v8722 = vpow.pop %v8721
          %v8723 = vadd.f32 %v8720, 1.0
          %v8724 = vadd.f32 %v8722, 1.0
          %v8725 = vrcp.pop %v8723
          %v8726 = vrcp.pop %v8724
          %vm8727 = vcmask 7168
          %8728 = vst.msk [vmem:[%s7] sm:$0xff] %vm8727, %v8725
          %8729 = vst.msk [vmem:[%s7 + $0x8] sm:$0xff] %vm8727, %v8726
        $region79: #{discriminator_forward.1} parent=66 // pred_fallthru
          _
        // Predicated region
        $region80: #{discriminator_forward.1} parent=66 // pred_check
          %p8730 = pneg %p190
        $region81: #{discriminator_forward.1} parent=66 // pred_check_branch
          %8732 = sbr.rel (%p8730) target = $region83
        $region82: #{discriminator_forward.1} parent=66 // pred_region
          _
        $region83: #{discriminator_forward.1} parent=66 // pred_fallthru
          _
        // Predicated region
        $region84: #{discriminator_forward.1} parent=66 // pred_check
          %p8733 = pneg %p190
        $region85: #{discriminator_forward.1} parent=66 // pred_check_branch
          %8735 = sbr.rel (%p8733) target = $region87
        $region86: #{discriminator_forward.1} parent=66 // pred_region
          _
        $region87: #{discriminator_forward.1} parent=66 // pred_fallthru
          _
      $region67: #{discriminator_forward.1} parent=5 // pred_fallthru
        _
      %p8736 = scmp.le.s32.totalorder 2, %s15
      // Predicated region
      $region88: #{discriminator_forward.1} parent=5 // pred_check
        %p8737 = pneg %p8736
      $region89: #{discriminator_forward.1} parent=5 // pred_check_branch
        %8739 = sbr.rel (%p8737) target = $region91
      $region90: #{discriminator_forward.1} parent=5 // pred_region
        %s8740 = ssub.s32 %s15, 2
      $region91: #{discriminator_forward.1} parent=5 // pred_fallthru
        _
    $region6: #{discriminator_forward.1} parent=1 // loop_footer
      %s19 = sadd.s32 1, %s15
    $region7: #{discriminator_forward.1} parent=1 // loop_footer_branch
      %14 = sbr.rel target = $region3
    $region8: #{discriminator_forward.1} parent=1 // loop_exit
      _

</llo_original>
